<compile_context>
chip_gen: v7x
topology: tpu7x:2x2x1
jax: 0.10.0
libtpu: 0.0.40
codegen_flags: <defaults>
</compile_context>

<pallas_src>
import jax
import jax.numpy as jnp
from jax.experimental import pallas as pl
from jax.experimental.pallas import tpu as pltpu


# ---------------- in-kernel layer blocks (all operate on VMEM values/refs) ----

def _conv_relu_block(y, pad_ref, taps_ref, b_ref, meta):
    """ConvBlock: Conv2d(bias=True, stride=1) + ReLU.

    y: (N, IH, IW, Cin) value; pad_ref: (N, IH+2p, IW+2p, Cin) VMEM scratch;
    taps_ref: (K*K, Cin, Cout); b_ref: (1, Cout).  Returns (N, OH, OW, Cout).
    """
    n = y.shape[0]
    cin, cout = meta["cin"], meta["cout"]
    k, pad = meta["k"], meta["p"]
    ih, iw, oh, ow = meta["ih"], meta["iw"], meta["oh"], meta["ow"]
    m = n * oh * ow

    if pad > 0:  # zero borders once, then write the interior
        pad_ref[...] = jnp.zeros(pad_ref.shape, jnp.float32)
    pad_ref[:, pad:pad + ih, pad:pad + iw, :] = y

    acc = None
    for kh in range(k):
        for kw in range(k):
            col = pad_ref[:, kh:kh + oh, kw:kw + ow, :]          # (N, OH, OW, Cin)
            col2 = col.reshape(m, cin)                            # leading-dim merge only
            part = jnp.dot(col2, taps_ref[kh * k + kw],
                           preferred_element_type=jnp.float32)    # (M, Cout) on MXU
            acc = part if acc is None else acc + part
    acc = jnp.maximum(acc + b_ref[...], 0.0)                      # bias + ReLU
    return acc.reshape(n, oh, ow, cout)


def _maxpool2x2_block(y, hp_ref, po_ref):
    """MaxPool2d(kernel=2, stride=2, padding=0), floor semantics like PyTorch.

    y: (N, H, W, C) value; hp_ref: (N, H//2, W, C) scratch; po_ref: (N, H//2, W//2, C).
    Only contiguous slices + elementwise max (no strided / gather ops).
    """
    n, h, w, c = y.shape
    ph, pw = h // 2, w // 2
    for i in range(ph):                                           # pool along H
        hp_ref[:, i:i + 1, :, :] = jnp.maximum(y[:, 2 * i:2 * i + 1, :, :],
                                               y[:, 2 * i + 1:2 * i + 2, :, :])
    for j in range(pw):                                           # pool along W
        po_ref[:, :, j:j + 1, :] = jnp.maximum(hp_ref[:, :, 2 * j:2 * j + 1, :],
                                               hp_ref[:, :, 2 * j + 1:2 * j + 2, :])
    return po_ref[...]


def _flatten_linear_block(y, wl_ref, bl_ref):
    """Flatten + Linear.  wl_ref rows are pre-permuted at build time so the result
    equals PyTorch's NCHW Flatten followed by LazyLinear (no runtime transpose).

    y: (N, H, W, C) value; wl_ref: (H*W, C, classes); bl_ref: (1, classes).
    """
    n, h, w, c = y.shape
    acc = None
    for hh in range(h):
        for ww in range(w):
            part = jnp.dot(y[:, hh, ww, :], wl_ref[hh * w + ww],
                           preferred_element_type=jnp.float32)    # (N, classes)
            acc = part if acc is None else acc + part
    return acc + bl_ref[...]


def _fused_forward_kernel(plan, n_in_refs):
    """Builds the single fused kernel body from the per-layer plan."""
    def kernel(*refs):
        out_ref = refs[n_in_refs]
        scratch = refs[n_in_refs + 1:]
        y = refs[0][...]                                          # NHWC input value
        for kind, meta, pidx, sidx in plan:
            if kind == "conv":
                y = _conv_relu_block(y, scratch[sidx[0]],
                                     refs[pidx[0]], refs[pidx[1]], meta)
            elif kind == "maxpool":
                y = _maxpool2x2_block(y, scratch[sidx[0]], scratch[sidx[1]])
            else:  # flatten_linear
                y = _flatten_linear_block(y, refs[pidx[0]], refs[pidx[1]])
        out_ref[...] = y.astype(out_ref.dtype)
    return kernel


# ---------------- wrapper: builds + calls the single pallas_call --------------

def _full_spec(shape):
    nd = len(shape)
    return pl.BlockSpec(tuple(shape), lambda i, _nd=nd: (0,) * _nd)


def convsfig_forward(x_nchw, layers, params):
    """x_nchw: (N, C, H, W) like PyTorch.  One fused Pallas kernel for the net."""
    x = jnp.transpose(x_nchw, (0, 2, 3, 1)).astype(jnp.float32)   # tiny input-only op
    n = x.shape[0]

    flat_params = []
    in_specs = [_full_spec(x.shape)]
    scratch_shapes, plan = [], []
    pslot = 1
    out_shape = None
    for (kind, meta), p in zip(layers, params):
        if kind == "conv":
            taps, bias = p
            flat_params += [taps, bias]
            in_specs += [_full_spec(taps.shape), _full_spec(bias.shape)]
            scratch_shapes.append(pltpu.VMEM(
                (n, meta["ih"] + 2 * meta["p"], meta["iw"] + 2 * meta["p"],
                 meta["cin"]), jnp.float32))
            plan.append((kind, meta, (pslot, pslot + 1), (len(scratch_shapes) - 1,)))
            pslot += 2
            out_shape = (n, meta["oh"], meta["ow"], meta["cout"])
        elif kind == "maxpool":
            scratch_shapes.append(pltpu.VMEM((n, meta["oh"], meta["iw"], meta["c"]),
                                             jnp.float32))
            scratch_shapes.append(pltpu.VMEM((n, meta["oh"], meta["ow"], meta["c"]),
                                             jnp.float32))
            plan.append((kind, meta, (),
                         (len(scratch_shapes) - 2, len(scratch_shapes) - 1)))
            out_shape = (n, meta["oh"], meta["ow"], meta["c"])
        else:  # flatten_linear
            wl, bl = p
            flat_params += [wl, bl]
            in_specs += [_full_spec(wl.shape), _full_spec(bl.shape)]
            plan.append((kind, meta, (pslot, pslot + 1), ()))
            pslot += 2
            out_shape = (n, meta["classes"])
    # TODO(synk): configs not ending in an int (Linear) would additionally need an
    # NHWC->NCHW transpose of the final activation to match PyTorch's output layout.

    kernel = _fused_forward_kernel(plan, n_in_refs=pslot)
    return pl.pallas_call(
        kernel,
        out_shape=jax.ShapeDtypeStruct(out_shape, jnp.float32),
        grid=(1,),                                   # single step: no pipeline / TC-split overhead
        in_specs=in_specs,
        out_specs=_full_spec(out_shape),
        scratch_shapes=scratch_shapes,
        compiler_params=pltpu.CompilerParams(dimension_semantics=("arbitrary",)),
    )(x, *flat_params)


# ---------------- Convsfig: config parsing + params ---------------------------

def build_convsfig(configs, key, in_channels=3, in_hw=(16, 16)):
    """Deterministic synthetic init.  Weights are stored pre-transformed into the
    layouts the fused kernel consumes (one-time shuffle, per perf review):
      conv:   (Cout,Cin,KH,KW) -> taps (KH*KW, Cin, Cout), bias (1, Cout)
      linear: (classes, C*H*W) with PyTorch NCHW feature order
              -> (H*W, C, classes)  (folds the flatten transpose into the weight)
    """
    layers, params = [], []
    c, (h, w) = in_channels, in_hw
    for cfg in configs:
        if isinstance(cfg, list):
            cout, k, s, p = cfg
            assert s == 1, "fused kernel implements stride-1 convs (config uses s=1)"
            key, k1, k2 = jax.random.split(key, 3)
            w_pt = jax.random.normal(k1, (cout, c, k, k), jnp.float32) * 0.1
            b_pt = jax.random.normal(k2, (cout,), jnp.float32) * 0.1
            taps = jnp.transpose(w_pt, (2, 3, 1, 0)).reshape(k * k, c, cout)
            oh = (h + 2 * p - k) // s + 1
            ow = (w + 2 * p - k) // s + 1
            layers.append(("conv", dict(cin=c, cout=cout, k=k, p=p,
                                        ih=h, iw=w, oh=oh, ow=ow)))
            params.append((taps, b_pt.reshape(1, cout)))
            c, h, w = cout, oh, ow
        elif isinstance(cfg, tuple):
            assert cfg == (2, 2, 0), "only MaxPool2d(2,2,0) implemented"
            layers.append(("maxpool", dict(c=c, ih=h, iw=w, oh=h // 2, ow=w // 2)))
            params.append(None)
            h, w = h // 2, w // 2
        elif isinstance(cfg, int):
            feat = c * h * w                       # LazyLinear in_features resolved statically
            key, k1, k2 = jax.random.split(key, 3)
            w_pt = jax.random.normal(k1, (cfg, feat), jnp.float32) * 0.05
            b_pt = jax.random.normal(k2, (cfg,), jnp.float32) * 0.05
            wl = jnp.transpose(w_pt.reshape(cfg, c, h, w), (2, 3, 1, 0)).reshape(h * w, c, cfg)
            layers.append(("flatten_linear", dict(c=c, h=h, w=w, classes=cfg)))
            params.append((wl, b_pt.reshape(1, cfg)))
        elif isinstance(cfg, str):
            # TODO(synk): 'avg_pool' (AdaptiveAvgPool2d) branch not exercised by chosen config.
            raise NotImplementedError("'avg_pool' branch not implemented")
        else:
            raise ValueError(f"bad config entry: {cfg!r}")
    return layers, params


# ---------------- pure-JAX reference (correctness check only) -----------------

def convsfig_reference(x_nchw, layers, params):
    y = jnp.transpose(x_nchw, (0, 2, 3, 1)).astype(jnp.float32)
    for (kind, meta), p in zip(layers, params):
        if kind == "conv":
            taps, b = p
            k, pad = meta["k"], meta["p"]
            rhs = taps.reshape(k, k, meta["cin"], meta["cout"])   # HWIO
            y = jax.lax.conv_general_dilated(
                y, rhs, window_strides=(1, 1), padding=[(pad, pad), (pad, pad)],
                dimension_numbers=("NHWC", "HWIO", "NHWC"),
                precision=jax.lax.Precision.HIGHEST)
            y = jnp.maximum(y + b.reshape(1, 1, 1, -1), 0.0)
        elif kind == "maxpool":
            y = jax.lax.reduce_window(y, -jnp.inf, jax.lax.max,
                                      (1, 2, 2, 1), (1, 2, 2, 1), "VALID")
        else:
            wl, bl = p
            wl4 = wl.reshape(meta["h"], meta["w"], meta["c"], meta["classes"])
            y = jnp.einsum("nhwc,hwck->nk", y, wl4,
                           precision=jax.lax.Precision.HIGHEST) + bl
    return y


if __name__ == "__main__":
    configs = [[8, 3, 1, 1], (2, 2, 0), [16, 3, 1, 1], (2, 2, 0), 10]
    key = jax.random.PRNGKey(0)
    key, kx = jax.random.split(key)
    x = jax.random.normal(kx, (2, 3, 16, 16), jnp.float32)        # NCHW like PyTorch

    layers, params = build_convsfig(configs, key, in_channels=3, in_hw=(16, 16))

    fwd = jax.jit(lambda xx: convsfig_forward(xx, layers, params))
    out = jax.block_until_ready(fwd(x))
    assert out.shape == (2, 10), out.shape
    assert bool(jnp.all(jnp.isfinite(out)))

    ref = convsfig_reference(x, layers, params)
    assert jnp.allclose(out, ref, rtol=1e-3, atol=1e-3), \
        float(jnp.max(jnp.abs(out - ref)))

    print("KERNEL_OK")
</pallas_src>

<mosaic_0001>
module attributes {stable_mosaic.version = 11 : i64} {
  func.func @kernel(%arg0: i32, %arg1: memref<2x16x16x3xf32, #tpu.memory_space<vmem>>, %arg2: memref<9x3x8xf32, #tpu.memory_space<vmem>>, %arg3: memref<1x8xf32, #tpu.memory_space<vmem>>, %arg4: memref<9x8x16xf32, #tpu.memory_space<vmem>>, %arg5: memref<1x16xf32, #tpu.memory_space<vmem>>, %arg6: memref<16x16x10xf32, #tpu.memory_space<vmem>>, %arg7: memref<1x10xf32, #tpu.memory_space<vmem>>, %arg8: memref<2x10xf32, #tpu.memory_space<vmem>>, %arg9: memref<2x18x18x3xf32, #tpu.memory_space<vmem>>, %arg10: memref<2x8x16x8xf32, #tpu.memory_space<vmem>>, %arg11: memref<2x8x8x8xf32, #tpu.memory_space<vmem>>, %arg12: memref<2x10x10x8xf32, #tpu.memory_space<vmem>>, %arg13: memref<2x4x8x16xf32, #tpu.memory_space<vmem>>, %arg14: memref<2x4x4x16xf32, #tpu.memory_space<vmem>>) attributes {dimension_semantics = [#tpu.dimension_semantics<arbitrary>], iteration_bounds = array<i64: 1>, scalar_prefetch = 0 : i64, scratch_operands = 6 : i64, tpu.core_type = #tpu.core_type<tc>, window_params = [{pipeline_mode = #tpu.pipeline_mode<synchronous>, transform_indices = @transform_0, window_bounds = array<i64: 2, 16, 16, 3>}, {pipeline_mode = #tpu.pipeline_mode<synchronous>, transform_indices = @transform_1, window_bounds = array<i64: 9, 3, 8>}, {pipeline_mode = #tpu.pipeline_mode<synchronous>, transform_indices = @transform_2, window_bounds = array<i64: 1, 8>}, {pipeline_mode = #tpu.pipeline_mode<synchronous>, transform_indices = @transform_3, window_bounds = array<i64: 9, 8, 16>}, {pipeline_mode = #tpu.pipeline_mode<synchronous>, transform_indices = @transform_4, window_bounds = array<i64: 1, 16>}, {pipeline_mode = #tpu.pipeline_mode<synchronous>, transform_indices = @transform_5, window_bounds = array<i64: 16, 16, 10>}, {pipeline_mode = #tpu.pipeline_mode<synchronous>, transform_indices = @transform_6, window_bounds = array<i64: 1, 10>}, {pipeline_mode = #tpu.pipeline_mode<synchronous>, transform_indices = @transform_7, window_bounds = array<i64: 2, 10>}]} {
    %c0 = arith.constant 0 : index
    %c0_0 = arith.constant 0 : index
    %c0_1 = arith.constant 0 : index
    %c0_2 = arith.constant 0 : index
    %0 = vector.load %arg1[%c0, %c0_0, %c0_1, %c0_2] : memref<2x16x16x3xf32, #tpu.memory_space<vmem>>, vector<2x16x16x3xf32>
    %cst = arith.constant 0.000000e+00 : f32
    %1 = vector.broadcast %cst : f32 to vector<2x18x18x3xf32>
    %c0_3 = arith.constant 0 : index
    %c0_4 = arith.constant 0 : index
    %c0_5 = arith.constant 0 : index
    %c0_6 = arith.constant 0 : index
    %2 = vector.load %arg9[%c0_3, %c0_4, %c0_5, %c0_6] : memref<2x18x18x3xf32, #tpu.memory_space<vmem>>, vector<2x18x18x3xf32>
    tpu.vector_store %arg9[%c0_3, %c0_4, %c0_5, %c0_6], %1 {strides = array<i32>} : memref<2x18x18x3xf32, #tpu.memory_space<vmem>>, vector<2x18x18x3xf32>,
    %c0_7 = arith.constant 0 : index
    %c1 = arith.constant 1 : index
    %c1_8 = arith.constant 1 : index
    %c0_9 = arith.constant 0 : index
    %3 = vector.load %arg9[%c0_7, %c1, %c1_8, %c0_9] : memref<2x18x18x3xf32, #tpu.memory_space<vmem>>, vector<2x16x16x3xf32>
    tpu.vector_store %arg9[%c0_7, %c1, %c1_8, %c0_9], %0 {strides = array<i32>} : memref<2x18x18x3xf32, #tpu.memory_space<vmem>>, vector<2x16x16x3xf32>,
    %c0_10 = arith.constant 0 : index
    %c0_11 = arith.constant 0 : index
    %c0_12 = arith.constant 0 : index
    %c0_13 = arith.constant 0 : index
    %4 = vector.load %arg9[%c0_10, %c0_11, %c0_12, %c0_13] : memref<2x18x18x3xf32, #tpu.memory_space<vmem>>, vector<2x16x16x3xf32>
    %5 = vector.shape_cast %4 : vector<2x16x16x3xf32> to vector<512x3xf32>
    %c0_14 = arith.constant 0 : index
    %c0_15 = arith.constant 0 : index
    %c0_16 = arith.constant 0 : index
    %6 = vector.load %arg2[%c0_14, %c0_15, %c0_16] : memref<9x3x8xf32, #tpu.memory_space<vmem>>, vector<1x3x8xf32>
    %7 = vector.shape_cast %6 : vector<1x3x8xf32> to vector<3x8xf32>
    %cst_17 = arith.constant dense<0.000000e+00> : vector<512x8xf32>
    %8 = tpu.matmul %5, %7, %cst_17 {dimension_numbers = #tpu.dot_dimension_numbers<[1], [0], [0], [1], [0, 0, 1, 1], [], []>} : vector<512x3xf32>, vector<3x8xf32>, vector<512x8xf32> -> vector<512x8xf32>
    %c0_18 = arith.constant 0 : index
    %c0_19 = arith.constant 0 : index
    %c1_20 = arith.constant 1 : index
    %c0_21 = arith.constant 0 : index
    %9 = vector.load %arg9[%c0_18, %c0_19, %c1_20, %c0_21] : memref<2x18x18x3xf32, #tpu.memory_space<vmem>>, vector<2x16x16x3xf32>
    %10 = vector.shape_cast %9 : vector<2x16x16x3xf32> to vector<512x3xf32>
    %c1_22 = arith.constant 1 : index
    %c0_23 = arith.constant 0 : index
    %c0_24 = arith.constant 0 : index
    %11 = vector.load %arg2[%c1_22, %c0_23, %c0_24] : memref<9x3x8xf32, #tpu.memory_space<vmem>>, vector<1x3x8xf32>
    %12 = vector.shape_cast %11 : vector<1x3x8xf32> to vector<3x8xf32>
    %cst_25 = arith.constant dense<0.000000e+00> : vector<512x8xf32>
    %13 = tpu.matmul %10, %12, %cst_25 {dimension_numbers = #tpu.dot_dimension_numbers<[1], [0], [0], [1], [0, 0, 1, 1], [], []>} : vector<512x3xf32>, vector<3x8xf32>, vector<512x8xf32> -> vector<512x8xf32>
    %14 = arith.addf %8, %13 : vector<512x8xf32>
    %c0_26 = arith.constant 0 : index
    %c0_27 = arith.constant 0 : index
    %c2 = arith.constant 2 : index
    %c0_28 = arith.constant 0 : index
    %15 = vector.load %arg9[%c0_26, %c0_27, %c2, %c0_28] : memref<2x18x18x3xf32, #tpu.memory_space<vmem>>, vector<2x16x16x3xf32>
    %16 = vector.shape_cast %15 : vector<2x16x16x3xf32> to vector<512x3xf32>
    %c2_29 = arith.constant 2 : index
    %c0_30 = arith.constant 0 : index
    %c0_31 = arith.constant 0 : index
    %17 = vector.load %arg2[%c2_29, %c0_30, %c0_31] : memref<9x3x8xf32, #tpu.memory_space<vmem>>, vector<1x3x8xf32>
    %18 = vector.shape_cast %17 : vector<1x3x8xf32> to vector<3x8xf32>
    %cst_32 = arith.constant dense<0.000000e+00> : vector<512x8xf32>
    %19 = tpu.matmul %16, %18, %cst_32 {dimension_numbers = #tpu.dot_dimension_numbers<[1], [0], [0], [1], [0, 0, 1, 1], [], []>} : vector<512x3xf32>, vector<3x8xf32>, vector<512x8xf32> -> vector<512x8xf32>
    %20 = arith.addf %14, %19 : vector<512x8xf32>
    %c0_33 = arith.constant 0 : index
    %c1_34 = arith.constant 1 : index
    %c0_35 = arith.constant 0 : index
    %c0_36 = arith.constant 0 : index
    %21 = vector.load %arg9[%c0_33, %c1_34, %c0_35, %c0_36] : memref<2x18x18x3xf32, #tpu.memory_space<vmem>>, vector<2x16x16x3xf32>
    %22 = vector.shape_cast %21 : vector<2x16x16x3xf32> to vector<512x3xf32>
    %c3 = arith.constant 3 : index
    %c0_37 = arith.constant 0 : index
    %c0_38 = arith.constant 0 : index
    %23 = vector.load %arg2[%c3, %c0_37, %c0_38] : memref<9x3x8xf32, #tpu.memory_space<vmem>>, vector<1x3x8xf32>
    %24 = vector.shape_cast %23 : vector<1x3x8xf32> to vector<3x8xf32>
    %cst_39 = arith.constant dense<0.000000e+00> : vector<512x8xf32>
    %25 = tpu.matmul %22, %24, %cst_39 {dimension_numbers = #tpu.dot_dimension_numbers<[1], [0], [0], [1], [0, 0, 1, 1], [], []>} : vector<512x3xf32>, vector<3x8xf32>, vector<512x8xf32> -> vector<512x8xf32>
    %26 = arith.addf %20, %25 : vector<512x8xf32>
    %c0_40 = arith.constant 0 : index
    %c1_41 = arith.constant 1 : index
    %c1_42 = arith.constant 1 : index
    %c0_43 = arith.constant 0 : index
    %27 = vector.load %arg9[%c0_40, %c1_41, %c1_42, %c0_43] : memref<2x18x18x3xf32, #tpu.memory_space<vmem>>, vector<2x16x16x3xf32>
    %28 = vector.shape_cast %27 : vector<2x16x16x3xf32> to vector<512x3xf32>
    %c4 = arith.constant 4 : index
    %c0_44 = arith.constant 0 : index
    %c0_45 = arith.constant 0 : index
    %29 = vector.load %arg2[%c4, %c0_44, %c0_45] : memref<9x3x8xf32, #tpu.memory_space<vmem>>, vector<1x3x8xf32>
    %30 = vector.shape_cast %29 : vector<1x3x8xf32> to vector<3x8xf32>
    %cst_46 = arith.constant dense<0.000000e+00> : vector<512x8xf32>
    %31 = tpu.matmul %28, %30, %cst_46 {dimension_numbers = #tpu.dot_dimension_numbers<[1], [0], [0], [1], [0, 0, 1, 1], [], []>} : vector<512x3xf32>, vector<3x8xf32>, vector<512x8xf32> -> vector<512x8xf32>
    %32 = arith.addf %26, %31 : vector<512x8xf32>
    %c0_47 = arith.constant 0 : index
    %c1_48 = arith.constant 1 : index
    %c2_49 = arith.constant 2 : index
    %c0_50 = arith.constant 0 : index
    %33 = vector.load %arg9[%c0_47, %c1_48, %c2_49, %c0_50] : memref<2x18x18x3xf32, #tpu.memory_space<vmem>>, vector<2x16x16x3xf32>
    %34 = vector.shape_cast %33 : vector<2x16x16x3xf32> to vector<512x3xf32>
    %c5 = arith.constant 5 : index
    %c0_51 = arith.constant 0 : index
    %c0_52 = arith.constant 0 : index
    %35 = vector.load %arg2[%c5, %c0_51, %c0_52] : memref<9x3x8xf32, #tpu.memory_space<vmem>>, vector<1x3x8xf32>
    %36 = vector.shape_cast %35 : vector<1x3x8xf32> to vector<3x8xf32>
    %cst_53 = arith.constant dense<0.000000e+00> : vector<512x8xf32>
    %37 = tpu.matmul %34, %36, %cst_53 {dimension_numbers = #tpu.dot_dimension_numbers<[1], [0], [0], [1], [0, 0, 1, 1], [], []>} : vector<512x3xf32>, vector<3x8xf32>, vector<512x8xf32> -> vector<512x8xf32>
    %38 = arith.addf %32, %37 : vector<512x8xf32>
    %c0_54 = arith.constant 0 : index
    %c2_55 = arith.constant 2 : index
    %c0_56 = arith.constant 0 : index
    %c0_57 = arith.constant 0 : index
    %39 = vector.load %arg9[%c0_54, %c2_55, %c0_56, %c0_57] : memref<2x18x18x3xf32, #tpu.memory_space<vmem>>, vector<2x16x16x3xf32>
    %40 = vector.shape_cast %39 : vector<2x16x16x3xf32> to vector<512x3xf32>
    %c6 = arith.constant 6 : index
    %c0_58 = arith.constant 0 : index
    %c0_59 = arith.constant 0 : index
    %41 = vector.load %arg2[%c6, %c0_58, %c0_59] : memref<9x3x8xf32, #tpu.memory_space<vmem>>, vector<1x3x8xf32>
    %42 = vector.shape_cast %41 : vector<1x3x8xf32> to vector<3x8xf32>
    %cst_60 = arith.constant dense<0.000000e+00> : vector<512x8xf32>
    %43 = tpu.matmul %40, %42, %cst_60 {dimension_numbers = #tpu.dot_dimension_numbers<[1], [0], [0], [1], [0, 0, 1, 1], [], []>} : vector<512x3xf32>, vector<3x8xf32>, vector<512x8xf32> -> vector<512x8xf32>
    %44 = arith.addf %38, %43 : vector<512x8xf32>
    %c0_61 = arith.constant 0 : index
    %c2_62 = arith.constant 2 : index
    %c1_63 = arith.constant 1 : index
    %c0_64 = arith.constant 0 : index
    %45 = vector.load %arg9[%c0_61, %c2_62, %c1_63, %c0_64] : memref<2x18x18x3xf32, #tpu.memory_space<vmem>>, vector<2x16x16x3xf32>
    %46 = vector.shape_cast %45 : vector<2x16x16x3xf32> to vector<512x3xf32>
    %c7 = arith.constant 7 : index
    %c0_65 = arith.constant 0 : index
    %c0_66 = arith.constant 0 : index
    %47 = vector.load %arg2[%c7, %c0_65, %c0_66] : memref<9x3x8xf32, #tpu.memory_space<vmem>>, vector<1x3x8xf32>
    %48 = vector.shape_cast %47 : vector<1x3x8xf32> to vector<3x8xf32>
    %cst_67 = arith.constant dense<0.000000e+00> : vector<512x8xf32>
    %49 = tpu.matmul %46, %48, %cst_67 {dimension_numbers = #tpu.dot_dimension_numbers<[1], [0], [0], [1], [0, 0, 1, 1], [], []>} : vector<512x3xf32>, vector<3x8xf32>, vector<512x8xf32> -> vector<512x8xf32>
    %50 = arith.addf %44, %49 : vector<512x8xf32>
    %c0_68 = arith.constant 0 : index
    %c2_69 = arith.constant 2 : index
    %c2_70 = arith.constant 2 : index
    %c0_71 = arith.constant 0 : index
    %51 = vector.load %arg9[%c0_68, %c2_69, %c2_70, %c0_71] : memref<2x18x18x3xf32, #tpu.memory_space<vmem>>, vector<2x16x16x3xf32>
    %52 = vector.shape_cast %51 : vector<2x16x16x3xf32> to vector<512x3xf32>
    %c8 = arith.constant 8 : index
    %c0_72 = arith.constant 0 : index
    %c0_73 = arith.constant 0 : index
    %53 = vector.load %arg2[%c8, %c0_72, %c0_73] : memref<9x3x8xf32, #tpu.memory_space<vmem>>, vector<1x3x8xf32>
    %54 = vector.shape_cast %53 : vector<1x3x8xf32> to vector<3x8xf32>
    %cst_74 = arith.constant dense<0.000000e+00> : vector<512x8xf32>
    %55 = tpu.matmul %52, %54, %cst_74 {dimension_numbers = #tpu.dot_dimension_numbers<[1], [0], [0], [1], [0, 0, 1, 1], [], []>} : vector<512x3xf32>, vector<3x8xf32>, vector<512x8xf32> -> vector<512x8xf32>
    %56 = arith.addf %50, %55 : vector<512x8xf32>
    %c0_75 = arith.constant 0 : index
    %c0_76 = arith.constant 0 : index
    %57 = vector.load %arg3[%c0_75, %c0_76] : memref<1x8xf32, #tpu.memory_space<vmem>>, vector<1x8xf32>
    %58 = vector.broadcast %57 : vector<1x8xf32> to vector<512x8xf32>
    %59 = arith.addf %56, %58 : vector<512x8xf32>
    %cst_77 = arith.constant 0.000000e+00 : f32
    %60 = vector.broadcast %cst_77 : f32 to vector<512x8xf32>
    %61 = arith.maximumf %59, %60 : vector<512x8xf32>
    %62 = vector.shape_cast %61 : vector<512x8xf32> to vector<2x16x16x8xf32>
    %63 = vector.extract_strided_slice %62 {offsets = [0, 0, 0, 0], sizes = [2, 1, 16, 8], strides = [1, 1, 1, 1]} : vector<2x16x16x8xf32> to vector<2x1x16x8xf32>
    %64 = vector.extract_strided_slice %62 {offsets = [0, 1, 0, 0], sizes = [2, 1, 16, 8], strides = [1, 1, 1, 1]} : vector<2x16x16x8xf32> to vector<2x1x16x8xf32>
    %65 = arith.maximumf %63, %64 : vector<2x1x16x8xf32>
    %c0_78 = arith.constant 0 : index
    %c0_79 = arith.constant 0 : index
    %c0_80 = arith.constant 0 : index
    %c0_81 = arith.constant 0 : index
    %66 = vector.load %arg10[%c0_78, %c0_79, %c0_80, %c0_81] : memref<2x8x16x8xf32, #tpu.memory_space<vmem>>, vector<2x1x16x8xf32>
    tpu.vector_store %arg10[%c0_78, %c0_79, %c0_80, %c0_81], %65 {strides = array<i32>} : memref<2x8x16x8xf32, #tpu.memory_space<vmem>>, vector<2x1x16x8xf32>,
    %67 = vector.extract_strided_slice %62 {offsets = [0, 2, 0, 0], sizes = [2, 1, 16, 8], strides = [1, 1, 1, 1]} : vector<2x16x16x8xf32> to vector<2x1x16x8xf32>
    %68 = vector.extract_strided_slice %62 {offsets = [0, 3, 0, 0], sizes = [2, 1, 16, 8], strides = [1, 1, 1, 1]} : vector<2x16x16x8xf32> to vector<2x1x16x8xf32>
    %69 = arith.maximumf %67, %68 : vector<2x1x16x8xf32>
    %c0_82 = arith.constant 0 : index
    %c1_83 = arith.constant 1 : index
    %c0_84 = arith.constant 0 : index
    %c0_85 = arith.constant 0 : index
    %70 = vector.load %arg10[%c0_82, %c1_83, %c0_84, %c0_85] : memref<2x8x16x8xf32, #tpu.memory_space<vmem>>, vector<2x1x16x8xf32>
    tpu.vector_store %arg10[%c0_82, %c1_83, %c0_84, %c0_85], %69 {strides = array<i32>} : memref<2x8x16x8xf32, #tpu.memory_space<vmem>>, vector<2x1x16x8xf32>,
    %71 = vector.extract_strided_slice %62 {offsets = [0, 4, 0, 0], sizes = [2, 1, 16, 8], strides = [1, 1, 1, 1]} : vector<2x16x16x8xf32> to vector<2x1x16x8xf32>
    %72 = vector.extract_strided_slice %62 {offsets = [0, 5, 0, 0], sizes = [2, 1, 16, 8], strides = [1, 1, 1, 1]} : vector<2x16x16x8xf32> to vector<2x1x16x8xf32>
    %73 = arith.maximumf %71, %72 : vector<2x1x16x8xf32>
    %c0_86 = arith.constant 0 : index
    %c2_87 = arith.constant 2 : index
    %c0_88 = arith.constant 0 : index
    %c0_89 = arith.constant 0 : index
    %74 = vector.load %arg10[%c0_86, %c2_87, %c0_88, %c0_89] : memref<2x8x16x8xf32, #tpu.memory_space<vmem>>, vector<2x1x16x8xf32>
    tpu.vector_store %arg10[%c0_86, %c2_87, %c0_88, %c0_89], %73 {strides = array<i32>} : memref<2x8x16x8xf32, #tpu.memory_space<vmem>>, vector<2x1x16x8xf32>,
    %75 = vector.extract_strided_slice %62 {offsets = [0, 6, 0, 0], sizes = [2, 1, 16, 8], strides = [1, 1, 1, 1]} : vector<2x16x16x8xf32> to vector<2x1x16x8xf32>
    %76 = vector.extract_strided_slice %62 {offsets = [0, 7, 0, 0], sizes = [2, 1, 16, 8], strides = [1, 1, 1, 1]} : vector<2x16x16x8xf32> to vector<2x1x16x8xf32>
    %77 = arith.maximumf %75, %76 : vector<2x1x16x8xf32>
    %c0_90 = arith.constant 0 : index
    %c3_91 = arith.constant 3 : index
    %c0_92 = arith.constant 0 : index
    %c0_93 = arith.constant 0 : index
    %78 = vector.load %arg10[%c0_90, %c3_91, %c0_92, %c0_93] : memref<2x8x16x8xf32, #tpu.memory_space<vmem>>, vector<2x1x16x8xf32>
    tpu.vector_store %arg10[%c0_90, %c3_91, %c0_92, %c0_93], %77 {strides = array<i32>} : memref<2x8x16x8xf32, #tpu.memory_space<vmem>>, vector<2x1x16x8xf32>,
    %79 = vector.extract_strided_slice %62 {offsets = [0, 8, 0, 0], sizes = [2, 1, 16, 8], strides = [1, 1, 1, 1]} : vector<2x16x16x8xf32> to vector<2x1x16x8xf32>
    %80 = vector.extract_strided_slice %62 {offsets = [0, 9, 0, 0], sizes = [2, 1, 16, 8], strides = [1, 1, 1, 1]} : vector<2x16x16x8xf32> to vector<2x1x16x8xf32>
    %81 = arith.maximumf %79, %80 : vector<2x1x16x8xf32>
    %c0_94 = arith.constant 0 : index
    %c4_95 = arith.constant 4 : index
    %c0_96 = arith.constant 0 : index
    %c0_97 = arith.constant 0 : index
    %82 = vector.load %arg10[%c0_94, %c4_95, %c0_96, %c0_97] : memref<2x8x16x8xf32, #tpu.memory_space<vmem>>, vector<2x1x16x8xf32>
    tpu.vector_store %arg10[%c0_94, %c4_95, %c0_96, %c0_97], %81 {strides = array<i32>} : memref<2x8x16x8xf32, #tpu.memory_space<vmem>>, vector<2x1x16x8xf32>,
    %83 = vector.extract_strided_slice %62 {offsets = [0, 10, 0, 0], sizes = [2, 1, 16, 8], strides = [1, 1, 1, 1]} : vector<2x16x16x8xf32> to vector<2x1x16x8xf32>
    %84 = vector.extract_strided_slice %62 {offsets = [0, 11, 0, 0], sizes = [2, 1, 16, 8], strides = [1, 1, 1, 1]} : vector<2x16x16x8xf32> to vector<2x1x16x8xf32>
    %85 = arith.maximumf %83, %84 : vector<2x1x16x8xf32>
    %c0_98 = arith.constant 0 : index
    %c5_99 = arith.constant 5 : index
    %c0_100 = arith.constant 0 : index
    %c0_101 = arith.constant 0 : index
    %86 = vector.load %arg10[%c0_98, %c5_99, %c0_100, %c0_101] : memref<2x8x16x8xf32, #tpu.memory_space<vmem>>, vector<2x1x16x8xf32>
    tpu.vector_store %arg10[%c0_98, %c5_99, %c0_100, %c0_101], %85 {strides = array<i32>} : memref<2x8x16x8xf32, #tpu.memory_space<vmem>>, vector<2x1x16x8xf32>,
    %87 = vector.extract_strided_slice %62 {offsets = [0, 12, 0, 0], sizes = [2, 1, 16, 8], strides = [1, 1, 1, 1]} : vector<2x16x16x8xf32> to vector<2x1x16x8xf32>
    %88 = vector.extract_strided_slice %62 {offsets = [0, 13, 0, 0], sizes = [2, 1, 16, 8], strides = [1, 1, 1, 1]} : vector<2x16x16x8xf32> to vector<2x1x16x8xf32>
    %89 = arith.maximumf %87, %88 : vector<2x1x16x8xf32>
    %c0_102 = arith.constant 0 : index
    %c6_103 = arith.constant 6 : index
    %c0_104 = arith.constant 0 : index
    %c0_105 = arith.constant 0 : index
    %90 = vector.load %arg10[%c0_102, %c6_103, %c0_104, %c0_105] : memref<2x8x16x8xf32, #tpu.memory_space<vmem>>, vector<2x1x16x8xf32>
    tpu.vector_store %arg10[%c0_102, %c6_103, %c0_104, %c0_105], %89 {strides = array<i32>} : memref<2x8x16x8xf32, #tpu.memory_space<vmem>>, vector<2x1x16x8xf32>,
    %91 = vector.extract_strided_slice %62 {offsets = [0, 14, 0, 0], sizes = [2, 1, 16, 8], strides = [1, 1, 1, 1]} : vector<2x16x16x8xf32> to vector<2x1x16x8xf32>
    %92 = vector.extract_strided_slice %62 {offsets = [0, 15, 0, 0], sizes = [2, 1, 16, 8], strides = [1, 1, 1, 1]} : vector<2x16x16x8xf32> to vector<2x1x16x8xf32>
    %93 = arith.maximumf %91, %92 : vector<2x1x16x8xf32>
    %c0_106 = arith.constant 0 : index
    %c7_107 = arith.constant 7 : index
    %c0_108 = arith.constant 0 : index
    %c0_109 = arith.constant 0 : index
    %94 = vector.load %arg10[%c0_106, %c7_107, %c0_108, %c0_109] : memref<2x8x16x8xf32, #tpu.memory_space<vmem>>, vector<2x1x16x8xf32>
    tpu.vector_store %arg10[%c0_106, %c7_107, %c0_108, %c0_109], %93 {strides = array<i32>} : memref<2x8x16x8xf32, #tpu.memory_space<vmem>>, vector<2x1x16x8xf32>,
    %c0_110 = arith.constant 0 : index
    %c0_111 = arith.constant 0 : index
    %c0_112 = arith.constant 0 : index
    %c0_113 = arith.constant 0 : index
    %95 = vector.load %arg10[%c0_110, %c0_111, %c0_112, %c0_113] : memref<2x8x16x8xf32, #tpu.memory_space<vmem>>, vector<2x8x1x8xf32>
    %c0_114 = arith.constant 0 : index
    %c0_115 = arith.constant 0 : index
    %c1_116 = arith.constant 1 : index
    %c0_117 = arith.constant 0 : index
    %96 = vector.load %arg10[%c0_114, %c0_115, %c1_116, %c0_117] : memref<2x8x16x8xf32, #tpu.memory_space<vmem>>, vector<2x8x1x8xf32>
    %97 = arith.maximumf %95, %96 : vector<2x8x1x8xf32>
    %c0_118 = arith.constant 0 : index
    %c0_119 = arith.constant 0 : index
    %c0_120 = arith.constant 0 : index
    %c0_121 = arith.constant 0 : index
    %98 = vector.load %arg11[%c0_118, %c0_119, %c0_120, %c0_121] : memref<2x8x8x8xf32, #tpu.memory_space<vmem>>, vector<2x8x1x8xf32>
    tpu.vector_store %arg11[%c0_118, %c0_119, %c0_120, %c0_121], %97 {strides = array<i32>} : memref<2x8x8x8xf32, #tpu.memory_space<vmem>>, vector<2x8x1x8xf32>,
    %c0_122 = arith.constant 0 : index
    %c0_123 = arith.constant 0 : index
    %c2_124 = arith.constant 2 : index
    %c0_125 = arith.constant 0 : index
    %99 = vector.load %arg10[%c0_122, %c0_123, %c2_124, %c0_125] : memref<2x8x16x8xf32, #tpu.memory_space<vmem>>, vector<2x8x1x8xf32>
    %c0_126 = arith.constant 0 : index
    %c0_127 = arith.constant 0 : index
    %c3_128 = arith.constant 3 : index
    %c0_129 = arith.constant 0 : index
    %100 = vector.load %arg10[%c0_126, %c0_127, %c3_128, %c0_129] : memref<2x8x16x8xf32, #tpu.memory_space<vmem>>, vector<2x8x1x8xf32>
    %101 = arith.maximumf %99, %100 : vector<2x8x1x8xf32>
    %c0_130 = arith.constant 0 : index
    %c0_131 = arith.constant 0 : index
    %c1_132 = arith.constant 1 : index
    %c0_133 = arith.constant 0 : index
    %102 = vector.load %arg11[%c0_130, %c0_131, %c1_132, %c0_133] : memref<2x8x8x8xf32, #tpu.memory_space<vmem>>, vector<2x8x1x8xf32>
    tpu.vector_store %arg11[%c0_130, %c0_131, %c1_132, %c0_133], %101 {strides = array<i32>} : memref<2x8x8x8xf32, #tpu.memory_space<vmem>>, vector<2x8x1x8xf32>,
    %c0_134 = arith.constant 0 : index
    %c0_135 = arith.constant 0 : index
    %c4_136 = arith.constant 4 : index
    %c0_137 = arith.constant 0 : index
    %103 = vector.load %arg10[%c0_134, %c0_135, %c4_136, %c0_137] : memref<2x8x16x8xf32, #tpu.memory_space<vmem>>, vector<2x8x1x8xf32>
    %c0_138 = arith.constant 0 : index
    %c0_139 = arith.constant 0 : index
    %c5_140 = arith.constant 5 : index
    %c0_141 = arith.constant 0 : index
    %104 = vector.load %arg10[%c0_138, %c0_139, %c5_140, %c0_141] : memref<2x8x16x8xf32, #tpu.memory_space<vmem>>, vector<2x8x1x8xf32>
    %105 = arith.maximumf %103, %104 : vector<2x8x1x8xf32>
    %c0_142 = arith.constant 0 : index
    %c0_143 = arith.constant 0 : index
    %c2_144 = arith.constant 2 : index
    %c0_145 = arith.constant 0 : index
    %106 = vector.load %arg11[%c0_142, %c0_143, %c2_144, %c0_145] : memref<2x8x8x8xf32, #tpu.memory_space<vmem>>, vector<2x8x1x8xf32>
    tpu.vector_store %arg11[%c0_142, %c0_143, %c2_144, %c0_145], %105 {strides = array<i32>} : memref<2x8x8x8xf32, #tpu.memory_space<vmem>>, vector<2x8x1x8xf32>,
    %c0_146 = arith.constant 0 : index
    %c0_147 = arith.constant 0 : index
    %c6_148 = arith.constant 6 : index
    %c0_149 = arith.constant 0 : index
    %107 = vector.load %arg10[%c0_146, %c0_147, %c6_148, %c0_149] : memref<2x8x16x8xf32, #tpu.memory_space<vmem>>, vector<2x8x1x8xf32>
    %c0_150 = arith.constant 0 : index
    %c0_151 = arith.constant 0 : index
    %c7_152 = arith.constant 7 : index
    %c0_153 = arith.constant 0 : index
    %108 = vector.load %arg10[%c0_150, %c0_151, %c7_152, %c0_153] : memref<2x8x16x8xf32, #tpu.memory_space<vmem>>, vector<2x8x1x8xf32>
    %109 = arith.maximumf %107, %108 : vector<2x8x1x8xf32>
    %c0_154 = arith.constant 0 : index
    %c0_155 = arith.constant 0 : index
    %c3_156 = arith.constant 3 : index
    %c0_157 = arith.constant 0 : index
    %110 = vector.load %arg11[%c0_154, %c0_155, %c3_156, %c0_157] : memref<2x8x8x8xf32, #tpu.memory_space<vmem>>, vector<2x8x1x8xf32>
    tpu.vector_store %arg11[%c0_154, %c0_155, %c3_156, %c0_157], %109 {strides = array<i32>} : memref<2x8x8x8xf32, #tpu.memory_space<vmem>>, vector<2x8x1x8xf32>,
    %c0_158 = arith.constant 0 : index
    %c0_159 = arith.constant 0 : index
    %c8_160 = arith.constant 8 : index
    %c0_161 = arith.constant 0 : index
    %111 = vector.load %arg10[%c0_158, %c0_159, %c8_160, %c0_161] : memref<2x8x16x8xf32, #tpu.memory_space<vmem>>, vector<2x8x1x8xf32>
    %c0_162 = arith.constant 0 : index
    %c0_163 = arith.constant 0 : index
    %c9 = arith.constant 9 : index
    %c0_164 = arith.constant 0 : index
    %112 = vector.load %arg10[%c0_162, %c0_163, %c9, %c0_164] : memref<2x8x16x8xf32, #tpu.memory_space<vmem>>, vector<2x8x1x8xf32>
    %113 = arith.maximumf %111, %112 : vector<2x8x1x8xf32>
    %c0_165 = arith.constant 0 : index
    %c0_166 = arith.constant 0 : index
    %c4_167 = arith.constant 4 : index
    %c0_168 = arith.constant 0 : index
    %114 = vector.load %arg11[%c0_165, %c0_166, %c4_167, %c0_168] : memref<2x8x8x8xf32, #tpu.memory_space<vmem>>, vector<2x8x1x8xf32>
    tpu.vector_store %arg11[%c0_165, %c0_166, %c4_167, %c0_168], %113 {strides = array<i32>} : memref<2x8x8x8xf32, #tpu.memory_space<vmem>>, vector<2x8x1x8xf32>,
    %c0_169 = arith.constant 0 : index
    %c0_170 = arith.constant 0 : index
    %c10 = arith.constant 10 : index
    %c0_171 = arith.constant 0 : index
    %115 = vector.load %arg10[%c0_169, %c0_170, %c10, %c0_171] : memref<2x8x16x8xf32, #tpu.memory_space<vmem>>, vector<2x8x1x8xf32>
    %c0_172 = arith.constant 0 : index
    %c0_173 = arith.constant 0 : index
    %c11 = arith.constant 11 : index
    %c0_174 = arith.constant 0 : index
    %116 = vector.load %arg10[%c0_172, %c0_173, %c11, %c0_174] : memref<2x8x16x8xf32, #tpu.memory_space<vmem>>, vector<2x8x1x8xf32>
    %117 = arith.maximumf %115, %116 : vector<2x8x1x8xf32>
    %c0_175 = arith.constant 0 : index
    %c0_176 = arith.constant 0 : index
    %c5_177 = arith.constant 5 : index
    %c0_178 = arith.constant 0 : index
    %118 = vector.load %arg11[%c0_175, %c0_176, %c5_177, %c0_178] : memref<2x8x8x8xf32, #tpu.memory_space<vmem>>, vector<2x8x1x8xf32>
    tpu.vector_store %arg11[%c0_175, %c0_176, %c5_177, %c0_178], %117 {strides = array<i32>} : memref<2x8x8x8xf32, #tpu.memory_space<vmem>>, vector<2x8x1x8xf32>,
    %c0_179 = arith.constant 0 : index
    %c0_180 = arith.constant 0 : index
    %c12 = arith.constant 12 : index
    %c0_181 = arith.constant 0 : index
    %119 = vector.load %arg10[%c0_179, %c0_180, %c12, %c0_181] : memref<2x8x16x8xf32, #tpu.memory_space<vmem>>, vector<2x8x1x8xf32>
    %c0_182 = arith.constant 0 : index
    %c0_183 = arith.constant 0 : index
    %c13 = arith.constant 13 : index
    %c0_184 = arith.constant 0 : index
    %120 = vector.load %arg10[%c0_182, %c0_183, %c13, %c0_184] : memref<2x8x16x8xf32, #tpu.memory_space<vmem>>, vector<2x8x1x8xf32>
    %121 = arith.maximumf %119, %120 : vector<2x8x1x8xf32>
    %c0_185 = arith.constant 0 : index
    %c0_186 = arith.constant 0 : index
    %c6_187 = arith.constant 6 : index
    %c0_188 = arith.constant 0 : index
    %122 = vector.load %arg11[%c0_185, %c0_186, %c6_187, %c0_188] : memref<2x8x8x8xf32, #tpu.memory_space<vmem>>, vector<2x8x1x8xf32>
    tpu.vector_store %arg11[%c0_185, %c0_186, %c6_187, %c0_188], %121 {strides = array<i32>} : memref<2x8x8x8xf32, #tpu.memory_space<vmem>>, vector<2x8x1x8xf32>,
    %c0_189 = arith.constant 0 : index
    %c0_190 = arith.constant 0 : index
    %c14 = arith.constant 14 : index
    %c0_191 = arith.constant 0 : index
    %123 = vector.load %arg10[%c0_189, %c0_190, %c14, %c0_191] : memref<2x8x16x8xf32, #tpu.memory_space<vmem>>, vector<2x8x1x8xf32>
    %c0_192 = arith.constant 0 : index
    %c0_193 = arith.constant 0 : index
    %c15 = arith.constant 15 : index
    %c0_194 = arith.constant 0 : index
    %124 = vector.load %arg10[%c0_192, %c0_193, %c15, %c0_194] : memref<2x8x16x8xf32, #tpu.memory_space<vmem>>, vector<2x8x1x8xf32>
    %125 = arith.maximumf %123, %124 : vector<2x8x1x8xf32>
    %c0_195 = arith.constant 0 : index
    %c0_196 = arith.constant 0 : index
    %c7_197 = arith.constant 7 : index
    %c0_198 = arith.constant 0 : index
    %126 = vector.load %arg11[%c0_195, %c0_196, %c7_197, %c0_198] : memref<2x8x8x8xf32, #tpu.memory_space<vmem>>, vector<2x8x1x8xf32>
    tpu.vector_store %arg11[%c0_195, %c0_196, %c7_197, %c0_198], %125 {strides = array<i32>} : memref<2x8x8x8xf32, #tpu.memory_space<vmem>>, vector<2x8x1x8xf32>,
    %c0_199 = arith.constant 0 : index
    %c0_200 = arith.constant 0 : index
    %c0_201 = arith.constant 0 : index
    %c0_202 = arith.constant 0 : index
    %127 = vector.load %arg11[%c0_199, %c0_200, %c0_201, %c0_202] : memref<2x8x8x8xf32, #tpu.memory_space<vmem>>, vector<2x8x8x8xf32>
    %cst_203 = arith.constant 0.000000e+00 : f32
    %128 = vector.broadcast %cst_203 : f32 to vector<2x10x10x8xf32>
    %c0_204 = arith.constant 0 : index
    %c0_205 = arith.constant 0 : index
    %c0_206 = arith.constant 0 : index
    %c0_207 = arith.constant 0 : index
    %129 = vector.load %arg12[%c0_204, %c0_205, %c0_206, %c0_207] : memref<2x10x10x8xf32, #tpu.memory_space<vmem>>, vector<2x10x10x8xf32>
    tpu.vector_store %arg12[%c0_204, %c0_205, %c0_206, %c0_207], %128 {strides = array<i32>} : memref<2x10x10x8xf32, #tpu.memory_space<vmem>>, vector<2x10x10x8xf32>,
    %c0_208 = arith.constant 0 : index
    %c1_209 = arith.constant 1 : index
    %c1_210 = arith.constant 1 : index
    %c0_211 = arith.constant 0 : index
    %130 = vector.load %arg12[%c0_208, %c1_209, %c1_210, %c0_211] : memref<2x10x10x8xf32, #tpu.memory_space<vmem>>, vector<2x8x8x8xf32>
    tpu.vector_store %arg12[%c0_208, %c1_209, %c1_210, %c0_211], %127 {strides = array<i32>} : memref<2x10x10x8xf32, #tpu.memory_space<vmem>>, vector<2x8x8x8xf32>,
    %c0_212 = arith.constant 0 : index
    %c0_213 = arith.constant 0 : index
    %c0_214 = arith.constant 0 : index
    %c0_215 = arith.constant 0 : index
    %131 = vector.load %arg12[%c0_212, %c0_213, %c0_214, %c0_215] : memref<2x10x10x8xf32, #tpu.memory_space<vmem>>, vector<2x8x8x8xf32>
    %132 = vector.shape_cast %131 : vector<2x8x8x8xf32> to vector<128x8xf32>
    %c0_216 = arith.constant 0 : index
    %c0_217 = arith.constant 0 : index
    %c0_218 = arith.constant 0 : index
    %133 = vector.load %arg4[%c0_216, %c0_217, %c0_218] : memref<9x8x16xf32, #tpu.memory_space<vmem>>, vector<1x8x16xf32>
    %134 = vector.shape_cast %133 : vector<1x8x16xf32> to vector<8x16xf32>
    %cst_219 = arith.constant dense<0.000000e+00> : vector<128x16xf32>
    %135 = tpu.matmul %132, %134, %cst_219 {dimension_numbers = #tpu.dot_dimension_numbers<[1], [0], [0], [1], [0, 0, 1, 1], [], []>} : vector<128x8xf32>, vector<8x16xf32>, vector<128x16xf32> -> vector<128x16xf32>
    %c0_220 = arith.constant 0 : index
    %c0_221 = arith.constant 0 : index
    %c1_222 = arith.constant 1 : index
    %c0_223 = arith.constant 0 : index
    %136 = vector.load %arg12[%c0_220, %c0_221, %c1_222, %c0_223] : memref<2x10x10x8xf32, #tpu.memory_space<vmem>>, vector<2x8x8x8xf32>
    %137 = vector.shape_cast %136 : vector<2x8x8x8xf32> to vector<128x8xf32>
    %c1_224 = arith.constant 1 : index
    %c0_225 = arith.constant 0 : index
    %c0_226 = arith.constant 0 : index
    %138 = vector.load %arg4[%c1_224, %c0_225, %c0_226] : memref<9x8x16xf32, #tpu.memory_space<vmem>>, vector<1x8x16xf32>
    %139 = vector.shape_cast %138 : vector<1x8x16xf32> to vector<8x16xf32>
    %cst_227 = arith.constant dense<0.000000e+00> : vector<128x16xf32>
    %140 = tpu.matmul %137, %139, %cst_227 {dimension_numbers = #tpu.dot_dimension_numbers<[1], [0], [0], [1], [0, 0, 1, 1], [], []>} : vector<128x8xf32>, vector<8x16xf32>, vector<128x16xf32> -> vector<128x16xf32>
    %141 = arith.addf %135, %140 : vector<128x16xf32>
    %c0_228 = arith.constant 0 : index
    %c0_229 = arith.constant 0 : index
    %c2_230 = arith.constant 2 : index
    %c0_231 = arith.constant 0 : index
    %142 = vector.load %arg12[%c0_228, %c0_229, %c2_230, %c0_231] : memref<2x10x10x8xf32, #tpu.memory_space<vmem>>, vector<2x8x8x8xf32>
    %143 = vector.shape_cast %142 : vector<2x8x8x8xf32> to vector<128x8xf32>
    %c2_232 = arith.constant 2 : index
    %c0_233 = arith.constant 0 : index
    %c0_234 = arith.constant 0 : index
    %144 = vector.load %arg4[%c2_232, %c0_233, %c0_234] : memref<9x8x16xf32, #tpu.memory_space<vmem>>, vector<1x8x16xf32>
    %145 = vector.shape_cast %144 : vector<1x8x16xf32> to vector<8x16xf32>
    %cst_235 = arith.constant dense<0.000000e+00> : vector<128x16xf32>
    %146 = tpu.matmul %143, %145, %cst_235 {dimension_numbers = #tpu.dot_dimension_numbers<[1], [0], [0], [1], [0, 0, 1, 1], [], []>} : vector<128x8xf32>, vector<8x16xf32>, vector<128x16xf32> -> vector<128x16xf32>
    %147 = arith.addf %141, %146 : vector<128x16xf32>
    %c0_236 = arith.constant 0 : index
    %c1_237 = arith.constant 1 : index
    %c0_238 = arith.constant 0 : index
    %c0_239 = arith.constant 0 : index
    %148 = vector.load %arg12[%c0_236, %c1_237, %c0_238, %c0_239] : memref<2x10x10x8xf32, #tpu.memory_space<vmem>>, vector<2x8x8x8xf32>
    %149 = vector.shape_cast %148 : vector<2x8x8x8xf32> to vector<128x8xf32>
    %c3_240 = arith.constant 3 : index
    %c0_241 = arith.constant 0 : index
    %c0_242 = arith.constant 0 : index
    %150 = vector.load %arg4[%c3_240, %c0_241, %c0_242] : memref<9x8x16xf32, #tpu.memory_space<vmem>>, vector<1x8x16xf32>
    %151 = vector.shape_cast %150 : vector<1x8x16xf32> to vector<8x16xf32>
    %cst_243 = arith.constant dense<0.000000e+00> : vector<128x16xf32>
    %152 = tpu.matmul %149, %151, %cst_243 {dimension_numbers = #tpu.dot_dimension_numbers<[1], [0], [0], [1], [0, 0, 1, 1], [], []>} : vector<128x8xf32>, vector<8x16xf32>, vector<128x16xf32> -> vector<128x16xf32>
    %153 = arith.addf %147, %152 : vector<128x16xf32>
    %c0_244 = arith.constant 0 : index
    %c1_245 = arith.constant 1 : index
    %c1_246 = arith.constant 1 : index
    %c0_247 = arith.constant 0 : index
    %154 = vector.load %arg12[%c0_244, %c1_245, %c1_246, %c0_247] : memref<2x10x10x8xf32, #tpu.memory_space<vmem>>, vector<2x8x8x8xf32>
    %155 = vector.shape_cast %154 : vector<2x8x8x8xf32> to vector<128x8xf32>
    %c4_248 = arith.constant 4 : index
    %c0_249 = arith.constant 0 : index
    %c0_250 = arith.constant 0 : index
    %156 = vector.load %arg4[%c4_248, %c0_249, %c0_250] : memref<9x8x16xf32, #tpu.memory_space<vmem>>, vector<1x8x16xf32>
    %157 = vector.shape_cast %156 : vector<1x8x16xf32> to vector<8x16xf32>
    %cst_251 = arith.constant dense<0.000000e+00> : vector<128x16xf32>
    %158 = tpu.matmul %155, %157, %cst_251 {dimension_numbers = #tpu.dot_dimension_numbers<[1], [0], [0], [1], [0, 0, 1, 1], [], []>} : vector<128x8xf32>, vector<8x16xf32>, vector<128x16xf32> -> vector<128x16xf32>
    %159 = arith.addf %153, %158 : vector<128x16xf32>
    %c0_252 = arith.constant 0 : index
    %c1_253 = arith.constant 1 : index
    %c2_254 = arith.constant 2 : index
    %c0_255 = arith.constant 0 : index
    %160 = vector.load %arg12[%c0_252, %c1_253, %c2_254, %c0_255] : memref<2x10x10x8xf32, #tpu.memory_space<vmem>>, vector<2x8x8x8xf32>
    %161 = vector.shape_cast %160 : vector<2x8x8x8xf32> to vector<128x8xf32>
    %c5_256 = arith.constant 5 : index
    %c0_257 = arith.constant 0 : index
    %c0_258 = arith.constant 0 : index
    %162 = vector.load %arg4[%c5_256, %c0_257, %c0_258] : memref<9x8x16xf32, #tpu.memory_space<vmem>>, vector<1x8x16xf32>
    %163 = vector.shape_cast %162 : vector<1x8x16xf32> to vector<8x16xf32>
    %cst_259 = arith.constant dense<0.000000e+00> : vector<128x16xf32>
    %164 = tpu.matmul %161, %163, %cst_259 {dimension_numbers = #tpu.dot_dimension_numbers<[1], [0], [0], [1], [0, 0, 1, 1], [], []>} : vector<128x8xf32>, vector<8x16xf32>, vector<128x16xf32> -> vector<128x16xf32>
    %165 = arith.addf %159, %164 : vector<128x16xf32>
    %c0_260 = arith.constant 0 : index
    %c2_261 = arith.constant 2 : index
    %c0_262 = arith.constant 0 : index
    %c0_263 = arith.constant 0 : index
    %166 = vector.load %arg12[%c0_260, %c2_261, %c0_262, %c0_263] : memref<2x10x10x8xf32, #tpu.memory_space<vmem>>, vector<2x8x8x8xf32>
    %167 = vector.shape_cast %166 : vector<2x8x8x8xf32> to vector<128x8xf32>
    %c6_264 = arith.constant 6 : index
    %c0_265 = arith.constant 0 : index
    %c0_266 = arith.constant 0 : index
    %168 = vector.load %arg4[%c6_264, %c0_265, %c0_266] : memref<9x8x16xf32, #tpu.memory_space<vmem>>, vector<1x8x16xf32>
    %169 = vector.shape_cast %168 : vector<1x8x16xf32> to vector<8x16xf32>
    %cst_267 = arith.constant dense<0.000000e+00> : vector<128x16xf32>
    %170 = tpu.matmul %167, %169, %cst_267 {dimension_numbers = #tpu.dot_dimension_numbers<[1], [0], [0], [1], [0, 0, 1, 1], [], []>} : vector<128x8xf32>, vector<8x16xf32>, vector<128x16xf32> -> vector<128x16xf32>
    %171 = arith.addf %165, %170 : vector<128x16xf32>
    %c0_268 = arith.constant 0 : index
    %c2_269 = arith.constant 2 : index
    %c1_270 = arith.constant 1 : index
    %c0_271 = arith.constant 0 : index
    %172 = vector.load %arg12[%c0_268, %c2_269, %c1_270, %c0_271] : memref<2x10x10x8xf32, #tpu.memory_space<vmem>>, vector<2x8x8x8xf32>
    %173 = vector.shape_cast %172 : vector<2x8x8x8xf32> to vector<128x8xf32>
    %c7_272 = arith.constant 7 : index
    %c0_273 = arith.constant 0 : index
    %c0_274 = arith.constant 0 : index
    %174 = vector.load %arg4[%c7_272, %c0_273, %c0_274] : memref<9x8x16xf32, #tpu.memory_space<vmem>>, vector<1x8x16xf32>
    %175 = vector.shape_cast %174 : vector<1x8x16xf32> to vector<8x16xf32>
    %cst_275 = arith.constant dense<0.000000e+00> : vector<128x16xf32>
    %176 = tpu.matmul %173, %175, %cst_275 {dimension_numbers = #tpu.dot_dimension_numbers<[1], [0], [0], [1], [0, 0, 1, 1], [], []>} : vector<128x8xf32>, vector<8x16xf32>, vector<128x16xf32> -> vector<128x16xf32>
    %177 = arith.addf %171, %176 : vector<128x16xf32>
    %c0_276 = arith.constant 0 : index
    %c2_277 = arith.constant 2 : index
    %c2_278 = arith.constant 2 : index
    %c0_279 = arith.constant 0 : index
    %178 = vector.load %arg12[%c0_276, %c2_277, %c2_278, %c0_279] : memref<2x10x10x8xf32, #tpu.memory_space<vmem>>, vector<2x8x8x8xf32>
    %179 = vector.shape_cast %178 : vector<2x8x8x8xf32> to vector<128x8xf32>
    %c8_280 = arith.constant 8 : index
    %c0_281 = arith.constant 0 : index
    %c0_282 = arith.constant 0 : index
    %180 = vector.load %arg4[%c8_280, %c0_281, %c0_282] : memref<9x8x16xf32, #tpu.memory_space<vmem>>, vector<1x8x16xf32>
    %181 = vector.shape_cast %180 : vector<1x8x16xf32> to vector<8x16xf32>
    %cst_283 = arith.constant dense<0.000000e+00> : vector<128x16xf32>
    %182 = tpu.matmul %179, %181, %cst_283 {dimension_numbers = #tpu.dot_dimension_numbers<[1], [0], [0], [1], [0, 0, 1, 1], [], []>} : vector<128x8xf32>, vector<8x16xf32>, vector<128x16xf32> -> vector<128x16xf32>
    %183 = arith.addf %177, %182 : vector<128x16xf32>
    %c0_284 = arith.constant 0 : index
    %c0_285 = arith.constant 0 : index
    %184 = vector.load %arg5[%c0_284, %c0_285] : memref<1x16xf32, #tpu.memory_space<vmem>>, vector<1x16xf32>
    %185 = vector.broadcast %184 : vector<1x16xf32> to vector<128x16xf32>
    %186 = arith.addf %183, %185 : vector<128x16xf32>
    %cst_286 = arith.constant 0.000000e+00 : f32
    %187 = vector.broadcast %cst_286 : f32 to vector<128x16xf32>
    %188 = arith.maximumf %186, %187 : vector<128x16xf32>
    %189 = vector.shape_cast %188 : vector<128x16xf32> to vector<2x8x8x16xf32>
    %190 = vector.extract_strided_slice %189 {offsets = [0, 0, 0, 0], sizes = [2, 1, 8, 16], strides = [1, 1, 1, 1]} : vector<2x8x8x16xf32> to vector<2x1x8x16xf32>
    %191 = vector.extract_strided_slice %189 {offsets = [0, 1, 0, 0], sizes = [2, 1, 8, 16], strides = [1, 1, 1, 1]} : vector<2x8x8x16xf32> to vector<2x1x8x16xf32>
    %192 = arith.maximumf %190, %191 : vector<2x1x8x16xf32>
    %c0_287 = arith.constant 0 : index
    %c0_288 = arith.constant 0 : index
    %c0_289 = arith.constant 0 : index
    %c0_290 = arith.constant 0 : index
    %193 = vector.load %arg13[%c0_287, %c0_288, %c0_289, %c0_290] : memref<2x4x8x16xf32, #tpu.memory_space<vmem>>, vector<2x1x8x16xf32>
    tpu.vector_store %arg13[%c0_287, %c0_288, %c0_289, %c0_290], %192 {strides = array<i32>} : memref<2x4x8x16xf32, #tpu.memory_space<vmem>>, vector<2x1x8x16xf32>,
    %194 = vector.extract_strided_slice %189 {offsets = [0, 2, 0, 0], sizes = [2, 1, 8, 16], strides = [1, 1, 1, 1]} : vector<2x8x8x16xf32> to vector<2x1x8x16xf32>
    %195 = vector.extract_strided_slice %189 {offsets = [0, 3, 0, 0], sizes = [2, 1, 8, 16], strides = [1, 1, 1, 1]} : vector<2x8x8x16xf32> to vector<2x1x8x16xf32>
    %196 = arith.maximumf %194, %195 : vector<2x1x8x16xf32>
    %c0_291 = arith.constant 0 : index
    %c1_292 = arith.constant 1 : index
    %c0_293 = arith.constant 0 : index
    %c0_294 = arith.constant 0 : index
    %197 = vector.load %arg13[%c0_291, %c1_292, %c0_293, %c0_294] : memref<2x4x8x16xf32, #tpu.memory_space<vmem>>, vector<2x1x8x16xf32>
    tpu.vector_store %arg13[%c0_291, %c1_292, %c0_293, %c0_294], %196 {strides = array<i32>} : memref<2x4x8x16xf32, #tpu.memory_space<vmem>>, vector<2x1x8x16xf32>,
    %198 = vector.extract_strided_slice %189 {offsets = [0, 4, 0, 0], sizes = [2, 1, 8, 16], strides = [1, 1, 1, 1]} : vector<2x8x8x16xf32> to vector<2x1x8x16xf32>
    %199 = vector.extract_strided_slice %189 {offsets = [0, 5, 0, 0], sizes = [2, 1, 8, 16], strides = [1, 1, 1, 1]} : vector<2x8x8x16xf32> to vector<2x1x8x16xf32>
    %200 = arith.maximumf %198, %199 : vector<2x1x8x16xf32>
    %c0_295 = arith.constant 0 : index
    %c2_296 = arith.constant 2 : index
    %c0_297 = arith.constant 0 : index
    %c0_298 = arith.constant 0 : index
    %201 = vector.load %arg13[%c0_295, %c2_296, %c0_297, %c0_298] : memref<2x4x8x16xf32, #tpu.memory_space<vmem>>, vector<2x1x8x16xf32>
    tpu.vector_store %arg13[%c0_295, %c2_296, %c0_297, %c0_298], %200 {strides = array<i32>} : memref<2x4x8x16xf32, #tpu.memory_space<vmem>>, vector<2x1x8x16xf32>,
    %202 = vector.extract_strided_slice %189 {offsets = [0, 6, 0, 0], sizes = [2, 1, 8, 16], strides = [1, 1, 1, 1]} : vector<2x8x8x16xf32> to vector<2x1x8x16xf32>
    %203 = vector.extract_strided_slice %189 {offsets = [0, 7, 0, 0], sizes = [2, 1, 8, 16], strides = [1, 1, 1, 1]} : vector<2x8x8x16xf32> to vector<2x1x8x16xf32>
    %204 = arith.maximumf %202, %203 : vector<2x1x8x16xf32>
    %c0_299 = arith.constant 0 : index
    %c3_300 = arith.constant 3 : index
    %c0_301 = arith.constant 0 : index
    %c0_302 = arith.constant 0 : index
    %205 = vector.load %arg13[%c0_299, %c3_300, %c0_301, %c0_302] : memref<2x4x8x16xf32, #tpu.memory_space<vmem>>, vector<2x1x8x16xf32>
    tpu.vector_store %arg13[%c0_299, %c3_300, %c0_301, %c0_302], %204 {strides = array<i32>} : memref<2x4x8x16xf32, #tpu.memory_space<vmem>>, vector<2x1x8x16xf32>,
    %c0_303 = arith.constant 0 : index
    %c0_304 = arith.constant 0 : index
    %c0_305 = arith.constant 0 : index
    %c0_306 = arith.constant 0 : index
    %206 = vector.load %arg13[%c0_303, %c0_304, %c0_305, %c0_306] : memref<2x4x8x16xf32, #tpu.memory_space<vmem>>, vector<2x4x1x16xf32>
    %c0_307 = arith.constant 0 : index
    %c0_308 = arith.constant 0 : index
    %c1_309 = arith.constant 1 : index
    %c0_310 = arith.constant 0 : index
    %207 = vector.load %arg13[%c0_307, %c0_308, %c1_309, %c0_310] : memref<2x4x8x16xf32, #tpu.memory_space<vmem>>, vector<2x4x1x16xf32>
    %208 = arith.maximumf %206, %207 : vector<2x4x1x16xf32>
    %c0_311 = arith.constant 0 : index
    %c0_312 = arith.constant 0 : index
    %c0_313 = arith.constant 0 : index
    %c0_314 = arith.constant 0 : index
    %209 = vector.load %arg14[%c0_311, %c0_312, %c0_313, %c0_314] : memref<2x4x4x16xf32, #tpu.memory_space<vmem>>, vector<2x4x1x16xf32>
    tpu.vector_store %arg14[%c0_311, %c0_312, %c0_313, %c0_314], %208 {strides = array<i32>} : memref<2x4x4x16xf32, #tpu.memory_space<vmem>>, vector<2x4x1x16xf32>,
    %c0_315 = arith.constant 0 : index
    %c0_316 = arith.constant 0 : index
    %c2_317 = arith.constant 2 : index
    %c0_318 = arith.constant 0 : index
    %210 = vector.load %arg13[%c0_315, %c0_316, %c2_317, %c0_318] : memref<2x4x8x16xf32, #tpu.memory_space<vmem>>, vector<2x4x1x16xf32>
    %c0_319 = arith.constant 0 : index
    %c0_320 = arith.constant 0 : index
    %c3_321 = arith.constant 3 : index
    %c0_322 = arith.constant 0 : index
    %211 = vector.load %arg13[%c0_319, %c0_320, %c3_321, %c0_322] : memref<2x4x8x16xf32, #tpu.memory_space<vmem>>, vector<2x4x1x16xf32>
    %212 = arith.maximumf %210, %211 : vector<2x4x1x16xf32>
    %c0_323 = arith.constant 0 : index
    %c0_324 = arith.constant 0 : index
    %c1_325 = arith.constant 1 : index
    %c0_326 = arith.constant 0 : index
    %213 = vector.load %arg14[%c0_323, %c0_324, %c1_325, %c0_326] : memref<2x4x4x16xf32, #tpu.memory_space<vmem>>, vector<2x4x1x16xf32>
    tpu.vector_store %arg14[%c0_323, %c0_324, %c1_325, %c0_326], %212 {strides = array<i32>} : memref<2x4x4x16xf32, #tpu.memory_space<vmem>>, vector<2x4x1x16xf32>,
    %c0_327 = arith.constant 0 : index
    %c0_328 = arith.constant 0 : index
    %c4_329 = arith.constant 4 : index
    %c0_330 = arith.constant 0 : index
    %214 = vector.load %arg13[%c0_327, %c0_328, %c4_329, %c0_330] : memref<2x4x8x16xf32, #tpu.memory_space<vmem>>, vector<2x4x1x16xf32>
    %c0_331 = arith.constant 0 : index
    %c0_332 = arith.constant 0 : index
    %c5_333 = arith.constant 5 : index
    %c0_334 = arith.constant 0 : index
    %215 = vector.load %arg13[%c0_331, %c0_332, %c5_333, %c0_334] : memref<2x4x8x16xf32, #tpu.memory_space<vmem>>, vector<2x4x1x16xf32>
    %216 = arith.maximumf %214, %215 : vector<2x4x1x16xf32>
    %c0_335 = arith.constant 0 : index
    %c0_336 = arith.constant 0 : index
    %c2_337 = arith.constant 2 : index
    %c0_338 = arith.constant 0 : index
    %217 = vector.load %arg14[%c0_335, %c0_336, %c2_337, %c0_338] : memref<2x4x4x16xf32, #tpu.memory_space<vmem>>, vector<2x4x1x16xf32>
    tpu.vector_store %arg14[%c0_335, %c0_336, %c2_337, %c0_338], %216 {strides = array<i32>} : memref<2x4x4x16xf32, #tpu.memory_space<vmem>>, vector<2x4x1x16xf32>,
    %c0_339 = arith.constant 0 : index
    %c0_340 = arith.constant 0 : index
    %c6_341 = arith.constant 6 : index
    %c0_342 = arith.constant 0 : index
    %218 = vector.load %arg13[%c0_339, %c0_340, %c6_341, %c0_342] : memref<2x4x8x16xf32, #tpu.memory_space<vmem>>, vector<2x4x1x16xf32>
    %c0_343 = arith.constant 0 : index
    %c0_344 = arith.constant 0 : index
    %c7_345 = arith.constant 7 : index
    %c0_346 = arith.constant 0 : index
    %219 = vector.load %arg13[%c0_343, %c0_344, %c7_345, %c0_346] : memref<2x4x8x16xf32, #tpu.memory_space<vmem>>, vector<2x4x1x16xf32>
    %220 = arith.maximumf %218, %219 : vector<2x4x1x16xf32>
    %c0_347 = arith.constant 0 : index
    %c0_348 = arith.constant 0 : index
    %c3_349 = arith.constant 3 : index
    %c0_350 = arith.constant 0 : index
    %221 = vector.load %arg14[%c0_347, %c0_348, %c3_349, %c0_350] : memref<2x4x4x16xf32, #tpu.memory_space<vmem>>, vector<2x4x1x16xf32>
    tpu.vector_store %arg14[%c0_347, %c0_348, %c3_349, %c0_350], %220 {strides = array<i32>} : memref<2x4x4x16xf32, #tpu.memory_space<vmem>>, vector<2x4x1x16xf32>,
    %c0_351 = arith.constant 0 : index
    %c0_352 = arith.constant 0 : index
    %c0_353 = arith.constant 0 : index
    %c0_354 = arith.constant 0 : index
    %222 = vector.load %arg14[%c0_351, %c0_352, %c0_353, %c0_354] : memref<2x4x4x16xf32, #tpu.memory_space<vmem>>, vector<2x4x4x16xf32>
    %223 = vector.extract_strided_slice %222 {offsets = [0, 0, 0, 0], sizes = [2, 1, 1, 16], strides = [1, 1, 1, 1]} : vector<2x4x4x16xf32> to vector<2x1x1x16xf32>
    %224 = vector.shape_cast %223 : vector<2x1x1x16xf32> to vector<2x16xf32>
    %c0_355 = arith.constant 0 : index
    %c0_356 = arith.constant 0 : index
    %c0_357 = arith.constant 0 : index
    %225 = vector.load %arg6[%c0_355, %c0_356, %c0_357] : memref<16x16x10xf32, #tpu.memory_space<vmem>>, vector<1x16x10xf32>
    %226 = vector.shape_cast %225 : vector<1x16x10xf32> to vector<16x10xf32>
    %cst_358 = arith.constant dense<0.000000e+00> : vector<2x10xf32>
    %227 = tpu.matmul %224, %226, %cst_358 {dimension_numbers = #tpu.dot_dimension_numbers<[1], [0], [0], [1], [0, 0, 1, 1], [], []>} : vector<2x16xf32>, vector<16x10xf32>, vector<2x10xf32> -> vector<2x10xf32>
    %228 = vector.extract_strided_slice %222 {offsets = [0, 0, 1, 0], sizes = [2, 1, 1, 16], strides = [1, 1, 1, 1]} : vector<2x4x4x16xf32> to vector<2x1x1x16xf32>
    %229 = vector.shape_cast %228 : vector<2x1x1x16xf32> to vector<2x16xf32>
    %c1_359 = arith.constant 1 : index
    %c0_360 = arith.constant 0 : index
    %c0_361 = arith.constant 0 : index
    %230 = vector.load %arg6[%c1_359, %c0_360, %c0_361] : memref<16x16x10xf32, #tpu.memory_space<vmem>>, vector<1x16x10xf32>
    %231 = vector.shape_cast %230 : vector<1x16x10xf32> to vector<16x10xf32>
    %cst_362 = arith.constant dense<0.000000e+00> : vector<2x10xf32>
    %232 = tpu.matmul %229, %231, %cst_362 {dimension_numbers = #tpu.dot_dimension_numbers<[1], [0], [0], [1], [0, 0, 1, 1], [], []>} : vector<2x16xf32>, vector<16x10xf32>, vector<2x10xf32> -> vector<2x10xf32>
    %233 = arith.addf %227, %232 : vector<2x10xf32>
    %234 = vector.extract_strided_slice %222 {offsets = [0, 0, 2, 0], sizes = [2, 1, 1, 16], strides = [1, 1, 1, 1]} : vector<2x4x4x16xf32> to vector<2x1x1x16xf32>
    %235 = vector.shape_cast %234 : vector<2x1x1x16xf32> to vector<2x16xf32>
    %c2_363 = arith.constant 2 : index
    %c0_364 = arith.constant 0 : index
    %c0_365 = arith.constant 0 : index
    %236 = vector.load %arg6[%c2_363, %c0_364, %c0_365] : memref<16x16x10xf32, #tpu.memory_space<vmem>>, vector<1x16x10xf32>
    %237 = vector.shape_cast %236 : vector<1x16x10xf32> to vector<16x10xf32>
    %cst_366 = arith.constant dense<0.000000e+00> : vector<2x10xf32>
    %238 = tpu.matmul %235, %237, %cst_366 {dimension_numbers = #tpu.dot_dimension_numbers<[1], [0], [0], [1], [0, 0, 1, 1], [], []>} : vector<2x16xf32>, vector<16x10xf32>, vector<2x10xf32> -> vector<2x10xf32>
    %239 = arith.addf %233, %238 : vector<2x10xf32>
    %240 = vector.extract_strided_slice %222 {offsets = [0, 0, 3, 0], sizes = [2, 1, 1, 16], strides = [1, 1, 1, 1]} : vector<2x4x4x16xf32> to vector<2x1x1x16xf32>
    %241 = vector.shape_cast %240 : vector<2x1x1x16xf32> to vector<2x16xf32>
    %c3_367 = arith.constant 3 : index
    %c0_368 = arith.constant 0 : index
    %c0_369 = arith.constant 0 : index
    %242 = vector.load %arg6[%c3_367, %c0_368, %c0_369] : memref<16x16x10xf32, #tpu.memory_space<vmem>>, vector<1x16x10xf32>
    %243 = vector.shape_cast %242 : vector<1x16x10xf32> to vector<16x10xf32>
    %cst_370 = arith.constant dense<0.000000e+00> : vector<2x10xf32>
    %244 = tpu.matmul %241, %243, %cst_370 {dimension_numbers = #tpu.dot_dimension_numbers<[1], [0], [0], [1], [0, 0, 1, 1], [], []>} : vector<2x16xf32>, vector<16x10xf32>, vector<2x10xf32> -> vector<2x10xf32>
    %245 = arith.addf %239, %244 : vector<2x10xf32>
    %246 = vector.extract_strided_slice %222 {offsets = [0, 1, 0, 0], sizes = [2, 1, 1, 16], strides = [1, 1, 1, 1]} : vector<2x4x4x16xf32> to vector<2x1x1x16xf32>
    %247 = vector.shape_cast %246 : vector<2x1x1x16xf32> to vector<2x16xf32>
    %c4_371 = arith.constant 4 : index
    %c0_372 = arith.constant 0 : index
    %c0_373 = arith.constant 0 : index
    %248 = vector.load %arg6[%c4_371, %c0_372, %c0_373] : memref<16x16x10xf32, #tpu.memory_space<vmem>>, vector<1x16x10xf32>
    %249 = vector.shape_cast %248 : vector<1x16x10xf32> to vector<16x10xf32>
    %cst_374 = arith.constant dense<0.000000e+00> : vector<2x10xf32>
    %250 = tpu.matmul %247, %249, %cst_374 {dimension_numbers = #tpu.dot_dimension_numbers<[1], [0], [0], [1], [0, 0, 1, 1], [], []>} : vector<2x16xf32>, vector<16x10xf32>, vector<2x10xf32> -> vector<2x10xf32>
    %251 = arith.addf %245, %250 : vector<2x10xf32>
    %252 = vector.extract_strided_slice %222 {offsets = [0, 1, 1, 0], sizes = [2, 1, 1, 16], strides = [1, 1, 1, 1]} : vector<2x4x4x16xf32> to vector<2x1x1x16xf32>
    %253 = vector.shape_cast %252 : vector<2x1x1x16xf32> to vector<2x16xf32>
    %c5_375 = arith.constant 5 : index
    %c0_376 = arith.constant 0 : index
    %c0_377 = arith.constant 0 : index
    %254 = vector.load %arg6[%c5_375, %c0_376, %c0_377] : memref<16x16x10xf32, #tpu.memory_space<vmem>>, vector<1x16x10xf32>
    %255 = vector.shape_cast %254 : vector<1x16x10xf32> to vector<16x10xf32>
    %cst_378 = arith.constant dense<0.000000e+00> : vector<2x10xf32>
    %256 = tpu.matmul %253, %255, %cst_378 {dimension_numbers = #tpu.dot_dimension_numbers<[1], [0], [0], [1], [0, 0, 1, 1], [], []>} : vector<2x16xf32>, vector<16x10xf32>, vector<2x10xf32> -> vector<2x10xf32>
    %257 = arith.addf %251, %256 : vector<2x10xf32>
    %258 = vector.extract_strided_slice %222 {offsets = [0, 1, 2, 0], sizes = [2, 1, 1, 16], strides = [1, 1, 1, 1]} : vector<2x4x4x16xf32> to vector<2x1x1x16xf32>
    %259 = vector.shape_cast %258 : vector<2x1x1x16xf32> to vector<2x16xf32>
    %c6_379 = arith.constant 6 : index
    %c0_380 = arith.constant 0 : index
    %c0_381 = arith.constant 0 : index
    %260 = vector.load %arg6[%c6_379, %c0_380, %c0_381] : memref<16x16x10xf32, #tpu.memory_space<vmem>>, vector<1x16x10xf32>
    %261 = vector.shape_cast %260 : vector<1x16x10xf32> to vector<16x10xf32>
    %cst_382 = arith.constant dense<0.000000e+00> : vector<2x10xf32>
    %262 = tpu.matmul %259, %261, %cst_382 {dimension_numbers = #tpu.dot_dimension_numbers<[1], [0], [0], [1], [0, 0, 1, 1], [], []>} : vector<2x16xf32>, vector<16x10xf32>, vector<2x10xf32> -> vector<2x10xf32>
    %263 = arith.addf %257, %262 : vector<2x10xf32>
    %264 = vector.extract_strided_slice %222 {offsets = [0, 1, 3, 0], sizes = [2, 1, 1, 16], strides = [1, 1, 1, 1]} : vector<2x4x4x16xf32> to vector<2x1x1x16xf32>
    %265 = vector.shape_cast %264 : vector<2x1x1x16xf32> to vector<2x16xf32>
    %c7_383 = arith.constant 7 : index
    %c0_384 = arith.constant 0 : index
    %c0_385 = arith.constant 0 : index
    %266 = vector.load %arg6[%c7_383, %c0_384, %c0_385] : memref<16x16x10xf32, #tpu.memory_space<vmem>>, vector<1x16x10xf32>
    %267 = vector.shape_cast %266 : vector<1x16x10xf32> to vector<16x10xf32>
    %cst_386 = arith.constant dense<0.000000e+00> : vector<2x10xf32>
    %268 = tpu.matmul %265, %267, %cst_386 {dimension_numbers = #tpu.dot_dimension_numbers<[1], [0], [0], [1], [0, 0, 1, 1], [], []>} : vector<2x16xf32>, vector<16x10xf32>, vector<2x10xf32> -> vector<2x10xf32>
    %269 = arith.addf %263, %268 : vector<2x10xf32>
    %270 = vector.extract_strided_slice %222 {offsets = [0, 2, 0, 0], sizes = [2, 1, 1, 16], strides = [1, 1, 1, 1]} : vector<2x4x4x16xf32> to vector<2x1x1x16xf32>
    %271 = vector.shape_cast %270 : vector<2x1x1x16xf32> to vector<2x16xf32>
    %c8_387 = arith.constant 8 : index
    %c0_388 = arith.constant 0 : index
    %c0_389 = arith.constant 0 : index
    %272 = vector.load %arg6[%c8_387, %c0_388, %c0_389] : memref<16x16x10xf32, #tpu.memory_space<vmem>>, vector<1x16x10xf32>
    %273 = vector.shape_cast %272 : vector<1x16x10xf32> to vector<16x10xf32>
    %cst_390 = arith.constant dense<0.000000e+00> : vector<2x10xf32>
    %274 = tpu.matmul %271, %273, %cst_390 {dimension_numbers = #tpu.dot_dimension_numbers<[1], [0], [0], [1], [0, 0, 1, 1], [], []>} : vector<2x16xf32>, vector<16x10xf32>, vector<2x10xf32> -> vector<2x10xf32>
    %275 = arith.addf %269, %274 : vector<2x10xf32>
    %276 = vector.extract_strided_slice %222 {offsets = [0, 2, 1, 0], sizes = [2, 1, 1, 16], strides = [1, 1, 1, 1]} : vector<2x4x4x16xf32> to vector<2x1x1x16xf32>
    %277 = vector.shape_cast %276 : vector<2x1x1x16xf32> to vector<2x16xf32>
    %c9_391 = arith.constant 9 : index
    %c0_392 = arith.constant 0 : index
    %c0_393 = arith.constant 0 : index
    %278 = vector.load %arg6[%c9_391, %c0_392, %c0_393] : memref<16x16x10xf32, #tpu.memory_space<vmem>>, vector<1x16x10xf32>
    %279 = vector.shape_cast %278 : vector<1x16x10xf32> to vector<16x10xf32>
    %cst_394 = arith.constant dense<0.000000e+00> : vector<2x10xf32>
    %280 = tpu.matmul %277, %279, %cst_394 {dimension_numbers = #tpu.dot_dimension_numbers<[1], [0], [0], [1], [0, 0, 1, 1], [], []>} : vector<2x16xf32>, vector<16x10xf32>, vector<2x10xf32> -> vector<2x10xf32>
    %281 = arith.addf %275, %280 : vector<2x10xf32>
    %282 = vector.extract_strided_slice %222 {offsets = [0, 2, 2, 0], sizes = [2, 1, 1, 16], strides = [1, 1, 1, 1]} : vector<2x4x4x16xf32> to vector<2x1x1x16xf32>
    %283 = vector.shape_cast %282 : vector<2x1x1x16xf32> to vector<2x16xf32>
    %c10_395 = arith.constant 10 : index
    %c0_396 = arith.constant 0 : index
    %c0_397 = arith.constant 0 : index
    %284 = vector.load %arg6[%c10_395, %c0_396, %c0_397] : memref<16x16x10xf32, #tpu.memory_space<vmem>>, vector<1x16x10xf32>
    %285 = vector.shape_cast %284 : vector<1x16x10xf32> to vector<16x10xf32>
    %cst_398 = arith.constant dense<0.000000e+00> : vector<2x10xf32>
    %286 = tpu.matmul %283, %285, %cst_398 {dimension_numbers = #tpu.dot_dimension_numbers<[1], [0], [0], [1], [0, 0, 1, 1], [], []>} : vector<2x16xf32>, vector<16x10xf32>, vector<2x10xf32> -> vector<2x10xf32>
    %287 = arith.addf %281, %286 : vector<2x10xf32>
    %288 = vector.extract_strided_slice %222 {offsets = [0, 2, 3, 0], sizes = [2, 1, 1, 16], strides = [1, 1, 1, 1]} : vector<2x4x4x16xf32> to vector<2x1x1x16xf32>
    %289 = vector.shape_cast %288 : vector<2x1x1x16xf32> to vector<2x16xf32>
    %c11_399 = arith.constant 11 : index
    %c0_400 = arith.constant 0 : index
    %c0_401 = arith.constant 0 : index
    %290 = vector.load %arg6[%c11_399, %c0_400, %c0_401] : memref<16x16x10xf32, #tpu.memory_space<vmem>>, vector<1x16x10xf32>
    %291 = vector.shape_cast %290 : vector<1x16x10xf32> to vector<16x10xf32>
    %cst_402 = arith.constant dense<0.000000e+00> : vector<2x10xf32>
    %292 = tpu.matmul %289, %291, %cst_402 {dimension_numbers = #tpu.dot_dimension_numbers<[1], [0], [0], [1], [0, 0, 1, 1], [], []>} : vector<2x16xf32>, vector<16x10xf32>, vector<2x10xf32> -> vector<2x10xf32>
    %293 = arith.addf %287, %292 : vector<2x10xf32>
    %294 = vector.extract_strided_slice %222 {offsets = [0, 3, 0, 0], sizes = [2, 1, 1, 16], strides = [1, 1, 1, 1]} : vector<2x4x4x16xf32> to vector<2x1x1x16xf32>
    %295 = vector.shape_cast %294 : vector<2x1x1x16xf32> to vector<2x16xf32>
    %c12_403 = arith.constant 12 : index
    %c0_404 = arith.constant 0 : index
    %c0_405 = arith.constant 0 : index
    %296 = vector.load %arg6[%c12_403, %c0_404, %c0_405] : memref<16x16x10xf32, #tpu.memory_space<vmem>>, vector<1x16x10xf32>
    %297 = vector.shape_cast %296 : vector<1x16x10xf32> to vector<16x10xf32>
    %cst_406 = arith.constant dense<0.000000e+00> : vector<2x10xf32>
    %298 = tpu.matmul %295, %297, %cst_406 {dimension_numbers = #tpu.dot_dimension_numbers<[1], [0], [0], [1], [0, 0, 1, 1], [], []>} : vector<2x16xf32>, vector<16x10xf32>, vector<2x10xf32> -> vector<2x10xf32>
    %299 = arith.addf %293, %298 : vector<2x10xf32>
    %300 = vector.extract_strided_slice %222 {offsets = [0, 3, 1, 0], sizes = [2, 1, 1, 16], strides = [1, 1, 1, 1]} : vector<2x4x4x16xf32> to vector<2x1x1x16xf32>
    %301 = vector.shape_cast %300 : vector<2x1x1x16xf32> to vector<2x16xf32>
    %c13_407 = arith.constant 13 : index
    %c0_408 = arith.constant 0 : index
    %c0_409 = arith.constant 0 : index
    %302 = vector.load %arg6[%c13_407, %c0_408, %c0_409] : memref<16x16x10xf32, #tpu.memory_space<vmem>>, vector<1x16x10xf32>
    %303 = vector.shape_cast %302 : vector<1x16x10xf32> to vector<16x10xf32>
    %cst_410 = arith.constant dense<0.000000e+00> : vector<2x10xf32>
    %304 = tpu.matmul %301, %303, %cst_410 {dimension_numbers = #tpu.dot_dimension_numbers<[1], [0], [0], [1], [0, 0, 1, 1], [], []>} : vector<2x16xf32>, vector<16x10xf32>, vector<2x10xf32> -> vector<2x10xf32>
    %305 = arith.addf %299, %304 : vector<2x10xf32>
    %306 = vector.extract_strided_slice %222 {offsets = [0, 3, 2, 0], sizes = [2, 1, 1, 16], strides = [1, 1, 1, 1]} : vector<2x4x4x16xf32> to vector<2x1x1x16xf32>
    %307 = vector.shape_cast %306 : vector<2x1x1x16xf32> to vector<2x16xf32>
    %c14_411 = arith.constant 14 : index
    %c0_412 = arith.constant 0 : index
    %c0_413 = arith.constant 0 : index
    %308 = vector.load %arg6[%c14_411, %c0_412, %c0_413] : memref<16x16x10xf32, #tpu.memory_space<vmem>>, vector<1x16x10xf32>
    %309 = vector.shape_cast %308 : vector<1x16x10xf32> to vector<16x10xf32>
    %cst_414 = arith.constant dense<0.000000e+00> : vector<2x10xf32>
    %310 = tpu.matmul %307, %309, %cst_414 {dimension_numbers = #tpu.dot_dimension_numbers<[1], [0], [0], [1], [0, 0, 1, 1], [], []>} : vector<2x16xf32>, vector<16x10xf32>, vector<2x10xf32> -> vector<2x10xf32>
    %311 = arith.addf %305, %310 : vector<2x10xf32>
    %312 = vector.extract_strided_slice %222 {offsets = [0, 3, 3, 0], sizes = [2, 1, 1, 16], strides = [1, 1, 1, 1]} : vector<2x4x4x16xf32> to vector<2x1x1x16xf32>
    %313 = vector.shape_cast %312 : vector<2x1x1x16xf32> to vector<2x16xf32>
    %c15_415 = arith.constant 15 : index
    %c0_416 = arith.constant 0 : index
    %c0_417 = arith.constant 0 : index
    %314 = vector.load %arg6[%c15_415, %c0_416, %c0_417] : memref<16x16x10xf32, #tpu.memory_space<vmem>>, vector<1x16x10xf32>
    %315 = vector.shape_cast %314 : vector<1x16x10xf32> to vector<16x10xf32>
    %cst_418 = arith.constant dense<0.000000e+00> : vector<2x10xf32>
    %316 = tpu.matmul %313, %315, %cst_418 {dimension_numbers = #tpu.dot_dimension_numbers<[1], [0], [0], [1], [0, 0, 1, 1], [], []>} : vector<2x16xf32>, vector<16x10xf32>, vector<2x10xf32> -> vector<2x10xf32>
    %317 = arith.addf %311, %316 : vector<2x10xf32>
    %c0_419 = arith.constant 0 : index
    %c0_420 = arith.constant 0 : index
    %318 = vector.load %arg7[%c0_419, %c0_420] : memref<1x10xf32, #tpu.memory_space<vmem>>, vector<1x10xf32>
    %319 = vector.broadcast %318 : vector<1x10xf32> to vector<2x10xf32>
    %320 = arith.addf %317, %319 : vector<2x10xf32>
    %c0_421 = arith.constant 0 : index
    %c0_422 = arith.constant 0 : index
    %321 = vector.load %arg8[%c0_421, %c0_422] : memref<2x10xf32, #tpu.memory_space<vmem>>, vector<2x10xf32>
    tpu.vector_store %arg8[%c0_421, %c0_422], %320 {strides = array<i32>} : memref<2x10xf32, #tpu.memory_space<vmem>>, vector<2x10xf32>,
    return
  }
  func.func @transform_0(%arg0: i32) -> (i32, i32, i32, i32) {
    %c0_i32 = arith.constant 0 : i32
    %c0_i32_0 = arith.constant 0 : i32
    %c0_i32_1 = arith.constant 0 : i32
    %c0_i32_2 = arith.constant 0 : i32
    %c0_i32_3 = arith.constant 0 : i32
    return %c0_i32, %c0_i32_0, %c0_i32_1, %c0_i32_2 : i32, i32, i32, i32
  }
  func.func @transform_1(%arg0: i32) -> (i32, i32, i32) {
    %c0_i32 = arith.constant 0 : i32
    %c0_i32_0 = arith.constant 0 : i32
    %c0_i32_1 = arith.constant 0 : i32
    %c0_i32_2 = arith.constant 0 : i32
    return %c0_i32, %c0_i32_0, %c0_i32_1 : i32, i32, i32
  }
  func.func @transform_2(%arg0: i32) -> (i32, i32) {
    %c0_i32 = arith.constant 0 : i32
    %c0_i32_0 = arith.constant 0 : i32
    %c0_i32_1 = arith.constant 0 : i32
    return %c0_i32, %c0_i32_0 : i32, i32
  }
  func.func @transform_3(%arg0: i32) -> (i32, i32, i32) {
    %c0_i32 = arith.constant 0 : i32
    %c0_i32_0 = arith.constant 0 : i32
    %c0_i32_1 = arith.constant 0 : i32
    %c0_i32_2 = arith.constant 0 : i32
    return %c0_i32, %c0_i32_0, %c0_i32_1 : i32, i32, i32
  }
  func.func @transform_4(%arg0: i32) -> (i32, i32) {
    %c0_i32 = arith.constant 0 : i32
    %c0_i32_0 = arith.constant 0 : i32
    %c0_i32_1 = arith.constant 0 : i32
    return %c0_i32, %c0_i32_0 : i32, i32
  }
  func.func @transform_5(%arg0: i32) -> (i32, i32, i32) {
    %c0_i32 = arith.constant 0 : i32
    %c0_i32_0 = arith.constant 0 : i32
    %c0_i32_1 = arith.constant 0 : i32
    %c0_i32_2 = arith.constant 0 : i32
    return %c0_i32, %c0_i32_0, %c0_i32_1 : i32, i32, i32
  }
  func.func @transform_6(%arg0: i32) -> (i32, i32) {
    %c0_i32 = arith.constant 0 : i32
    %c0_i32_0 = arith.constant 0 : i32
    %c0_i32_1 = arith.constant 0 : i32
    return %c0_i32, %c0_i32_0 : i32, i32
  }
  func.func @transform_7(%arg0: i32) -> (i32, i32) {
    %c0_i32 = arith.constant 0 : i32
    %c0_i32_0 = arith.constant 0 : i32
    %c0_i32_1 = arith.constant 0 : i32
    return %c0_i32, %c0_i32_0 : i32, i32
  }
}

</mosaic_0001>

<llo_original>
// kernel: _lambda_.1
$region0: #{_lambda_.1}
  #allocation0 [shape = 'u32[]', space=smem, size = 0x4, offset = 0x4, fixed_abs, tag = 'smem constant byte address 0x4 - core index']
  #allocation1 [shape = 'u32[144,128]{1,0:T(1,128)}', space=vmem, size = 0x12000, scoped, tag = 'internal scratch']
  #allocation2 [shape = 'f32[2,18,18,3]{3,2,1,0:T(8,128)}', space=vmem, size = 0x6c000, scoped, tag = 'scratch operand']
  #allocation3 [shape = 'f32[2,8,16,8]{3,2,1,0:T(8,128)}', space=vmem, size = 0x20000, scoped, tag = 'scratch operand']
  #allocation4 [shape = 'f32[2,8,8,8]{3,2,1,0:T(8,128)}', space=vmem, size = 0x10000, scoped, tag = 'scratch operand']
  #allocation5 [shape = 'f32[2,10,10,8]{3,2,1,0:T(8,128)}', space=vmem, size = 0x28000, scoped, tag = 'scratch operand']
  #allocation6 [shape = 'f32[2,4,8,16]{3,2,1,0:T(8,128)}', space=vmem, size = 0x8000, scoped, tag = 'scratch operand']
  #allocation7 [shape = 'f32[2,4,4,16]{3,2,1,0:T(4,128)}', space=vmem, size = 0x4000, scoped, tag = 'scratch operand']
  %s0 = inlined_call_operand.vmem [shape: f32[2,16,16,3], index: 0, kind: input, shape index: {}]
  %s1 = inlined_call_operand.vmem [shape: f32[9,3,8], index: 1, kind: input, shape index: {}]
  %s2 = inlined_call_operand.vmem [shape: f32[1,8], index: 2, kind: input, shape index: {}]
  %s3 = inlined_call_operand.vmem [shape: f32[9,8,16], index: 3, kind: input, shape index: {}]
  %s4 = inlined_call_operand.vmem [shape: f32[1,16], index: 4, kind: input, shape index: {}]
  %s5 = inlined_call_operand.vmem [shape: f32[16,16,10], index: 5, kind: input, shape index: {}]
  %s6 = inlined_call_operand.vmem [shape: f32[1,10], index: 6, kind: input, shape index: {}]
  %s7 = inlined_call_operand.hbm [shape: f32[2,10], index: 7, kind: output, shape index: {}]
  %s8 = sld [smem:[#allocation0]]
  $region38: #{_lambda_.1} parent=0
    _
  %s10 = ssub.s32 1, %s8
  %s11 = scalar_select 0, %s10, %s8
  $region1: #{_lambda_.1} parent=0
    #allocation8 [shape = 'u8[1024]{0}', space=vmem, size = 0x400, scoped, tag = 'output window, operand 0, single buffered']
    #allocation9 [shape = 's32[1]{0}', space=sflag, size = 0x4, scoped, tag = 'scoped memory for _lambda_.1']
    %12 = vsyncpa [#allocation9], 0
    // Predicated region
    $region2: #{_lambda_.1} parent=1 // pred_check
      _
    $region3: #{_lambda_.1} parent=1 // pred_check_branch
      %14 = sbr.rel (0) target = $region5
    $region4: #{_lambda_.1} parent=1 // pred_region
      _
    $region5: #{_lambda_.1} parent=1 // pred_fallthru
      _
    // Predicated region
    $region6: #{_lambda_.1} parent=1 // pred_check
      _
    $region7: #{_lambda_.1} parent=1 // pred_check_branch
      %16 = sbr.rel (0) target = $region9
    $region8: #{_lambda_.1} parent=1 // pred_region
      _
    $region9: #{_lambda_.1} parent=1 // pred_fallthru
      _
    // Predicated region
    $region10: #{_lambda_.1} parent=1 // pred_check
      _
    $region11: #{_lambda_.1} parent=1 // pred_check_branch
      %18 = sbr.rel (0) target = $region13
    $region12: #{_lambda_.1} parent=1 // pred_region
      _
    $region13: #{_lambda_.1} parent=1 // pred_fallthru
      _
    // Predicated region
    $region14: #{_lambda_.1} parent=1 // pred_check
      _
    $region15: #{_lambda_.1} parent=1 // pred_check_branch
      %20 = sbr.rel (0) target = $region17
    $region16: #{_lambda_.1} parent=1 // pred_region
      _
    $region17: #{_lambda_.1} parent=1 // pred_fallthru
      _
    // Predicated region
    $region18: #{_lambda_.1} parent=1 // pred_check
      _
    $region19: #{_lambda_.1} parent=1 // pred_check_branch
      %22 = sbr.rel (0) target = $region21
    $region20: #{_lambda_.1} parent=1 // pred_region
      _
    $region21: #{_lambda_.1} parent=1 // pred_fallthru
      _
    // Predicated region
    $region22: #{_lambda_.1} parent=1 // pred_check
      _
    $region23: #{_lambda_.1} parent=1 // pred_check_branch
      %24 = sbr.rel (0) target = $region25
    $region24: #{_lambda_.1} parent=1 // pred_region
      _
    $region25: #{_lambda_.1} parent=1 // pred_fallthru
      _
    // Predicated region
    $region26: #{_lambda_.1} parent=1 // pred_check
      _
    $region27: #{_lambda_.1} parent=1 // pred_check_branch
      %26 = sbr.rel (0) target = $region29
    $region28: #{_lambda_.1} parent=1 // pred_region
      _
    $region29: #{_lambda_.1} parent=1 // pred_fallthru
      _
    %v27 = vld [vmem:[%s0] sm:$0xff]
    %v28 = vld [vmem:[%s0 + $0x8] sm:$0xff]
    %v29 = vld [vmem:[%s0 + $0x10] sm:$0xff]
    %v30 = vld [vmem:[%s0 + $0x18] sm:$0xff]
    %v31 = vld [vmem:[%s0 + $0x20] sm:$0xff]
    %v32 = vld [vmem:[%s0 + $0x28] sm:$0xff]
    %v33 = vld [vmem:[%s0 + $0x30] sm:$0xff]
    %v34 = vld [vmem:[%s0 + $0x38] sm:$0xff]
    %v35 = vld [vmem:[%s0 + $0x40] sm:$0xff]
    %v36 = vld [vmem:[%s0 + $0x48] sm:$0xff]
    %v37 = vld [vmem:[%s0 + $0x50] sm:$0xff]
    %v38 = vld [vmem:[%s0 + $0x58] sm:$0xff]
    %v39 = vld [vmem:[%s0 + $0x60] sm:$0xff]
    %v40 = vld [vmem:[%s0 + $0x68] sm:$0xff]
    %v41 = vld [vmem:[%s0 + $0x70] sm:$0xff]
    %v42 = vld [vmem:[%s0 + $0x78] sm:$0xff]
    %v43 = vld [vmem:[%s0 + $0x80] sm:$0xff]
    %v44 = vld [vmem:[%s0 + $0x88] sm:$0xff]
    %v45 = vld [vmem:[%s0 + $0x90] sm:$0xff]
    %v46 = vld [vmem:[%s0 + $0x98] sm:$0xff]
    %v47 = vld [vmem:[%s0 + $0xa0] sm:$0xff]
    %v48 = vld [vmem:[%s0 + $0xa8] sm:$0xff]
    %v49 = vld [vmem:[%s0 + $0xb0] sm:$0xff]
    %v50 = vld [vmem:[%s0 + $0xb8] sm:$0xff]
    %v51 = vld [vmem:[%s0 + $0xc0] sm:$0xff]
    %v52 = vld [vmem:[%s0 + $0xc8] sm:$0xff]
    %v53 = vld [vmem:[%s0 + $0xd0] sm:$0xff]
    %v54 = vld [vmem:[%s0 + $0xd8] sm:$0xff]
    %v55 = vld [vmem:[%s0 + $0xe0] sm:$0xff]
    %v56 = vld [vmem:[%s0 + $0xe8] sm:$0xff]
    %v57 = vld [vmem:[%s0 + $0xf0] sm:$0xff]
    %v58 = vld [vmem:[%s0 + $0xf8] sm:$0xff]
    %v59 = vld [vmem:[%s0 + $0x100] sm:$0xff]
    %v60 = vld [vmem:[%s0 + $0x108] sm:$0xff]
    %v61 = vld [vmem:[%s0 + $0x110] sm:$0xff]
    %v62 = vld [vmem:[%s0 + $0x118] sm:$0xff]
    %v63 = vld [vmem:[%s0 + $0x120] sm:$0xff]
    %v64 = vld [vmem:[%s0 + $0x128] sm:$0xff]
    %v65 = vld [vmem:[%s0 + $0x130] sm:$0xff]
    %v66 = vld [vmem:[%s0 + $0x138] sm:$0xff]
    %v67 = vld [vmem:[%s0 + $0x140] sm:$0xff]
    %v68 = vld [vmem:[%s0 + $0x148] sm:$0xff]
    %v69 = vld [vmem:[%s0 + $0x150] sm:$0xff]
    %v70 = vld [vmem:[%s0 + $0x158] sm:$0xff]
    %v71 = vld [vmem:[%s0 + $0x160] sm:$0xff]
    %v72 = vld [vmem:[%s0 + $0x168] sm:$0xff]
    %v73 = vld [vmem:[%s0 + $0x170] sm:$0xff]
    %v74 = vld [vmem:[%s0 + $0x178] sm:$0xff]
    %v75 = vld [vmem:[%s0 + $0x180] sm:$0xff]
    %v76 = vld [vmem:[%s0 + $0x188] sm:$0xff]
    %v77 = vld [vmem:[%s0 + $0x190] sm:$0xff]
    %v78 = vld [vmem:[%s0 + $0x198] sm:$0xff]
    %v79 = vld [vmem:[%s0 + $0x1a0] sm:$0xff]
    %v80 = vld [vmem:[%s0 + $0x1a8] sm:$0xff]
    %v81 = vld [vmem:[%s0 + $0x1b0] sm:$0xff]
    %v82 = vld [vmem:[%s0 + $0x1b8] sm:$0xff]
    %v83 = vld [vmem:[%s0 + $0x1c0] sm:$0xff]
    %v84 = vld [vmem:[%s0 + $0x1c8] sm:$0xff]
    %v85 = vld [vmem:[%s0 + $0x1d0] sm:$0xff]
    %v86 = vld [vmem:[%s0 + $0x1d8] sm:$0xff]
    %v87 = vld [vmem:[%s0 + $0x1e0] sm:$0xff]
    %v88 = vld [vmem:[%s0 + $0x1e8] sm:$0xff]
    %v89 = vld [vmem:[%s0 + $0x1f0] sm:$0xff]
    %v90 = vld [vmem:[%s0 + $0x1f8] sm:$0xff]
    %vm91 = vcmask 23552
    %92 = vst.msk [vmem:[#allocation2] sm:$0xff] %vm91, 0.0
    %93 = vst.msk [vmem:[#allocation2 + $0x8] sm:$0xff] %vm91, 0.0
    %vm94 = vcmask 17408
    %95 = vst.msk [vmem:[#allocation2 + $0x10] sm:$0x3] %vm94, 0.0
    %96 = vst.msk [vmem:[#allocation2 + $0x18] sm:$0xff] %vm91, 0.0
    %97 = vst.msk [vmem:[#allocation2 + $0x20] sm:$0xff] %vm91, 0.0
    %98 = vst.msk [vmem:[#allocation2 + $0x28] sm:$0x3] %vm94, 0.0
    %99 = vst.msk [vmem:[#allocation2 + $0x30] sm:$0xff] %vm91, 0.0
    %100 = vst.msk [vmem:[#allocation2 + $0x38] sm:$0xff] %vm91, 0.0
    %101 = vst.msk [vmem:[#allocation2 + $0x40] sm:$0x3] %vm94, 0.0
    %102 = vst.msk [vmem:[#allocation2 + $0x48] sm:$0xff] %vm91, 0.0
    %103 = vst.msk [vmem:[#allocation2 + $0x50] sm:$0xff] %vm91, 0.0
    %104 = vst.msk [vmem:[#allocation2 + $0x58] sm:$0x3] %vm94, 0.0
    %105 = vst.msk [vmem:[#allocation2 + $0x60] sm:$0xff] %vm91, 0.0
    %106 = vst.msk [vmem:[#allocation2 + $0x68] sm:$0xff] %vm91, 0.0
    %107 = vst.msk [vmem:[#allocation2 + $0x70] sm:$0x3] %vm94, 0.0
    %108 = vst.msk [vmem:[#allocation2 + $0x78] sm:$0xff] %vm91, 0.0
    %109 = vst.msk [vmem:[#allocation2 + $0x80] sm:$0xff] %vm91, 0.0
    %110 = vst.msk [vmem:[#allocation2 + $0x88] sm:$0x3] %vm94, 0.0
    %111 = vst.msk [vmem:[#allocation2 + $0x90] sm:$0xff] %vm91, 0.0
    %112 = vst.msk [vmem:[#allocation2 + $0x98] sm:$0xff] %vm91, 0.0
    %113 = vst.msk [vmem:[#allocation2 + $0xa0] sm:$0x3] %vm94, 0.0
    %114 = vst.msk [vmem:[#allocation2 + $0xa8] sm:$0xff] %vm91, 0.0
    %115 = vst.msk [vmem:[#allocation2 + $0xb0] sm:$0xff] %vm91, 0.0
    %116 = vst.msk [vmem:[#allocation2 + $0xb8] sm:$0x3] %vm94, 0.0
    %117 = vst.msk [vmem:[#allocation2 + $0xc0] sm:$0xff] %vm91, 0.0
    %118 = vst.msk [vmem:[#allocation2 + $0xc8] sm:$0xff] %vm91, 0.0
    %119 = vst.msk [vmem:[#allocation2 + $0xd0] sm:$0x3] %vm94, 0.0
    %120 = vst.msk [vmem:[#allocation2 + $0xd8] sm:$0xff] %vm91, 0.0
    %121 = vst.msk [vmem:[#allocation2 + $0xe0] sm:$0xff] %vm91, 0.0
    %122 = vst.msk [vmem:[#allocation2 + $0xe8] sm:$0x3] %vm94, 0.0
    %123 = vst.msk [vmem:[#allocation2 + $0xf0] sm:$0xff] %vm91, 0.0
    %124 = vst.msk [vmem:[#allocation2 + $0xf8] sm:$0xff] %vm91, 0.0
    %125 = vst.msk [vmem:[#allocation2 + $0x100] sm:$0x3] %vm94, 0.0
    %126 = vst.msk [vmem:[#allocation2 + $0x108] sm:$0xff] %vm91, 0.0
    %127 = vst.msk [vmem:[#allocation2 + $0x110] sm:$0xff] %vm91, 0.0
    %128 = vst.msk [vmem:[#allocation2 + $0x118] sm:$0x3] %vm94, 0.0
    %129 = vst.msk [vmem:[#allocation2 + $0x120] sm:$0xff] %vm91, 0.0
    %130 = vst.msk [vmem:[#allocation2 + $0x128] sm:$0xff] %vm91, 0.0
    %131 = vst.msk [vmem:[#allocation2 + $0x130] sm:$0x3] %vm94, 0.0
    %132 = vst.msk [vmem:[#allocation2 + $0x138] sm:$0xff] %vm91, 0.0
    %133 = vst.msk [vmem:[#allocation2 + $0x140] sm:$0xff] %vm91, 0.0
    %134 = vst.msk [vmem:[#allocation2 + $0x148] sm:$0x3] %vm94, 0.0
    %135 = vst.msk [vmem:[#allocation2 + $0x150] sm:$0xff] %vm91, 0.0
    %136 = vst.msk [vmem:[#allocation2 + $0x158] sm:$0xff] %vm91, 0.0
    %137 = vst.msk [vmem:[#allocation2 + $0x160] sm:$0x3] %vm94, 0.0
    %138 = vst.msk [vmem:[#allocation2 + $0x168] sm:$0xff] %vm91, 0.0
    %139 = vst.msk [vmem:[#allocation2 + $0x170] sm:$0xff] %vm91, 0.0
    %140 = vst.msk [vmem:[#allocation2 + $0x178] sm:$0x3] %vm94, 0.0
    %141 = vst.msk [vmem:[#allocation2 + $0x180] sm:$0xff] %vm91, 0.0
    %142 = vst.msk [vmem:[#allocation2 + $0x188] sm:$0xff] %vm91, 0.0
    %143 = vst.msk [vmem:[#allocation2 + $0x190] sm:$0x3] %vm94, 0.0
    %144 = vst.msk [vmem:[#allocation2 + $0x198] sm:$0xff] %vm91, 0.0
    %145 = vst.msk [vmem:[#allocation2 + $0x1a0] sm:$0xff] %vm91, 0.0
    %146 = vst.msk [vmem:[#allocation2 + $0x1a8] sm:$0x3] %vm94, 0.0
    %147 = vst.msk [vmem:[#allocation2 + $0x1b0] sm:$0xff] %vm91, 0.0
    %148 = vst.msk [vmem:[#allocation2 + $0x1b8] sm:$0xff] %vm91, 0.0
    %149 = vst.msk [vmem:[#allocation2 + $0x1c0] sm:$0x3] %vm94, 0.0
    %150 = vst.msk [vmem:[#allocation2 + $0x1c8] sm:$0xff] %vm91, 0.0
    %151 = vst.msk [vmem:[#allocation2 + $0x1d0] sm:$0xff] %vm91, 0.0
    %152 = vst.msk [vmem:[#allocation2 + $0x1d8] sm:$0x3] %vm94, 0.0
    %153 = vst.msk [vmem:[#allocation2 + $0x1e0] sm:$0xff] %vm91, 0.0
    %154 = vst.msk [vmem:[#allocation2 + $0x1e8] sm:$0xff] %vm91, 0.0
    %155 = vst.msk [vmem:[#allocation2 + $0x1f0] sm:$0x3] %vm94, 0.0
    %156 = vst.msk [vmem:[#allocation2 + $0x1f8] sm:$0xff] %vm91, 0.0
    %157 = vst.msk [vmem:[#allocation2 + $0x200] sm:$0xff] %vm91, 0.0
    %158 = vst.msk [vmem:[#allocation2 + $0x208] sm:$0x3] %vm94, 0.0
    %159 = vst.msk [vmem:[#allocation2 + $0x210] sm:$0xff] %vm91, 0.0
    %160 = vst.msk [vmem:[#allocation2 + $0x218] sm:$0xff] %vm91, 0.0
    %161 = vst.msk [vmem:[#allocation2 + $0x220] sm:$0x3] %vm94, 0.0
    %162 = vst.msk [vmem:[#allocation2 + $0x228] sm:$0xff] %vm91, 0.0
    %163 = vst.msk [vmem:[#allocation2 + $0x230] sm:$0xff] %vm91, 0.0
    %164 = vst.msk [vmem:[#allocation2 + $0x238] sm:$0x3] %vm94, 0.0
    %165 = vst.msk [vmem:[#allocation2 + $0x240] sm:$0xff] %vm91, 0.0
    %166 = vst.msk [vmem:[#allocation2 + $0x248] sm:$0xff] %vm91, 0.0
    %167 = vst.msk [vmem:[#allocation2 + $0x250] sm:$0x3] %vm94, 0.0
    %168 = vst.msk [vmem:[#allocation2 + $0x258] sm:$0xff] %vm91, 0.0
    %169 = vst.msk [vmem:[#allocation2 + $0x260] sm:$0xff] %vm91, 0.0
    %170 = vst.msk [vmem:[#allocation2 + $0x268] sm:$0x3] %vm94, 0.0
    %171 = vst.msk [vmem:[#allocation2 + $0x270] sm:$0xff] %vm91, 0.0
    %172 = vst.msk [vmem:[#allocation2 + $0x278] sm:$0xff] %vm91, 0.0
    %173 = vst.msk [vmem:[#allocation2 + $0x280] sm:$0x3] %vm94, 0.0
    %174 = vst.msk [vmem:[#allocation2 + $0x288] sm:$0xff] %vm91, 0.0
    %175 = vst.msk [vmem:[#allocation2 + $0x290] sm:$0xff] %vm91, 0.0
    %176 = vst.msk [vmem:[#allocation2 + $0x298] sm:$0x3] %vm94, 0.0
    %177 = vst.msk [vmem:[#allocation2 + $0x2a0] sm:$0xff] %vm91, 0.0
    %178 = vst.msk [vmem:[#allocation2 + $0x2a8] sm:$0xff] %vm91, 0.0
    %179 = vst.msk [vmem:[#allocation2 + $0x2b0] sm:$0x3] %vm94, 0.0
    %180 = vst.msk [vmem:[#allocation2 + $0x2b8] sm:$0xff] %vm91, 0.0
    %181 = vst.msk [vmem:[#allocation2 + $0x2c0] sm:$0xff] %vm91, 0.0
    %182 = vst.msk [vmem:[#allocation2 + $0x2c8] sm:$0x3] %vm94, 0.0
    %183 = vst.msk [vmem:[#allocation2 + $0x2d0] sm:$0xff] %vm91, 0.0
    %184 = vst.msk [vmem:[#allocation2 + $0x2d8] sm:$0xff] %vm91, 0.0
    %185 = vst.msk [vmem:[#allocation2 + $0x2e0] sm:$0x3] %vm94, 0.0
    %186 = vst.msk [vmem:[#allocation2 + $0x2e8] sm:$0xff] %vm91, 0.0
    %187 = vst.msk [vmem:[#allocation2 + $0x2f0] sm:$0xff] %vm91, 0.0
    %188 = vst.msk [vmem:[#allocation2 + $0x2f8] sm:$0x3] %vm94, 0.0
    %189 = vst.msk [vmem:[#allocation2 + $0x300] sm:$0xff] %vm91, 0.0
    %190 = vst.msk [vmem:[#allocation2 + $0x308] sm:$0xff] %vm91, 0.0
    %191 = vst.msk [vmem:[#allocation2 + $0x310] sm:$0x3] %vm94, 0.0
    %192 = vst.msk [vmem:[#allocation2 + $0x318] sm:$0xff] %vm91, 0.0
    %193 = vst.msk [vmem:[#allocation2 + $0x320] sm:$0xff] %vm91, 0.0
    %194 = vst.msk [vmem:[#allocation2 + $0x328] sm:$0x3] %vm94, 0.0
    %195 = vst.msk [vmem:[#allocation2 + $0x330] sm:$0xff] %vm91, 0.0
    %196 = vst.msk [vmem:[#allocation2 + $0x338] sm:$0xff] %vm91, 0.0
    %197 = vst.msk [vmem:[#allocation2 + $0x340] sm:$0x3] %vm94, 0.0
    %198 = vst.msk [vmem:[#allocation2 + $0x348] sm:$0xff] %vm91, 0.0
    %199 = vst.msk [vmem:[#allocation2 + $0x350] sm:$0xff] %vm91, 0.0
    %200 = vst.msk [vmem:[#allocation2 + $0x358] sm:$0x3] %vm94, 0.0
    %s201 = scalar_lea.vmem [#allocation2], 24
    %202 = vst.msk [vmem:[%s201 + $0x1] sm:$0xff] %vm91, %v27
    %203 = vst.msk [vmem:[%s201 + $0x9] sm:$0xff] %vm91, %v28
    %204 = vst.msk [vmem:[%s201 + $0x19] sm:$0xff] %vm91, %v29
    %205 = vst.msk [vmem:[%s201 + $0x21] sm:$0xff] %vm91, %v30
    %206 = vst.msk [vmem:[%s201 + $0x31] sm:$0xff] %vm91, %v31
    %207 = vst.msk [vmem:[%s201 + $0x39] sm:$0xff] %vm91, %v32
    %208 = vst.msk [vmem:[%s201 + $0x49] sm:$0xff] %vm91, %v33
    %209 = vst.msk [vmem:[%s201 + $0x51] sm:$0xff] %vm91, %v34
    %210 = vst.msk [vmem:[%s201 + $0x61] sm:$0xff] %vm91, %v35
    %211 = vst.msk [vmem:[%s201 + $0x69] sm:$0xff] %vm91, %v36
    %212 = vst.msk [vmem:[%s201 + $0x79] sm:$0xff] %vm91, %v37
    %213 = vst.msk [vmem:[%s201 + $0x81] sm:$0xff] %vm91, %v38
    %214 = vst.msk [vmem:[%s201 + $0x91] sm:$0xff] %vm91, %v39
    %215 = vst.msk [vmem:[%s201 + $0x99] sm:$0xff] %vm91, %v40
    %216 = vst.msk [vmem:[%s201 + $0xa9] sm:$0xff] %vm91, %v41
    %217 = vst.msk [vmem:[%s201 + $0xb1] sm:$0xff] %vm91, %v42
    %218 = vst.msk [vmem:[%s201 + $0xc1] sm:$0xff] %vm91, %v43
    %219 = vst.msk [vmem:[%s201 + $0xc9] sm:$0xff] %vm91, %v44
    %220 = vst.msk [vmem:[%s201 + $0xd9] sm:$0xff] %vm91, %v45
    %221 = vst.msk [vmem:[%s201 + $0xe1] sm:$0xff] %vm91, %v46
    %222 = vst.msk [vmem:[%s201 + $0xf1] sm:$0xff] %vm91, %v47
    %223 = vst.msk [vmem:[%s201 + $0xf9] sm:$0xff] %vm91, %v48
    %224 = vst.msk [vmem:[%s201 + $0x109] sm:$0xff] %vm91, %v49
    %225 = vst.msk [vmem:[%s201 + $0x111] sm:$0xff] %vm91, %v50
    %226 = vst.msk [vmem:[%s201 + $0x121] sm:$0xff] %vm91, %v51
    %227 = vst.msk [vmem:[%s201 + $0x129] sm:$0xff] %vm91, %v52
    %228 = vst.msk [vmem:[%s201 + $0x139] sm:$0xff] %vm91, %v53
    %229 = vst.msk [vmem:[%s201 + $0x141] sm:$0xff] %vm91, %v54
    %230 = vst.msk [vmem:[%s201 + $0x151] sm:$0xff] %vm91, %v55
    %231 = vst.msk [vmem:[%s201 + $0x159] sm:$0xff] %vm91, %v56
    %232 = vst.msk [vmem:[%s201 + $0x169] sm:$0xff] %vm91, %v57
    %233 = vst.msk [vmem:[%s201 + $0x171] sm:$0xff] %vm91, %v58
    %234 = vst.msk [vmem:[%s201 + $0x1b1] sm:$0xff] %vm91, %v59
    %235 = vst.msk [vmem:[%s201 + $0x1b9] sm:$0xff] %vm91, %v60
    %236 = vst.msk [vmem:[%s201 + $0x1c9] sm:$0xff] %vm91, %v61
    %237 = vst.msk [vmem:[%s201 + $0x1d1] sm:$0xff] %vm91, %v62
    %238 = vst.msk [vmem:[%s201 + $0x1e1] sm:$0xff] %vm91, %v63
    %239 = vst.msk [vmem:[%s201 + $0x1e9] sm:$0xff] %vm91, %v64
    %240 = vst.msk [vmem:[%s201 + $0x1f9] sm:$0xff] %vm91, %v65
    %241 = vst.msk [vmem:[%s201 + $0x201] sm:$0xff] %vm91, %v66
    %242 = vst.msk [vmem:[%s201 + $0x211] sm:$0xff] %vm91, %v67
    %243 = vst.msk [vmem:[%s201 + $0x219] sm:$0xff] %vm91, %v68
    %244 = vst.msk [vmem:[%s201 + $0x229] sm:$0xff] %vm91, %v69
    %245 = vst.msk [vmem:[%s201 + $0x231] sm:$0xff] %vm91, %v70
    %246 = vst.msk [vmem:[%s201 + $0x241] sm:$0xff] %vm91, %v71
    %247 = vst.msk [vmem:[%s201 + $0x249] sm:$0xff] %vm91, %v72
    %248 = vst.msk [vmem:[%s201 + $0x259] sm:$0xff] %vm91, %v73
    %249 = vst.msk [vmem:[%s201 + $0x261] sm:$0xff] %vm91, %v74
    %250 = vst.msk [vmem:[%s201 + $0x271] sm:$0xff] %vm91, %v75
    %251 = vst.msk [vmem:[%s201 + $0x279] sm:$0xff] %vm91, %v76
    %252 = vst.msk [vmem:[%s201 + $0x289] sm:$0xff] %vm91, %v77
    %253 = vst.msk [vmem:[%s201 + $0x291] sm:$0xff] %vm91, %v78
    %254 = vst.msk [vmem:[%s201 + $0x2a1] sm:$0xff] %vm91, %v79
    %255 = vst.msk [vmem:[%s201 + $0x2a9] sm:$0xff] %vm91, %v80
    %256 = vst.msk [vmem:[%s201 + $0x2b9] sm:$0xff] %vm91, %v81
    %257 = vst.msk [vmem:[%s201 + $0x2c1] sm:$0xff] %vm91, %v82
    %258 = vst.msk [vmem:[%s201 + $0x2d1] sm:$0xff] %vm91, %v83
    %259 = vst.msk [vmem:[%s201 + $0x2d9] sm:$0xff] %vm91, %v84
    %260 = vst.msk [vmem:[%s201 + $0x2e9] sm:$0xff] %vm91, %v85
    %261 = vst.msk [vmem:[%s201 + $0x2f1] sm:$0xff] %vm91, %v86
    %262 = vst.msk [vmem:[%s201 + $0x301] sm:$0xff] %vm91, %v87
    %263 = vst.msk [vmem:[%s201 + $0x309] sm:$0xff] %vm91, %v88
    %264 = vst.msk [vmem:[%s201 + $0x319] sm:$0xff] %vm91, %v89
    %265 = vst.msk [vmem:[%s201 + $0x321] sm:$0xff] %vm91, %v90
    %v266 = vld [vmem:[#allocation2] sm:$0xff]
    %v267 = vld [vmem:[#allocation2 + $0x8] sm:$0xff]
    %v268 = vld [vmem:[#allocation2 + $0x18] sm:$0xff]
    %v269 = vld [vmem:[#allocation2 + $0x20] sm:$0xff]
    %v270 = vld [vmem:[#allocation2 + $0x30] sm:$0xff]
    %v271 = vld [vmem:[#allocation2 + $0x38] sm:$0xff]
    %v272 = vld [vmem:[#allocation2 + $0x48] sm:$0xff]
    %v273 = vld [vmem:[#allocation2 + $0x50] sm:$0xff]
    %v274 = vld [vmem:[#allocation2 + $0x60] sm:$0xff]
    %v275 = vld [vmem:[#allocation2 + $0x68] sm:$0xff]
    %v276 = vld [vmem:[#allocation2 + $0x78] sm:$0xff]
    %v277 = vld [vmem:[#allocation2 + $0x80] sm:$0xff]
    %v278 = vld [vmem:[#allocation2 + $0x90] sm:$0xff]
    %v279 = vld [vmem:[#allocation2 + $0x98] sm:$0xff]
    %v280 = vld [vmem:[#allocation2 + $0xa8] sm:$0xff]
    %v281 = vld [vmem:[#allocation2 + $0xb0] sm:$0xff]
    %v282 = vld [vmem:[#allocation2 + $0xc0] sm:$0xff]
    %v283 = vld [vmem:[#allocation2 + $0xc8] sm:$0xff]
    %v284 = vld [vmem:[#allocation2 + $0xd8] sm:$0xff]
    %v285 = vld [vmem:[#allocation2 + $0xe0] sm:$0xff]
    %v286 = vld [vmem:[#allocation2 + $0xf0] sm:$0xff]
    %v287 = vld [vmem:[#allocation2 + $0xf8] sm:$0xff]
    %v288 = vld [vmem:[#allocation2 + $0x108] sm:$0xff]
    %v289 = vld [vmem:[#allocation2 + $0x110] sm:$0xff]
    %v290 = vld [vmem:[#allocation2 + $0x120] sm:$0xff]
    %v291 = vld [vmem:[#allocation2 + $0x128] sm:$0xff]
    %v292 = vld [vmem:[#allocation2 + $0x138] sm:$0xff]
    %v293 = vld [vmem:[#allocation2 + $0x140] sm:$0xff]
    %v294 = vld [vmem:[#allocation2 + $0x150] sm:$0xff]
    %v295 = vld [vmem:[#allocation2 + $0x158] sm:$0xff]
    %v296 = vld [vmem:[#allocation2 + $0x168] sm:$0xff]
    %v297 = vld [vmem:[#allocation2 + $0x170] sm:$0xff]
    %v298 = vld [vmem:[#allocation2 + $0x1b0] sm:$0xff]
    %v299 = vld [vmem:[#allocation2 + $0x1b8] sm:$0xff]
    %v300 = vld [vmem:[#allocation2 + $0x1c8] sm:$0xff]
    %v301 = vld [vmem:[#allocation2 + $0x1d0] sm:$0xff]
    %v302 = vld [vmem:[#allocation2 + $0x1e0] sm:$0xff]
    %v303 = vld [vmem:[#allocation2 + $0x1e8] sm:$0xff]
    %v304 = vld [vmem:[#allocation2 + $0x1f8] sm:$0xff]
    %v305 = vld [vmem:[#allocation2 + $0x200] sm:$0xff]
    %v306 = vld [vmem:[#allocation2 + $0x210] sm:$0xff]
    %v307 = vld [vmem:[#allocation2 + $0x218] sm:$0xff]
    %v308 = vld [vmem:[#allocation2 + $0x228] sm:$0xff]
    %v309 = vld [vmem:[#allocation2 + $0x230] sm:$0xff]
    %v310 = vld [vmem:[#allocation2 + $0x240] sm:$0xff]
    %v311 = vld [vmem:[#allocation2 + $0x248] sm:$0xff]
    %v312 = vld [vmem:[#allocation2 + $0x258] sm:$0xff]
    %v313 = vld [vmem:[#allocation2 + $0x260] sm:$0xff]
    %v314 = vld [vmem:[#allocation2 + $0x270] sm:$0xff]
    %v315 = vld [vmem:[#allocation2 + $0x278] sm:$0xff]
    %v316 = vld [vmem:[#allocation2 + $0x288] sm:$0xff]
    %v317 = vld [vmem:[#allocation2 + $0x290] sm:$0xff]
    %v318 = vld [vmem:[#allocation2 + $0x2a0] sm:$0xff]
    %v319 = vld [vmem:[#allocation2 + $0x2a8] sm:$0xff]
    %v320 = vld [vmem:[#allocation2 + $0x2b8] sm:$0xff]
    %v321 = vld [vmem:[#allocation2 + $0x2c0] sm:$0xff]
    %v322 = vld [vmem:[#allocation2 + $0x2d0] sm:$0xff]
    %v323 = vld [vmem:[#allocation2 + $0x2d8] sm:$0xff]
    %v324 = vld [vmem:[#allocation2 + $0x2e8] sm:$0xff]
    %v325 = vld [vmem:[#allocation2 + $0x2f0] sm:$0xff]
    %v326 = vld [vmem:[#allocation2 + $0x300] sm:$0xff]
    %v327 = vld [vmem:[#allocation2 + $0x308] sm:$0xff]
    %v328 = vld [vmem:[#allocation2 + $0x318] sm:$0xff]
    %v329 = vld [vmem:[#allocation2 + $0x320] sm:$0xff]
    %v330 = vld [vmem:[%s1] sm:$0x7]
    %v331 = vld [vmem:[#allocation2 + $0x1] sm:$0xff]
    %v332 = vld [vmem:[#allocation2 + $0x9] sm:$0xff]
    %v333 = vld [vmem:[#allocation2 + $0x19] sm:$0xff]
    %v334 = vld [vmem:[#allocation2 + $0x21] sm:$0xff]
    %v335 = vld [vmem:[#allocation2 + $0x31] sm:$0xff]
    %v336 = vld [vmem:[#allocation2 + $0x39] sm:$0xff]
    %v337 = vld [vmem:[#allocation2 + $0x49] sm:$0xff]
    %v338 = vld [vmem:[#allocation2 + $0x51] sm:$0xff]
    %v339 = vld [vmem:[#allocation2 + $0x61] sm:$0xff]
    %v340 = vld [vmem:[#allocation2 + $0x69] sm:$0xff]
    %v341 = vld [vmem:[#allocation2 + $0x79] sm:$0xff]
    %v342 = vld [vmem:[#allocation2 + $0x81] sm:$0xff]
    %v343 = vld [vmem:[#allocation2 + $0x91] sm:$0xff]
    %v344 = vld [vmem:[#allocation2 + $0x99] sm:$0xff]
    %v345 = vld [vmem:[#allocation2 + $0xa9] sm:$0xff]
    %v346 = vld [vmem:[#allocation2 + $0xb1] sm:$0xff]
    %v347 = vld [vmem:[#allocation2 + $0xc1] sm:$0xff]
    %v348 = vld [vmem:[#allocation2 + $0xc9] sm:$0xff]
    %v349 = vld [vmem:[#allocation2 + $0xd9] sm:$0xff]
    %v350 = vld [vmem:[#allocation2 + $0xe1] sm:$0xff]
    %v351 = vld [vmem:[#allocation2 + $0xf1] sm:$0xff]
    %v352 = vld [vmem:[#allocation2 + $0xf9] sm:$0xff]
    %v353 = vld [vmem:[#allocation2 + $0x109] sm:$0xff]
    %v354 = vld [vmem:[#allocation2 + $0x111] sm:$0xff]
    %v355 = vld [vmem:[#allocation2 + $0x121] sm:$0xff]
    %v356 = vld [vmem:[#allocation2 + $0x129] sm:$0xff]
    %v357 = vld [vmem:[#allocation2 + $0x139] sm:$0xff]
    %v358 = vld [vmem:[#allocation2 + $0x141] sm:$0xff]
    %v359 = vld [vmem:[#allocation2 + $0x151] sm:$0xff]
    %v360 = vld [vmem:[#allocation2 + $0x159] sm:$0xff]
    %v361 = vld [vmem:[#allocation2 + $0x169] sm:$0xff]
    %v362 = vld [vmem:[#allocation2 + $0x171] sm:$0xff]
    %v363 = vld [vmem:[#allocation2 + $0x1b1] sm:$0xff]
    %v364 = vld [vmem:[#allocation2 + $0x1b9] sm:$0xff]
    %v365 = vld [vmem:[#allocation2 + $0x1c9] sm:$0xff]
    %v366 = vld [vmem:[#allocation2 + $0x1d1] sm:$0xff]
    %v367 = vld [vmem:[#allocation2 + $0x1e1] sm:$0xff]
    %v368 = vld [vmem:[#allocation2 + $0x1e9] sm:$0xff]
    %v369 = vld [vmem:[#allocation2 + $0x1f9] sm:$0xff]
    %v370 = vld [vmem:[#allocation2 + $0x201] sm:$0xff]
    %v371 = vld [vmem:[#allocation2 + $0x211] sm:$0xff]
    %v372 = vld [vmem:[#allocation2 + $0x219] sm:$0xff]
    %v373 = vld [vmem:[#allocation2 + $0x229] sm:$0xff]
    %v374 = vld [vmem:[#allocation2 + $0x231] sm:$0xff]
    %v375 = vld [vmem:[#allocation2 + $0x241] sm:$0xff]
    %v376 = vld [vmem:[#allocation2 + $0x249] sm:$0xff]
    %v377 = vld [vmem:[#allocation2 + $0x259] sm:$0xff]
    %v378 = vld [vmem:[#allocation2 + $0x261] sm:$0xff]
    %v379 = vld [vmem:[#allocation2 + $0x271] sm:$0xff]
    %v380 = vld [vmem:[#allocation2 + $0x279] sm:$0xff]
    %v381 = vld [vmem:[#allocation2 + $0x289] sm:$0xff]
    %v382 = vld [vmem:[#allocation2 + $0x291] sm:$0xff]
    %v383 = vld [vmem:[#allocation2 + $0x2a1] sm:$0xff]
    %v384 = vld [vmem:[#allocation2 + $0x2a9] sm:$0xff]
    %v385 = vld [vmem:[#allocation2 + $0x2b9] sm:$0xff]
    %v386 = vld [vmem:[#allocation2 + $0x2c1] sm:$0xff]
    %v387 = vld [vmem:[#allocation2 + $0x2d1] sm:$0xff]
    %v388 = vld [vmem:[#allocation2 + $0x2d9] sm:$0xff]
    %v389 = vld [vmem:[#allocation2 + $0x2e9] sm:$0xff]
    %v390 = vld [vmem:[#allocation2 + $0x2f1] sm:$0xff]
    %v391 = vld [vmem:[#allocation2 + $0x301] sm:$0xff]
    %v392 = vld [vmem:[#allocation2 + $0x309] sm:$0xff]
    %v393 = vld [vmem:[#allocation2 + $0x319] sm:$0xff]
    %v394 = vld [vmem:[#allocation2 + $0x321] sm:$0xff]
    %s395 = scalar_lea.vmem %s1, 4
    %v396 = vld [vmem:[%s395] sm:$0x7]
    %v398 = vsel %vm91, %v331, 0
    %v401 = vsel %vm91, %v332, 0
    %v404 = vsel %vm91, %v333, 0
    %v407 = vsel %vm91, %v334, 0
    %v410 = vsel %vm91, %v335, 0
    %v413 = vsel %vm91, %v336, 0
    %v416 = vsel %vm91, %v337, 0
    %v419 = vsel %vm91, %v338, 0
    %v422 = vsel %vm91, %v339, 0
    %v425 = vsel %vm91, %v340, 0
    %v428 = vsel %vm91, %v341, 0
    %v431 = vsel %vm91, %v342, 0
    %v434 = vsel %vm91, %v343, 0
    %v437 = vsel %vm91, %v344, 0
    %v440 = vsel %vm91, %v345, 0
    %v443 = vsel %vm91, %v346, 0
    %v446 = vsel %vm91, %v347, 0
    %v449 = vsel %vm91, %v348, 0
    %v452 = vsel %vm91, %v349, 0
    %v455 = vsel %vm91, %v350, 0
    %v458 = vsel %vm91, %v351, 0
    %v461 = vsel %vm91, %v352, 0
    %v464 = vsel %vm91, %v353, 0
    %v467 = vsel %vm91, %v354, 0
    %v470 = vsel %vm91, %v355, 0
    %v473 = vsel %vm91, %v356, 0
    %v476 = vsel %vm91, %v357, 0
    %v479 = vsel %vm91, %v358, 0
    %v482 = vsel %vm91, %v359, 0
    %v485 = vsel %vm91, %v360, 0
    %v488 = vsel %vm91, %v361, 0
    %v491 = vsel %vm91, %v362, 0
    %v494 = vsel %vm91, %v363, 0
    %v497 = vsel %vm91, %v364, 0
    %v500 = vsel %vm91, %v365, 0
    %v503 = vsel %vm91, %v366, 0
    %v506 = vsel %vm91, %v367, 0
    %v509 = vsel %vm91, %v368, 0
    %v512 = vsel %vm91, %v369, 0
    %v515 = vsel %vm91, %v370, 0
    %v518 = vsel %vm91, %v371, 0
    %v521 = vsel %vm91, %v372, 0
    %v524 = vsel %vm91, %v373, 0
    %v527 = vsel %vm91, %v374, 0
    %v530 = vsel %vm91, %v375, 0
    %v533 = vsel %vm91, %v376, 0
    %v536 = vsel %vm91, %v377, 0
    %v539 = vsel %vm91, %v378, 0
    %v542 = vsel %vm91, %v379, 0
    %v545 = vsel %vm91, %v380, 0
    %v548 = vsel %vm91, %v381, 0
    %v551 = vsel %vm91, %v382, 0
    %v554 = vsel %vm91, %v383, 0
    %v557 = vsel %vm91, %v384, 0
    %v560 = vsel %vm91, %v385, 0
    %v563 = vsel %vm91, %v386, 0
    %v566 = vsel %vm91, %v387, 0
    %v569 = vsel %vm91, %v388, 0
    %v572 = vsel %vm91, %v389, 0
    %v575 = vsel %vm91, %v390, 0
    %v578 = vsel %vm91, %v391, 0
    %v581 = vsel %vm91, %v392, 0
    %v584 = vsel %vm91, %v393, 0
    %v587 = vsel %vm91, %v394, 0
    %vm589 = vcmask 1042432
    %v591 = vsel %vm589, %v396, 0
    %593 = vmatprep.subr.mxu0 0.0
    %594 = vmatpush1.msra.mxu0 %v591
    %595 = vmatprep.subr.mxu0 0.0
    %596 = vmatpush1.msra.mxu0 0.0
    %597 = vmatprep.subr.mxu0 0.0
    %598 = vmatpush1.msra.mxu0 0.0
    %599 = vmatprep.subr.mxu0 0.0
    %600 = vmatpush1.msra.mxu0 0.0
    %601 = vmatprep.subr.mxu0 0.0
    %602 = vmatpush1.msra.mxu0 0.0
    %603 = vmatprep.subr.mxu0 0.0
    %604 = vmatpush1.msra.mxu0 0.0
    %605 = vmatprep.subr.mxu0 0.0
    %606 = vmatpush1.msra.mxu0 0.0
    %607 = vmatprep.subr.mxu0 0.0
    %608 = vmatpush1.msra.mxu0 0.0
    %609 = vmatprep.subr.mxu0 0.0
    %610 = vmatpush1.msra.mxu0 0.0
    %611 = vmatprep.subr.mxu0 0.0
    %612 = vmatpush1.msra.mxu0 0.0
    %613 = vmatprep.subr.mxu0 0.0
    %614 = vmatpush1.msra.mxu0 0.0
    %615 = vmatprep.subr.mxu0 0.0
    %616 = vmatpush1.msra.mxu0 0.0
    %617 = vmatprep.subr.mxu0 0.0
    %618 = vmatpush1.msra.mxu0 0.0
    %619 = vmatprep.subr.mxu0 0.0
    %620 = vmatpush1.msra.mxu0 0.0
    %621 = vmatprep.subr.mxu0 0.0
    %622 = vmatpush1.msra.mxu0 0.0
    %623 = vmatprep.subr.mxu0 0.0
    %624 = vmatpush1.msra.mxu0 0.0
    %625 = vmatprep.subr.mxu0 0.0
    %626 = vmatpush1.msra.mxu0 0.0
    %627 = vmatprep.subr.mxu0 0.0
    %628 = vmatpush1.msra.mxu0 0.0
    %629 = vmatprep.subr.mxu0 0.0
    %630 = vmatpush1.msra.mxu0 0.0
    %631 = vmatprep.subr.mxu0 0.0
    %632 = vmatpush1.msra.mxu0 0.0
    %633 = vmatprep.subr.mxu0 0.0
    %634 = vmatpush1.msra.mxu0 0.0
    %635 = vmatprep.subr.mxu0 0.0
    %636 = vmatpush1.msra.mxu0 0.0
    %637 = vmatprep.subr.mxu0 0.0
    %638 = vmatpush1.msra.mxu0 0.0
    %639 = vmatprep.subr.mxu0 0.0
    %640 = vmatpush1.msra.mxu0 0.0
    %641 = vmatprep.subr.mxu0 0.0
    %642 = vmatpush1.msra.mxu0 0.0
    %643 = vmatprep.subr.mxu0 0.0
    %644 = vmatpush1.msra.mxu0 0.0
    %645 = vmatprep.subr.mxu0 0.0
    %646 = vmatpush1.msra.mxu0 0.0
    %647 = vmatprep.subr.mxu0 0.0
    %648 = vmatpush1.msra.mxu0 0.0
    %649 = vmatprep.subr.mxu0 0.0
    %650 = vmatpush1.msra.mxu0 0.0
    %651 = vmatprep.subr.mxu0 0.0
    %652 = vmatpush1.msra.mxu0 0.0
    %653 = vmatprep.subr.mxu0 0.0
    %654 = vmatpush1.msra.mxu0 0.0
    %655 = vmatprep.subr.mxu0 0.0
    %656 = vmatpush1.msra.mxu0 0.0
    %657 = vmatprep.mubr.f32.mxu0 0.0
    %658 = vmatmul.mubr.f32.gmra.mrb[0].mxu0 %v398
    %v659 = vpop.f32.mrb[0].mxu0
    %v660 = vadd.f32 0.0, %v659
    %v661 = vpop.f32.mrb[0].mxu0
    %662 = vmatprep.mubr.f32.mxu0 0.0
    %663 = vmatmul.mubr.f32.gmra.mrb[0].mxu0 %v401
    %v664 = vpop.f32.mrb[0].mxu0
    %v665 = vadd.f32 0.0, %v664
    %v666 = vpop.f32.mrb[0].mxu0
    %667 = vmatprep.mubr.f32.mxu0 0.0
    %668 = vmatmul.mubr.f32.gmra.mrb[0].mxu0 %v404
    %v669 = vpop.f32.mrb[0].mxu0
    %v670 = vadd.f32 0.0, %v669
    %v671 = vpop.f32.mrb[0].mxu0
    %672 = vmatprep.mubr.f32.mxu0 0.0
    %673 = vmatmul.mubr.f32.gmra.mrb[0].mxu0 %v407
    %v674 = vpop.f32.mrb[0].mxu0
    %v675 = vadd.f32 0.0, %v674
    %v676 = vpop.f32.mrb[0].mxu0
    %677 = vmatprep.mubr.f32.mxu0 0.0
    %678 = vmatmul.mubr.f32.gmra.mrb[0].mxu0 %v410
    %v679 = vpop.f32.mrb[0].mxu0
    %v680 = vadd.f32 0.0, %v679
    %v681 = vpop.f32.mrb[0].mxu0
    %682 = vmatprep.mubr.f32.mxu0 0.0
    %683 = vmatmul.mubr.f32.gmra.mrb[0].mxu0 %v413
    %v684 = vpop.f32.mrb[0].mxu0
    %v685 = vadd.f32 0.0, %v684
    %v686 = vpop.f32.mrb[0].mxu0
    %687 = vmatprep.mubr.f32.mxu0 0.0
    %688 = vmatmul.mubr.f32.gmra.mrb[0].mxu0 %v416
    %v689 = vpop.f32.mrb[0].mxu0
    %v690 = vadd.f32 0.0, %v689
    %v691 = vpop.f32.mrb[0].mxu0
    %692 = vmatprep.mubr.f32.mxu0 0.0
    %693 = vmatmul.mubr.f32.gmra.mrb[0].mxu0 %v419
    %v694 = vpop.f32.mrb[0].mxu0
    %v695 = vadd.f32 0.0, %v694
    %v696 = vpop.f32.mrb[0].mxu0
    %697 = vmatprep.mubr.f32.mxu0 0.0
    %698 = vmatmul.mubr.f32.gmra.mrb[0].mxu0 %v422
    %v699 = vpop.f32.mrb[0].mxu0
    %v700 = vadd.f32 0.0, %v699
    %v701 = vpop.f32.mrb[0].mxu0
    %702 = vmatprep.mubr.f32.mxu0 0.0
    %703 = vmatmul.mubr.f32.gmra.mrb[0].mxu0 %v425
    %v704 = vpop.f32.mrb[0].mxu0
    %v705 = vadd.f32 0.0, %v704
    %v706 = vpop.f32.mrb[0].mxu0
    %707 = vmatprep.mubr.f32.mxu0 0.0
    %708 = vmatmul.mubr.f32.gmra.mrb[0].mxu0 %v428
    %v709 = vpop.f32.mrb[0].mxu0
    %v710 = vadd.f32 0.0, %v709
    %v711 = vpop.f32.mrb[0].mxu0
    %712 = vmatprep.mubr.f32.mxu0 0.0
    %713 = vmatmul.mubr.f32.gmra.mrb[0].mxu0 %v431
    %v714 = vpop.f32.mrb[0].mxu0
    %v715 = vadd.f32 0.0, %v714
    %v716 = vpop.f32.mrb[0].mxu0
    %717 = vmatprep.mubr.f32.mxu0 0.0
    %718 = vmatmul.mubr.f32.gmra.mrb[0].mxu0 %v434
    %v719 = vpop.f32.mrb[0].mxu0
    %v720 = vadd.f32 0.0, %v719
    %v721 = vpop.f32.mrb[0].mxu0
    %722 = vmatprep.mubr.f32.mxu0 0.0
    %723 = vmatmul.mubr.f32.gmra.mrb[0].mxu0 %v437
    %v724 = vpop.f32.mrb[0].mxu0
    %v725 = vadd.f32 0.0, %v724
    %v726 = vpop.f32.mrb[0].mxu0
    %727 = vmatprep.mubr.f32.mxu0 0.0
    %728 = vmatmul.mubr.f32.gmra.mrb[0].mxu0 %v440
    %v729 = vpop.f32.mrb[0].mxu0
    %v730 = vadd.f32 0.0, %v729
    %v731 = vpop.f32.mrb[0].mxu0
    %732 = vmatprep.mubr.f32.mxu0 0.0
    %733 = vmatmul.mubr.f32.gmra.mrb[0].mxu0 %v443
    %v734 = vpop.f32.mrb[0].mxu0
    %v735 = vadd.f32 0.0, %v734
    %v736 = vpop.f32.mrb[0].mxu0
    %737 = vmatprep.mubr.f32.mxu0 0.0
    %738 = vmatmul.mubr.f32.gmra.mrb[0].mxu0 %v446
    %v739 = vpop.f32.mrb[0].mxu0
    %v740 = vadd.f32 0.0, %v739
    %v741 = vpop.f32.mrb[0].mxu0
    %742 = vmatprep.mubr.f32.mxu0 0.0
    %743 = vmatmul.mubr.f32.gmra.mrb[0].mxu0 %v449
    %v744 = vpop.f32.mrb[0].mxu0
    %v745 = vadd.f32 0.0, %v744
    %v746 = vpop.f32.mrb[0].mxu0
    %747 = vmatprep.mubr.f32.mxu0 0.0
    %748 = vmatmul.mubr.f32.gmra.mrb[0].mxu0 %v452
    %v749 = vpop.f32.mrb[0].mxu0
    %v750 = vadd.f32 0.0, %v749
    %v751 = vpop.f32.mrb[0].mxu0
    %752 = vmatprep.mubr.f32.mxu0 0.0
    %753 = vmatmul.mubr.f32.gmra.mrb[0].mxu0 %v455
    %v754 = vpop.f32.mrb[0].mxu0
    %v755 = vadd.f32 0.0, %v754
    %v756 = vpop.f32.mrb[0].mxu0
    %757 = vmatprep.mubr.f32.mxu0 0.0
    %758 = vmatmul.mubr.f32.gmra.mrb[0].mxu0 %v458
    %v759 = vpop.f32.mrb[0].mxu0
    %v760 = vadd.f32 0.0, %v759
    %v761 = vpop.f32.mrb[0].mxu0
    %762 = vmatprep.mubr.f32.mxu0 0.0
    %763 = vmatmul.mubr.f32.gmra.mrb[0].mxu0 %v461
    %v764 = vpop.f32.mrb[0].mxu0
    %v765 = vadd.f32 0.0, %v764
    %v766 = vpop.f32.mrb[0].mxu0
    %767 = vmatprep.mubr.f32.mxu0 0.0
    %768 = vmatmul.mubr.f32.gmra.mrb[0].mxu0 %v464
    %v769 = vpop.f32.mrb[0].mxu0
    %v770 = vadd.f32 0.0, %v769
    %v771 = vpop.f32.mrb[0].mxu0
    %772 = vmatprep.mubr.f32.mxu0 0.0
    %773 = vmatmul.mubr.f32.gmra.mrb[0].mxu0 %v467
    %v774 = vpop.f32.mrb[0].mxu0
    %v775 = vadd.f32 0.0, %v774
    %v776 = vpop.f32.mrb[0].mxu0
    %777 = vmatprep.mubr.f32.mxu0 0.0
    %778 = vmatmul.mubr.f32.gmra.mrb[0].mxu0 %v470
    %v779 = vpop.f32.mrb[0].mxu0
    %v780 = vadd.f32 0.0, %v779
    %v781 = vpop.f32.mrb[0].mxu0
    %782 = vmatprep.mubr.f32.mxu0 0.0
    %783 = vmatmul.mubr.f32.gmra.mrb[0].mxu0 %v473
    %v784 = vpop.f32.mrb[0].mxu0
    %v785 = vadd.f32 0.0, %v784
    %v786 = vpop.f32.mrb[0].mxu0
    %787 = vmatprep.mubr.f32.mxu0 0.0
    %788 = vmatmul.mubr.f32.gmra.mrb[0].mxu0 %v476
    %v789 = vpop.f32.mrb[0].mxu0
    %v790 = vadd.f32 0.0, %v789
    %v791 = vpop.f32.mrb[0].mxu0
    %792 = vmatprep.mubr.f32.mxu0 0.0
    %793 = vmatmul.mubr.f32.gmra.mrb[0].mxu0 %v479
    %v794 = vpop.f32.mrb[0].mxu0
    %v795 = vadd.f32 0.0, %v794
    %v796 = vpop.f32.mrb[0].mxu0
    %797 = vmatprep.mubr.f32.mxu0 0.0
    %798 = vmatmul.mubr.f32.gmra.mrb[0].mxu0 %v482
    %v799 = vpop.f32.mrb[0].mxu0
    %v800 = vadd.f32 0.0, %v799
    %v801 = vpop.f32.mrb[0].mxu0
    %802 = vmatprep.mubr.f32.mxu0 0.0
    %803 = vmatmul.mubr.f32.gmra.mrb[0].mxu0 %v485
    %v804 = vpop.f32.mrb[0].mxu0
    %v805 = vadd.f32 0.0, %v804
    %v806 = vpop.f32.mrb[0].mxu0
    %807 = vmatprep.mubr.f32.mxu0 0.0
    %808 = vmatmul.mubr.f32.gmra.mrb[0].mxu0 %v488
    %v809 = vpop.f32.mrb[0].mxu0
    %v810 = vadd.f32 0.0, %v809
    %v811 = vpop.f32.mrb[0].mxu0
    %812 = vmatprep.mubr.f32.mxu0 0.0
    %813 = vmatmul.mubr.f32.gmra.mrb[0].mxu0 %v491
    %v814 = vpop.f32.mrb[0].mxu0
    %v815 = vadd.f32 0.0, %v814
    %v816 = vpop.f32.mrb[0].mxu0
    %817 = vmatprep.mubr.f32.mxu0 0.0
    %818 = vmatmul.mubr.f32.gmra.mrb[0].mxu0 %v494
    %v819 = vpop.f32.mrb[0].mxu0
    %v820 = vadd.f32 0.0, %v819
    %v821 = vpop.f32.mrb[0].mxu0
    %822 = vmatprep.mubr.f32.mxu0 0.0
    %823 = vmatmul.mubr.f32.gmra.mrb[0].mxu0 %v497
    %v824 = vpop.f32.mrb[0].mxu0
    %v825 = vadd.f32 0.0, %v824
    %v826 = vpop.f32.mrb[0].mxu0
    %827 = vmatprep.mubr.f32.mxu0 0.0
    %828 = vmatmul.mubr.f32.gmra.mrb[0].mxu0 %v500
    %v829 = vpop.f32.mrb[0].mxu0
    %v830 = vadd.f32 0.0, %v829
    %v831 = vpop.f32.mrb[0].mxu0
    %832 = vmatprep.mubr.f32.mxu0 0.0
    %833 = vmatmul.mubr.f32.gmra.mrb[0].mxu0 %v503
    %v834 = vpop.f32.mrb[0].mxu0
    %v835 = vadd.f32 0.0, %v834
    %v836 = vpop.f32.mrb[0].mxu0
    %837 = vmatprep.mubr.f32.mxu0 0.0
    %838 = vmatmul.mubr.f32.gmra.mrb[0].mxu0 %v506
    %v839 = vpop.f32.mrb[0].mxu0
    %v840 = vadd.f32 0.0, %v839
    %v841 = vpop.f32.mrb[0].mxu0
    %842 = vmatprep.mubr.f32.mxu0 0.0
    %843 = vmatmul.mubr.f32.gmra.mrb[0].mxu0 %v509
    %v844 = vpop.f32.mrb[0].mxu0
    %v845 = vadd.f32 0.0, %v844
    %v846 = vpop.f32.mrb[0].mxu0
    %847 = vmatprep.mubr.f32.mxu0 0.0
    %848 = vmatmul.mubr.f32.gmra.mrb[0].mxu0 %v512
    %v849 = vpop.f32.mrb[0].mxu0
    %v850 = vadd.f32 0.0, %v849
    %v851 = vpop.f32.mrb[0].mxu0
    %852 = vmatprep.mubr.f32.mxu0 0.0
    %853 = vmatmul.mubr.f32.gmra.mrb[0].mxu0 %v515
    %v854 = vpop.f32.mrb[0].mxu0
    %v855 = vadd.f32 0.0, %v854
    %v856 = vpop.f32.mrb[0].mxu0
    %857 = vmatprep.mubr.f32.mxu0 0.0
    %858 = vmatmul.mubr.f32.gmra.mrb[0].mxu0 %v518
    %v859 = vpop.f32.mrb[0].mxu0
    %v860 = vadd.f32 0.0, %v859
    %v861 = vpop.f32.mrb[0].mxu0
    %862 = vmatprep.mubr.f32.mxu0 0.0
    %863 = vmatmul.mubr.f32.gmra.mrb[0].mxu0 %v521
    %v864 = vpop.f32.mrb[0].mxu0
    %v865 = vadd.f32 0.0, %v864
    %v866 = vpop.f32.mrb[0].mxu0
    %867 = vmatprep.mubr.f32.mxu0 0.0
    %868 = vmatmul.mubr.f32.gmra.mrb[0].mxu0 %v524
    %v869 = vpop.f32.mrb[0].mxu0
    %v870 = vadd.f32 0.0, %v869
    %v871 = vpop.f32.mrb[0].mxu0
    %872 = vmatprep.mubr.f32.mxu0 0.0
    %873 = vmatmul.mubr.f32.gmra.mrb[0].mxu0 %v527
    %v874 = vpop.f32.mrb[0].mxu0
    %v875 = vadd.f32 0.0, %v874
    %v876 = vpop.f32.mrb[0].mxu0
    %877 = vmatprep.mubr.f32.mxu0 0.0
    %878 = vmatmul.mubr.f32.gmra.mrb[0].mxu0 %v530
    %v879 = vpop.f32.mrb[0].mxu0
    %v880 = vadd.f32 0.0, %v879
    %v881 = vpop.f32.mrb[0].mxu0
    %882 = vmatprep.mubr.f32.mxu0 0.0
    %883 = vmatmul.mubr.f32.gmra.mrb[0].mxu0 %v533
    %v884 = vpop.f32.mrb[0].mxu0
    %v885 = vadd.f32 0.0, %v884
    %v886 = vpop.f32.mrb[0].mxu0
    %887 = vmatprep.mubr.f32.mxu0 0.0
    %888 = vmatmul.mubr.f32.gmra.mrb[0].mxu0 %v536
    %v889 = vpop.f32.mrb[0].mxu0
    %v890 = vadd.f32 0.0, %v889
    %v891 = vpop.f32.mrb[0].mxu0
    %892 = vmatprep.mubr.f32.mxu0 0.0
    %893 = vmatmul.mubr.f32.gmra.mrb[0].mxu0 %v539
    %v894 = vpop.f32.mrb[0].mxu0
    %v895 = vadd.f32 0.0, %v894
    %v896 = vpop.f32.mrb[0].mxu0
    %897 = vmatprep.mubr.f32.mxu0 0.0
    %898 = vmatmul.mubr.f32.gmra.mrb[0].mxu0 %v542
    %v899 = vpop.f32.mrb[0].mxu0
    %v900 = vadd.f32 0.0, %v899
    %v901 = vpop.f32.mrb[0].mxu0
    %902 = vmatprep.mubr.f32.mxu0 0.0
    %903 = vmatmul.mubr.f32.gmra.mrb[0].mxu0 %v545
    %v904 = vpop.f32.mrb[0].mxu0
    %v905 = vadd.f32 0.0, %v904
    %v906 = vpop.f32.mrb[0].mxu0
    %907 = vmatprep.mubr.f32.mxu0 0.0
    %908 = vmatmul.mubr.f32.gmra.mrb[0].mxu0 %v548
    %v909 = vpop.f32.mrb[0].mxu0
    %v910 = vadd.f32 0.0, %v909
    %v911 = vpop.f32.mrb[0].mxu0
    %912 = vmatprep.mubr.f32.mxu0 0.0
    %913 = vmatmul.mubr.f32.gmra.mrb[0].mxu0 %v551
    %v914 = vpop.f32.mrb[0].mxu0
    %v915 = vadd.f32 0.0, %v914
    %v916 = vpop.f32.mrb[0].mxu0
    %917 = vmatprep.mubr.f32.mxu0 0.0
    %918 = vmatmul.mubr.f32.gmra.mrb[0].mxu0 %v554
    %v919 = vpop.f32.mrb[0].mxu0
    %v920 = vadd.f32 0.0, %v919
    %v921 = vpop.f32.mrb[0].mxu0
    %922 = vmatprep.mubr.f32.mxu0 0.0
    %923 = vmatmul.mubr.f32.gmra.mrb[0].mxu0 %v557
    %v924 = vpop.f32.mrb[0].mxu0
    %v925 = vadd.f32 0.0, %v924
    %v926 = vpop.f32.mrb[0].mxu0
    %927 = vmatprep.mubr.f32.mxu0 0.0
    %928 = vmatmul.mubr.f32.gmra.mrb[0].mxu0 %v560
    %v929 = vpop.f32.mrb[0].mxu0
    %v930 = vadd.f32 0.0, %v929
    %v931 = vpop.f32.mrb[0].mxu0
    %932 = vmatprep.mubr.f32.mxu0 0.0
    %933 = vmatmul.mubr.f32.gmra.mrb[0].mxu0 %v563
    %v934 = vpop.f32.mrb[0].mxu0
    %v935 = vadd.f32 0.0, %v934
    %v936 = vpop.f32.mrb[0].mxu0
    %937 = vmatprep.mubr.f32.mxu0 0.0
    %938 = vmatmul.mubr.f32.gmra.mrb[0].mxu0 %v566
    %v939 = vpop.f32.mrb[0].mxu0
    %v940 = vadd.f32 0.0, %v939
    %v941 = vpop.f32.mrb[0].mxu0
    %942 = vmatprep.mubr.f32.mxu0 0.0
    %943 = vmatmul.mubr.f32.gmra.mrb[0].mxu0 %v569
    %v944 = vpop.f32.mrb[0].mxu0
    %v945 = vadd.f32 0.0, %v944
    %v946 = vpop.f32.mrb[0].mxu0
    %947 = vmatprep.mubr.f32.mxu0 0.0
    %948 = vmatmul.mubr.f32.gmra.mrb[0].mxu0 %v572
    %v949 = vpop.f32.mrb[0].mxu0
    %v950 = vadd.f32 0.0, %v949
    %v951 = vpop.f32.mrb[0].mxu0
    %952 = vmatprep.mubr.f32.mxu0 0.0
    %953 = vmatmul.mubr.f32.gmra.mrb[0].mxu0 %v575
    %v954 = vpop.f32.mrb[0].mxu0
    %v955 = vadd.f32 0.0, %v954
    %v956 = vpop.f32.mrb[0].mxu0
    %957 = vmatprep.mubr.f32.mxu0 0.0
    %958 = vmatmul.mubr.f32.gmra.mrb[0].mxu0 %v578
    %v959 = vpop.f32.mrb[0].mxu0
    %v960 = vadd.f32 0.0, %v959
    %v961 = vpop.f32.mrb[0].mxu0
    %962 = vmatprep.mubr.f32.mxu0 0.0
    %963 = vmatmul.mubr.f32.gmra.mrb[0].mxu0 %v581
    %v964 = vpop.f32.mrb[0].mxu0
    %v965 = vadd.f32 0.0, %v964
    %v966 = vpop.f32.mrb[0].mxu0
    %967 = vmatprep.mubr.f32.mxu0 0.0
    %968 = vmatmul.mubr.f32.gmra.mrb[0].mxu0 %v584
    %v969 = vpop.f32.mrb[0].mxu0
    %v970 = vadd.f32 0.0, %v969
    %v971 = vpop.f32.mrb[0].mxu0
    %972 = vmatprep.mubr.f32.mxu0 0.0
    %973 = vmatmul.mubr.f32.gmra.mrb[0].mxu0 %v587
    %v974 = vpop.f32.mrb[0].mxu0
    %v975 = vadd.f32 0.0, %v974
    %v976 = vpop.f32.mrb[0].mxu0
    %977 = vdwg.mxu0
    %v979 = vsel %vm91, %v266, 0
    %v982 = vsel %vm91, %v267, 0
    %v985 = vsel %vm91, %v268, 0
    %v988 = vsel %vm91, %v269, 0
    %v991 = vsel %vm91, %v270, 0
    %v994 = vsel %vm91, %v271, 0
    %v997 = vsel %vm91, %v272, 0
    %v1000 = vsel %vm91, %v273, 0
    %v1003 = vsel %vm91, %v274, 0
    %v1006 = vsel %vm91, %v275, 0
    %v1009 = vsel %vm91, %v276, 0
    %v1012 = vsel %vm91, %v277, 0
    %v1015 = vsel %vm91, %v278, 0
    %v1018 = vsel %vm91, %v279, 0
    %v1021 = vsel %vm91, %v280, 0
    %v1024 = vsel %vm91, %v281, 0
    %v1027 = vsel %vm91, %v282, 0
    %v1030 = vsel %vm91, %v283, 0
    %v1033 = vsel %vm91, %v284, 0
    %v1036 = vsel %vm91, %v285, 0
    %v1039 = vsel %vm91, %v286, 0
    %v1042 = vsel %vm91, %v287, 0
    %v1045 = vsel %vm91, %v288, 0
    %v1048 = vsel %vm91, %v289, 0
    %v1051 = vsel %vm91, %v290, 0
    %v1054 = vsel %vm91, %v291, 0
    %v1057 = vsel %vm91, %v292, 0
    %v1060 = vsel %vm91, %v293, 0
    %v1063 = vsel %vm91, %v294, 0
    %v1066 = vsel %vm91, %v295, 0
    %v1069 = vsel %vm91, %v296, 0
    %v1072 = vsel %vm91, %v297, 0
    %v1075 = vsel %vm91, %v298, 0
    %v1078 = vsel %vm91, %v299, 0
    %v1081 = vsel %vm91, %v300, 0
    %v1084 = vsel %vm91, %v301, 0
    %v1087 = vsel %vm91, %v302, 0
    %v1090 = vsel %vm91, %v303, 0
    %v1093 = vsel %vm91, %v304, 0
    %v1096 = vsel %vm91, %v305, 0
    %v1099 = vsel %vm91, %v306, 0
    %v1102 = vsel %vm91, %v307, 0
    %v1105 = vsel %vm91, %v308, 0
    %v1108 = vsel %vm91, %v309, 0
    %v1111 = vsel %vm91, %v310, 0
    %v1114 = vsel %vm91, %v311, 0
    %v1117 = vsel %vm91, %v312, 0
    %v1120 = vsel %vm91, %v313, 0
    %v1123 = vsel %vm91, %v314, 0
    %v1126 = vsel %vm91, %v315, 0
    %v1129 = vsel %vm91, %v316, 0
    %v1132 = vsel %vm91, %v317, 0
    %v1135 = vsel %vm91, %v318, 0
    %v1138 = vsel %vm91, %v319, 0
    %v1141 = vsel %vm91, %v320, 0
    %v1144 = vsel %vm91, %v321, 0
    %v1147 = vsel %vm91, %v322, 0
    %v1150 = vsel %vm91, %v323, 0
    %v1153 = vsel %vm91, %v324, 0
    %v1156 = vsel %vm91, %v325, 0
    %v1159 = vsel %vm91, %v326, 0
    %v1162 = vsel %vm91, %v327, 0
    %v1165 = vsel %vm91, %v328, 0
    %v1168 = vsel %vm91, %v329, 0
    %v1171 = vsel %vm589, %v330, 0
    %1173 = vmatprep.subr.mxu0 0.0
    %1174 = vmatpush1.msra.mxu0 %v1171
    %1175 = vmatprep.subr.mxu0 0.0
    %1176 = vmatpush1.msra.mxu0 0.0
    %1177 = vmatprep.subr.mxu0 0.0
    %1178 = vmatpush1.msra.mxu0 0.0
    %1179 = vmatprep.subr.mxu0 0.0
    %1180 = vmatpush1.msra.mxu0 0.0
    %1181 = vmatprep.subr.mxu0 0.0
    %1182 = vmatpush1.msra.mxu0 0.0
    %1183 = vmatprep.subr.mxu0 0.0
    %1184 = vmatpush1.msra.mxu0 0.0
    %1185 = vmatprep.subr.mxu0 0.0
    %1186 = vmatpush1.msra.mxu0 0.0
    %1187 = vmatprep.subr.mxu0 0.0
    %1188 = vmatpush1.msra.mxu0 0.0
    %1189 = vmatprep.subr.mxu0 0.0
    %1190 = vmatpush1.msra.mxu0 0.0
    %1191 = vmatprep.subr.mxu0 0.0
    %1192 = vmatpush1.msra.mxu0 0.0
    %1193 = vmatprep.subr.mxu0 0.0
    %1194 = vmatpush1.msra.mxu0 0.0
    %1195 = vmatprep.subr.mxu0 0.0
    %1196 = vmatpush1.msra.mxu0 0.0
    %1197 = vmatprep.subr.mxu0 0.0
    %1198 = vmatpush1.msra.mxu0 0.0
    %1199 = vmatprep.subr.mxu0 0.0
    %1200 = vmatpush1.msra.mxu0 0.0
    %1201 = vmatprep.subr.mxu0 0.0
    %1202 = vmatpush1.msra.mxu0 0.0
    %1203 = vmatprep.subr.mxu0 0.0
    %1204 = vmatpush1.msra.mxu0 0.0
    %1205 = vmatprep.subr.mxu0 0.0
    %1206 = vmatpush1.msra.mxu0 0.0
    %1207 = vmatprep.subr.mxu0 0.0
    %1208 = vmatpush1.msra.mxu0 0.0
    %1209 = vmatprep.subr.mxu0 0.0
    %1210 = vmatpush1.msra.mxu0 0.0
    %1211 = vmatprep.subr.mxu0 0.0
    %1212 = vmatpush1.msra.mxu0 0.0
    %1213 = vmatprep.subr.mxu0 0.0
    %1214 = vmatpush1.msra.mxu0 0.0
    %1215 = vmatprep.subr.mxu0 0.0
    %1216 = vmatpush1.msra.mxu0 0.0
    %1217 = vmatprep.subr.mxu0 0.0
    %1218 = vmatpush1.msra.mxu0 0.0
    %1219 = vmatprep.subr.mxu0 0.0
    %1220 = vmatpush1.msra.mxu0 0.0
    %1221 = vmatprep.subr.mxu0 0.0
    %1222 = vmatpush1.msra.mxu0 0.0
    %1223 = vmatprep.subr.mxu0 0.0
    %1224 = vmatpush1.msra.mxu0 0.0
    %1225 = vmatprep.subr.mxu0 0.0
    %1226 = vmatpush1.msra.mxu0 0.0
    %1227 = vmatprep.subr.mxu0 0.0
    %1228 = vmatpush1.msra.mxu0 0.0
    %1229 = vmatprep.subr.mxu0 0.0
    %1230 = vmatpush1.msra.mxu0 0.0
    %1231 = vmatprep.subr.mxu0 0.0
    %1232 = vmatpush1.msra.mxu0 0.0
    %1233 = vmatprep.subr.mxu0 0.0
    %1234 = vmatpush1.msra.mxu0 0.0
    %1235 = vmatprep.subr.mxu0 0.0
    %1236 = vmatpush1.msra.mxu0 0.0
    %1237 = vmatprep.mubr.f32.mxu0 0.0
    %1238 = vmatmul.mubr.f32.gmra.mrb[0].mxu0 %v979
    %v1239 = vpop.f32.mrb[0].mxu0
    %v1240 = vadd.f32 %v660, %v1239
    %v1241 = vpop.f32.mrb[0].mxu0
    %1242 = vmatprep.mubr.f32.mxu0 0.0
    %1243 = vmatmul.mubr.f32.gmra.mrb[0].mxu0 %v982
    %v1244 = vpop.f32.mrb[0].mxu0
    %v1245 = vadd.f32 %v665, %v1244
    %v1246 = vpop.f32.mrb[0].mxu0
    %1247 = vmatprep.mubr.f32.mxu0 0.0
    %1248 = vmatmul.mubr.f32.gmra.mrb[0].mxu0 %v985
    %v1249 = vpop.f32.mrb[0].mxu0
    %v1250 = vadd.f32 %v670, %v1249
    %v1251 = vpop.f32.mrb[0].mxu0
    %1252 = vmatprep.mubr.f32.mxu0 0.0
    %1253 = vmatmul.mubr.f32.gmra.mrb[0].mxu0 %v988
    %v1254 = vpop.f32.mrb[0].mxu0
    %v1255 = vadd.f32 %v675, %v1254
    %v1256 = vpop.f32.mrb[0].mxu0
    %1257 = vmatprep.mubr.f32.mxu0 0.0
    %1258 = vmatmul.mubr.f32.gmra.mrb[0].mxu0 %v991
    %v1259 = vpop.f32.mrb[0].mxu0
    %v1260 = vadd.f32 %v680, %v1259
    %v1261 = vpop.f32.mrb[0].mxu0
    %1262 = vmatprep.mubr.f32.mxu0 0.0
    %1263 = vmatmul.mubr.f32.gmra.mrb[0].mxu0 %v994
    %v1264 = vpop.f32.mrb[0].mxu0
    %v1265 = vadd.f32 %v685, %v1264
    %v1266 = vpop.f32.mrb[0].mxu0
    %1267 = vmatprep.mubr.f32.mxu0 0.0
    %1268 = vmatmul.mubr.f32.gmra.mrb[0].mxu0 %v997
    %v1269 = vpop.f32.mrb[0].mxu0
    %v1270 = vadd.f32 %v690, %v1269
    %v1271 = vpop.f32.mrb[0].mxu0
    %1272 = vmatprep.mubr.f32.mxu0 0.0
    %1273 = vmatmul.mubr.f32.gmra.mrb[0].mxu0 %v1000
    %v1274 = vpop.f32.mrb[0].mxu0
    %v1275 = vadd.f32 %v695, %v1274
    %v1276 = vpop.f32.mrb[0].mxu0
    %1277 = vmatprep.mubr.f32.mxu0 0.0
    %1278 = vmatmul.mubr.f32.gmra.mrb[0].mxu0 %v1003
    %v1279 = vpop.f32.mrb[0].mxu0
    %v1280 = vadd.f32 %v700, %v1279
    %v1281 = vpop.f32.mrb[0].mxu0
    %1282 = vmatprep.mubr.f32.mxu0 0.0
    %1283 = vmatmul.mubr.f32.gmra.mrb[0].mxu0 %v1006
    %v1284 = vpop.f32.mrb[0].mxu0
    %v1285 = vadd.f32 %v705, %v1284
    %v1286 = vpop.f32.mrb[0].mxu0
    %1287 = vmatprep.mubr.f32.mxu0 0.0
    %1288 = vmatmul.mubr.f32.gmra.mrb[0].mxu0 %v1009
    %v1289 = vpop.f32.mrb[0].mxu0
    %v1290 = vadd.f32 %v710, %v1289
    %v1291 = vpop.f32.mrb[0].mxu0
    %1292 = vmatprep.mubr.f32.mxu0 0.0
    %1293 = vmatmul.mubr.f32.gmra.mrb[0].mxu0 %v1012
    %v1294 = vpop.f32.mrb[0].mxu0
    %v1295 = vadd.f32 %v715, %v1294
    %v1296 = vpop.f32.mrb[0].mxu0
    %1297 = vmatprep.mubr.f32.mxu0 0.0
    %1298 = vmatmul.mubr.f32.gmra.mrb[0].mxu0 %v1015
    %v1299 = vpop.f32.mrb[0].mxu0
    %v1300 = vadd.f32 %v720, %v1299
    %v1301 = vpop.f32.mrb[0].mxu0
    %1302 = vmatprep.mubr.f32.mxu0 0.0
    %1303 = vmatmul.mubr.f32.gmra.mrb[0].mxu0 %v1018
    %v1304 = vpop.f32.mrb[0].mxu0
    %v1305 = vadd.f32 %v725, %v1304
    %v1306 = vpop.f32.mrb[0].mxu0
    %1307 = vmatprep.mubr.f32.mxu0 0.0
    %1308 = vmatmul.mubr.f32.gmra.mrb[0].mxu0 %v1021
    %v1309 = vpop.f32.mrb[0].mxu0
    %v1310 = vadd.f32 %v730, %v1309
    %v1311 = vpop.f32.mrb[0].mxu0
    %1312 = vmatprep.mubr.f32.mxu0 0.0
    %1313 = vmatmul.mubr.f32.gmra.mrb[0].mxu0 %v1024
    %v1314 = vpop.f32.mrb[0].mxu0
    %v1315 = vadd.f32 %v735, %v1314
    %v1316 = vpop.f32.mrb[0].mxu0
    %1317 = vmatprep.mubr.f32.mxu0 0.0
    %1318 = vmatmul.mubr.f32.gmra.mrb[0].mxu0 %v1027
    %v1319 = vpop.f32.mrb[0].mxu0
    %v1320 = vadd.f32 %v740, %v1319
    %v1321 = vpop.f32.mrb[0].mxu0
    %1322 = vmatprep.mubr.f32.mxu0 0.0
    %1323 = vmatmul.mubr.f32.gmra.mrb[0].mxu0 %v1030
    %v1324 = vpop.f32.mrb[0].mxu0
    %v1325 = vadd.f32 %v745, %v1324
    %v1326 = vpop.f32.mrb[0].mxu0
    %1327 = vmatprep.mubr.f32.mxu0 0.0
    %1328 = vmatmul.mubr.f32.gmra.mrb[0].mxu0 %v1033
    %v1329 = vpop.f32.mrb[0].mxu0
    %v1330 = vadd.f32 %v750, %v1329
    %v1331 = vpop.f32.mrb[0].mxu0
    %1332 = vmatprep.mubr.f32.mxu0 0.0
    %1333 = vmatmul.mubr.f32.gmra.mrb[0].mxu0 %v1036
    %v1334 = vpop.f32.mrb[0].mxu0
    %v1335 = vadd.f32 %v755, %v1334
    %v1336 = vpop.f32.mrb[0].mxu0
    %1337 = vmatprep.mubr.f32.mxu0 0.0
    %1338 = vmatmul.mubr.f32.gmra.mrb[0].mxu0 %v1039
    %v1339 = vpop.f32.mrb[0].mxu0
    %v1340 = vadd.f32 %v760, %v1339
    %v1341 = vpop.f32.mrb[0].mxu0
    %1342 = vmatprep.mubr.f32.mxu0 0.0
    %1343 = vmatmul.mubr.f32.gmra.mrb[0].mxu0 %v1042
    %v1344 = vpop.f32.mrb[0].mxu0
    %v1345 = vadd.f32 %v765, %v1344
    %v1346 = vpop.f32.mrb[0].mxu0
    %1347 = vmatprep.mubr.f32.mxu0 0.0
    %1348 = vmatmul.mubr.f32.gmra.mrb[0].mxu0 %v1045
    %v1349 = vpop.f32.mrb[0].mxu0
    %v1350 = vadd.f32 %v770, %v1349
    %v1351 = vpop.f32.mrb[0].mxu0
    %1352 = vmatprep.mubr.f32.mxu0 0.0
    %1353 = vmatmul.mubr.f32.gmra.mrb[0].mxu0 %v1048
    %v1354 = vpop.f32.mrb[0].mxu0
    %v1355 = vadd.f32 %v775, %v1354
    %v1356 = vpop.f32.mrb[0].mxu0
    %1357 = vmatprep.mubr.f32.mxu0 0.0
    %1358 = vmatmul.mubr.f32.gmra.mrb[0].mxu0 %v1051
    %v1359 = vpop.f32.mrb[0].mxu0
    %v1360 = vadd.f32 %v780, %v1359
    %v1361 = vpop.f32.mrb[0].mxu0
    %1362 = vmatprep.mubr.f32.mxu0 0.0
    %1363 = vmatmul.mubr.f32.gmra.mrb[0].mxu0 %v1054
    %v1364 = vpop.f32.mrb[0].mxu0
    %v1365 = vadd.f32 %v785, %v1364
    %v1366 = vpop.f32.mrb[0].mxu0
    %1367 = vmatprep.mubr.f32.mxu0 0.0
    %1368 = vmatmul.mubr.f32.gmra.mrb[0].mxu0 %v1057
    %v1369 = vpop.f32.mrb[0].mxu0
    %v1370 = vadd.f32 %v790, %v1369
    %v1371 = vpop.f32.mrb[0].mxu0
    %1372 = vmatprep.mubr.f32.mxu0 0.0
    %1373 = vmatmul.mubr.f32.gmra.mrb[0].mxu0 %v1060
    %v1374 = vpop.f32.mrb[0].mxu0
    %v1375 = vadd.f32 %v795, %v1374
    %v1376 = vpop.f32.mrb[0].mxu0
    %1377 = vmatprep.mubr.f32.mxu0 0.0
    %1378 = vmatmul.mubr.f32.gmra.mrb[0].mxu0 %v1063
    %v1379 = vpop.f32.mrb[0].mxu0
    %v1380 = vadd.f32 %v800, %v1379
    %v1381 = vpop.f32.mrb[0].mxu0
    %1382 = vmatprep.mubr.f32.mxu0 0.0
    %1383 = vmatmul.mubr.f32.gmra.mrb[0].mxu0 %v1066
    %v1384 = vpop.f32.mrb[0].mxu0
    %v1385 = vadd.f32 %v805, %v1384
    %v1386 = vpop.f32.mrb[0].mxu0
    %1387 = vmatprep.mubr.f32.mxu0 0.0
    %1388 = vmatmul.mubr.f32.gmra.mrb[0].mxu0 %v1069
    %v1389 = vpop.f32.mrb[0].mxu0
    %v1390 = vadd.f32 %v810, %v1389
    %v1391 = vpop.f32.mrb[0].mxu0
    %1392 = vmatprep.mubr.f32.mxu0 0.0
    %1393 = vmatmul.mubr.f32.gmra.mrb[0].mxu0 %v1072
    %v1394 = vpop.f32.mrb[0].mxu0
    %v1395 = vadd.f32 %v815, %v1394
    %v1396 = vpop.f32.mrb[0].mxu0
    %1397 = vmatprep.mubr.f32.mxu0 0.0
    %1398 = vmatmul.mubr.f32.gmra.mrb[0].mxu0 %v1075
    %v1399 = vpop.f32.mrb[0].mxu0
    %v1400 = vadd.f32 %v820, %v1399
    %v1401 = vpop.f32.mrb[0].mxu0
    %1402 = vmatprep.mubr.f32.mxu0 0.0
    %1403 = vmatmul.mubr.f32.gmra.mrb[0].mxu0 %v1078
    %v1404 = vpop.f32.mrb[0].mxu0
    %v1405 = vadd.f32 %v825, %v1404
    %v1406 = vpop.f32.mrb[0].mxu0
    %1407 = vmatprep.mubr.f32.mxu0 0.0
    %1408 = vmatmul.mubr.f32.gmra.mrb[0].mxu0 %v1081
    %v1409 = vpop.f32.mrb[0].mxu0
    %v1410 = vadd.f32 %v830, %v1409
    %v1411 = vpop.f32.mrb[0].mxu0
    %1412 = vmatprep.mubr.f32.mxu0 0.0
    %1413 = vmatmul.mubr.f32.gmra.mrb[0].mxu0 %v1084
    %v1414 = vpop.f32.mrb[0].mxu0
    %v1415 = vadd.f32 %v835, %v1414
    %v1416 = vpop.f32.mrb[0].mxu0
    %1417 = vmatprep.mubr.f32.mxu0 0.0
    %1418 = vmatmul.mubr.f32.gmra.mrb[0].mxu0 %v1087
    %v1419 = vpop.f32.mrb[0].mxu0
    %v1420 = vadd.f32 %v840, %v1419
    %v1421 = vpop.f32.mrb[0].mxu0
    %1422 = vmatprep.mubr.f32.mxu0 0.0
    %1423 = vmatmul.mubr.f32.gmra.mrb[0].mxu0 %v1090
    %v1424 = vpop.f32.mrb[0].mxu0
    %v1425 = vadd.f32 %v845, %v1424
    %v1426 = vpop.f32.mrb[0].mxu0
    %1427 = vmatprep.mubr.f32.mxu0 0.0
    %1428 = vmatmul.mubr.f32.gmra.mrb[0].mxu0 %v1093
    %v1429 = vpop.f32.mrb[0].mxu0
    %v1430 = vadd.f32 %v850, %v1429
    %v1431 = vpop.f32.mrb[0].mxu0
    %1432 = vmatprep.mubr.f32.mxu0 0.0
    %1433 = vmatmul.mubr.f32.gmra.mrb[0].mxu0 %v1096
    %v1434 = vpop.f32.mrb[0].mxu0
    %v1435 = vadd.f32 %v855, %v1434
    %v1436 = vpop.f32.mrb[0].mxu0
    %1437 = vmatprep.mubr.f32.mxu0 0.0
    %1438 = vmatmul.mubr.f32.gmra.mrb[0].mxu0 %v1099
    %v1439 = vpop.f32.mrb[0].mxu0
    %v1440 = vadd.f32 %v860, %v1439
    %v1441 = vpop.f32.mrb[0].mxu0
    %1442 = vmatprep.mubr.f32.mxu0 0.0
    %1443 = vmatmul.mubr.f32.gmra.mrb[0].mxu0 %v1102
    %v1444 = vpop.f32.mrb[0].mxu0
    %v1445 = vadd.f32 %v865, %v1444
    %v1446 = vpop.f32.mrb[0].mxu0
    %1447 = vmatprep.mubr.f32.mxu0 0.0
    %1448 = vmatmul.mubr.f32.gmra.mrb[0].mxu0 %v1105
    %v1449 = vpop.f32.mrb[0].mxu0
    %v1450 = vadd.f32 %v870, %v1449
    %v1451 = vpop.f32.mrb[0].mxu0
    %1452 = vmatprep.mubr.f32.mxu0 0.0
    %1453 = vmatmul.mubr.f32.gmra.mrb[0].mxu0 %v1108
    %v1454 = vpop.f32.mrb[0].mxu0
    %v1455 = vadd.f32 %v875, %v1454
    %v1456 = vpop.f32.mrb[0].mxu0
    %1457 = vmatprep.mubr.f32.mxu0 0.0
    %1458 = vmatmul.mubr.f32.gmra.mrb[0].mxu0 %v1111
    %v1459 = vpop.f32.mrb[0].mxu0
    %v1460 = vadd.f32 %v880, %v1459
    %v1461 = vpop.f32.mrb[0].mxu0
    %1462 = vmatprep.mubr.f32.mxu0 0.0
    %1463 = vmatmul.mubr.f32.gmra.mrb[0].mxu0 %v1114
    %v1464 = vpop.f32.mrb[0].mxu0
    %v1465 = vadd.f32 %v885, %v1464
    %v1466 = vpop.f32.mrb[0].mxu0
    %1467 = vmatprep.mubr.f32.mxu0 0.0
    %1468 = vmatmul.mubr.f32.gmra.mrb[0].mxu0 %v1117
    %v1469 = vpop.f32.mrb[0].mxu0
    %v1470 = vadd.f32 %v890, %v1469
    %v1471 = vpop.f32.mrb[0].mxu0
    %1472 = vmatprep.mubr.f32.mxu0 0.0
    %1473 = vmatmul.mubr.f32.gmra.mrb[0].mxu0 %v1120
    %v1474 = vpop.f32.mrb[0].mxu0
    %v1475 = vadd.f32 %v895, %v1474
    %v1476 = vpop.f32.mrb[0].mxu0
    %1477 = vmatprep.mubr.f32.mxu0 0.0
    %1478 = vmatmul.mubr.f32.gmra.mrb[0].mxu0 %v1123
    %v1479 = vpop.f32.mrb[0].mxu0
    %v1480 = vadd.f32 %v900, %v1479
    %v1481 = vpop.f32.mrb[0].mxu0
    %1482 = vmatprep.mubr.f32.mxu0 0.0
    %1483 = vmatmul.mubr.f32.gmra.mrb[0].mxu0 %v1126
    %v1484 = vpop.f32.mrb[0].mxu0
    %v1485 = vadd.f32 %v905, %v1484
    %v1486 = vpop.f32.mrb[0].mxu0
    %1487 = vmatprep.mubr.f32.mxu0 0.0
    %1488 = vmatmul.mubr.f32.gmra.mrb[0].mxu0 %v1129
    %v1489 = vpop.f32.mrb[0].mxu0
    %v1490 = vadd.f32 %v910, %v1489
    %v1491 = vpop.f32.mrb[0].mxu0
    %1492 = vmatprep.mubr.f32.mxu0 0.0
    %1493 = vmatmul.mubr.f32.gmra.mrb[0].mxu0 %v1132
    %v1494 = vpop.f32.mrb[0].mxu0
    %v1495 = vadd.f32 %v915, %v1494
    %v1496 = vpop.f32.mrb[0].mxu0
    %1497 = vmatprep.mubr.f32.mxu0 0.0
    %1498 = vmatmul.mubr.f32.gmra.mrb[0].mxu0 %v1135
    %v1499 = vpop.f32.mrb[0].mxu0
    %v1500 = vadd.f32 %v920, %v1499
    %v1501 = vpop.f32.mrb[0].mxu0
    %1502 = vmatprep.mubr.f32.mxu0 0.0
    %1503 = vmatmul.mubr.f32.gmra.mrb[0].mxu0 %v1138
    %v1504 = vpop.f32.mrb[0].mxu0
    %v1505 = vadd.f32 %v925, %v1504
    %v1506 = vpop.f32.mrb[0].mxu0
    %1507 = vmatprep.mubr.f32.mxu0 0.0
    %1508 = vmatmul.mubr.f32.gmra.mrb[0].mxu0 %v1141
    %v1509 = vpop.f32.mrb[0].mxu0
    %v1510 = vadd.f32 %v930, %v1509
    %v1511 = vpop.f32.mrb[0].mxu0
    %1512 = vmatprep.mubr.f32.mxu0 0.0
    %1513 = vmatmul.mubr.f32.gmra.mrb[0].mxu0 %v1144
    %v1514 = vpop.f32.mrb[0].mxu0
    %v1515 = vadd.f32 %v935, %v1514
    %v1516 = vpop.f32.mrb[0].mxu0
    %1517 = vmatprep.mubr.f32.mxu0 0.0
    %1518 = vmatmul.mubr.f32.gmra.mrb[0].mxu0 %v1147
    %v1519 = vpop.f32.mrb[0].mxu0
    %v1520 = vadd.f32 %v940, %v1519
    %v1521 = vpop.f32.mrb[0].mxu0
    %1522 = vmatprep.mubr.f32.mxu0 0.0
    %1523 = vmatmul.mubr.f32.gmra.mrb[0].mxu0 %v1150
    %v1524 = vpop.f32.mrb[0].mxu0
    %v1525 = vadd.f32 %v945, %v1524
    %v1526 = vpop.f32.mrb[0].mxu0
    %1527 = vmatprep.mubr.f32.mxu0 0.0
    %1528 = vmatmul.mubr.f32.gmra.mrb[0].mxu0 %v1153
    %v1529 = vpop.f32.mrb[0].mxu0
    %v1530 = vadd.f32 %v950, %v1529
    %v1531 = vpop.f32.mrb[0].mxu0
    %1532 = vmatprep.mubr.f32.mxu0 0.0
    %1533 = vmatmul.mubr.f32.gmra.mrb[0].mxu0 %v1156
    %v1534 = vpop.f32.mrb[0].mxu0
    %v1535 = vadd.f32 %v955, %v1534
    %v1536 = vpop.f32.mrb[0].mxu0
    %1537 = vmatprep.mubr.f32.mxu0 0.0
    %1538 = vmatmul.mubr.f32.gmra.mrb[0].mxu0 %v1159
    %v1539 = vpop.f32.mrb[0].mxu0
    %v1540 = vadd.f32 %v960, %v1539
    %v1541 = vpop.f32.mrb[0].mxu0
    %1542 = vmatprep.mubr.f32.mxu0 0.0
    %1543 = vmatmul.mubr.f32.gmra.mrb[0].mxu0 %v1162
    %v1544 = vpop.f32.mrb[0].mxu0
    %v1545 = vadd.f32 %v965, %v1544
    %v1546 = vpop.f32.mrb[0].mxu0
    %1547 = vmatprep.mubr.f32.mxu0 0.0
    %1548 = vmatmul.mubr.f32.gmra.mrb[0].mxu0 %v1165
    %v1549 = vpop.f32.mrb[0].mxu0
    %v1550 = vadd.f32 %v970, %v1549
    %v1551 = vpop.f32.mrb[0].mxu0
    %1552 = vmatprep.mubr.f32.mxu0 0.0
    %1553 = vmatmul.mubr.f32.gmra.mrb[0].mxu0 %v1168
    %v1554 = vpop.f32.mrb[0].mxu0
    %v1555 = vadd.f32 %v975, %v1554
    %v1556 = vpop.f32.mrb[0].mxu0
    %1557 = vdwg.mxu0
    %v1558 = vld [vmem:[#allocation2 + $0x2] sm:$0xff]
    %v1559 = vld [vmem:[#allocation2 + $0xa] sm:$0xff]
    %v1560 = vld [vmem:[#allocation2 + $0x1a] sm:$0xff]
    %v1561 = vld [vmem:[#allocation2 + $0x22] sm:$0xff]
    %v1562 = vld [vmem:[#allocation2 + $0x32] sm:$0xff]
    %v1563 = vld [vmem:[#allocation2 + $0x3a] sm:$0xff]
    %v1564 = vld [vmem:[#allocation2 + $0x4a] sm:$0xff]
    %v1565 = vld [vmem:[#allocation2 + $0x52] sm:$0xff]
    %v1566 = vld [vmem:[#allocation2 + $0x62] sm:$0xff]
    %v1567 = vld [vmem:[#allocation2 + $0x6a] sm:$0xff]
    %v1568 = vld [vmem:[#allocation2 + $0x7a] sm:$0xff]
    %v1569 = vld [vmem:[#allocation2 + $0x82] sm:$0xff]
    %v1570 = vld [vmem:[#allocation2 + $0x92] sm:$0xff]
    %v1571 = vld [vmem:[#allocation2 + $0x9a] sm:$0xff]
    %v1572 = vld [vmem:[#allocation2 + $0xaa] sm:$0xff]
    %v1573 = vld [vmem:[#allocation2 + $0xb2] sm:$0xff]
    %v1574 = vld [vmem:[#allocation2 + $0xc2] sm:$0xff]
    %v1575 = vld [vmem:[#allocation2 + $0xca] sm:$0xff]
    %v1576 = vld [vmem:[#allocation2 + $0xda] sm:$0xff]
    %v1577 = vld [vmem:[#allocation2 + $0xe2] sm:$0xff]
    %v1578 = vld [vmem:[#allocation2 + $0xf2] sm:$0xff]
    %v1579 = vld [vmem:[#allocation2 + $0xfa] sm:$0xff]
    %v1580 = vld [vmem:[#allocation2 + $0x10a] sm:$0xff]
    %v1581 = vld [vmem:[#allocation2 + $0x112] sm:$0xff]
    %v1582 = vld [vmem:[#allocation2 + $0x122] sm:$0xff]
    %v1583 = vld [vmem:[#allocation2 + $0x12a] sm:$0xff]
    %v1584 = vld [vmem:[#allocation2 + $0x13a] sm:$0xff]
    %v1585 = vld [vmem:[#allocation2 + $0x142] sm:$0xff]
    %v1586 = vld [vmem:[#allocation2 + $0x152] sm:$0xff]
    %v1587 = vld [vmem:[#allocation2 + $0x15a] sm:$0xff]
    %v1588 = vld [vmem:[#allocation2 + $0x16a] sm:$0xff]
    %v1589 = vld [vmem:[#allocation2 + $0x172] sm:$0xff]
    %v1590 = vld [vmem:[#allocation2 + $0x1b2] sm:$0xff]
    %v1591 = vld [vmem:[#allocation2 + $0x1ba] sm:$0xff]
    %v1592 = vld [vmem:[#allocation2 + $0x1ca] sm:$0xff]
    %v1593 = vld [vmem:[#allocation2 + $0x1d2] sm:$0xff]
    %v1594 = vld [vmem:[#allocation2 + $0x1e2] sm:$0xff]
    %v1595 = vld [vmem:[#allocation2 + $0x1ea] sm:$0xff]
    %v1596 = vld [vmem:[#allocation2 + $0x1fa] sm:$0xff]
    %v1597 = vld [vmem:[#allocation2 + $0x202] sm:$0xff]
    %v1598 = vld [vmem:[#allocation2 + $0x212] sm:$0xff]
    %v1599 = vld [vmem:[#allocation2 + $0x21a] sm:$0xff]
    %v1600 = vld [vmem:[#allocation2 + $0x22a] sm:$0xff]
    %v1601 = vld [vmem:[#allocation2 + $0x232] sm:$0xff]
    %v1602 = vld [vmem:[#allocation2 + $0x242] sm:$0xff]
    %v1603 = vld [vmem:[#allocation2 + $0x24a] sm:$0xff]
    %v1604 = vld [vmem:[#allocation2 + $0x25a] sm:$0xff]
    %v1605 = vld [vmem:[#allocation2 + $0x262] sm:$0xff]
    %v1606 = vld [vmem:[#allocation2 + $0x272] sm:$0xff]
    %v1607 = vld [vmem:[#allocation2 + $0x27a] sm:$0xff]
    %v1608 = vld [vmem:[#allocation2 + $0x28a] sm:$0xff]
    %v1609 = vld [vmem:[#allocation2 + $0x292] sm:$0xff]
    %v1610 = vld [vmem:[#allocation2 + $0x2a2] sm:$0xff]
    %v1611 = vld [vmem:[#allocation2 + $0x2aa] sm:$0xff]
    %v1612 = vld [vmem:[#allocation2 + $0x2ba] sm:$0xff]
    %v1613 = vld [vmem:[#allocation2 + $0x2c2] sm:$0xff]
    %v1614 = vld [vmem:[#allocation2 + $0x2d2] sm:$0xff]
    %v1615 = vld [vmem:[#allocation2 + $0x2da] sm:$0xff]
    %v1616 = vld [vmem:[#allocation2 + $0x2ea] sm:$0xff]
    %v1617 = vld [vmem:[#allocation2 + $0x2f2] sm:$0xff]
    %v1618 = vld [vmem:[#allocation2 + $0x302] sm:$0xff]
    %v1619 = vld [vmem:[#allocation2 + $0x30a] sm:$0xff]
    %v1620 = vld [vmem:[#allocation2 + $0x31a] sm:$0xff]
    %v1621 = vld [vmem:[#allocation2 + $0x322] sm:$0xff]
    %s1622 = scalar_lea.vmem %s1, 8
    %v1623 = vld [vmem:[%s1622] sm:$0x7]
    %v1625 = vsel %vm91, %v1558, 0
    %v1628 = vsel %vm91, %v1559, 0
    %v1631 = vsel %vm91, %v1560, 0
    %v1634 = vsel %vm91, %v1561, 0
    %v1637 = vsel %vm91, %v1562, 0
    %v1640 = vsel %vm91, %v1563, 0
    %v1643 = vsel %vm91, %v1564, 0
    %v1646 = vsel %vm91, %v1565, 0
    %v1649 = vsel %vm91, %v1566, 0
    %v1652 = vsel %vm91, %v1567, 0
    %v1655 = vsel %vm91, %v1568, 0
    %v1658 = vsel %vm91, %v1569, 0
    %v1661 = vsel %vm91, %v1570, 0
    %v1664 = vsel %vm91, %v1571, 0
    %v1667 = vsel %vm91, %v1572, 0
    %v1670 = vsel %vm91, %v1573, 0
    %v1673 = vsel %vm91, %v1574, 0
    %v1676 = vsel %vm91, %v1575, 0
    %v1679 = vsel %vm91, %v1576, 0
    %v1682 = vsel %vm91, %v1577, 0
    %v1685 = vsel %vm91, %v1578, 0
    %v1688 = vsel %vm91, %v1579, 0
    %v1691 = vsel %vm91, %v1580, 0
    %v1694 = vsel %vm91, %v1581, 0
    %v1697 = vsel %vm91, %v1582, 0
    %v1700 = vsel %vm91, %v1583, 0
    %v1703 = vsel %vm91, %v1584, 0
    %v1706 = vsel %vm91, %v1585, 0
    %v1709 = vsel %vm91, %v1586, 0
    %v1712 = vsel %vm91, %v1587, 0
    %v1715 = vsel %vm91, %v1588, 0
    %v1718 = vsel %vm91, %v1589, 0
    %v1721 = vsel %vm91, %v1590, 0
    %v1724 = vsel %vm91, %v1591, 0
    %v1727 = vsel %vm91, %v1592, 0
    %v1730 = vsel %vm91, %v1593, 0
    %v1733 = vsel %vm91, %v1594, 0
    %v1736 = vsel %vm91, %v1595, 0
    %v1739 = vsel %vm91, %v1596, 0
    %v1742 = vsel %vm91, %v1597, 0
    %v1745 = vsel %vm91, %v1598, 0
    %v1748 = vsel %vm91, %v1599, 0
    %v1751 = vsel %vm91, %v1600, 0
    %v1754 = vsel %vm91, %v1601, 0
    %v1757 = vsel %vm91, %v1602, 0
    %v1760 = vsel %vm91, %v1603, 0
    %v1763 = vsel %vm91, %v1604, 0
    %v1766 = vsel %vm91, %v1605, 0
    %v1769 = vsel %vm91, %v1606, 0
    %v1772 = vsel %vm91, %v1607, 0
    %v1775 = vsel %vm91, %v1608, 0
    %v1778 = vsel %vm91, %v1609, 0
    %v1781 = vsel %vm91, %v1610, 0
    %v1784 = vsel %vm91, %v1611, 0
    %v1787 = vsel %vm91, %v1612, 0
    %v1790 = vsel %vm91, %v1613, 0
    %v1793 = vsel %vm91, %v1614, 0
    %v1796 = vsel %vm91, %v1615, 0
    %v1799 = vsel %vm91, %v1616, 0
    %v1802 = vsel %vm91, %v1617, 0
    %v1805 = vsel %vm91, %v1618, 0
    %v1808 = vsel %vm91, %v1619, 0
    %v1811 = vsel %vm91, %v1620, 0
    %v1814 = vsel %vm91, %v1621, 0
    %v1817 = vsel %vm589, %v1623, 0
    %1819 = vmatprep.subr.mxu0 0.0
    %1820 = vmatpush1.msra.mxu0 %v1817
    %1821 = vmatprep.subr.mxu0 0.0
    %1822 = vmatpush1.msra.mxu0 0.0
    %1823 = vmatprep.subr.mxu0 0.0
    %1824 = vmatpush1.msra.mxu0 0.0
    %1825 = vmatprep.subr.mxu0 0.0
    %1826 = vmatpush1.msra.mxu0 0.0
    %1827 = vmatprep.subr.mxu0 0.0
    %1828 = vmatpush1.msra.mxu0 0.0
    %1829 = vmatprep.subr.mxu0 0.0
    %1830 = vmatpush1.msra.mxu0 0.0
    %1831 = vmatprep.subr.mxu0 0.0
    %1832 = vmatpush1.msra.mxu0 0.0
    %1833 = vmatprep.subr.mxu0 0.0
    %1834 = vmatpush1.msra.mxu0 0.0
    %1835 = vmatprep.subr.mxu0 0.0
    %1836 = vmatpush1.msra.mxu0 0.0
    %1837 = vmatprep.subr.mxu0 0.0
    %1838 = vmatpush1.msra.mxu0 0.0
    %1839 = vmatprep.subr.mxu0 0.0
    %1840 = vmatpush1.msra.mxu0 0.0
    %1841 = vmatprep.subr.mxu0 0.0
    %1842 = vmatpush1.msra.mxu0 0.0
    %1843 = vmatprep.subr.mxu0 0.0
    %1844 = vmatpush1.msra.mxu0 0.0
    %1845 = vmatprep.subr.mxu0 0.0
    %1846 = vmatpush1.msra.mxu0 0.0
    %1847 = vmatprep.subr.mxu0 0.0
    %1848 = vmatpush1.msra.mxu0 0.0
    %1849 = vmatprep.subr.mxu0 0.0
    %1850 = vmatpush1.msra.mxu0 0.0
    %1851 = vmatprep.subr.mxu0 0.0
    %1852 = vmatpush1.msra.mxu0 0.0
    %1853 = vmatprep.subr.mxu0 0.0
    %1854 = vmatpush1.msra.mxu0 0.0
    %1855 = vmatprep.subr.mxu0 0.0
    %1856 = vmatpush1.msra.mxu0 0.0
    %1857 = vmatprep.subr.mxu0 0.0
    %1858 = vmatpush1.msra.mxu0 0.0
    %1859 = vmatprep.subr.mxu0 0.0
    %1860 = vmatpush1.msra.mxu0 0.0
    %1861 = vmatprep.subr.mxu0 0.0
    %1862 = vmatpush1.msra.mxu0 0.0
    %1863 = vmatprep.subr.mxu0 0.0
    %1864 = vmatpush1.msra.mxu0 0.0
    %1865 = vmatprep.subr.mxu0 0.0
    %1866 = vmatpush1.msra.mxu0 0.0
    %1867 = vmatprep.subr.mxu0 0.0
    %1868 = vmatpush1.msra.mxu0 0.0
    %1869 = vmatprep.subr.mxu0 0.0
    %1870 = vmatpush1.msra.mxu0 0.0
    %1871 = vmatprep.subr.mxu0 0.0
    %1872 = vmatpush1.msra.mxu0 0.0
    %1873 = vmatprep.subr.mxu0 0.0
    %1874 = vmatpush1.msra.mxu0 0.0
    %1875 = vmatprep.subr.mxu0 0.0
    %1876 = vmatpush1.msra.mxu0 0.0
    %1877 = vmatprep.subr.mxu0 0.0
    %1878 = vmatpush1.msra.mxu0 0.0
    %1879 = vmatprep.subr.mxu0 0.0
    %1880 = vmatpush1.msra.mxu0 0.0
    %1881 = vmatprep.subr.mxu0 0.0
    %1882 = vmatpush1.msra.mxu0 0.0
    %1883 = vmatprep.mubr.f32.mxu0 0.0
    %1884 = vmatmul.mubr.f32.gmra.mrb[0].mxu0 %v1625
    %v1885 = vpop.f32.mrb[0].mxu0
    %v1886 = vadd.f32 0.0, %v1885
    %v1887 = vpop.f32.mrb[0].mxu0
    %1888 = vmatprep.mubr.f32.mxu0 0.0
    %1889 = vmatmul.mubr.f32.gmra.mrb[0].mxu0 %v1628
    %v1890 = vpop.f32.mrb[0].mxu0
    %v1891 = vadd.f32 0.0, %v1890
    %v1892 = vpop.f32.mrb[0].mxu0
    %1893 = vmatprep.mubr.f32.mxu0 0.0
    %1894 = vmatmul.mubr.f32.gmra.mrb[0].mxu0 %v1631
    %v1895 = vpop.f32.mrb[0].mxu0
    %v1896 = vadd.f32 0.0, %v1895
    %v1897 = vpop.f32.mrb[0].mxu0
    %1898 = vmatprep.mubr.f32.mxu0 0.0
    %1899 = vmatmul.mubr.f32.gmra.mrb[0].mxu0 %v1634
    %v1900 = vpop.f32.mrb[0].mxu0
    %v1901 = vadd.f32 0.0, %v1900
    %v1902 = vpop.f32.mrb[0].mxu0
    %1903 = vmatprep.mubr.f32.mxu0 0.0
    %1904 = vmatmul.mubr.f32.gmra.mrb[0].mxu0 %v1637
    %v1905 = vpop.f32.mrb[0].mxu0
    %v1906 = vadd.f32 0.0, %v1905
    %v1907 = vpop.f32.mrb[0].mxu0
    %1908 = vmatprep.mubr.f32.mxu0 0.0
    %1909 = vmatmul.mubr.f32.gmra.mrb[0].mxu0 %v1640
    %v1910 = vpop.f32.mrb[0].mxu0
    %v1911 = vadd.f32 0.0, %v1910
    %v1912 = vpop.f32.mrb[0].mxu0
    %1913 = vmatprep.mubr.f32.mxu0 0.0
    %1914 = vmatmul.mubr.f32.gmra.mrb[0].mxu0 %v1643
    %v1915 = vpop.f32.mrb[0].mxu0
    %v1916 = vadd.f32 0.0, %v1915
    %v1917 = vpop.f32.mrb[0].mxu0
    %1918 = vmatprep.mubr.f32.mxu0 0.0
    %1919 = vmatmul.mubr.f32.gmra.mrb[0].mxu0 %v1646
    %v1920 = vpop.f32.mrb[0].mxu0
    %v1921 = vadd.f32 0.0, %v1920
    %v1922 = vpop.f32.mrb[0].mxu0
    %1923 = vmatprep.mubr.f32.mxu0 0.0
    %1924 = vmatmul.mubr.f32.gmra.mrb[0].mxu0 %v1649
    %v1925 = vpop.f32.mrb[0].mxu0
    %v1926 = vadd.f32 0.0, %v1925
    %v1927 = vpop.f32.mrb[0].mxu0
    %1928 = vmatprep.mubr.f32.mxu0 0.0
    %1929 = vmatmul.mubr.f32.gmra.mrb[0].mxu0 %v1652
    %v1930 = vpop.f32.mrb[0].mxu0
    %v1931 = vadd.f32 0.0, %v1930
    %v1932 = vpop.f32.mrb[0].mxu0
    %1933 = vmatprep.mubr.f32.mxu0 0.0
    %1934 = vmatmul.mubr.f32.gmra.mrb[0].mxu0 %v1655
    %v1935 = vpop.f32.mrb[0].mxu0
    %v1936 = vadd.f32 0.0, %v1935
    %v1937 = vpop.f32.mrb[0].mxu0
    %1938 = vmatprep.mubr.f32.mxu0 0.0
    %1939 = vmatmul.mubr.f32.gmra.mrb[0].mxu0 %v1658
    %v1940 = vpop.f32.mrb[0].mxu0
    %v1941 = vadd.f32 0.0, %v1940
    %v1942 = vpop.f32.mrb[0].mxu0
    %1943 = vmatprep.mubr.f32.mxu0 0.0
    %1944 = vmatmul.mubr.f32.gmra.mrb[0].mxu0 %v1661
    %v1945 = vpop.f32.mrb[0].mxu0
    %v1946 = vadd.f32 0.0, %v1945
    %v1947 = vpop.f32.mrb[0].mxu0
    %1948 = vmatprep.mubr.f32.mxu0 0.0
    %1949 = vmatmul.mubr.f32.gmra.mrb[0].mxu0 %v1664
    %v1950 = vpop.f32.mrb[0].mxu0
    %v1951 = vadd.f32 0.0, %v1950
    %v1952 = vpop.f32.mrb[0].mxu0
    %1953 = vmatprep.mubr.f32.mxu0 0.0
    %1954 = vmatmul.mubr.f32.gmra.mrb[0].mxu0 %v1667
    %v1955 = vpop.f32.mrb[0].mxu0
    %v1956 = vadd.f32 0.0, %v1955
    %v1957 = vpop.f32.mrb[0].mxu0
    %1958 = vmatprep.mubr.f32.mxu0 0.0
    %1959 = vmatmul.mubr.f32.gmra.mrb[0].mxu0 %v1670
    %v1960 = vpop.f32.mrb[0].mxu0
    %v1961 = vadd.f32 0.0, %v1960
    %v1962 = vpop.f32.mrb[0].mxu0
    %1963 = vmatprep.mubr.f32.mxu0 0.0
    %1964 = vmatmul.mubr.f32.gmra.mrb[0].mxu0 %v1673
    %v1965 = vpop.f32.mrb[0].mxu0
    %v1966 = vadd.f32 0.0, %v1965
    %v1967 = vpop.f32.mrb[0].mxu0
    %1968 = vmatprep.mubr.f32.mxu0 0.0
    %1969 = vmatmul.mubr.f32.gmra.mrb[0].mxu0 %v1676
    %v1970 = vpop.f32.mrb[0].mxu0
    %v1971 = vadd.f32 0.0, %v1970
    %v1972 = vpop.f32.mrb[0].mxu0
    %1973 = vmatprep.mubr.f32.mxu0 0.0
    %1974 = vmatmul.mubr.f32.gmra.mrb[0].mxu0 %v1679
    %v1975 = vpop.f32.mrb[0].mxu0
    %v1976 = vadd.f32 0.0, %v1975
    %v1977 = vpop.f32.mrb[0].mxu0
    %1978 = vmatprep.mubr.f32.mxu0 0.0
    %1979 = vmatmul.mubr.f32.gmra.mrb[0].mxu0 %v1682
    %v1980 = vpop.f32.mrb[0].mxu0
    %v1981 = vadd.f32 0.0, %v1980
    %v1982 = vpop.f32.mrb[0].mxu0
    %1983 = vmatprep.mubr.f32.mxu0 0.0
    %1984 = vmatmul.mubr.f32.gmra.mrb[0].mxu0 %v1685
    %v1985 = vpop.f32.mrb[0].mxu0
    %v1986 = vadd.f32 0.0, %v1985
    %v1987 = vpop.f32.mrb[0].mxu0
    %1988 = vmatprep.mubr.f32.mxu0 0.0
    %1989 = vmatmul.mubr.f32.gmra.mrb[0].mxu0 %v1688
    %v1990 = vpop.f32.mrb[0].mxu0
    %v1991 = vadd.f32 0.0, %v1990
    %v1992 = vpop.f32.mrb[0].mxu0
    %1993 = vmatprep.mubr.f32.mxu0 0.0
    %1994 = vmatmul.mubr.f32.gmra.mrb[0].mxu0 %v1691
    %v1995 = vpop.f32.mrb[0].mxu0
    %v1996 = vadd.f32 0.0, %v1995
    %v1997 = vpop.f32.mrb[0].mxu0
    %1998 = vmatprep.mubr.f32.mxu0 0.0
    %1999 = vmatmul.mubr.f32.gmra.mrb[0].mxu0 %v1694
    %v2000 = vpop.f32.mrb[0].mxu0
    %v2001 = vadd.f32 0.0, %v2000
    %v2002 = vpop.f32.mrb[0].mxu0
    %2003 = vmatprep.mubr.f32.mxu0 0.0
    %2004 = vmatmul.mubr.f32.gmra.mrb[0].mxu0 %v1697
    %v2005 = vpop.f32.mrb[0].mxu0
    %v2006 = vadd.f32 0.0, %v2005
    %v2007 = vpop.f32.mrb[0].mxu0
    %2008 = vmatprep.mubr.f32.mxu0 0.0
    %2009 = vmatmul.mubr.f32.gmra.mrb[0].mxu0 %v1700
    %v2010 = vpop.f32.mrb[0].mxu0
    %v2011 = vadd.f32 0.0, %v2010
    %v2012 = vpop.f32.mrb[0].mxu0
    %2013 = vmatprep.mubr.f32.mxu0 0.0
    %2014 = vmatmul.mubr.f32.gmra.mrb[0].mxu0 %v1703
    %v2015 = vpop.f32.mrb[0].mxu0
    %v2016 = vadd.f32 0.0, %v2015
    %v2017 = vpop.f32.mrb[0].mxu0
    %2018 = vmatprep.mubr.f32.mxu0 0.0
    %2019 = vmatmul.mubr.f32.gmra.mrb[0].mxu0 %v1706
    %v2020 = vpop.f32.mrb[0].mxu0
    %v2021 = vadd.f32 0.0, %v2020
    %v2022 = vpop.f32.mrb[0].mxu0
    %2023 = vmatprep.mubr.f32.mxu0 0.0
    %2024 = vmatmul.mubr.f32.gmra.mrb[0].mxu0 %v1709
    %v2025 = vpop.f32.mrb[0].mxu0
    %v2026 = vadd.f32 0.0, %v2025
    %v2027 = vpop.f32.mrb[0].mxu0
    %2028 = vmatprep.mubr.f32.mxu0 0.0
    %2029 = vmatmul.mubr.f32.gmra.mrb[0].mxu0 %v1712
    %v2030 = vpop.f32.mrb[0].mxu0
    %v2031 = vadd.f32 0.0, %v2030
    %v2032 = vpop.f32.mrb[0].mxu0
    %2033 = vmatprep.mubr.f32.mxu0 0.0
    %2034 = vmatmul.mubr.f32.gmra.mrb[0].mxu0 %v1715
    %v2035 = vpop.f32.mrb[0].mxu0
    %v2036 = vadd.f32 0.0, %v2035
    %v2037 = vpop.f32.mrb[0].mxu0
    %2038 = vmatprep.mubr.f32.mxu0 0.0
    %2039 = vmatmul.mubr.f32.gmra.mrb[0].mxu0 %v1718
    %v2040 = vpop.f32.mrb[0].mxu0
    %v2041 = vadd.f32 0.0, %v2040
    %v2042 = vpop.f32.mrb[0].mxu0
    %2043 = vmatprep.mubr.f32.mxu0 0.0
    %2044 = vmatmul.mubr.f32.gmra.mrb[0].mxu0 %v1721
    %v2045 = vpop.f32.mrb[0].mxu0
    %v2046 = vadd.f32 0.0, %v2045
    %v2047 = vpop.f32.mrb[0].mxu0
    %2048 = vmatprep.mubr.f32.mxu0 0.0
    %2049 = vmatmul.mubr.f32.gmra.mrb[0].mxu0 %v1724
    %v2050 = vpop.f32.mrb[0].mxu0
    %v2051 = vadd.f32 0.0, %v2050
    %v2052 = vpop.f32.mrb[0].mxu0
    %2053 = vmatprep.mubr.f32.mxu0 0.0
    %2054 = vmatmul.mubr.f32.gmra.mrb[0].mxu0 %v1727
    %v2055 = vpop.f32.mrb[0].mxu0
    %v2056 = vadd.f32 0.0, %v2055
    %v2057 = vpop.f32.mrb[0].mxu0
    %2058 = vmatprep.mubr.f32.mxu0 0.0
    %2059 = vmatmul.mubr.f32.gmra.mrb[0].mxu0 %v1730
    %v2060 = vpop.f32.mrb[0].mxu0
    %v2061 = vadd.f32 0.0, %v2060
    %v2062 = vpop.f32.mrb[0].mxu0
    %2063 = vmatprep.mubr.f32.mxu0 0.0
    %2064 = vmatmul.mubr.f32.gmra.mrb[0].mxu0 %v1733
    %v2065 = vpop.f32.mrb[0].mxu0
    %v2066 = vadd.f32 0.0, %v2065
    %v2067 = vpop.f32.mrb[0].mxu0
    %2068 = vmatprep.mubr.f32.mxu0 0.0
    %2069 = vmatmul.mubr.f32.gmra.mrb[0].mxu0 %v1736
    %v2070 = vpop.f32.mrb[0].mxu0
    %v2071 = vadd.f32 0.0, %v2070
    %v2072 = vpop.f32.mrb[0].mxu0
    %2073 = vmatprep.mubr.f32.mxu0 0.0
    %2074 = vmatmul.mubr.f32.gmra.mrb[0].mxu0 %v1739
    %v2075 = vpop.f32.mrb[0].mxu0
    %v2076 = vadd.f32 0.0, %v2075
    %v2077 = vpop.f32.mrb[0].mxu0
    %2078 = vmatprep.mubr.f32.mxu0 0.0
    %2079 = vmatmul.mubr.f32.gmra.mrb[0].mxu0 %v1742
    %v2080 = vpop.f32.mrb[0].mxu0
    %v2081 = vadd.f32 0.0, %v2080
    %v2082 = vpop.f32.mrb[0].mxu0
    %2083 = vmatprep.mubr.f32.mxu0 0.0
    %2084 = vmatmul.mubr.f32.gmra.mrb[0].mxu0 %v1745
    %v2085 = vpop.f32.mrb[0].mxu0
    %v2086 = vadd.f32 0.0, %v2085
    %v2087 = vpop.f32.mrb[0].mxu0
    %2088 = vmatprep.mubr.f32.mxu0 0.0
    %2089 = vmatmul.mubr.f32.gmra.mrb[0].mxu0 %v1748
    %v2090 = vpop.f32.mrb[0].mxu0
    %v2091 = vadd.f32 0.0, %v2090
    %v2092 = vpop.f32.mrb[0].mxu0
    %2093 = vmatprep.mubr.f32.mxu0 0.0
    %2094 = vmatmul.mubr.f32.gmra.mrb[0].mxu0 %v1751
    %v2095 = vpop.f32.mrb[0].mxu0
    %v2096 = vadd.f32 0.0, %v2095
    %v2097 = vpop.f32.mrb[0].mxu0
    %2098 = vmatprep.mubr.f32.mxu0 0.0
    %2099 = vmatmul.mubr.f32.gmra.mrb[0].mxu0 %v1754
    %v2100 = vpop.f32.mrb[0].mxu0
    %v2101 = vadd.f32 0.0, %v2100
    %v2102 = vpop.f32.mrb[0].mxu0
    %2103 = vmatprep.mubr.f32.mxu0 0.0
    %2104 = vmatmul.mubr.f32.gmra.mrb[0].mxu0 %v1757
    %v2105 = vpop.f32.mrb[0].mxu0
    %v2106 = vadd.f32 0.0, %v2105
    %v2107 = vpop.f32.mrb[0].mxu0
    %2108 = vmatprep.mubr.f32.mxu0 0.0
    %2109 = vmatmul.mubr.f32.gmra.mrb[0].mxu0 %v1760
    %v2110 = vpop.f32.mrb[0].mxu0
    %v2111 = vadd.f32 0.0, %v2110
    %v2112 = vpop.f32.mrb[0].mxu0
    %2113 = vmatprep.mubr.f32.mxu0 0.0
    %2114 = vmatmul.mubr.f32.gmra.mrb[0].mxu0 %v1763
    %v2115 = vpop.f32.mrb[0].mxu0
    %v2116 = vadd.f32 0.0, %v2115
    %v2117 = vpop.f32.mrb[0].mxu0
    %2118 = vmatprep.mubr.f32.mxu0 0.0
    %2119 = vmatmul.mubr.f32.gmra.mrb[0].mxu0 %v1766
    %v2120 = vpop.f32.mrb[0].mxu0
    %v2121 = vadd.f32 0.0, %v2120
    %v2122 = vpop.f32.mrb[0].mxu0
    %2123 = vmatprep.mubr.f32.mxu0 0.0
    %2124 = vmatmul.mubr.f32.gmra.mrb[0].mxu0 %v1769
    %v2125 = vpop.f32.mrb[0].mxu0
    %v2126 = vadd.f32 0.0, %v2125
    %v2127 = vpop.f32.mrb[0].mxu0
    %2128 = vmatprep.mubr.f32.mxu0 0.0
    %2129 = vmatmul.mubr.f32.gmra.mrb[0].mxu0 %v1772
    %v2130 = vpop.f32.mrb[0].mxu0
    %v2131 = vadd.f32 0.0, %v2130
    %v2132 = vpop.f32.mrb[0].mxu0
    %2133 = vmatprep.mubr.f32.mxu0 0.0
    %2134 = vmatmul.mubr.f32.gmra.mrb[0].mxu0 %v1775
    %v2135 = vpop.f32.mrb[0].mxu0
    %v2136 = vadd.f32 0.0, %v2135
    %v2137 = vpop.f32.mrb[0].mxu0
    %2138 = vmatprep.mubr.f32.mxu0 0.0
    %2139 = vmatmul.mubr.f32.gmra.mrb[0].mxu0 %v1778
    %v2140 = vpop.f32.mrb[0].mxu0
    %v2141 = vadd.f32 0.0, %v2140
    %v2142 = vpop.f32.mrb[0].mxu0
    %2143 = vmatprep.mubr.f32.mxu0 0.0
    %2144 = vmatmul.mubr.f32.gmra.mrb[0].mxu0 %v1781
    %v2145 = vpop.f32.mrb[0].mxu0
    %v2146 = vadd.f32 0.0, %v2145
    %v2147 = vpop.f32.mrb[0].mxu0
    %2148 = vmatprep.mubr.f32.mxu0 0.0
    %2149 = vmatmul.mubr.f32.gmra.mrb[0].mxu0 %v1784
    %v2150 = vpop.f32.mrb[0].mxu0
    %v2151 = vadd.f32 0.0, %v2150
    %v2152 = vpop.f32.mrb[0].mxu0
    %2153 = vmatprep.mubr.f32.mxu0 0.0
    %2154 = vmatmul.mubr.f32.gmra.mrb[0].mxu0 %v1787
    %v2155 = vpop.f32.mrb[0].mxu0
    %v2156 = vadd.f32 0.0, %v2155
    %v2157 = vpop.f32.mrb[0].mxu0
    %2158 = vmatprep.mubr.f32.mxu0 0.0
    %2159 = vmatmul.mubr.f32.gmra.mrb[0].mxu0 %v1790
    %v2160 = vpop.f32.mrb[0].mxu0
    %v2161 = vadd.f32 0.0, %v2160
    %v2162 = vpop.f32.mrb[0].mxu0
    %2163 = vmatprep.mubr.f32.mxu0 0.0
    %2164 = vmatmul.mubr.f32.gmra.mrb[0].mxu0 %v1793
    %v2165 = vpop.f32.mrb[0].mxu0
    %v2166 = vadd.f32 0.0, %v2165
    %v2167 = vpop.f32.mrb[0].mxu0
    %2168 = vmatprep.mubr.f32.mxu0 0.0
    %2169 = vmatmul.mubr.f32.gmra.mrb[0].mxu0 %v1796
    %v2170 = vpop.f32.mrb[0].mxu0
    %v2171 = vadd.f32 0.0, %v2170
    %v2172 = vpop.f32.mrb[0].mxu0
    %2173 = vmatprep.mubr.f32.mxu0 0.0
    %2174 = vmatmul.mubr.f32.gmra.mrb[0].mxu0 %v1799
    %v2175 = vpop.f32.mrb[0].mxu0
    %v2176 = vadd.f32 0.0, %v2175
    %v2177 = vpop.f32.mrb[0].mxu0
    %2178 = vmatprep.mubr.f32.mxu0 0.0
    %2179 = vmatmul.mubr.f32.gmra.mrb[0].mxu0 %v1802
    %v2180 = vpop.f32.mrb[0].mxu0
    %v2181 = vadd.f32 0.0, %v2180
    %v2182 = vpop.f32.mrb[0].mxu0
    %2183 = vmatprep.mubr.f32.mxu0 0.0
    %2184 = vmatmul.mubr.f32.gmra.mrb[0].mxu0 %v1805
    %v2185 = vpop.f32.mrb[0].mxu0
    %v2186 = vadd.f32 0.0, %v2185
    %v2187 = vpop.f32.mrb[0].mxu0
    %2188 = vmatprep.mubr.f32.mxu0 0.0
    %2189 = vmatmul.mubr.f32.gmra.mrb[0].mxu0 %v1808
    %v2190 = vpop.f32.mrb[0].mxu0
    %v2191 = vadd.f32 0.0, %v2190
    %v2192 = vpop.f32.mrb[0].mxu0
    %2193 = vmatprep.mubr.f32.mxu0 0.0
    %2194 = vmatmul.mubr.f32.gmra.mrb[0].mxu0 %v1811
    %v2195 = vpop.f32.mrb[0].mxu0
    %v2196 = vadd.f32 0.0, %v2195
    %v2197 = vpop.f32.mrb[0].mxu0
    %2198 = vmatprep.mubr.f32.mxu0 0.0
    %2199 = vmatmul.mubr.f32.gmra.mrb[0].mxu0 %v1814
    %v2200 = vpop.f32.mrb[0].mxu0
    %v2201 = vadd.f32 0.0, %v2200
    %v2202 = vpop.f32.mrb[0].mxu0
    %2203 = vdwg.mxu0
    %v2204 = vadd.f32 %v1240, %v1886
    %v2205 = vadd.f32 %v1245, %v1891
    %v2206 = vadd.f32 %v1250, %v1896
    %v2207 = vadd.f32 %v1255, %v1901
    %v2208 = vadd.f32 %v1260, %v1906
    %v2209 = vadd.f32 %v1265, %v1911
    %v2210 = vadd.f32 %v1270, %v1916
    %v2211 = vadd.f32 %v1275, %v1921
    %v2212 = vadd.f32 %v1280, %v1926
    %v2213 = vadd.f32 %v1285, %v1931
    %v2214 = vadd.f32 %v1290, %v1936
    %v2215 = vadd.f32 %v1295, %v1941
    %v2216 = vadd.f32 %v1300, %v1946
    %v2217 = vadd.f32 %v1305, %v1951
    %v2218 = vadd.f32 %v1310, %v1956
    %v2219 = vadd.f32 %v1315, %v1961
    %v2220 = vadd.f32 %v1320, %v1966
    %v2221 = vadd.f32 %v1325, %v1971
    %v2222 = vadd.f32 %v1330, %v1976
    %v2223 = vadd.f32 %v1335, %v1981
    %v2224 = vadd.f32 %v1340, %v1986
    %v2225 = vadd.f32 %v1345, %v1991
    %v2226 = vadd.f32 %v1350, %v1996
    %v2227 = vadd.f32 %v1355, %v2001
    %v2228 = vadd.f32 %v1360, %v2006
    %v2229 = vadd.f32 %v1365, %v2011
    %v2230 = vadd.f32 %v1370, %v2016
    %v2231 = vadd.f32 %v1375, %v2021
    %v2232 = vadd.f32 %v1380, %v2026
    %v2233 = vadd.f32 %v1385, %v2031
    %v2234 = vadd.f32 %v1390, %v2036
    %v2235 = vadd.f32 %v1395, %v2041
    %v2236 = vadd.f32 %v1400, %v2046
    %v2237 = vadd.f32 %v1405, %v2051
    %v2238 = vadd.f32 %v1410, %v2056
    %v2239 = vadd.f32 %v1415, %v2061
    %v2240 = vadd.f32 %v1420, %v2066
    %v2241 = vadd.f32 %v1425, %v2071
    %v2242 = vadd.f32 %v1430, %v2076
    %v2243 = vadd.f32 %v1435, %v2081
    %v2244 = vadd.f32 %v1440, %v2086
    %v2245 = vadd.f32 %v1445, %v2091
    %v2246 = vadd.f32 %v1450, %v2096
    %v2247 = vadd.f32 %v1455, %v2101
    %v2248 = vadd.f32 %v1460, %v2106
    %v2249 = vadd.f32 %v1465, %v2111
    %v2250 = vadd.f32 %v1470, %v2116
    %v2251 = vadd.f32 %v1475, %v2121
    %v2252 = vadd.f32 %v1480, %v2126
    %v2253 = vadd.f32 %v1485, %v2131
    %v2254 = vadd.f32 %v1490, %v2136
    %v2255 = vadd.f32 %v1495, %v2141
    %v2256 = vadd.f32 %v1500, %v2146
    %v2257 = vadd.f32 %v1505, %v2151
    %v2258 = vadd.f32 %v1510, %v2156
    %v2259 = vadd.f32 %v1515, %v2161
    %v2260 = vadd.f32 %v1520, %v2166
    %v2261 = vadd.f32 %v1525, %v2171
    %v2262 = vadd.f32 %v1530, %v2176
    %v2263 = vadd.f32 %v1535, %v2181
    %v2264 = vadd.f32 %v1540, %v2186
    %v2265 = vadd.f32 %v1545, %v2191
    %v2266 = vadd.f32 %v1550, %v2196
    %v2267 = vadd.f32 %v1555, %v2201
    %v2268 = vld [vmem:[%s201] sm:$0xff]
    %v2269 = vld [vmem:[%s201 + $0x8] sm:$0xff]
    %v2270 = vld [vmem:[%s201 + $0x18] sm:$0xff]
    %v2271 = vld [vmem:[%s201 + $0x20] sm:$0xff]
    %v2272 = vld [vmem:[%s201 + $0x30] sm:$0xff]
    %v2273 = vld [vmem:[%s201 + $0x38] sm:$0xff]
    %v2274 = vld [vmem:[%s201 + $0x48] sm:$0xff]
    %v2275 = vld [vmem:[%s201 + $0x50] sm:$0xff]
    %v2276 = vld [vmem:[%s201 + $0x60] sm:$0xff]
    %v2277 = vld [vmem:[%s201 + $0x68] sm:$0xff]
    %v2278 = vld [vmem:[%s201 + $0x78] sm:$0xff]
    %v2279 = vld [vmem:[%s201 + $0x80] sm:$0xff]
    %v2280 = vld [vmem:[%s201 + $0x90] sm:$0xff]
    %v2281 = vld [vmem:[%s201 + $0x98] sm:$0xff]
    %v2282 = vld [vmem:[%s201 + $0xa8] sm:$0xff]
    %v2283 = vld [vmem:[%s201 + $0xb0] sm:$0xff]
    %v2284 = vld [vmem:[%s201 + $0xc0] sm:$0xff]
    %v2285 = vld [vmem:[%s201 + $0xc8] sm:$0xff]
    %v2286 = vld [vmem:[%s201 + $0xd8] sm:$0xff]
    %v2287 = vld [vmem:[%s201 + $0xe0] sm:$0xff]
    %v2288 = vld [vmem:[%s201 + $0xf0] sm:$0xff]
    %v2289 = vld [vmem:[%s201 + $0xf8] sm:$0xff]
    %v2290 = vld [vmem:[%s201 + $0x108] sm:$0xff]
    %v2291 = vld [vmem:[%s201 + $0x110] sm:$0xff]
    %v2292 = vld [vmem:[%s201 + $0x120] sm:$0xff]
    %v2293 = vld [vmem:[%s201 + $0x128] sm:$0xff]
    %v2294 = vld [vmem:[%s201 + $0x138] sm:$0xff]
    %v2295 = vld [vmem:[%s201 + $0x140] sm:$0xff]
    %v2296 = vld [vmem:[%s201 + $0x150] sm:$0xff]
    %v2297 = vld [vmem:[%s201 + $0x158] sm:$0xff]
    %v2298 = vld [vmem:[%s201 + $0x168] sm:$0xff]
    %v2299 = vld [vmem:[%s201 + $0x170] sm:$0xff]
    %v2300 = vld [vmem:[%s201 + $0x1b0] sm:$0xff]
    %v2301 = vld [vmem:[%s201 + $0x1b8] sm:$0xff]
    %v2302 = vld [vmem:[%s201 + $0x1c8] sm:$0xff]
    %v2303 = vld [vmem:[%s201 + $0x1d0] sm:$0xff]
    %v2304 = vld [vmem:[%s201 + $0x1e0] sm:$0xff]
    %v2305 = vld [vmem:[%s201 + $0x1e8] sm:$0xff]
    %v2306 = vld [vmem:[%s201 + $0x1f8] sm:$0xff]
    %v2307 = vld [vmem:[%s201 + $0x200] sm:$0xff]
    %v2308 = vld [vmem:[%s201 + $0x210] sm:$0xff]
    %v2309 = vld [vmem:[%s201 + $0x218] sm:$0xff]
    %v2310 = vld [vmem:[%s201 + $0x228] sm:$0xff]
    %v2311 = vld [vmem:[%s201 + $0x230] sm:$0xff]
    %v2312 = vld [vmem:[%s201 + $0x240] sm:$0xff]
    %v2313 = vld [vmem:[%s201 + $0x248] sm:$0xff]
    %v2314 = vld [vmem:[%s201 + $0x258] sm:$0xff]
    %v2315 = vld [vmem:[%s201 + $0x260] sm:$0xff]
    %v2316 = vld [vmem:[%s201 + $0x270] sm:$0xff]
    %v2317 = vld [vmem:[%s201 + $0x278] sm:$0xff]
    %v2318 = vld [vmem:[%s201 + $0x288] sm:$0xff]
    %v2319 = vld [vmem:[%s201 + $0x290] sm:$0xff]
    %v2320 = vld [vmem:[%s201 + $0x2a0] sm:$0xff]
    %v2321 = vld [vmem:[%s201 + $0x2a8] sm:$0xff]
    %v2322 = vld [vmem:[%s201 + $0x2b8] sm:$0xff]
    %v2323 = vld [vmem:[%s201 + $0x2c0] sm:$0xff]
    %v2324 = vld [vmem:[%s201 + $0x2d0] sm:$0xff]
    %v2325 = vld [vmem:[%s201 + $0x2d8] sm:$0xff]
    %v2326 = vld [vmem:[%s201 + $0x2e8] sm:$0xff]
    %v2327 = vld [vmem:[%s201 + $0x2f0] sm:$0xff]
    %v2328 = vld [vmem:[%s201 + $0x300] sm:$0xff]
    %v2329 = vld [vmem:[%s201 + $0x308] sm:$0xff]
    %v2330 = vld [vmem:[%s201 + $0x318] sm:$0xff]
    %v2331 = vld [vmem:[%s201 + $0x320] sm:$0xff]
    %s2332 = scalar_lea.vmem %s1, 12
    %v2333 = vld [vmem:[%s2332] sm:$0x7]
    %v2335 = vsel %vm91, %v2268, 0
    %v2338 = vsel %vm91, %v2269, 0
    %v2341 = vsel %vm91, %v2270, 0
    %v2344 = vsel %vm91, %v2271, 0
    %v2347 = vsel %vm91, %v2272, 0
    %v2350 = vsel %vm91, %v2273, 0
    %v2353 = vsel %vm91, %v2274, 0
    %v2356 = vsel %vm91, %v2275, 0
    %v2359 = vsel %vm91, %v2276, 0
    %v2362 = vsel %vm91, %v2277, 0
    %v2365 = vsel %vm91, %v2278, 0
    %v2368 = vsel %vm91, %v2279, 0
    %v2371 = vsel %vm91, %v2280, 0
    %v2374 = vsel %vm91, %v2281, 0
    %v2377 = vsel %vm91, %v2282, 0
    %v2380 = vsel %vm91, %v2283, 0
    %v2383 = vsel %vm91, %v2284, 0
    %v2386 = vsel %vm91, %v2285, 0
    %v2389 = vsel %vm91, %v2286, 0
    %v2392 = vsel %vm91, %v2287, 0
    %v2395 = vsel %vm91, %v2288, 0
    %v2398 = vsel %vm91, %v2289, 0
    %v2401 = vsel %vm91, %v2290, 0
    %v2404 = vsel %vm91, %v2291, 0
    %v2407 = vsel %vm91, %v2292, 0
    %v2410 = vsel %vm91, %v2293, 0
    %v2413 = vsel %vm91, %v2294, 0
    %v2416 = vsel %vm91, %v2295, 0
    %v2419 = vsel %vm91, %v2296, 0
    %v2422 = vsel %vm91, %v2297, 0
    %v2425 = vsel %vm91, %v2298, 0
    %v2428 = vsel %vm91, %v2299, 0
    %v2431 = vsel %vm91, %v2300, 0
    %v2434 = vsel %vm91, %v2301, 0
    %v2437 = vsel %vm91, %v2302, 0
    %v2440 = vsel %vm91, %v2303, 0
    %v2443 = vsel %vm91, %v2304, 0
    %v2446 = vsel %vm91, %v2305, 0
    %v2449 = vsel %vm91, %v2306, 0
    %v2452 = vsel %vm91, %v2307, 0
    %v2455 = vsel %vm91, %v2308, 0
    %v2458 = vsel %vm91, %v2309, 0
    %v2461 = vsel %vm91, %v2310, 0
    %v2464 = vsel %vm91, %v2311, 0
    %v2467 = vsel %vm91, %v2312, 0
    %v2470 = vsel %vm91, %v2313, 0
    %v2473 = vsel %vm91, %v2314, 0
    %v2476 = vsel %vm91, %v2315, 0
    %v2479 = vsel %vm91, %v2316, 0
    %v2482 = vsel %vm91, %v2317, 0
    %v2485 = vsel %vm91, %v2318, 0
    %v2488 = vsel %vm91, %v2319, 0
    %v2491 = vsel %vm91, %v2320, 0
    %v2494 = vsel %vm91, %v2321, 0
    %v2497 = vsel %vm91, %v2322, 0
    %v2500 = vsel %vm91, %v2323, 0
    %v2503 = vsel %vm91, %v2324, 0
    %v2506 = vsel %vm91, %v2325, 0
    %v2509 = vsel %vm91, %v2326, 0
    %v2512 = vsel %vm91, %v2327, 0
    %v2515 = vsel %vm91, %v2328, 0
    %v2518 = vsel %vm91, %v2329, 0
    %v2521 = vsel %vm91, %v2330, 0
    %v2524 = vsel %vm91, %v2331, 0
    %v2527 = vsel %vm589, %v2333, 0
    %2529 = vmatprep.subr.mxu0 0.0
    %2530 = vmatpush1.msra.mxu0 %v2527
    %2531 = vmatprep.subr.mxu0 0.0
    %2532 = vmatpush1.msra.mxu0 0.0
    %2533 = vmatprep.subr.mxu0 0.0
    %2534 = vmatpush1.msra.mxu0 0.0
    %2535 = vmatprep.subr.mxu0 0.0
    %2536 = vmatpush1.msra.mxu0 0.0
    %2537 = vmatprep.subr.mxu0 0.0
    %2538 = vmatpush1.msra.mxu0 0.0
    %2539 = vmatprep.subr.mxu0 0.0
    %2540 = vmatpush1.msra.mxu0 0.0
    %2541 = vmatprep.subr.mxu0 0.0
    %2542 = vmatpush1.msra.mxu0 0.0
    %2543 = vmatprep.subr.mxu0 0.0
    %2544 = vmatpush1.msra.mxu0 0.0
    %2545 = vmatprep.subr.mxu0 0.0
    %2546 = vmatpush1.msra.mxu0 0.0
    %2547 = vmatprep.subr.mxu0 0.0
    %2548 = vmatpush1.msra.mxu0 0.0
    %2549 = vmatprep.subr.mxu0 0.0
    %2550 = vmatpush1.msra.mxu0 0.0
    %2551 = vmatprep.subr.mxu0 0.0
    %2552 = vmatpush1.msra.mxu0 0.0
    %2553 = vmatprep.subr.mxu0 0.0
    %2554 = vmatpush1.msra.mxu0 0.0
    %2555 = vmatprep.subr.mxu0 0.0
    %2556 = vmatpush1.msra.mxu0 0.0
    %2557 = vmatprep.subr.mxu0 0.0
    %2558 = vmatpush1.msra.mxu0 0.0
    %2559 = vmatprep.subr.mxu0 0.0
    %2560 = vmatpush1.msra.mxu0 0.0
    %2561 = vmatprep.subr.mxu0 0.0
    %2562 = vmatpush1.msra.mxu0 0.0
    %2563 = vmatprep.subr.mxu0 0.0
    %2564 = vmatpush1.msra.mxu0 0.0
    %2565 = vmatprep.subr.mxu0 0.0
    %2566 = vmatpush1.msra.mxu0 0.0
    %2567 = vmatprep.subr.mxu0 0.0
    %2568 = vmatpush1.msra.mxu0 0.0
    %2569 = vmatprep.subr.mxu0 0.0
    %2570 = vmatpush1.msra.mxu0 0.0
    %2571 = vmatprep.subr.mxu0 0.0
    %2572 = vmatpush1.msra.mxu0 0.0
    %2573 = vmatprep.subr.mxu0 0.0
    %2574 = vmatpush1.msra.mxu0 0.0
    %2575 = vmatprep.subr.mxu0 0.0
    %2576 = vmatpush1.msra.mxu0 0.0
    %2577 = vmatprep.subr.mxu0 0.0
    %2578 = vmatpush1.msra.mxu0 0.0
    %2579 = vmatprep.subr.mxu0 0.0
    %2580 = vmatpush1.msra.mxu0 0.0
    %2581 = vmatprep.subr.mxu0 0.0
    %2582 = vmatpush1.msra.mxu0 0.0
    %2583 = vmatprep.subr.mxu0 0.0
    %2584 = vmatpush1.msra.mxu0 0.0
    %2585 = vmatprep.subr.mxu0 0.0
    %2586 = vmatpush1.msra.mxu0 0.0
    %2587 = vmatprep.subr.mxu0 0.0
    %2588 = vmatpush1.msra.mxu0 0.0
    %2589 = vmatprep.subr.mxu0 0.0
    %2590 = vmatpush1.msra.mxu0 0.0
    %2591 = vmatprep.subr.mxu0 0.0
    %2592 = vmatpush1.msra.mxu0 0.0
    %2593 = vmatprep.mubr.f32.mxu0 0.0
    %2594 = vmatmul.mubr.f32.gmra.mrb[0].mxu0 %v2335
    %v2595 = vpop.f32.mrb[0].mxu0
    %v2596 = vadd.f32 0.0, %v2595
    %v2597 = vpop.f32.mrb[0].mxu0
    %2598 = vmatprep.mubr.f32.mxu0 0.0
    %2599 = vmatmul.mubr.f32.gmra.mrb[0].mxu0 %v2338
    %v2600 = vpop.f32.mrb[0].mxu0
    %v2601 = vadd.f32 0.0, %v2600
    %v2602 = vpop.f32.mrb[0].mxu0
    %2603 = vmatprep.mubr.f32.mxu0 0.0
    %2604 = vmatmul.mubr.f32.gmra.mrb[0].mxu0 %v2341
    %v2605 = vpop.f32.mrb[0].mxu0
    %v2606 = vadd.f32 0.0, %v2605
    %v2607 = vpop.f32.mrb[0].mxu0
    %2608 = vmatprep.mubr.f32.mxu0 0.0
    %2609 = vmatmul.mubr.f32.gmra.mrb[0].mxu0 %v2344
    %v2610 = vpop.f32.mrb[0].mxu0
    %v2611 = vadd.f32 0.0, %v2610
    %v2612 = vpop.f32.mrb[0].mxu0
    %2613 = vmatprep.mubr.f32.mxu0 0.0
    %2614 = vmatmul.mubr.f32.gmra.mrb[0].mxu0 %v2347
    %v2615 = vpop.f32.mrb[0].mxu0
    %v2616 = vadd.f32 0.0, %v2615
    %v2617 = vpop.f32.mrb[0].mxu0
    %2618 = vmatprep.mubr.f32.mxu0 0.0
    %2619 = vmatmul.mubr.f32.gmra.mrb[0].mxu0 %v2350
    %v2620 = vpop.f32.mrb[0].mxu0
    %v2621 = vadd.f32 0.0, %v2620
    %v2622 = vpop.f32.mrb[0].mxu0
    %2623 = vmatprep.mubr.f32.mxu0 0.0
    %2624 = vmatmul.mubr.f32.gmra.mrb[0].mxu0 %v2353
    %v2625 = vpop.f32.mrb[0].mxu0
    %v2626 = vadd.f32 0.0, %v2625
    %v2627 = vpop.f32.mrb[0].mxu0
    %2628 = vmatprep.mubr.f32.mxu0 0.0
    %2629 = vmatmul.mubr.f32.gmra.mrb[0].mxu0 %v2356
    %v2630 = vpop.f32.mrb[0].mxu0
    %v2631 = vadd.f32 0.0, %v2630
    %v2632 = vpop.f32.mrb[0].mxu0
    %2633 = vmatprep.mubr.f32.mxu0 0.0
    %2634 = vmatmul.mubr.f32.gmra.mrb[0].mxu0 %v2359
    %v2635 = vpop.f32.mrb[0].mxu0
    %v2636 = vadd.f32 0.0, %v2635
    %v2637 = vpop.f32.mrb[0].mxu0
    %2638 = vmatprep.mubr.f32.mxu0 0.0
    %2639 = vmatmul.mubr.f32.gmra.mrb[0].mxu0 %v2362
    %v2640 = vpop.f32.mrb[0].mxu0
    %v2641 = vadd.f32 0.0, %v2640
    %v2642 = vpop.f32.mrb[0].mxu0
    %2643 = vmatprep.mubr.f32.mxu0 0.0
    %2644 = vmatmul.mubr.f32.gmra.mrb[0].mxu0 %v2365
    %v2645 = vpop.f32.mrb[0].mxu0
    %v2646 = vadd.f32 0.0, %v2645
    %v2647 = vpop.f32.mrb[0].mxu0
    %2648 = vmatprep.mubr.f32.mxu0 0.0
    %2649 = vmatmul.mubr.f32.gmra.mrb[0].mxu0 %v2368
    %v2650 = vpop.f32.mrb[0].mxu0
    %v2651 = vadd.f32 0.0, %v2650
    %v2652 = vpop.f32.mrb[0].mxu0
    %2653 = vmatprep.mubr.f32.mxu0 0.0
    %2654 = vmatmul.mubr.f32.gmra.mrb[0].mxu0 %v2371
    %v2655 = vpop.f32.mrb[0].mxu0
    %v2656 = vadd.f32 0.0, %v2655
    %v2657 = vpop.f32.mrb[0].mxu0
    %2658 = vmatprep.mubr.f32.mxu0 0.0
    %2659 = vmatmul.mubr.f32.gmra.mrb[0].mxu0 %v2374
    %v2660 = vpop.f32.mrb[0].mxu0
    %v2661 = vadd.f32 0.0, %v2660
    %v2662 = vpop.f32.mrb[0].mxu0
    %2663 = vmatprep.mubr.f32.mxu0 0.0
    %2664 = vmatmul.mubr.f32.gmra.mrb[0].mxu0 %v2377
    %v2665 = vpop.f32.mrb[0].mxu0
    %v2666 = vadd.f32 0.0, %v2665
    %v2667 = vpop.f32.mrb[0].mxu0
    %2668 = vmatprep.mubr.f32.mxu0 0.0
    %2669 = vmatmul.mubr.f32.gmra.mrb[0].mxu0 %v2380
    %v2670 = vpop.f32.mrb[0].mxu0
    %v2671 = vadd.f32 0.0, %v2670
    %v2672 = vpop.f32.mrb[0].mxu0
    %2673 = vmatprep.mubr.f32.mxu0 0.0
    %2674 = vmatmul.mubr.f32.gmra.mrb[0].mxu0 %v2383
    %v2675 = vpop.f32.mrb[0].mxu0
    %v2676 = vadd.f32 0.0, %v2675
    %v2677 = vpop.f32.mrb[0].mxu0
    %2678 = vmatprep.mubr.f32.mxu0 0.0
    %2679 = vmatmul.mubr.f32.gmra.mrb[0].mxu0 %v2386
    %v2680 = vpop.f32.mrb[0].mxu0
    %v2681 = vadd.f32 0.0, %v2680
    %v2682 = vpop.f32.mrb[0].mxu0
    %2683 = vmatprep.mubr.f32.mxu0 0.0
    %2684 = vmatmul.mubr.f32.gmra.mrb[0].mxu0 %v2389
    %v2685 = vpop.f32.mrb[0].mxu0
    %v2686 = vadd.f32 0.0, %v2685
    %v2687 = vpop.f32.mrb[0].mxu0
    %2688 = vmatprep.mubr.f32.mxu0 0.0
    %2689 = vmatmul.mubr.f32.gmra.mrb[0].mxu0 %v2392
    %v2690 = vpop.f32.mrb[0].mxu0
    %v2691 = vadd.f32 0.0, %v2690
    %v2692 = vpop.f32.mrb[0].mxu0
    %2693 = vmatprep.mubr.f32.mxu0 0.0
    %2694 = vmatmul.mubr.f32.gmra.mrb[0].mxu0 %v2395
    %v2695 = vpop.f32.mrb[0].mxu0
    %v2696 = vadd.f32 0.0, %v2695
    %v2697 = vpop.f32.mrb[0].mxu0
    %2698 = vmatprep.mubr.f32.mxu0 0.0
    %2699 = vmatmul.mubr.f32.gmra.mrb[0].mxu0 %v2398
    %v2700 = vpop.f32.mrb[0].mxu0
    %v2701 = vadd.f32 0.0, %v2700
    %v2702 = vpop.f32.mrb[0].mxu0
    %2703 = vmatprep.mubr.f32.mxu0 0.0
    %2704 = vmatmul.mubr.f32.gmra.mrb[0].mxu0 %v2401
    %v2705 = vpop.f32.mrb[0].mxu0
    %v2706 = vadd.f32 0.0, %v2705
    %v2707 = vpop.f32.mrb[0].mxu0
    %2708 = vmatprep.mubr.f32.mxu0 0.0
    %2709 = vmatmul.mubr.f32.gmra.mrb[0].mxu0 %v2404
    %v2710 = vpop.f32.mrb[0].mxu0
    %v2711 = vadd.f32 0.0, %v2710
    %v2712 = vpop.f32.mrb[0].mxu0
    %2713 = vmatprep.mubr.f32.mxu0 0.0
    %2714 = vmatmul.mubr.f32.gmra.mrb[0].mxu0 %v2407
    %v2715 = vpop.f32.mrb[0].mxu0
    %v2716 = vadd.f32 0.0, %v2715
    %v2717 = vpop.f32.mrb[0].mxu0
    %2718 = vmatprep.mubr.f32.mxu0 0.0
    %2719 = vmatmul.mubr.f32.gmra.mrb[0].mxu0 %v2410
    %v2720 = vpop.f32.mrb[0].mxu0
    %v2721 = vadd.f32 0.0, %v2720
    %v2722 = vpop.f32.mrb[0].mxu0
    %2723 = vmatprep.mubr.f32.mxu0 0.0
    %2724 = vmatmul.mubr.f32.gmra.mrb[0].mxu0 %v2413
    %v2725 = vpop.f32.mrb[0].mxu0
    %v2726 = vadd.f32 0.0, %v2725
    %v2727 = vpop.f32.mrb[0].mxu0
    %2728 = vmatprep.mubr.f32.mxu0 0.0
    %2729 = vmatmul.mubr.f32.gmra.mrb[0].mxu0 %v2416
    %v2730 = vpop.f32.mrb[0].mxu0
    %v2731 = vadd.f32 0.0, %v2730
    %v2732 = vpop.f32.mrb[0].mxu0
    %2733 = vmatprep.mubr.f32.mxu0 0.0
    %2734 = vmatmul.mubr.f32.gmra.mrb[0].mxu0 %v2419
    %v2735 = vpop.f32.mrb[0].mxu0
    %v2736 = vadd.f32 0.0, %v2735
    %v2737 = vpop.f32.mrb[0].mxu0
    %2738 = vmatprep.mubr.f32.mxu0 0.0
    %2739 = vmatmul.mubr.f32.gmra.mrb[0].mxu0 %v2422
    %v2740 = vpop.f32.mrb[0].mxu0
    %v2741 = vadd.f32 0.0, %v2740
    %v2742 = vpop.f32.mrb[0].mxu0
    %2743 = vmatprep.mubr.f32.mxu0 0.0
    %2744 = vmatmul.mubr.f32.gmra.mrb[0].mxu0 %v2425
    %v2745 = vpop.f32.mrb[0].mxu0
    %v2746 = vadd.f32 0.0, %v2745
    %v2747 = vpop.f32.mrb[0].mxu0
    %2748 = vmatprep.mubr.f32.mxu0 0.0
    %2749 = vmatmul.mubr.f32.gmra.mrb[0].mxu0 %v2428
    %v2750 = vpop.f32.mrb[0].mxu0
    %v2751 = vadd.f32 0.0, %v2750
    %v2752 = vpop.f32.mrb[0].mxu0
    %2753 = vmatprep.mubr.f32.mxu0 0.0
    %2754 = vmatmul.mubr.f32.gmra.mrb[0].mxu0 %v2431
    %v2755 = vpop.f32.mrb[0].mxu0
    %v2756 = vadd.f32 0.0, %v2755
    %v2757 = vpop.f32.mrb[0].mxu0
    %2758 = vmatprep.mubr.f32.mxu0 0.0
    %2759 = vmatmul.mubr.f32.gmra.mrb[0].mxu0 %v2434
    %v2760 = vpop.f32.mrb[0].mxu0
    %v2761 = vadd.f32 0.0, %v2760
    %v2762 = vpop.f32.mrb[0].mxu0
    %2763 = vmatprep.mubr.f32.mxu0 0.0
    %2764 = vmatmul.mubr.f32.gmra.mrb[0].mxu0 %v2437
    %v2765 = vpop.f32.mrb[0].mxu0
    %v2766 = vadd.f32 0.0, %v2765
    %v2767 = vpop.f32.mrb[0].mxu0
    %2768 = vmatprep.mubr.f32.mxu0 0.0
    %2769 = vmatmul.mubr.f32.gmra.mrb[0].mxu0 %v2440
    %v2770 = vpop.f32.mrb[0].mxu0
    %v2771 = vadd.f32 0.0, %v2770
    %v2772 = vpop.f32.mrb[0].mxu0
    %2773 = vmatprep.mubr.f32.mxu0 0.0
    %2774 = vmatmul.mubr.f32.gmra.mrb[0].mxu0 %v2443
    %v2775 = vpop.f32.mrb[0].mxu0
    %v2776 = vadd.f32 0.0, %v2775
    %v2777 = vpop.f32.mrb[0].mxu0
    %2778 = vmatprep.mubr.f32.mxu0 0.0
    %2779 = vmatmul.mubr.f32.gmra.mrb[0].mxu0 %v2446
    %v2780 = vpop.f32.mrb[0].mxu0
    %v2781 = vadd.f32 0.0, %v2780
    %v2782 = vpop.f32.mrb[0].mxu0
    %2783 = vmatprep.mubr.f32.mxu0 0.0
    %2784 = vmatmul.mubr.f32.gmra.mrb[0].mxu0 %v2449
    %v2785 = vpop.f32.mrb[0].mxu0
    %v2786 = vadd.f32 0.0, %v2785
    %v2787 = vpop.f32.mrb[0].mxu0
    %2788 = vmatprep.mubr.f32.mxu0 0.0
    %2789 = vmatmul.mubr.f32.gmra.mrb[0].mxu0 %v2452
    %v2790 = vpop.f32.mrb[0].mxu0
    %v2791 = vadd.f32 0.0, %v2790
    %v2792 = vpop.f32.mrb[0].mxu0
    %2793 = vmatprep.mubr.f32.mxu0 0.0
    %2794 = vmatmul.mubr.f32.gmra.mrb[0].mxu0 %v2455
    %v2795 = vpop.f32.mrb[0].mxu0
    %v2796 = vadd.f32 0.0, %v2795
    %v2797 = vpop.f32.mrb[0].mxu0
    %2798 = vmatprep.mubr.f32.mxu0 0.0
    %2799 = vmatmul.mubr.f32.gmra.mrb[0].mxu0 %v2458
    %v2800 = vpop.f32.mrb[0].mxu0
    %v2801 = vadd.f32 0.0, %v2800
    %v2802 = vpop.f32.mrb[0].mxu0
    %2803 = vmatprep.mubr.f32.mxu0 0.0
    %2804 = vmatmul.mubr.f32.gmra.mrb[0].mxu0 %v2461
    %v2805 = vpop.f32.mrb[0].mxu0
    %v2806 = vadd.f32 0.0, %v2805
    %v2807 = vpop.f32.mrb[0].mxu0
    %2808 = vmatprep.mubr.f32.mxu0 0.0
    %2809 = vmatmul.mubr.f32.gmra.mrb[0].mxu0 %v2464
    %v2810 = vpop.f32.mrb[0].mxu0
    %v2811 = vadd.f32 0.0, %v2810
    %v2812 = vpop.f32.mrb[0].mxu0
    %2813 = vmatprep.mubr.f32.mxu0 0.0
    %2814 = vmatmul.mubr.f32.gmra.mrb[0].mxu0 %v2467
    %v2815 = vpop.f32.mrb[0].mxu0
    %v2816 = vadd.f32 0.0, %v2815
    %v2817 = vpop.f32.mrb[0].mxu0
    %2818 = vmatprep.mubr.f32.mxu0 0.0
    %2819 = vmatmul.mubr.f32.gmra.mrb[0].mxu0 %v2470
    %v2820 = vpop.f32.mrb[0].mxu0
    %v2821 = vadd.f32 0.0, %v2820
    %v2822 = vpop.f32.mrb[0].mxu0
    %2823 = vmatprep.mubr.f32.mxu0 0.0
    %2824 = vmatmul.mubr.f32.gmra.mrb[0].mxu0 %v2473
    %v2825 = vpop.f32.mrb[0].mxu0
    %v2826 = vadd.f32 0.0, %v2825
    %v2827 = vpop.f32.mrb[0].mxu0
    %2828 = vmatprep.mubr.f32.mxu0 0.0
    %2829 = vmatmul.mubr.f32.gmra.mrb[0].mxu0 %v2476
    %v2830 = vpop.f32.mrb[0].mxu0
    %v2831 = vadd.f32 0.0, %v2830
    %v2832 = vpop.f32.mrb[0].mxu0
    %2833 = vmatprep.mubr.f32.mxu0 0.0
    %2834 = vmatmul.mubr.f32.gmra.mrb[0].mxu0 %v2479
    %v2835 = vpop.f32.mrb[0].mxu0
    %v2836 = vadd.f32 0.0, %v2835
    %v2837 = vpop.f32.mrb[0].mxu0
    %2838 = vmatprep.mubr.f32.mxu0 0.0
    %2839 = vmatmul.mubr.f32.gmra.mrb[0].mxu0 %v2482
    %v2840 = vpop.f32.mrb[0].mxu0
    %v2841 = vadd.f32 0.0, %v2840
    %v2842 = vpop.f32.mrb[0].mxu0
    %2843 = vmatprep.mubr.f32.mxu0 0.0
    %2844 = vmatmul.mubr.f32.gmra.mrb[0].mxu0 %v2485
    %v2845 = vpop.f32.mrb[0].mxu0
    %v2846 = vadd.f32 0.0, %v2845
    %v2847 = vpop.f32.mrb[0].mxu0
    %2848 = vmatprep.mubr.f32.mxu0 0.0
    %2849 = vmatmul.mubr.f32.gmra.mrb[0].mxu0 %v2488
    %v2850 = vpop.f32.mrb[0].mxu0
    %v2851 = vadd.f32 0.0, %v2850
    %v2852 = vpop.f32.mrb[0].mxu0
    %2853 = vmatprep.mubr.f32.mxu0 0.0
    %2854 = vmatmul.mubr.f32.gmra.mrb[0].mxu0 %v2491
    %v2855 = vpop.f32.mrb[0].mxu0
    %v2856 = vadd.f32 0.0, %v2855
    %v2857 = vpop.f32.mrb[0].mxu0
    %2858 = vmatprep.mubr.f32.mxu0 0.0
    %2859 = vmatmul.mubr.f32.gmra.mrb[0].mxu0 %v2494
    %v2860 = vpop.f32.mrb[0].mxu0
    %v2861 = vadd.f32 0.0, %v2860
    %v2862 = vpop.f32.mrb[0].mxu0
    %2863 = vmatprep.mubr.f32.mxu0 0.0
    %2864 = vmatmul.mubr.f32.gmra.mrb[0].mxu0 %v2497
    %v2865 = vpop.f32.mrb[0].mxu0
    %v2866 = vadd.f32 0.0, %v2865
    %v2867 = vpop.f32.mrb[0].mxu0
    %2868 = vmatprep.mubr.f32.mxu0 0.0
    %2869 = vmatmul.mubr.f32.gmra.mrb[0].mxu0 %v2500
    %v2870 = vpop.f32.mrb[0].mxu0
    %v2871 = vadd.f32 0.0, %v2870
    %v2872 = vpop.f32.mrb[0].mxu0
    %2873 = vmatprep.mubr.f32.mxu0 0.0
    %2874 = vmatmul.mubr.f32.gmra.mrb[0].mxu0 %v2503
    %v2875 = vpop.f32.mrb[0].mxu0
    %v2876 = vadd.f32 0.0, %v2875
    %v2877 = vpop.f32.mrb[0].mxu0
    %2878 = vmatprep.mubr.f32.mxu0 0.0
    %2879 = vmatmul.mubr.f32.gmra.mrb[0].mxu0 %v2506
    %v2880 = vpop.f32.mrb[0].mxu0
    %v2881 = vadd.f32 0.0, %v2880
    %v2882 = vpop.f32.mrb[0].mxu0
    %2883 = vmatprep.mubr.f32.mxu0 0.0
    %2884 = vmatmul.mubr.f32.gmra.mrb[0].mxu0 %v2509
    %v2885 = vpop.f32.mrb[0].mxu0
    %v2886 = vadd.f32 0.0, %v2885
    %v2887 = vpop.f32.mrb[0].mxu0
    %2888 = vmatprep.mubr.f32.mxu0 0.0
    %2889 = vmatmul.mubr.f32.gmra.mrb[0].mxu0 %v2512
    %v2890 = vpop.f32.mrb[0].mxu0
    %v2891 = vadd.f32 0.0, %v2890
    %v2892 = vpop.f32.mrb[0].mxu0
    %2893 = vmatprep.mubr.f32.mxu0 0.0
    %2894 = vmatmul.mubr.f32.gmra.mrb[0].mxu0 %v2515
    %v2895 = vpop.f32.mrb[0].mxu0
    %v2896 = vadd.f32 0.0, %v2895
    %v2897 = vpop.f32.mrb[0].mxu0
    %2898 = vmatprep.mubr.f32.mxu0 0.0
    %2899 = vmatmul.mubr.f32.gmra.mrb[0].mxu0 %v2518
    %v2900 = vpop.f32.mrb[0].mxu0
    %v2901 = vadd.f32 0.0, %v2900
    %v2902 = vpop.f32.mrb[0].mxu0
    %2903 = vmatprep.mubr.f32.mxu0 0.0
    %2904 = vmatmul.mubr.f32.gmra.mrb[0].mxu0 %v2521
    %v2905 = vpop.f32.mrb[0].mxu0
    %v2906 = vadd.f32 0.0, %v2905
    %v2907 = vpop.f32.mrb[0].mxu0
    %2908 = vmatprep.mubr.f32.mxu0 0.0
    %2909 = vmatmul.mubr.f32.gmra.mrb[0].mxu0 %v2524
    %v2910 = vpop.f32.mrb[0].mxu0
    %v2911 = vadd.f32 0.0, %v2910
    %v2912 = vpop.f32.mrb[0].mxu0
    %2913 = vdwg.mxu0
    %v2914 = vadd.f32 %v2204, %v2596
    %v2915 = vadd.f32 %v2205, %v2601
    %v2916 = vadd.f32 %v2206, %v2606
    %v2917 = vadd.f32 %v2207, %v2611
    %v2918 = vadd.f32 %v2208, %v2616
    %v2919 = vadd.f32 %v2209, %v2621
    %v2920 = vadd.f32 %v2210, %v2626
    %v2921 = vadd.f32 %v2211, %v2631
    %v2922 = vadd.f32 %v2212, %v2636
    %v2923 = vadd.f32 %v2213, %v2641
    %v2924 = vadd.f32 %v2214, %v2646
    %v2925 = vadd.f32 %v2215, %v2651
    %v2926 = vadd.f32 %v2216, %v2656
    %v2927 = vadd.f32 %v2217, %v2661
    %v2928 = vadd.f32 %v2218, %v2666
    %v2929 = vadd.f32 %v2219, %v2671
    %v2930 = vadd.f32 %v2220, %v2676
    %v2931 = vadd.f32 %v2221, %v2681
    %v2932 = vadd.f32 %v2222, %v2686
    %v2933 = vadd.f32 %v2223, %v2691
    %v2934 = vadd.f32 %v2224, %v2696
    %v2935 = vadd.f32 %v2225, %v2701
    %v2936 = vadd.f32 %v2226, %v2706
    %v2937 = vadd.f32 %v2227, %v2711
    %v2938 = vadd.f32 %v2228, %v2716
    %v2939 = vadd.f32 %v2229, %v2721
    %v2940 = vadd.f32 %v2230, %v2726
    %v2941 = vadd.f32 %v2231, %v2731
    %v2942 = vadd.f32 %v2232, %v2736
    %v2943 = vadd.f32 %v2233, %v2741
    %v2944 = vadd.f32 %v2234, %v2746
    %v2945 = vadd.f32 %v2235, %v2751
    %v2946 = vadd.f32 %v2236, %v2756
    %v2947 = vadd.f32 %v2237, %v2761
    %v2948 = vadd.f32 %v2238, %v2766
    %v2949 = vadd.f32 %v2239, %v2771
    %v2950 = vadd.f32 %v2240, %v2776
    %v2951 = vadd.f32 %v2241, %v2781
    %v2952 = vadd.f32 %v2242, %v2786
    %v2953 = vadd.f32 %v2243, %v2791
    %v2954 = vadd.f32 %v2244, %v2796
    %v2955 = vadd.f32 %v2245, %v2801
    %v2956 = vadd.f32 %v2246, %v2806
    %v2957 = vadd.f32 %v2247, %v2811
    %v2958 = vadd.f32 %v2248, %v2816
    %v2959 = vadd.f32 %v2249, %v2821
    %v2960 = vadd.f32 %v2250, %v2826
    %v2961 = vadd.f32 %v2251, %v2831
    %v2962 = vadd.f32 %v2252, %v2836
    %v2963 = vadd.f32 %v2253, %v2841
    %v2964 = vadd.f32 %v2254, %v2846
    %v2965 = vadd.f32 %v2255, %v2851
    %v2966 = vadd.f32 %v2256, %v2856
    %v2967 = vadd.f32 %v2257, %v2861
    %v2968 = vadd.f32 %v2258, %v2866
    %v2969 = vadd.f32 %v2259, %v2871
    %v2970 = vadd.f32 %v2260, %v2876
    %v2971 = vadd.f32 %v2261, %v2881
    %v2972 = vadd.f32 %v2262, %v2886
    %v2973 = vadd.f32 %v2263, %v2891
    %v2974 = vadd.f32 %v2264, %v2896
    %v2975 = vadd.f32 %v2265, %v2901
    %v2976 = vadd.f32 %v2266, %v2906
    %v2977 = vadd.f32 %v2267, %v2911
    %v2978 = vld [vmem:[%s201 + $0x1] sm:$0xff]
    %v2979 = vld [vmem:[%s201 + $0x9] sm:$0xff]
    %v2980 = vld [vmem:[%s201 + $0x19] sm:$0xff]
    %v2981 = vld [vmem:[%s201 + $0x21] sm:$0xff]
    %v2982 = vld [vmem:[%s201 + $0x31] sm:$0xff]
    %v2983 = vld [vmem:[%s201 + $0x39] sm:$0xff]
    %v2984 = vld [vmem:[%s201 + $0x49] sm:$0xff]
    %v2985 = vld [vmem:[%s201 + $0x51] sm:$0xff]
    %v2986 = vld [vmem:[%s201 + $0x61] sm:$0xff]
    %v2987 = vld [vmem:[%s201 + $0x69] sm:$0xff]
    %v2988 = vld [vmem:[%s201 + $0x79] sm:$0xff]
    %v2989 = vld [vmem:[%s201 + $0x81] sm:$0xff]
    %v2990 = vld [vmem:[%s201 + $0x91] sm:$0xff]
    %v2991 = vld [vmem:[%s201 + $0x99] sm:$0xff]
    %v2992 = vld [vmem:[%s201 + $0xa9] sm:$0xff]
    %v2993 = vld [vmem:[%s201 + $0xb1] sm:$0xff]
    %v2994 = vld [vmem:[%s201 + $0xc1] sm:$0xff]
    %v2995 = vld [vmem:[%s201 + $0xc9] sm:$0xff]
    %v2996 = vld [vmem:[%s201 + $0xd9] sm:$0xff]
    %v2997 = vld [vmem:[%s201 + $0xe1] sm:$0xff]
    %v2998 = vld [vmem:[%s201 + $0xf1] sm:$0xff]
    %v2999 = vld [vmem:[%s201 + $0xf9] sm:$0xff]
    %v3000 = vld [vmem:[%s201 + $0x109] sm:$0xff]
    %v3001 = vld [vmem:[%s201 + $0x111] sm:$0xff]
    %v3002 = vld [vmem:[%s201 + $0x121] sm:$0xff]
    %v3003 = vld [vmem:[%s201 + $0x129] sm:$0xff]
    %v3004 = vld [vmem:[%s201 + $0x139] sm:$0xff]
    %v3005 = vld [vmem:[%s201 + $0x141] sm:$0xff]
    %v3006 = vld [vmem:[%s201 + $0x151] sm:$0xff]
    %v3007 = vld [vmem:[%s201 + $0x159] sm:$0xff]
    %v3008 = vld [vmem:[%s201 + $0x169] sm:$0xff]
    %v3009 = vld [vmem:[%s201 + $0x171] sm:$0xff]
    %v3010 = vld [vmem:[%s201 + $0x1b1] sm:$0xff]
    %v3011 = vld [vmem:[%s201 + $0x1b9] sm:$0xff]
    %v3012 = vld [vmem:[%s201 + $0x1c9] sm:$0xff]
    %v3013 = vld [vmem:[%s201 + $0x1d1] sm:$0xff]
    %v3014 = vld [vmem:[%s201 + $0x1e1] sm:$0xff]
    %v3015 = vld [vmem:[%s201 + $0x1e9] sm:$0xff]
    %v3016 = vld [vmem:[%s201 + $0x1f9] sm:$0xff]
    %v3017 = vld [vmem:[%s201 + $0x201] sm:$0xff]
    %v3018 = vld [vmem:[%s201 + $0x211] sm:$0xff]
    %v3019 = vld [vmem:[%s201 + $0x219] sm:$0xff]
    %v3020 = vld [vmem:[%s201 + $0x229] sm:$0xff]
    %v3021 = vld [vmem:[%s201 + $0x231] sm:$0xff]
    %v3022 = vld [vmem:[%s201 + $0x241] sm:$0xff]
    %v3023 = vld [vmem:[%s201 + $0x249] sm:$0xff]
    %v3024 = vld [vmem:[%s201 + $0x259] sm:$0xff]
    %v3025 = vld [vmem:[%s201 + $0x261] sm:$0xff]
    %v3026 = vld [vmem:[%s201 + $0x271] sm:$0xff]
    %v3027 = vld [vmem:[%s201 + $0x279] sm:$0xff]
    %v3028 = vld [vmem:[%s201 + $0x289] sm:$0xff]
    %v3029 = vld [vmem:[%s201 + $0x291] sm:$0xff]
    %v3030 = vld [vmem:[%s201 + $0x2a1] sm:$0xff]
    %v3031 = vld [vmem:[%s201 + $0x2a9] sm:$0xff]
    %v3032 = vld [vmem:[%s201 + $0x2b9] sm:$0xff]
    %v3033 = vld [vmem:[%s201 + $0x2c1] sm:$0xff]
    %v3034 = vld [vmem:[%s201 + $0x2d1] sm:$0xff]
    %v3035 = vld [vmem:[%s201 + $0x2d9] sm:$0xff]
    %v3036 = vld [vmem:[%s201 + $0x2e9] sm:$0xff]
    %v3037 = vld [vmem:[%s201 + $0x2f1] sm:$0xff]
    %v3038 = vld [vmem:[%s201 + $0x301] sm:$0xff]
    %v3039 = vld [vmem:[%s201 + $0x309] sm:$0xff]
    %v3040 = vld [vmem:[%s201 + $0x319] sm:$0xff]
    %v3041 = vld [vmem:[%s201 + $0x321] sm:$0xff]
    %s3042 = scalar_lea.vmem %s1, 16
    %v3043 = vld [vmem:[%s3042] sm:$0x7]
    %v3045 = vsel %vm91, %v2978, 0
    %v3048 = vsel %vm91, %v2979, 0
    %v3051 = vsel %vm91, %v2980, 0
    %v3054 = vsel %vm91, %v2981, 0
    %v3057 = vsel %vm91, %v2982, 0
    %v3060 = vsel %vm91, %v2983, 0
    %v3063 = vsel %vm91, %v2984, 0
    %v3066 = vsel %vm91, %v2985, 0
    %v3069 = vsel %vm91, %v2986, 0
    %v3072 = vsel %vm91, %v2987, 0
    %v3075 = vsel %vm91, %v2988, 0
    %v3078 = vsel %vm91, %v2989, 0
    %v3081 = vsel %vm91, %v2990, 0
    %v3084 = vsel %vm91, %v2991, 0
    %v3087 = vsel %vm91, %v2992, 0
    %v3090 = vsel %vm91, %v2993, 0
    %v3093 = vsel %vm91, %v2994, 0
    %v3096 = vsel %vm91, %v2995, 0
    %v3099 = vsel %vm91, %v2996, 0
    %v3102 = vsel %vm91, %v2997, 0
    %v3105 = vsel %vm91, %v2998, 0
    %v3108 = vsel %vm91, %v2999, 0
    %v3111 = vsel %vm91, %v3000, 0
    %v3114 = vsel %vm91, %v3001, 0
    %v3117 = vsel %vm91, %v3002, 0
    %v3120 = vsel %vm91, %v3003, 0
    %v3123 = vsel %vm91, %v3004, 0
    %v3126 = vsel %vm91, %v3005, 0
    %v3129 = vsel %vm91, %v3006, 0
    %v3132 = vsel %vm91, %v3007, 0
    %v3135 = vsel %vm91, %v3008, 0
    %v3138 = vsel %vm91, %v3009, 0
    %v3141 = vsel %vm91, %v3010, 0
    %v3144 = vsel %vm91, %v3011, 0
    %v3147 = vsel %vm91, %v3012, 0
    %v3150 = vsel %vm91, %v3013, 0
    %v3153 = vsel %vm91, %v3014, 0
    %v3156 = vsel %vm91, %v3015, 0
    %v3159 = vsel %vm91, %v3016, 0
    %v3162 = vsel %vm91, %v3017, 0
    %v3165 = vsel %vm91, %v3018, 0
    %v3168 = vsel %vm91, %v3019, 0
    %v3171 = vsel %vm91, %v3020, 0
    %v3174 = vsel %vm91, %v3021, 0
    %v3177 = vsel %vm91, %v3022, 0
    %v3180 = vsel %vm91, %v3023, 0
    %v3183 = vsel %vm91, %v3024, 0
    %v3186 = vsel %vm91, %v3025, 0
    %v3189 = vsel %vm91, %v3026, 0
    %v3192 = vsel %vm91, %v3027, 0
    %v3195 = vsel %vm91, %v3028, 0
    %v3198 = vsel %vm91, %v3029, 0
    %v3201 = vsel %vm91, %v3030, 0
    %v3204 = vsel %vm91, %v3031, 0
    %v3207 = vsel %vm91, %v3032, 0
    %v3210 = vsel %vm91, %v3033, 0
    %v3213 = vsel %vm91, %v3034, 0
    %v3216 = vsel %vm91, %v3035, 0
    %v3219 = vsel %vm91, %v3036, 0
    %v3222 = vsel %vm91, %v3037, 0
    %v3225 = vsel %vm91, %v3038, 0
    %v3228 = vsel %vm91, %v3039, 0
    %v3231 = vsel %vm91, %v3040, 0
    %v3234 = vsel %vm91, %v3041, 0
    %v3237 = vsel %vm589, %v3043, 0
    %3239 = vmatprep.subr.mxu0 0.0
    %3240 = vmatpush1.msra.mxu0 %v3237
    %3241 = vmatprep.subr.mxu0 0.0
    %3242 = vmatpush1.msra.mxu0 0.0
    %3243 = vmatprep.subr.mxu0 0.0
    %3244 = vmatpush1.msra.mxu0 0.0
    %3245 = vmatprep.subr.mxu0 0.0
    %3246 = vmatpush1.msra.mxu0 0.0
    %3247 = vmatprep.subr.mxu0 0.0
    %3248 = vmatpush1.msra.mxu0 0.0
    %3249 = vmatprep.subr.mxu0 0.0
    %3250 = vmatpush1.msra.mxu0 0.0
    %3251 = vmatprep.subr.mxu0 0.0
    %3252 = vmatpush1.msra.mxu0 0.0
    %3253 = vmatprep.subr.mxu0 0.0
    %3254 = vmatpush1.msra.mxu0 0.0
    %3255 = vmatprep.subr.mxu0 0.0
    %3256 = vmatpush1.msra.mxu0 0.0
    %3257 = vmatprep.subr.mxu0 0.0
    %3258 = vmatpush1.msra.mxu0 0.0
    %3259 = vmatprep.subr.mxu0 0.0
    %3260 = vmatpush1.msra.mxu0 0.0
    %3261 = vmatprep.subr.mxu0 0.0
    %3262 = vmatpush1.msra.mxu0 0.0
    %3263 = vmatprep.subr.mxu0 0.0
    %3264 = vmatpush1.msra.mxu0 0.0
    %3265 = vmatprep.subr.mxu0 0.0
    %3266 = vmatpush1.msra.mxu0 0.0
    %3267 = vmatprep.subr.mxu0 0.0
    %3268 = vmatpush1.msra.mxu0 0.0
    %3269 = vmatprep.subr.mxu0 0.0
    %3270 = vmatpush1.msra.mxu0 0.0
    %3271 = vmatprep.subr.mxu0 0.0
    %3272 = vmatpush1.msra.mxu0 0.0
    %3273 = vmatprep.subr.mxu0 0.0
    %3274 = vmatpush1.msra.mxu0 0.0
    %3275 = vmatprep.subr.mxu0 0.0
    %3276 = vmatpush1.msra.mxu0 0.0
    %3277 = vmatprep.subr.mxu0 0.0
    %3278 = vmatpush1.msra.mxu0 0.0
    %3279 = vmatprep.subr.mxu0 0.0
    %3280 = vmatpush1.msra.mxu0 0.0
    %3281 = vmatprep.subr.mxu0 0.0
    %3282 = vmatpush1.msra.mxu0 0.0
    %3283 = vmatprep.subr.mxu0 0.0
    %3284 = vmatpush1.msra.mxu0 0.0
    %3285 = vmatprep.subr.mxu0 0.0
    %3286 = vmatpush1.msra.mxu0 0.0
    %3287 = vmatprep.subr.mxu0 0.0
    %3288 = vmatpush1.msra.mxu0 0.0
    %3289 = vmatprep.subr.mxu0 0.0
    %3290 = vmatpush1.msra.mxu0 0.0
    %3291 = vmatprep.subr.mxu0 0.0
    %3292 = vmatpush1.msra.mxu0 0.0
    %3293 = vmatprep.subr.mxu0 0.0
    %3294 = vmatpush1.msra.mxu0 0.0
    %3295 = vmatprep.subr.mxu0 0.0
    %3296 = vmatpush1.msra.mxu0 0.0
    %3297 = vmatprep.subr.mxu0 0.0
    %3298 = vmatpush1.msra.mxu0 0.0
    %3299 = vmatprep.subr.mxu0 0.0
    %3300 = vmatpush1.msra.mxu0 0.0
    %3301 = vmatprep.subr.mxu0 0.0
    %3302 = vmatpush1.msra.mxu0 0.0
    %3303 = vmatprep.mubr.f32.mxu0 0.0
    %3304 = vmatmul.mubr.f32.gmra.mrb[0].mxu0 %v3045
    %v3305 = vpop.f32.mrb[0].mxu0
    %v3306 = vadd.f32 0.0, %v3305
    %v3307 = vpop.f32.mrb[0].mxu0
    %3308 = vmatprep.mubr.f32.mxu0 0.0
    %3309 = vmatmul.mubr.f32.gmra.mrb[0].mxu0 %v3048
    %v3310 = vpop.f32.mrb[0].mxu0
    %v3311 = vadd.f32 0.0, %v3310
    %v3312 = vpop.f32.mrb[0].mxu0
    %3313 = vmatprep.mubr.f32.mxu0 0.0
    %3314 = vmatmul.mubr.f32.gmra.mrb[0].mxu0 %v3051
    %v3315 = vpop.f32.mrb[0].mxu0
    %v3316 = vadd.f32 0.0, %v3315
    %v3317 = vpop.f32.mrb[0].mxu0
    %3318 = vmatprep.mubr.f32.mxu0 0.0
    %3319 = vmatmul.mubr.f32.gmra.mrb[0].mxu0 %v3054
    %v3320 = vpop.f32.mrb[0].mxu0
    %v3321 = vadd.f32 0.0, %v3320
    %v3322 = vpop.f32.mrb[0].mxu0
    %3323 = vmatprep.mubr.f32.mxu0 0.0
    %3324 = vmatmul.mubr.f32.gmra.mrb[0].mxu0 %v3057
    %v3325 = vpop.f32.mrb[0].mxu0
    %v3326 = vadd.f32 0.0, %v3325
    %v3327 = vpop.f32.mrb[0].mxu0
    %3328 = vmatprep.mubr.f32.mxu0 0.0
    %3329 = vmatmul.mubr.f32.gmra.mrb[0].mxu0 %v3060
    %v3330 = vpop.f32.mrb[0].mxu0
    %v3331 = vadd.f32 0.0, %v3330
    %v3332 = vpop.f32.mrb[0].mxu0
    %3333 = vmatprep.mubr.f32.mxu0 0.0
    %3334 = vmatmul.mubr.f32.gmra.mrb[0].mxu0 %v3063
    %v3335 = vpop.f32.mrb[0].mxu0
    %v3336 = vadd.f32 0.0, %v3335
    %v3337 = vpop.f32.mrb[0].mxu0
    %3338 = vmatprep.mubr.f32.mxu0 0.0
    %3339 = vmatmul.mubr.f32.gmra.mrb[0].mxu0 %v3066
    %v3340 = vpop.f32.mrb[0].mxu0
    %v3341 = vadd.f32 0.0, %v3340
    %v3342 = vpop.f32.mrb[0].mxu0
    %3343 = vmatprep.mubr.f32.mxu0 0.0
    %3344 = vmatmul.mubr.f32.gmra.mrb[0].mxu0 %v3069
    %v3345 = vpop.f32.mrb[0].mxu0
    %v3346 = vadd.f32 0.0, %v3345
    %v3347 = vpop.f32.mrb[0].mxu0
    %3348 = vmatprep.mubr.f32.mxu0 0.0
    %3349 = vmatmul.mubr.f32.gmra.mrb[0].mxu0 %v3072
    %v3350 = vpop.f32.mrb[0].mxu0
    %v3351 = vadd.f32 0.0, %v3350
    %v3352 = vpop.f32.mrb[0].mxu0
    %3353 = vmatprep.mubr.f32.mxu0 0.0
    %3354 = vmatmul.mubr.f32.gmra.mrb[0].mxu0 %v3075
    %v3355 = vpop.f32.mrb[0].mxu0
    %v3356 = vadd.f32 0.0, %v3355
    %v3357 = vpop.f32.mrb[0].mxu0
    %3358 = vmatprep.mubr.f32.mxu0 0.0
    %3359 = vmatmul.mubr.f32.gmra.mrb[0].mxu0 %v3078
    %v3360 = vpop.f32.mrb[0].mxu0
    %v3361 = vadd.f32 0.0, %v3360
    %v3362 = vpop.f32.mrb[0].mxu0
    %3363 = vmatprep.mubr.f32.mxu0 0.0
    %3364 = vmatmul.mubr.f32.gmra.mrb[0].mxu0 %v3081
    %v3365 = vpop.f32.mrb[0].mxu0
    %v3366 = vadd.f32 0.0, %v3365
    %v3367 = vpop.f32.mrb[0].mxu0
    %3368 = vmatprep.mubr.f32.mxu0 0.0
    %3369 = vmatmul.mubr.f32.gmra.mrb[0].mxu0 %v3084
    %v3370 = vpop.f32.mrb[0].mxu0
    %v3371 = vadd.f32 0.0, %v3370
    %v3372 = vpop.f32.mrb[0].mxu0
    %3373 = vmatprep.mubr.f32.mxu0 0.0
    %3374 = vmatmul.mubr.f32.gmra.mrb[0].mxu0 %v3087
    %v3375 = vpop.f32.mrb[0].mxu0
    %v3376 = vadd.f32 0.0, %v3375
    %v3377 = vpop.f32.mrb[0].mxu0
    %3378 = vmatprep.mubr.f32.mxu0 0.0
    %3379 = vmatmul.mubr.f32.gmra.mrb[0].mxu0 %v3090
    %v3380 = vpop.f32.mrb[0].mxu0
    %v3381 = vadd.f32 0.0, %v3380
    %v3382 = vpop.f32.mrb[0].mxu0
    %3383 = vmatprep.mubr.f32.mxu0 0.0
    %3384 = vmatmul.mubr.f32.gmra.mrb[0].mxu0 %v3093
    %v3385 = vpop.f32.mrb[0].mxu0
    %v3386 = vadd.f32 0.0, %v3385
    %v3387 = vpop.f32.mrb[0].mxu0
    %3388 = vmatprep.mubr.f32.mxu0 0.0
    %3389 = vmatmul.mubr.f32.gmra.mrb[0].mxu0 %v3096
    %v3390 = vpop.f32.mrb[0].mxu0
    %v3391 = vadd.f32 0.0, %v3390
    %v3392 = vpop.f32.mrb[0].mxu0
    %3393 = vmatprep.mubr.f32.mxu0 0.0
    %3394 = vmatmul.mubr.f32.gmra.mrb[0].mxu0 %v3099
    %v3395 = vpop.f32.mrb[0].mxu0
    %v3396 = vadd.f32 0.0, %v3395
    %v3397 = vpop.f32.mrb[0].mxu0
    %3398 = vmatprep.mubr.f32.mxu0 0.0
    %3399 = vmatmul.mubr.f32.gmra.mrb[0].mxu0 %v3102
    %v3400 = vpop.f32.mrb[0].mxu0
    %v3401 = vadd.f32 0.0, %v3400
    %v3402 = vpop.f32.mrb[0].mxu0
    %3403 = vmatprep.mubr.f32.mxu0 0.0
    %3404 = vmatmul.mubr.f32.gmra.mrb[0].mxu0 %v3105
    %v3405 = vpop.f32.mrb[0].mxu0
    %v3406 = vadd.f32 0.0, %v3405
    %v3407 = vpop.f32.mrb[0].mxu0
    %3408 = vmatprep.mubr.f32.mxu0 0.0
    %3409 = vmatmul.mubr.f32.gmra.mrb[0].mxu0 %v3108
    %v3410 = vpop.f32.mrb[0].mxu0
    %v3411 = vadd.f32 0.0, %v3410
    %v3412 = vpop.f32.mrb[0].mxu0
    %3413 = vmatprep.mubr.f32.mxu0 0.0
    %3414 = vmatmul.mubr.f32.gmra.mrb[0].mxu0 %v3111
    %v3415 = vpop.f32.mrb[0].mxu0
    %v3416 = vadd.f32 0.0, %v3415
    %v3417 = vpop.f32.mrb[0].mxu0
    %3418 = vmatprep.mubr.f32.mxu0 0.0
    %3419 = vmatmul.mubr.f32.gmra.mrb[0].mxu0 %v3114
    %v3420 = vpop.f32.mrb[0].mxu0
    %v3421 = vadd.f32 0.0, %v3420
    %v3422 = vpop.f32.mrb[0].mxu0
    %3423 = vmatprep.mubr.f32.mxu0 0.0
    %3424 = vmatmul.mubr.f32.gmra.mrb[0].mxu0 %v3117
    %v3425 = vpop.f32.mrb[0].mxu0
    %v3426 = vadd.f32 0.0, %v3425
    %v3427 = vpop.f32.mrb[0].mxu0
    %3428 = vmatprep.mubr.f32.mxu0 0.0
    %3429 = vmatmul.mubr.f32.gmra.mrb[0].mxu0 %v3120
    %v3430 = vpop.f32.mrb[0].mxu0
    %v3431 = vadd.f32 0.0, %v3430
    %v3432 = vpop.f32.mrb[0].mxu0
    %3433 = vmatprep.mubr.f32.mxu0 0.0
    %3434 = vmatmul.mubr.f32.gmra.mrb[0].mxu0 %v3123
    %v3435 = vpop.f32.mrb[0].mxu0
    %v3436 = vadd.f32 0.0, %v3435
    %v3437 = vpop.f32.mrb[0].mxu0
    %3438 = vmatprep.mubr.f32.mxu0 0.0
    %3439 = vmatmul.mubr.f32.gmra.mrb[0].mxu0 %v3126
    %v3440 = vpop.f32.mrb[0].mxu0
    %v3441 = vadd.f32 0.0, %v3440
    %v3442 = vpop.f32.mrb[0].mxu0
    %3443 = vmatprep.mubr.f32.mxu0 0.0
    %3444 = vmatmul.mubr.f32.gmra.mrb[0].mxu0 %v3129
    %v3445 = vpop.f32.mrb[0].mxu0
    %v3446 = vadd.f32 0.0, %v3445
    %v3447 = vpop.f32.mrb[0].mxu0
    %3448 = vmatprep.mubr.f32.mxu0 0.0
    %3449 = vmatmul.mubr.f32.gmra.mrb[0].mxu0 %v3132
    %v3450 = vpop.f32.mrb[0].mxu0
    %v3451 = vadd.f32 0.0, %v3450
    %v3452 = vpop.f32.mrb[0].mxu0
    %3453 = vmatprep.mubr.f32.mxu0 0.0
    %3454 = vmatmul.mubr.f32.gmra.mrb[0].mxu0 %v3135
    %v3455 = vpop.f32.mrb[0].mxu0
    %v3456 = vadd.f32 0.0, %v3455
    %v3457 = vpop.f32.mrb[0].mxu0
    %3458 = vmatprep.mubr.f32.mxu0 0.0
    %3459 = vmatmul.mubr.f32.gmra.mrb[0].mxu0 %v3138
    %v3460 = vpop.f32.mrb[0].mxu0
    %v3461 = vadd.f32 0.0, %v3460
    %v3462 = vpop.f32.mrb[0].mxu0
    %3463 = vmatprep.mubr.f32.mxu0 0.0
    %3464 = vmatmul.mubr.f32.gmra.mrb[0].mxu0 %v3141
    %v3465 = vpop.f32.mrb[0].mxu0
    %v3466 = vadd.f32 0.0, %v3465
    %v3467 = vpop.f32.mrb[0].mxu0
    %3468 = vmatprep.mubr.f32.mxu0 0.0
    %3469 = vmatmul.mubr.f32.gmra.mrb[0].mxu0 %v3144
    %v3470 = vpop.f32.mrb[0].mxu0
    %v3471 = vadd.f32 0.0, %v3470
    %v3472 = vpop.f32.mrb[0].mxu0
    %3473 = vmatprep.mubr.f32.mxu0 0.0
    %3474 = vmatmul.mubr.f32.gmra.mrb[0].mxu0 %v3147
    %v3475 = vpop.f32.mrb[0].mxu0
    %v3476 = vadd.f32 0.0, %v3475
    %v3477 = vpop.f32.mrb[0].mxu0
    %3478 = vmatprep.mubr.f32.mxu0 0.0
    %3479 = vmatmul.mubr.f32.gmra.mrb[0].mxu0 %v3150
    %v3480 = vpop.f32.mrb[0].mxu0
    %v3481 = vadd.f32 0.0, %v3480
    %v3482 = vpop.f32.mrb[0].mxu0
    %3483 = vmatprep.mubr.f32.mxu0 0.0
    %3484 = vmatmul.mubr.f32.gmra.mrb[0].mxu0 %v3153
    %v3485 = vpop.f32.mrb[0].mxu0
    %v3486 = vadd.f32 0.0, %v3485
    %v3487 = vpop.f32.mrb[0].mxu0
    %3488 = vmatprep.mubr.f32.mxu0 0.0
    %3489 = vmatmul.mubr.f32.gmra.mrb[0].mxu0 %v3156
    %v3490 = vpop.f32.mrb[0].mxu0
    %v3491 = vadd.f32 0.0, %v3490
    %v3492 = vpop.f32.mrb[0].mxu0
    %3493 = vmatprep.mubr.f32.mxu0 0.0
    %3494 = vmatmul.mubr.f32.gmra.mrb[0].mxu0 %v3159
    %v3495 = vpop.f32.mrb[0].mxu0
    %v3496 = vadd.f32 0.0, %v3495
    %v3497 = vpop.f32.mrb[0].mxu0
    %3498 = vmatprep.mubr.f32.mxu0 0.0
    %3499 = vmatmul.mubr.f32.gmra.mrb[0].mxu0 %v3162
    %v3500 = vpop.f32.mrb[0].mxu0
    %v3501 = vadd.f32 0.0, %v3500
    %v3502 = vpop.f32.mrb[0].mxu0
    %3503 = vmatprep.mubr.f32.mxu0 0.0
    %3504 = vmatmul.mubr.f32.gmra.mrb[0].mxu0 %v3165
    %v3505 = vpop.f32.mrb[0].mxu0
    %v3506 = vadd.f32 0.0, %v3505
    %v3507 = vpop.f32.mrb[0].mxu0
    %3508 = vmatprep.mubr.f32.mxu0 0.0
    %3509 = vmatmul.mubr.f32.gmra.mrb[0].mxu0 %v3168
    %v3510 = vpop.f32.mrb[0].mxu0
    %v3511 = vadd.f32 0.0, %v3510
    %v3512 = vpop.f32.mrb[0].mxu0
    %3513 = vmatprep.mubr.f32.mxu0 0.0
    %3514 = vmatmul.mubr.f32.gmra.mrb[0].mxu0 %v3171
    %v3515 = vpop.f32.mrb[0].mxu0
    %v3516 = vadd.f32 0.0, %v3515
    %v3517 = vpop.f32.mrb[0].mxu0
    %3518 = vmatprep.mubr.f32.mxu0 0.0
    %3519 = vmatmul.mubr.f32.gmra.mrb[0].mxu0 %v3174
    %v3520 = vpop.f32.mrb[0].mxu0
    %v3521 = vadd.f32 0.0, %v3520
    %v3522 = vpop.f32.mrb[0].mxu0
    %3523 = vmatprep.mubr.f32.mxu0 0.0
    %3524 = vmatmul.mubr.f32.gmra.mrb[0].mxu0 %v3177
    %v3525 = vpop.f32.mrb[0].mxu0
    %v3526 = vadd.f32 0.0, %v3525
    %v3527 = vpop.f32.mrb[0].mxu0
    %3528 = vmatprep.mubr.f32.mxu0 0.0
    %3529 = vmatmul.mubr.f32.gmra.mrb[0].mxu0 %v3180
    %v3530 = vpop.f32.mrb[0].mxu0
    %v3531 = vadd.f32 0.0, %v3530
    %v3532 = vpop.f32.mrb[0].mxu0
    %3533 = vmatprep.mubr.f32.mxu0 0.0
    %3534 = vmatmul.mubr.f32.gmra.mrb[0].mxu0 %v3183
    %v3535 = vpop.f32.mrb[0].mxu0
    %v3536 = vadd.f32 0.0, %v3535
    %v3537 = vpop.f32.mrb[0].mxu0
    %3538 = vmatprep.mubr.f32.mxu0 0.0
    %3539 = vmatmul.mubr.f32.gmra.mrb[0].mxu0 %v3186
    %v3540 = vpop.f32.mrb[0].mxu0
    %v3541 = vadd.f32 0.0, %v3540
    %v3542 = vpop.f32.mrb[0].mxu0
    %3543 = vmatprep.mubr.f32.mxu0 0.0
    %3544 = vmatmul.mubr.f32.gmra.mrb[0].mxu0 %v3189
    %v3545 = vpop.f32.mrb[0].mxu0
    %v3546 = vadd.f32 0.0, %v3545
    %v3547 = vpop.f32.mrb[0].mxu0
    %3548 = vmatprep.mubr.f32.mxu0 0.0
    %3549 = vmatmul.mubr.f32.gmra.mrb[0].mxu0 %v3192
    %v3550 = vpop.f32.mrb[0].mxu0
    %v3551 = vadd.f32 0.0, %v3550
    %v3552 = vpop.f32.mrb[0].mxu0
    %3553 = vmatprep.mubr.f32.mxu0 0.0
    %3554 = vmatmul.mubr.f32.gmra.mrb[0].mxu0 %v3195
    %v3555 = vpop.f32.mrb[0].mxu0
    %v3556 = vadd.f32 0.0, %v3555
    %v3557 = vpop.f32.mrb[0].mxu0
    %3558 = vmatprep.mubr.f32.mxu0 0.0
    %3559 = vmatmul.mubr.f32.gmra.mrb[0].mxu0 %v3198
    %v3560 = vpop.f32.mrb[0].mxu0
    %v3561 = vadd.f32 0.0, %v3560
    %v3562 = vpop.f32.mrb[0].mxu0
    %3563 = vmatprep.mubr.f32.mxu0 0.0
    %3564 = vmatmul.mubr.f32.gmra.mrb[0].mxu0 %v3201
    %v3565 = vpop.f32.mrb[0].mxu0
    %v3566 = vadd.f32 0.0, %v3565
    %v3567 = vpop.f32.mrb[0].mxu0
    %3568 = vmatprep.mubr.f32.mxu0 0.0
    %3569 = vmatmul.mubr.f32.gmra.mrb[0].mxu0 %v3204
    %v3570 = vpop.f32.mrb[0].mxu0
    %v3571 = vadd.f32 0.0, %v3570
    %v3572 = vpop.f32.mrb[0].mxu0
    %3573 = vmatprep.mubr.f32.mxu0 0.0
    %3574 = vmatmul.mubr.f32.gmra.mrb[0].mxu0 %v3207
    %v3575 = vpop.f32.mrb[0].mxu0
    %v3576 = vadd.f32 0.0, %v3575
    %v3577 = vpop.f32.mrb[0].mxu0
    %3578 = vmatprep.mubr.f32.mxu0 0.0
    %3579 = vmatmul.mubr.f32.gmra.mrb[0].mxu0 %v3210
    %v3580 = vpop.f32.mrb[0].mxu0
    %v3581 = vadd.f32 0.0, %v3580
    %v3582 = vpop.f32.mrb[0].mxu0
    %3583 = vmatprep.mubr.f32.mxu0 0.0
    %3584 = vmatmul.mubr.f32.gmra.mrb[0].mxu0 %v3213
    %v3585 = vpop.f32.mrb[0].mxu0
    %v3586 = vadd.f32 0.0, %v3585
    %v3587 = vpop.f32.mrb[0].mxu0
    %3588 = vmatprep.mubr.f32.mxu0 0.0
    %3589 = vmatmul.mubr.f32.gmra.mrb[0].mxu0 %v3216
    %v3590 = vpop.f32.mrb[0].mxu0
    %v3591 = vadd.f32 0.0, %v3590
    %v3592 = vpop.f32.mrb[0].mxu0
    %3593 = vmatprep.mubr.f32.mxu0 0.0
    %3594 = vmatmul.mubr.f32.gmra.mrb[0].mxu0 %v3219
    %v3595 = vpop.f32.mrb[0].mxu0
    %v3596 = vadd.f32 0.0, %v3595
    %v3597 = vpop.f32.mrb[0].mxu0
    %3598 = vmatprep.mubr.f32.mxu0 0.0
    %3599 = vmatmul.mubr.f32.gmra.mrb[0].mxu0 %v3222
    %v3600 = vpop.f32.mrb[0].mxu0
    %v3601 = vadd.f32 0.0, %v3600
    %v3602 = vpop.f32.mrb[0].mxu0
    %3603 = vmatprep.mubr.f32.mxu0 0.0
    %3604 = vmatmul.mubr.f32.gmra.mrb[0].mxu0 %v3225
    %v3605 = vpop.f32.mrb[0].mxu0
    %v3606 = vadd.f32 0.0, %v3605
    %v3607 = vpop.f32.mrb[0].mxu0
    %3608 = vmatprep.mubr.f32.mxu0 0.0
    %3609 = vmatmul.mubr.f32.gmra.mrb[0].mxu0 %v3228
    %v3610 = vpop.f32.mrb[0].mxu0
    %v3611 = vadd.f32 0.0, %v3610
    %v3612 = vpop.f32.mrb[0].mxu0
    %3613 = vmatprep.mubr.f32.mxu0 0.0
    %3614 = vmatmul.mubr.f32.gmra.mrb[0].mxu0 %v3231
    %v3615 = vpop.f32.mrb[0].mxu0
    %v3616 = vadd.f32 0.0, %v3615
    %v3617 = vpop.f32.mrb[0].mxu0
    %3618 = vmatprep.mubr.f32.mxu0 0.0
    %3619 = vmatmul.mubr.f32.gmra.mrb[0].mxu0 %v3234
    %v3620 = vpop.f32.mrb[0].mxu0
    %v3621 = vadd.f32 0.0, %v3620
    %v3622 = vpop.f32.mrb[0].mxu0
    %3623 = vdwg.mxu0
    %v3624 = vadd.f32 %v2914, %v3306
    %v3625 = vadd.f32 %v2915, %v3311
    %v3626 = vadd.f32 %v2916, %v3316
    %v3627 = vadd.f32 %v2917, %v3321
    %v3628 = vadd.f32 %v2918, %v3326
    %v3629 = vadd.f32 %v2919, %v3331
    %v3630 = vadd.f32 %v2920, %v3336
    %v3631 = vadd.f32 %v2921, %v3341
    %v3632 = vadd.f32 %v2922, %v3346
    %v3633 = vadd.f32 %v2923, %v3351
    %v3634 = vadd.f32 %v2924, %v3356
    %v3635 = vadd.f32 %v2925, %v3361
    %v3636 = vadd.f32 %v2926, %v3366
    %v3637 = vadd.f32 %v2927, %v3371
    %v3638 = vadd.f32 %v2928, %v3376
    %v3639 = vadd.f32 %v2929, %v3381
    %v3640 = vadd.f32 %v2930, %v3386
    %v3641 = vadd.f32 %v2931, %v3391
    %v3642 = vadd.f32 %v2932, %v3396
    %v3643 = vadd.f32 %v2933, %v3401
    %v3644 = vadd.f32 %v2934, %v3406
    %v3645 = vadd.f32 %v2935, %v3411
    %v3646 = vadd.f32 %v2936, %v3416
    %v3647 = vadd.f32 %v2937, %v3421
    %v3648 = vadd.f32 %v2938, %v3426
    %v3649 = vadd.f32 %v2939, %v3431
    %v3650 = vadd.f32 %v2940, %v3436
    %v3651 = vadd.f32 %v2941, %v3441
    %v3652 = vadd.f32 %v2942, %v3446
    %v3653 = vadd.f32 %v2943, %v3451
    %v3654 = vadd.f32 %v2944, %v3456
    %v3655 = vadd.f32 %v2945, %v3461
    %v3656 = vadd.f32 %v2946, %v3466
    %v3657 = vadd.f32 %v2947, %v3471
    %v3658 = vadd.f32 %v2948, %v3476
    %v3659 = vadd.f32 %v2949, %v3481
    %v3660 = vadd.f32 %v2950, %v3486
    %v3661 = vadd.f32 %v2951, %v3491
    %v3662 = vadd.f32 %v2952, %v3496
    %v3663 = vadd.f32 %v2953, %v3501
    %v3664 = vadd.f32 %v2954, %v3506
    %v3665 = vadd.f32 %v2955, %v3511
    %v3666 = vadd.f32 %v2956, %v3516
    %v3667 = vadd.f32 %v2957, %v3521
    %v3668 = vadd.f32 %v2958, %v3526
    %v3669 = vadd.f32 %v2959, %v3531
    %v3670 = vadd.f32 %v2960, %v3536
    %v3671 = vadd.f32 %v2961, %v3541
    %v3672 = vadd.f32 %v2962, %v3546
    %v3673 = vadd.f32 %v2963, %v3551
    %v3674 = vadd.f32 %v2964, %v3556
    %v3675 = vadd.f32 %v2965, %v3561
    %v3676 = vadd.f32 %v2966, %v3566
    %v3677 = vadd.f32 %v2967, %v3571
    %v3678 = vadd.f32 %v2968, %v3576
    %v3679 = vadd.f32 %v2969, %v3581
    %v3680 = vadd.f32 %v2970, %v3586
    %v3681 = vadd.f32 %v2971, %v3591
    %v3682 = vadd.f32 %v2972, %v3596
    %v3683 = vadd.f32 %v2973, %v3601
    %v3684 = vadd.f32 %v2974, %v3606
    %v3685 = vadd.f32 %v2975, %v3611
    %v3686 = vadd.f32 %v2976, %v3616
    %v3687 = vadd.f32 %v2977, %v3621
    %v3688 = vld [vmem:[%s201 + $0x2] sm:$0xff]
    %v3689 = vld [vmem:[%s201 + $0xa] sm:$0xff]
    %v3690 = vld [vmem:[%s201 + $0x1a] sm:$0xff]
    %v3691 = vld [vmem:[%s201 + $0x22] sm:$0xff]
    %v3692 = vld [vmem:[%s201 + $0x32] sm:$0xff]
    %v3693 = vld [vmem:[%s201 + $0x3a] sm:$0xff]
    %v3694 = vld [vmem:[%s201 + $0x4a] sm:$0xff]
    %v3695 = vld [vmem:[%s201 + $0x52] sm:$0xff]
    %v3696 = vld [vmem:[%s201 + $0x62] sm:$0xff]
    %v3697 = vld [vmem:[%s201 + $0x6a] sm:$0xff]
    %v3698 = vld [vmem:[%s201 + $0x7a] sm:$0xff]
    %v3699 = vld [vmem:[%s201 + $0x82] sm:$0xff]
    %v3700 = vld [vmem:[%s201 + $0x92] sm:$0xff]
    %v3701 = vld [vmem:[%s201 + $0x9a] sm:$0xff]
    %v3702 = vld [vmem:[%s201 + $0xaa] sm:$0xff]
    %v3703 = vld [vmem:[%s201 + $0xb2] sm:$0xff]
    %v3704 = vld [vmem:[%s201 + $0xc2] sm:$0xff]
    %v3705 = vld [vmem:[%s201 + $0xca] sm:$0xff]
    %v3706 = vld [vmem:[%s201 + $0xda] sm:$0xff]
    %v3707 = vld [vmem:[%s201 + $0xe2] sm:$0xff]
    %v3708 = vld [vmem:[%s201 + $0xf2] sm:$0xff]
    %v3709 = vld [vmem:[%s201 + $0xfa] sm:$0xff]
    %v3710 = vld [vmem:[%s201 + $0x10a] sm:$0xff]
    %v3711 = vld [vmem:[%s201 + $0x112] sm:$0xff]
    %v3712 = vld [vmem:[%s201 + $0x122] sm:$0xff]
    %v3713 = vld [vmem:[%s201 + $0x12a] sm:$0xff]
    %v3714 = vld [vmem:[%s201 + $0x13a] sm:$0xff]
    %v3715 = vld [vmem:[%s201 + $0x142] sm:$0xff]
    %v3716 = vld [vmem:[%s201 + $0x152] sm:$0xff]
    %v3717 = vld [vmem:[%s201 + $0x15a] sm:$0xff]
    %v3718 = vld [vmem:[%s201 + $0x16a] sm:$0xff]
    %v3719 = vld [vmem:[%s201 + $0x172] sm:$0xff]
    %v3720 = vld [vmem:[%s201 + $0x1b2] sm:$0xff]
    %v3721 = vld [vmem:[%s201 + $0x1ba] sm:$0xff]
    %v3722 = vld [vmem:[%s201 + $0x1ca] sm:$0xff]
    %v3723 = vld [vmem:[%s201 + $0x1d2] sm:$0xff]
    %v3724 = vld [vmem:[%s201 + $0x1e2] sm:$0xff]
    %v3725 = vld [vmem:[%s201 + $0x1ea] sm:$0xff]
    %v3726 = vld [vmem:[%s201 + $0x1fa] sm:$0xff]
    %v3727 = vld [vmem:[%s201 + $0x202] sm:$0xff]
    %v3728 = vld [vmem:[%s201 + $0x212] sm:$0xff]
    %v3729 = vld [vmem:[%s201 + $0x21a] sm:$0xff]
    %v3730 = vld [vmem:[%s201 + $0x22a] sm:$0xff]
    %v3731 = vld [vmem:[%s201 + $0x232] sm:$0xff]
    %v3732 = vld [vmem:[%s201 + $0x242] sm:$0xff]
    %v3733 = vld [vmem:[%s201 + $0x24a] sm:$0xff]
    %v3734 = vld [vmem:[%s201 + $0x25a] sm:$0xff]
    %v3735 = vld [vmem:[%s201 + $0x262] sm:$0xff]
    %v3736 = vld [vmem:[%s201 + $0x272] sm:$0xff]
    %v3737 = vld [vmem:[%s201 + $0x27a] sm:$0xff]
    %v3738 = vld [vmem:[%s201 + $0x28a] sm:$0xff]
    %v3739 = vld [vmem:[%s201 + $0x292] sm:$0xff]
    %v3740 = vld [vmem:[%s201 + $0x2a2] sm:$0xff]
    %v3741 = vld [vmem:[%s201 + $0x2aa] sm:$0xff]
    %v3742 = vld [vmem:[%s201 + $0x2ba] sm:$0xff]
    %v3743 = vld [vmem:[%s201 + $0x2c2] sm:$0xff]
    %v3744 = vld [vmem:[%s201 + $0x2d2] sm:$0xff]
    %v3745 = vld [vmem:[%s201 + $0x2da] sm:$0xff]
    %v3746 = vld [vmem:[%s201 + $0x2ea] sm:$0xff]
    %v3747 = vld [vmem:[%s201 + $0x2f2] sm:$0xff]
    %v3748 = vld [vmem:[%s201 + $0x302] sm:$0xff]
    %v3749 = vld [vmem:[%s201 + $0x30a] sm:$0xff]
    %v3750 = vld [vmem:[%s201 + $0x31a] sm:$0xff]
    %v3751 = vld [vmem:[%s201 + $0x322] sm:$0xff]
    %s3752 = scalar_lea.vmem %s1, 20
    %v3753 = vld [vmem:[%s3752] sm:$0x7]
    %v3755 = vsel %vm91, %v3688, 0
    %v3758 = vsel %vm91, %v3689, 0
    %v3761 = vsel %vm91, %v3690, 0
    %v3764 = vsel %vm91, %v3691, 0
    %v3767 = vsel %vm91, %v3692, 0
    %v3770 = vsel %vm91, %v3693, 0
    %v3773 = vsel %vm91, %v3694, 0
    %v3776 = vsel %vm91, %v3695, 0
    %v3779 = vsel %vm91, %v3696, 0
    %v3782 = vsel %vm91, %v3697, 0
    %v3785 = vsel %vm91, %v3698, 0
    %v3788 = vsel %vm91, %v3699, 0
    %v3791 = vsel %vm91, %v3700, 0
    %v3794 = vsel %vm91, %v3701, 0
    %v3797 = vsel %vm91, %v3702, 0
    %v3800 = vsel %vm91, %v3703, 0
    %v3803 = vsel %vm91, %v3704, 0
    %v3806 = vsel %vm91, %v3705, 0
    %v3809 = vsel %vm91, %v3706, 0
    %v3812 = vsel %vm91, %v3707, 0
    %v3815 = vsel %vm91, %v3708, 0
    %v3818 = vsel %vm91, %v3709, 0
    %v3821 = vsel %vm91, %v3710, 0
    %v3824 = vsel %vm91, %v3711, 0
    %v3827 = vsel %vm91, %v3712, 0
    %v3830 = vsel %vm91, %v3713, 0
    %v3833 = vsel %vm91, %v3714, 0
    %v3836 = vsel %vm91, %v3715, 0
    %v3839 = vsel %vm91, %v3716, 0
    %v3842 = vsel %vm91, %v3717, 0
    %v3845 = vsel %vm91, %v3718, 0
    %v3848 = vsel %vm91, %v3719, 0
    %v3851 = vsel %vm91, %v3720, 0
    %v3854 = vsel %vm91, %v3721, 0
    %v3857 = vsel %vm91, %v3722, 0
    %v3860 = vsel %vm91, %v3723, 0
    %v3863 = vsel %vm91, %v3724, 0
    %v3866 = vsel %vm91, %v3725, 0
    %v3869 = vsel %vm91, %v3726, 0
    %v3872 = vsel %vm91, %v3727, 0
    %v3875 = vsel %vm91, %v3728, 0
    %v3878 = vsel %vm91, %v3729, 0
    %v3881 = vsel %vm91, %v3730, 0
    %v3884 = vsel %vm91, %v3731, 0
    %v3887 = vsel %vm91, %v3732, 0
    %v3890 = vsel %vm91, %v3733, 0
    %v3893 = vsel %vm91, %v3734, 0
    %v3896 = vsel %vm91, %v3735, 0
    %v3899 = vsel %vm91, %v3736, 0
    %v3902 = vsel %vm91, %v3737, 0
    %v3905 = vsel %vm91, %v3738, 0
    %v3908 = vsel %vm91, %v3739, 0
    %v3911 = vsel %vm91, %v3740, 0
    %v3914 = vsel %vm91, %v3741, 0
    %v3917 = vsel %vm91, %v3742, 0
    %v3920 = vsel %vm91, %v3743, 0
    %v3923 = vsel %vm91, %v3744, 0
    %v3926 = vsel %vm91, %v3745, 0
    %v3929 = vsel %vm91, %v3746, 0
    %v3932 = vsel %vm91, %v3747, 0
    %v3935 = vsel %vm91, %v3748, 0
    %v3938 = vsel %vm91, %v3749, 0
    %v3941 = vsel %vm91, %v3750, 0
    %v3944 = vsel %vm91, %v3751, 0
    %v3947 = vsel %vm589, %v3753, 0
    %3949 = vmatprep.subr.mxu0 0.0
    %3950 = vmatpush1.msra.mxu0 %v3947
    %3951 = vmatprep.subr.mxu0 0.0
    %3952 = vmatpush1.msra.mxu0 0.0
    %3953 = vmatprep.subr.mxu0 0.0
    %3954 = vmatpush1.msra.mxu0 0.0
    %3955 = vmatprep.subr.mxu0 0.0
    %3956 = vmatpush1.msra.mxu0 0.0
    %3957 = vmatprep.subr.mxu0 0.0
    %3958 = vmatpush1.msra.mxu0 0.0
    %3959 = vmatprep.subr.mxu0 0.0
    %3960 = vmatpush1.msra.mxu0 0.0
    %3961 = vmatprep.subr.mxu0 0.0
    %3962 = vmatpush1.msra.mxu0 0.0
    %3963 = vmatprep.subr.mxu0 0.0
    %3964 = vmatpush1.msra.mxu0 0.0
    %3965 = vmatprep.subr.mxu0 0.0
    %3966 = vmatpush1.msra.mxu0 0.0
    %3967 = vmatprep.subr.mxu0 0.0
    %3968 = vmatpush1.msra.mxu0 0.0
    %3969 = vmatprep.subr.mxu0 0.0
    %3970 = vmatpush1.msra.mxu0 0.0
    %3971 = vmatprep.subr.mxu0 0.0
    %3972 = vmatpush1.msra.mxu0 0.0
    %3973 = vmatprep.subr.mxu0 0.0
    %3974 = vmatpush1.msra.mxu0 0.0
    %3975 = vmatprep.subr.mxu0 0.0
    %3976 = vmatpush1.msra.mxu0 0.0
    %3977 = vmatprep.subr.mxu0 0.0
    %3978 = vmatpush1.msra.mxu0 0.0
    %3979 = vmatprep.subr.mxu0 0.0
    %3980 = vmatpush1.msra.mxu0 0.0
    %3981 = vmatprep.subr.mxu0 0.0
    %3982 = vmatpush1.msra.mxu0 0.0
    %3983 = vmatprep.subr.mxu0 0.0
    %3984 = vmatpush1.msra.mxu0 0.0
    %3985 = vmatprep.subr.mxu0 0.0
    %3986 = vmatpush1.msra.mxu0 0.0
    %3987 = vmatprep.subr.mxu0 0.0
    %3988 = vmatpush1.msra.mxu0 0.0
    %3989 = vmatprep.subr.mxu0 0.0
    %3990 = vmatpush1.msra.mxu0 0.0
    %3991 = vmatprep.subr.mxu0 0.0
    %3992 = vmatpush1.msra.mxu0 0.0
    %3993 = vmatprep.subr.mxu0 0.0
    %3994 = vmatpush1.msra.mxu0 0.0
    %3995 = vmatprep.subr.mxu0 0.0
    %3996 = vmatpush1.msra.mxu0 0.0
    %3997 = vmatprep.subr.mxu0 0.0
    %3998 = vmatpush1.msra.mxu0 0.0
    %3999 = vmatprep.subr.mxu0 0.0
    %4000 = vmatpush1.msra.mxu0 0.0
    %4001 = vmatprep.subr.mxu0 0.0
    %4002 = vmatpush1.msra.mxu0 0.0
    %4003 = vmatprep.subr.mxu0 0.0
    %4004 = vmatpush1.msra.mxu0 0.0
    %4005 = vmatprep.subr.mxu0 0.0
    %4006 = vmatpush1.msra.mxu0 0.0
    %4007 = vmatprep.subr.mxu0 0.0
    %4008 = vmatpush1.msra.mxu0 0.0
    %4009 = vmatprep.subr.mxu0 0.0
    %4010 = vmatpush1.msra.mxu0 0.0
    %4011 = vmatprep.subr.mxu0 0.0
    %4012 = vmatpush1.msra.mxu0 0.0
    %4013 = vmatprep.mubr.f32.mxu0 0.0
    %4014 = vmatmul.mubr.f32.gmra.mrb[0].mxu0 %v3755
    %v4015 = vpop.f32.mrb[0].mxu0
    %v4016 = vadd.f32 0.0, %v4015
    %v4017 = vpop.f32.mrb[0].mxu0
    %4018 = vmatprep.mubr.f32.mxu0 0.0
    %4019 = vmatmul.mubr.f32.gmra.mrb[0].mxu0 %v3758
    %v4020 = vpop.f32.mrb[0].mxu0
    %v4021 = vadd.f32 0.0, %v4020
    %v4022 = vpop.f32.mrb[0].mxu0
    %4023 = vmatprep.mubr.f32.mxu0 0.0
    %4024 = vmatmul.mubr.f32.gmra.mrb[0].mxu0 %v3761
    %v4025 = vpop.f32.mrb[0].mxu0
    %v4026 = vadd.f32 0.0, %v4025
    %v4027 = vpop.f32.mrb[0].mxu0
    %4028 = vmatprep.mubr.f32.mxu0 0.0
    %4029 = vmatmul.mubr.f32.gmra.mrb[0].mxu0 %v3764
    %v4030 = vpop.f32.mrb[0].mxu0
    %v4031 = vadd.f32 0.0, %v4030
    %v4032 = vpop.f32.mrb[0].mxu0
    %4033 = vmatprep.mubr.f32.mxu0 0.0
    %4034 = vmatmul.mubr.f32.gmra.mrb[0].mxu0 %v3767
    %v4035 = vpop.f32.mrb[0].mxu0
    %v4036 = vadd.f32 0.0, %v4035
    %v4037 = vpop.f32.mrb[0].mxu0
    %4038 = vmatprep.mubr.f32.mxu0 0.0
    %4039 = vmatmul.mubr.f32.gmra.mrb[0].mxu0 %v3770
    %v4040 = vpop.f32.mrb[0].mxu0
    %v4041 = vadd.f32 0.0, %v4040
    %v4042 = vpop.f32.mrb[0].mxu0
    %4043 = vmatprep.mubr.f32.mxu0 0.0
    %4044 = vmatmul.mubr.f32.gmra.mrb[0].mxu0 %v3773
    %v4045 = vpop.f32.mrb[0].mxu0
    %v4046 = vadd.f32 0.0, %v4045
    %v4047 = vpop.f32.mrb[0].mxu0
    %4048 = vmatprep.mubr.f32.mxu0 0.0
    %4049 = vmatmul.mubr.f32.gmra.mrb[0].mxu0 %v3776
    %v4050 = vpop.f32.mrb[0].mxu0
    %v4051 = vadd.f32 0.0, %v4050
    %v4052 = vpop.f32.mrb[0].mxu0
    %4053 = vmatprep.mubr.f32.mxu0 0.0
    %4054 = vmatmul.mubr.f32.gmra.mrb[0].mxu0 %v3779
    %v4055 = vpop.f32.mrb[0].mxu0
    %v4056 = vadd.f32 0.0, %v4055
    %v4057 = vpop.f32.mrb[0].mxu0
    %4058 = vmatprep.mubr.f32.mxu0 0.0
    %4059 = vmatmul.mubr.f32.gmra.mrb[0].mxu0 %v3782
    %v4060 = vpop.f32.mrb[0].mxu0
    %v4061 = vadd.f32 0.0, %v4060
    %v4062 = vpop.f32.mrb[0].mxu0
    %4063 = vmatprep.mubr.f32.mxu0 0.0
    %4064 = vmatmul.mubr.f32.gmra.mrb[0].mxu0 %v3785
    %v4065 = vpop.f32.mrb[0].mxu0
    %v4066 = vadd.f32 0.0, %v4065
    %v4067 = vpop.f32.mrb[0].mxu0
    %4068 = vmatprep.mubr.f32.mxu0 0.0
    %4069 = vmatmul.mubr.f32.gmra.mrb[0].mxu0 %v3788
    %v4070 = vpop.f32.mrb[0].mxu0
    %v4071 = vadd.f32 0.0, %v4070
    %v4072 = vpop.f32.mrb[0].mxu0
    %4073 = vmatprep.mubr.f32.mxu0 0.0
    %4074 = vmatmul.mubr.f32.gmra.mrb[0].mxu0 %v3791
    %v4075 = vpop.f32.mrb[0].mxu0
    %v4076 = vadd.f32 0.0, %v4075
    %v4077 = vpop.f32.mrb[0].mxu0
    %4078 = vmatprep.mubr.f32.mxu0 0.0
    %4079 = vmatmul.mubr.f32.gmra.mrb[0].mxu0 %v3794
    %v4080 = vpop.f32.mrb[0].mxu0
    %v4081 = vadd.f32 0.0, %v4080
    %v4082 = vpop.f32.mrb[0].mxu0
    %4083 = vmatprep.mubr.f32.mxu0 0.0
    %4084 = vmatmul.mubr.f32.gmra.mrb[0].mxu0 %v3797
    %v4085 = vpop.f32.mrb[0].mxu0
    %v4086 = vadd.f32 0.0, %v4085
    %v4087 = vpop.f32.mrb[0].mxu0
    %4088 = vmatprep.mubr.f32.mxu0 0.0
    %4089 = vmatmul.mubr.f32.gmra.mrb[0].mxu0 %v3800
    %v4090 = vpop.f32.mrb[0].mxu0
    %v4091 = vadd.f32 0.0, %v4090
    %v4092 = vpop.f32.mrb[0].mxu0
    %4093 = vmatprep.mubr.f32.mxu0 0.0
    %4094 = vmatmul.mubr.f32.gmra.mrb[0].mxu0 %v3803
    %v4095 = vpop.f32.mrb[0].mxu0
    %v4096 = vadd.f32 0.0, %v4095
    %v4097 = vpop.f32.mrb[0].mxu0
    %4098 = vmatprep.mubr.f32.mxu0 0.0
    %4099 = vmatmul.mubr.f32.gmra.mrb[0].mxu0 %v3806
    %v4100 = vpop.f32.mrb[0].mxu0
    %v4101 = vadd.f32 0.0, %v4100
    %v4102 = vpop.f32.mrb[0].mxu0
    %4103 = vmatprep.mubr.f32.mxu0 0.0
    %4104 = vmatmul.mubr.f32.gmra.mrb[0].mxu0 %v3809
    %v4105 = vpop.f32.mrb[0].mxu0
    %v4106 = vadd.f32 0.0, %v4105
    %v4107 = vpop.f32.mrb[0].mxu0
    %4108 = vmatprep.mubr.f32.mxu0 0.0
    %4109 = vmatmul.mubr.f32.gmra.mrb[0].mxu0 %v3812
    %v4110 = vpop.f32.mrb[0].mxu0
    %v4111 = vadd.f32 0.0, %v4110
    %v4112 = vpop.f32.mrb[0].mxu0
    %4113 = vmatprep.mubr.f32.mxu0 0.0
    %4114 = vmatmul.mubr.f32.gmra.mrb[0].mxu0 %v3815
    %v4115 = vpop.f32.mrb[0].mxu0
    %v4116 = vadd.f32 0.0, %v4115
    %v4117 = vpop.f32.mrb[0].mxu0
    %4118 = vmatprep.mubr.f32.mxu0 0.0
    %4119 = vmatmul.mubr.f32.gmra.mrb[0].mxu0 %v3818
    %v4120 = vpop.f32.mrb[0].mxu0
    %v4121 = vadd.f32 0.0, %v4120
    %v4122 = vpop.f32.mrb[0].mxu0
    %4123 = vmatprep.mubr.f32.mxu0 0.0
    %4124 = vmatmul.mubr.f32.gmra.mrb[0].mxu0 %v3821
    %v4125 = vpop.f32.mrb[0].mxu0
    %v4126 = vadd.f32 0.0, %v4125
    %v4127 = vpop.f32.mrb[0].mxu0
    %4128 = vmatprep.mubr.f32.mxu0 0.0
    %4129 = vmatmul.mubr.f32.gmra.mrb[0].mxu0 %v3824
    %v4130 = vpop.f32.mrb[0].mxu0
    %v4131 = vadd.f32 0.0, %v4130
    %v4132 = vpop.f32.mrb[0].mxu0
    %4133 = vmatprep.mubr.f32.mxu0 0.0
    %4134 = vmatmul.mubr.f32.gmra.mrb[0].mxu0 %v3827
    %v4135 = vpop.f32.mrb[0].mxu0
    %v4136 = vadd.f32 0.0, %v4135
    %v4137 = vpop.f32.mrb[0].mxu0
    %4138 = vmatprep.mubr.f32.mxu0 0.0
    %4139 = vmatmul.mubr.f32.gmra.mrb[0].mxu0 %v3830
    %v4140 = vpop.f32.mrb[0].mxu0
    %v4141 = vadd.f32 0.0, %v4140
    %v4142 = vpop.f32.mrb[0].mxu0
    %4143 = vmatprep.mubr.f32.mxu0 0.0
    %4144 = vmatmul.mubr.f32.gmra.mrb[0].mxu0 %v3833
    %v4145 = vpop.f32.mrb[0].mxu0
    %v4146 = vadd.f32 0.0, %v4145
    %v4147 = vpop.f32.mrb[0].mxu0
    %4148 = vmatprep.mubr.f32.mxu0 0.0
    %4149 = vmatmul.mubr.f32.gmra.mrb[0].mxu0 %v3836
    %v4150 = vpop.f32.mrb[0].mxu0
    %v4151 = vadd.f32 0.0, %v4150
    %v4152 = vpop.f32.mrb[0].mxu0
    %4153 = vmatprep.mubr.f32.mxu0 0.0
    %4154 = vmatmul.mubr.f32.gmra.mrb[0].mxu0 %v3839
    %v4155 = vpop.f32.mrb[0].mxu0
    %v4156 = vadd.f32 0.0, %v4155
    %v4157 = vpop.f32.mrb[0].mxu0
    %4158 = vmatprep.mubr.f32.mxu0 0.0
    %4159 = vmatmul.mubr.f32.gmra.mrb[0].mxu0 %v3842
    %v4160 = vpop.f32.mrb[0].mxu0
    %v4161 = vadd.f32 0.0, %v4160
    %v4162 = vpop.f32.mrb[0].mxu0
    %4163 = vmatprep.mubr.f32.mxu0 0.0
    %4164 = vmatmul.mubr.f32.gmra.mrb[0].mxu0 %v3845
    %v4165 = vpop.f32.mrb[0].mxu0
    %v4166 = vadd.f32 0.0, %v4165
    %v4167 = vpop.f32.mrb[0].mxu0
    %4168 = vmatprep.mubr.f32.mxu0 0.0
    %4169 = vmatmul.mubr.f32.gmra.mrb[0].mxu0 %v3848
    %v4170 = vpop.f32.mrb[0].mxu0
    %v4171 = vadd.f32 0.0, %v4170
    %v4172 = vpop.f32.mrb[0].mxu0
    %4173 = vmatprep.mubr.f32.mxu0 0.0
    %4174 = vmatmul.mubr.f32.gmra.mrb[0].mxu0 %v3851
    %v4175 = vpop.f32.mrb[0].mxu0
    %v4176 = vadd.f32 0.0, %v4175
    %v4177 = vpop.f32.mrb[0].mxu0
    %4178 = vmatprep.mubr.f32.mxu0 0.0
    %4179 = vmatmul.mubr.f32.gmra.mrb[0].mxu0 %v3854
    %v4180 = vpop.f32.mrb[0].mxu0
    %v4181 = vadd.f32 0.0, %v4180
    %v4182 = vpop.f32.mrb[0].mxu0
    %4183 = vmatprep.mubr.f32.mxu0 0.0
    %4184 = vmatmul.mubr.f32.gmra.mrb[0].mxu0 %v3857
    %v4185 = vpop.f32.mrb[0].mxu0
    %v4186 = vadd.f32 0.0, %v4185
    %v4187 = vpop.f32.mrb[0].mxu0
    %4188 = vmatprep.mubr.f32.mxu0 0.0
    %4189 = vmatmul.mubr.f32.gmra.mrb[0].mxu0 %v3860
    %v4190 = vpop.f32.mrb[0].mxu0
    %v4191 = vadd.f32 0.0, %v4190
    %v4192 = vpop.f32.mrb[0].mxu0
    %4193 = vmatprep.mubr.f32.mxu0 0.0
    %4194 = vmatmul.mubr.f32.gmra.mrb[0].mxu0 %v3863
    %v4195 = vpop.f32.mrb[0].mxu0
    %v4196 = vadd.f32 0.0, %v4195
    %v4197 = vpop.f32.mrb[0].mxu0
    %4198 = vmatprep.mubr.f32.mxu0 0.0
    %4199 = vmatmul.mubr.f32.gmra.mrb[0].mxu0 %v3866
    %v4200 = vpop.f32.mrb[0].mxu0
    %v4201 = vadd.f32 0.0, %v4200
    %v4202 = vpop.f32.mrb[0].mxu0
    %4203 = vmatprep.mubr.f32.mxu0 0.0
    %4204 = vmatmul.mubr.f32.gmra.mrb[0].mxu0 %v3869
    %v4205 = vpop.f32.mrb[0].mxu0
    %v4206 = vadd.f32 0.0, %v4205
    %v4207 = vpop.f32.mrb[0].mxu0
    %4208 = vmatprep.mubr.f32.mxu0 0.0
    %4209 = vmatmul.mubr.f32.gmra.mrb[0].mxu0 %v3872
    %v4210 = vpop.f32.mrb[0].mxu0
    %v4211 = vadd.f32 0.0, %v4210
    %v4212 = vpop.f32.mrb[0].mxu0
    %4213 = vmatprep.mubr.f32.mxu0 0.0
    %4214 = vmatmul.mubr.f32.gmra.mrb[0].mxu0 %v3875
    %v4215 = vpop.f32.mrb[0].mxu0
    %v4216 = vadd.f32 0.0, %v4215
    %v4217 = vpop.f32.mrb[0].mxu0
    %4218 = vmatprep.mubr.f32.mxu0 0.0
    %4219 = vmatmul.mubr.f32.gmra.mrb[0].mxu0 %v3878
    %v4220 = vpop.f32.mrb[0].mxu0
    %v4221 = vadd.f32 0.0, %v4220
    %v4222 = vpop.f32.mrb[0].mxu0
    %4223 = vmatprep.mubr.f32.mxu0 0.0
    %4224 = vmatmul.mubr.f32.gmra.mrb[0].mxu0 %v3881
    %v4225 = vpop.f32.mrb[0].mxu0
    %v4226 = vadd.f32 0.0, %v4225
    %v4227 = vpop.f32.mrb[0].mxu0
    %4228 = vmatprep.mubr.f32.mxu0 0.0
    %4229 = vmatmul.mubr.f32.gmra.mrb[0].mxu0 %v3884
    %v4230 = vpop.f32.mrb[0].mxu0
    %v4231 = vadd.f32 0.0, %v4230
    %v4232 = vpop.f32.mrb[0].mxu0
    %4233 = vmatprep.mubr.f32.mxu0 0.0
    %4234 = vmatmul.mubr.f32.gmra.mrb[0].mxu0 %v3887
    %v4235 = vpop.f32.mrb[0].mxu0
    %v4236 = vadd.f32 0.0, %v4235
    %v4237 = vpop.f32.mrb[0].mxu0
    %4238 = vmatprep.mubr.f32.mxu0 0.0
    %4239 = vmatmul.mubr.f32.gmra.mrb[0].mxu0 %v3890
    %v4240 = vpop.f32.mrb[0].mxu0
    %v4241 = vadd.f32 0.0, %v4240
    %v4242 = vpop.f32.mrb[0].mxu0
    %4243 = vmatprep.mubr.f32.mxu0 0.0
    %4244 = vmatmul.mubr.f32.gmra.mrb[0].mxu0 %v3893
    %v4245 = vpop.f32.mrb[0].mxu0
    %v4246 = vadd.f32 0.0, %v4245
    %v4247 = vpop.f32.mrb[0].mxu0
    %4248 = vmatprep.mubr.f32.mxu0 0.0
    %4249 = vmatmul.mubr.f32.gmra.mrb[0].mxu0 %v3896
    %v4250 = vpop.f32.mrb[0].mxu0
    %v4251 = vadd.f32 0.0, %v4250
    %v4252 = vpop.f32.mrb[0].mxu0
    %4253 = vmatprep.mubr.f32.mxu0 0.0
    %4254 = vmatmul.mubr.f32.gmra.mrb[0].mxu0 %v3899
    %v4255 = vpop.f32.mrb[0].mxu0
    %v4256 = vadd.f32 0.0, %v4255
    %v4257 = vpop.f32.mrb[0].mxu0
    %4258 = vmatprep.mubr.f32.mxu0 0.0
    %4259 = vmatmul.mubr.f32.gmra.mrb[0].mxu0 %v3902
    %v4260 = vpop.f32.mrb[0].mxu0
    %v4261 = vadd.f32 0.0, %v4260
    %v4262 = vpop.f32.mrb[0].mxu0
    %4263 = vmatprep.mubr.f32.mxu0 0.0
    %4264 = vmatmul.mubr.f32.gmra.mrb[0].mxu0 %v3905
    %v4265 = vpop.f32.mrb[0].mxu0
    %v4266 = vadd.f32 0.0, %v4265
    %v4267 = vpop.f32.mrb[0].mxu0
    %4268 = vmatprep.mubr.f32.mxu0 0.0
    %4269 = vmatmul.mubr.f32.gmra.mrb[0].mxu0 %v3908
    %v4270 = vpop.f32.mrb[0].mxu0
    %v4271 = vadd.f32 0.0, %v4270
    %v4272 = vpop.f32.mrb[0].mxu0
    %4273 = vmatprep.mubr.f32.mxu0 0.0
    %4274 = vmatmul.mubr.f32.gmra.mrb[0].mxu0 %v3911
    %v4275 = vpop.f32.mrb[0].mxu0
    %v4276 = vadd.f32 0.0, %v4275
    %v4277 = vpop.f32.mrb[0].mxu0
    %4278 = vmatprep.mubr.f32.mxu0 0.0
    %4279 = vmatmul.mubr.f32.gmra.mrb[0].mxu0 %v3914
    %v4280 = vpop.f32.mrb[0].mxu0
    %v4281 = vadd.f32 0.0, %v4280
    %v4282 = vpop.f32.mrb[0].mxu0
    %4283 = vmatprep.mubr.f32.mxu0 0.0
    %4284 = vmatmul.mubr.f32.gmra.mrb[0].mxu0 %v3917
    %v4285 = vpop.f32.mrb[0].mxu0
    %v4286 = vadd.f32 0.0, %v4285
    %v4287 = vpop.f32.mrb[0].mxu0
    %4288 = vmatprep.mubr.f32.mxu0 0.0
    %4289 = vmatmul.mubr.f32.gmra.mrb[0].mxu0 %v3920
    %v4290 = vpop.f32.mrb[0].mxu0
    %v4291 = vadd.f32 0.0, %v4290
    %v4292 = vpop.f32.mrb[0].mxu0
    %4293 = vmatprep.mubr.f32.mxu0 0.0
    %4294 = vmatmul.mubr.f32.gmra.mrb[0].mxu0 %v3923
    %v4295 = vpop.f32.mrb[0].mxu0
    %v4296 = vadd.f32 0.0, %v4295
    %v4297 = vpop.f32.mrb[0].mxu0
    %4298 = vmatprep.mubr.f32.mxu0 0.0
    %4299 = vmatmul.mubr.f32.gmra.mrb[0].mxu0 %v3926
    %v4300 = vpop.f32.mrb[0].mxu0
    %v4301 = vadd.f32 0.0, %v4300
    %v4302 = vpop.f32.mrb[0].mxu0
    %4303 = vmatprep.mubr.f32.mxu0 0.0
    %4304 = vmatmul.mubr.f32.gmra.mrb[0].mxu0 %v3929
    %v4305 = vpop.f32.mrb[0].mxu0
    %v4306 = vadd.f32 0.0, %v4305
    %v4307 = vpop.f32.mrb[0].mxu0
    %4308 = vmatprep.mubr.f32.mxu0 0.0
    %4309 = vmatmul.mubr.f32.gmra.mrb[0].mxu0 %v3932
    %v4310 = vpop.f32.mrb[0].mxu0
    %v4311 = vadd.f32 0.0, %v4310
    %v4312 = vpop.f32.mrb[0].mxu0
    %4313 = vmatprep.mubr.f32.mxu0 0.0
    %4314 = vmatmul.mubr.f32.gmra.mrb[0].mxu0 %v3935
    %v4315 = vpop.f32.mrb[0].mxu0
    %v4316 = vadd.f32 0.0, %v4315
    %v4317 = vpop.f32.mrb[0].mxu0
    %4318 = vmatprep.mubr.f32.mxu0 0.0
    %4319 = vmatmul.mubr.f32.gmra.mrb[0].mxu0 %v3938
    %v4320 = vpop.f32.mrb[0].mxu0
    %v4321 = vadd.f32 0.0, %v4320
    %v4322 = vpop.f32.mrb[0].mxu0
    %4323 = vmatprep.mubr.f32.mxu0 0.0
    %4324 = vmatmul.mubr.f32.gmra.mrb[0].mxu0 %v3941
    %v4325 = vpop.f32.mrb[0].mxu0
    %v4326 = vadd.f32 0.0, %v4325
    %v4327 = vpop.f32.mrb[0].mxu0
    %4328 = vmatprep.mubr.f32.mxu0 0.0
    %4329 = vmatmul.mubr.f32.gmra.mrb[0].mxu0 %v3944
    %v4330 = vpop.f32.mrb[0].mxu0
    %v4331 = vadd.f32 0.0, %v4330
    %v4332 = vpop.f32.mrb[0].mxu0
    %4333 = vdwg.mxu0
    %v4334 = vadd.f32 %v3624, %v4016
    %v4335 = vadd.f32 %v3625, %v4021
    %v4336 = vadd.f32 %v3626, %v4026
    %v4337 = vadd.f32 %v3627, %v4031
    %v4338 = vadd.f32 %v3628, %v4036
    %v4339 = vadd.f32 %v3629, %v4041
    %v4340 = vadd.f32 %v3630, %v4046
    %v4341 = vadd.f32 %v3631, %v4051
    %v4342 = vadd.f32 %v3632, %v4056
    %v4343 = vadd.f32 %v3633, %v4061
    %v4344 = vadd.f32 %v3634, %v4066
    %v4345 = vadd.f32 %v3635, %v4071
    %v4346 = vadd.f32 %v3636, %v4076
    %v4347 = vadd.f32 %v3637, %v4081
    %v4348 = vadd.f32 %v3638, %v4086
    %v4349 = vadd.f32 %v3639, %v4091
    %v4350 = vadd.f32 %v3640, %v4096
    %v4351 = vadd.f32 %v3641, %v4101
    %v4352 = vadd.f32 %v3642, %v4106
    %v4353 = vadd.f32 %v3643, %v4111
    %v4354 = vadd.f32 %v3644, %v4116
    %v4355 = vadd.f32 %v3645, %v4121
    %v4356 = vadd.f32 %v3646, %v4126
    %v4357 = vadd.f32 %v3647, %v4131
    %v4358 = vadd.f32 %v3648, %v4136
    %v4359 = vadd.f32 %v3649, %v4141
    %v4360 = vadd.f32 %v3650, %v4146
    %v4361 = vadd.f32 %v3651, %v4151
    %v4362 = vadd.f32 %v3652, %v4156
    %v4363 = vadd.f32 %v3653, %v4161
    %v4364 = vadd.f32 %v3654, %v4166
    %v4365 = vadd.f32 %v3655, %v4171
    %v4366 = vadd.f32 %v3656, %v4176
    %v4367 = vadd.f32 %v3657, %v4181
    %v4368 = vadd.f32 %v3658, %v4186
    %v4369 = vadd.f32 %v3659, %v4191
    %v4370 = vadd.f32 %v3660, %v4196
    %v4371 = vadd.f32 %v3661, %v4201
    %v4372 = vadd.f32 %v3662, %v4206
    %v4373 = vadd.f32 %v3663, %v4211
    %v4374 = vadd.f32 %v3664, %v4216
    %v4375 = vadd.f32 %v3665, %v4221
    %v4376 = vadd.f32 %v3666, %v4226
    %v4377 = vadd.f32 %v3667, %v4231
    %v4378 = vadd.f32 %v3668, %v4236
    %v4379 = vadd.f32 %v3669, %v4241
    %v4380 = vadd.f32 %v3670, %v4246
    %v4381 = vadd.f32 %v3671, %v4251
    %v4382 = vadd.f32 %v3672, %v4256
    %v4383 = vadd.f32 %v3673, %v4261
    %v4384 = vadd.f32 %v3674, %v4266
    %v4385 = vadd.f32 %v3675, %v4271
    %v4386 = vadd.f32 %v3676, %v4276
    %v4387 = vadd.f32 %v3677, %v4281
    %v4388 = vadd.f32 %v3678, %v4286
    %v4389 = vadd.f32 %v3679, %v4291
    %v4390 = vadd.f32 %v3680, %v4296
    %v4391 = vadd.f32 %v3681, %v4301
    %v4392 = vadd.f32 %v3682, %v4306
    %v4393 = vadd.f32 %v3683, %v4311
    %v4394 = vadd.f32 %v3684, %v4316
    %v4395 = vadd.f32 %v3685, %v4321
    %v4396 = vadd.f32 %v3686, %v4326
    %v4397 = vadd.f32 %v3687, %v4331
    %s4398 = scalar_lea.vmem [#allocation2], 48
    %v4399 = vld [vmem:[%s4398] sm:$0xff]
    %v4400 = vld [vmem:[%s4398 + $0x8] sm:$0xff]
    %v4401 = vld [vmem:[%s4398 + $0x18] sm:$0xff]
    %v4402 = vld [vmem:[%s4398 + $0x20] sm:$0xff]
    %v4403 = vld [vmem:[%s4398 + $0x30] sm:$0xff]
    %v4404 = vld [vmem:[%s4398 + $0x38] sm:$0xff]
    %v4405 = vld [vmem:[%s4398 + $0x48] sm:$0xff]
    %v4406 = vld [vmem:[%s4398 + $0x50] sm:$0xff]
    %v4407 = vld [vmem:[%s4398 + $0x60] sm:$0xff]
    %v4408 = vld [vmem:[%s4398 + $0x68] sm:$0xff]
    %v4409 = vld [vmem:[%s4398 + $0x78] sm:$0xff]
    %v4410 = vld [vmem:[%s4398 + $0x80] sm:$0xff]
    %v4411 = vld [vmem:[%s4398 + $0x90] sm:$0xff]
    %v4412 = vld [vmem:[%s4398 + $0x98] sm:$0xff]
    %v4413 = vld [vmem:[%s4398 + $0xa8] sm:$0xff]
    %v4414 = vld [vmem:[%s4398 + $0xb0] sm:$0xff]
    %v4415 = vld [vmem:[%s4398 + $0xc0] sm:$0xff]
    %v4416 = vld [vmem:[%s4398 + $0xc8] sm:$0xff]
    %v4417 = vld [vmem:[%s4398 + $0xd8] sm:$0xff]
    %v4418 = vld [vmem:[%s4398 + $0xe0] sm:$0xff]
    %v4419 = vld [vmem:[%s4398 + $0xf0] sm:$0xff]
    %v4420 = vld [vmem:[%s4398 + $0xf8] sm:$0xff]
    %v4421 = vld [vmem:[%s4398 + $0x108] sm:$0xff]
    %v4422 = vld [vmem:[%s4398 + $0x110] sm:$0xff]
    %v4423 = vld [vmem:[%s4398 + $0x120] sm:$0xff]
    %v4424 = vld [vmem:[%s4398 + $0x128] sm:$0xff]
    %v4425 = vld [vmem:[%s4398 + $0x138] sm:$0xff]
    %v4426 = vld [vmem:[%s4398 + $0x140] sm:$0xff]
    %v4427 = vld [vmem:[%s4398 + $0x150] sm:$0xff]
    %v4428 = vld [vmem:[%s4398 + $0x158] sm:$0xff]
    %v4429 = vld [vmem:[%s4398 + $0x168] sm:$0xff]
    %v4430 = vld [vmem:[%s4398 + $0x170] sm:$0xff]
    %v4431 = vld [vmem:[%s4398 + $0x1b0] sm:$0xff]
    %v4432 = vld [vmem:[%s4398 + $0x1b8] sm:$0xff]
    %v4433 = vld [vmem:[%s4398 + $0x1c8] sm:$0xff]
    %v4434 = vld [vmem:[%s4398 + $0x1d0] sm:$0xff]
    %v4435 = vld [vmem:[%s4398 + $0x1e0] sm:$0xff]
    %v4436 = vld [vmem:[%s4398 + $0x1e8] sm:$0xff]
    %v4437 = vld [vmem:[%s4398 + $0x1f8] sm:$0xff]
    %v4438 = vld [vmem:[%s4398 + $0x200] sm:$0xff]
    %v4439 = vld [vmem:[%s4398 + $0x210] sm:$0xff]
    %v4440 = vld [vmem:[%s4398 + $0x218] sm:$0xff]
    %v4441 = vld [vmem:[%s4398 + $0x228] sm:$0xff]
    %v4442 = vld [vmem:[%s4398 + $0x230] sm:$0xff]
    %v4443 = vld [vmem:[%s4398 + $0x240] sm:$0xff]
    %v4444 = vld [vmem:[%s4398 + $0x248] sm:$0xff]
    %v4445 = vld [vmem:[%s4398 + $0x258] sm:$0xff]
    %v4446 = vld [vmem:[%s4398 + $0x260] sm:$0xff]
    %v4447 = vld [vmem:[%s4398 + $0x270] sm:$0xff]
    %v4448 = vld [vmem:[%s4398 + $0x278] sm:$0xff]
    %v4449 = vld [vmem:[%s4398 + $0x288] sm:$0xff]
    %v4450 = vld [vmem:[%s4398 + $0x290] sm:$0xff]
    %v4451 = vld [vmem:[%s4398 + $0x2a0] sm:$0xff]
    %v4452 = vld [vmem:[%s4398 + $0x2a8] sm:$0xff]
    %v4453 = vld [vmem:[%s4398 + $0x2b8] sm:$0xff]
    %v4454 = vld [vmem:[%s4398 + $0x2c0] sm:$0xff]
    %v4455 = vld [vmem:[%s4398 + $0x2d0] sm:$0xff]
    %v4456 = vld [vmem:[%s4398 + $0x2d8] sm:$0xff]
    %v4457 = vld [vmem:[%s4398 + $0x2e8] sm:$0xff]
    %v4458 = vld [vmem:[%s4398 + $0x2f0] sm:$0xff]
    %v4459 = vld [vmem:[%s4398 + $0x300] sm:$0xff]
    %v4460 = vld [vmem:[%s4398 + $0x308] sm:$0xff]
    %v4461 = vld [vmem:[%s4398 + $0x318] sm:$0xff]
    %v4462 = vld [vmem:[%s4398 + $0x320] sm:$0xff]
    %s4463 = scalar_lea.vmem %s1, 24
    %v4464 = vld [vmem:[%s4463] sm:$0x7]
    %v4466 = vsel %vm91, %v4399, 0
    %v4469 = vsel %vm91, %v4400, 0
    %v4472 = vsel %vm91, %v4401, 0
    %v4475 = vsel %vm91, %v4402, 0
    %v4478 = vsel %vm91, %v4403, 0
    %v4481 = vsel %vm91, %v4404, 0
    %v4484 = vsel %vm91, %v4405, 0
    %v4487 = vsel %vm91, %v4406, 0
    %v4490 = vsel %vm91, %v4407, 0
    %v4493 = vsel %vm91, %v4408, 0
    %v4496 = vsel %vm91, %v4409, 0
    %v4499 = vsel %vm91, %v4410, 0
    %v4502 = vsel %vm91, %v4411, 0
    %v4505 = vsel %vm91, %v4412, 0
    %v4508 = vsel %vm91, %v4413, 0
    %v4511 = vsel %vm91, %v4414, 0
    %v4514 = vsel %vm91, %v4415, 0
    %v4517 = vsel %vm91, %v4416, 0
    %v4520 = vsel %vm91, %v4417, 0
    %v4523 = vsel %vm91, %v4418, 0
    %v4526 = vsel %vm91, %v4419, 0
    %v4529 = vsel %vm91, %v4420, 0
    %v4532 = vsel %vm91, %v4421, 0
    %v4535 = vsel %vm91, %v4422, 0
    %v4538 = vsel %vm91, %v4423, 0
    %v4541 = vsel %vm91, %v4424, 0
    %v4544 = vsel %vm91, %v4425, 0
    %v4547 = vsel %vm91, %v4426, 0
    %v4550 = vsel %vm91, %v4427, 0
    %v4553 = vsel %vm91, %v4428, 0
    %v4556 = vsel %vm91, %v4429, 0
    %v4559 = vsel %vm91, %v4430, 0
    %v4562 = vsel %vm91, %v4431, 0
    %v4565 = vsel %vm91, %v4432, 0
    %v4568 = vsel %vm91, %v4433, 0
    %v4571 = vsel %vm91, %v4434, 0
    %v4574 = vsel %vm91, %v4435, 0
    %v4577 = vsel %vm91, %v4436, 0
    %v4580 = vsel %vm91, %v4437, 0
    %v4583 = vsel %vm91, %v4438, 0
    %v4586 = vsel %vm91, %v4439, 0
    %v4589 = vsel %vm91, %v4440, 0
    %v4592 = vsel %vm91, %v4441, 0
    %v4595 = vsel %vm91, %v4442, 0
    %v4598 = vsel %vm91, %v4443, 0
    %v4601 = vsel %vm91, %v4444, 0
    %v4604 = vsel %vm91, %v4445, 0
    %v4607 = vsel %vm91, %v4446, 0
    %v4610 = vsel %vm91, %v4447, 0
    %v4613 = vsel %vm91, %v4448, 0
    %v4616 = vsel %vm91, %v4449, 0
    %v4619 = vsel %vm91, %v4450, 0
    %v4622 = vsel %vm91, %v4451, 0
    %v4625 = vsel %vm91, %v4452, 0
    %v4628 = vsel %vm91, %v4453, 0
    %v4631 = vsel %vm91, %v4454, 0
    %v4634 = vsel %vm91, %v4455, 0
    %v4637 = vsel %vm91, %v4456, 0
    %v4640 = vsel %vm91, %v4457, 0
    %v4643 = vsel %vm91, %v4458, 0
    %v4646 = vsel %vm91, %v4459, 0
    %v4649 = vsel %vm91, %v4460, 0
    %v4652 = vsel %vm91, %v4461, 0
    %v4655 = vsel %vm91, %v4462, 0
    %v4658 = vsel %vm589, %v4464, 0
    %4660 = vmatprep.subr.mxu0 0.0
    %4661 = vmatpush1.msra.mxu0 %v4658
    %4662 = vmatprep.subr.mxu0 0.0
    %4663 = vmatpush1.msra.mxu0 0.0
    %4664 = vmatprep.subr.mxu0 0.0
    %4665 = vmatpush1.msra.mxu0 0.0
    %4666 = vmatprep.subr.mxu0 0.0
    %4667 = vmatpush1.msra.mxu0 0.0
    %4668 = vmatprep.subr.mxu0 0.0
    %4669 = vmatpush1.msra.mxu0 0.0
    %4670 = vmatprep.subr.mxu0 0.0
    %4671 = vmatpush1.msra.mxu0 0.0
    %4672 = vmatprep.subr.mxu0 0.0
    %4673 = vmatpush1.msra.mxu0 0.0
    %4674 = vmatprep.subr.mxu0 0.0
    %4675 = vmatpush1.msra.mxu0 0.0
    %4676 = vmatprep.subr.mxu0 0.0
    %4677 = vmatpush1.msra.mxu0 0.0
    %4678 = vmatprep.subr.mxu0 0.0
    %4679 = vmatpush1.msra.mxu0 0.0
    %4680 = vmatprep.subr.mxu0 0.0
    %4681 = vmatpush1.msra.mxu0 0.0
    %4682 = vmatprep.subr.mxu0 0.0
    %4683 = vmatpush1.msra.mxu0 0.0
    %4684 = vmatprep.subr.mxu0 0.0
    %4685 = vmatpush1.msra.mxu0 0.0
    %4686 = vmatprep.subr.mxu0 0.0
    %4687 = vmatpush1.msra.mxu0 0.0
    %4688 = vmatprep.subr.mxu0 0.0
    %4689 = vmatpush1.msra.mxu0 0.0
    %4690 = vmatprep.subr.mxu0 0.0
    %4691 = vmatpush1.msra.mxu0 0.0
    %4692 = vmatprep.subr.mxu0 0.0
    %4693 = vmatpush1.msra.mxu0 0.0
    %4694 = vmatprep.subr.mxu0 0.0
    %4695 = vmatpush1.msra.mxu0 0.0
    %4696 = vmatprep.subr.mxu0 0.0
    %4697 = vmatpush1.msra.mxu0 0.0
    %4698 = vmatprep.subr.mxu0 0.0
    %4699 = vmatpush1.msra.mxu0 0.0
    %4700 = vmatprep.subr.mxu0 0.0
    %4701 = vmatpush1.msra.mxu0 0.0
    %4702 = vmatprep.subr.mxu0 0.0
    %4703 = vmatpush1.msra.mxu0 0.0
    %4704 = vmatprep.subr.mxu0 0.0
    %4705 = vmatpush1.msra.mxu0 0.0
    %4706 = vmatprep.subr.mxu0 0.0
    %4707 = vmatpush1.msra.mxu0 0.0
    %4708 = vmatprep.subr.mxu0 0.0
    %4709 = vmatpush1.msra.mxu0 0.0
    %4710 = vmatprep.subr.mxu0 0.0
    %4711 = vmatpush1.msra.mxu0 0.0
    %4712 = vmatprep.subr.mxu0 0.0
    %4713 = vmatpush1.msra.mxu0 0.0
    %4714 = vmatprep.subr.mxu0 0.0
    %4715 = vmatpush1.msra.mxu0 0.0
    %4716 = vmatprep.subr.mxu0 0.0
    %4717 = vmatpush1.msra.mxu0 0.0
    %4718 = vmatprep.subr.mxu0 0.0
    %4719 = vmatpush1.msra.mxu0 0.0
    %4720 = vmatprep.subr.mxu0 0.0
    %4721 = vmatpush1.msra.mxu0 0.0
    %4722 = vmatprep.subr.mxu0 0.0
    %4723 = vmatpush1.msra.mxu0 0.0
    %4724 = vmatprep.mubr.f32.mxu0 0.0
    %4725 = vmatmul.mubr.f32.gmra.mrb[0].mxu0 %v4466
    %v4726 = vpop.f32.mrb[0].mxu0
    %v4727 = vadd.f32 0.0, %v4726
    %v4728 = vpop.f32.mrb[0].mxu0
    %4729 = vmatprep.mubr.f32.mxu0 0.0
    %4730 = vmatmul.mubr.f32.gmra.mrb[0].mxu0 %v4469
    %v4731 = vpop.f32.mrb[0].mxu0
    %v4732 = vadd.f32 0.0, %v4731
    %v4733 = vpop.f32.mrb[0].mxu0
    %4734 = vmatprep.mubr.f32.mxu0 0.0
    %4735 = vmatmul.mubr.f32.gmra.mrb[0].mxu0 %v4472
    %v4736 = vpop.f32.mrb[0].mxu0
    %v4737 = vadd.f32 0.0, %v4736
    %v4738 = vpop.f32.mrb[0].mxu0
    %4739 = vmatprep.mubr.f32.mxu0 0.0
    %4740 = vmatmul.mubr.f32.gmra.mrb[0].mxu0 %v4475
    %v4741 = vpop.f32.mrb[0].mxu0
    %v4742 = vadd.f32 0.0, %v4741
    %v4743 = vpop.f32.mrb[0].mxu0
    %4744 = vmatprep.mubr.f32.mxu0 0.0
    %4745 = vmatmul.mubr.f32.gmra.mrb[0].mxu0 %v4478
    %v4746 = vpop.f32.mrb[0].mxu0
    %v4747 = vadd.f32 0.0, %v4746
    %v4748 = vpop.f32.mrb[0].mxu0
    %4749 = vmatprep.mubr.f32.mxu0 0.0
    %4750 = vmatmul.mubr.f32.gmra.mrb[0].mxu0 %v4481
    %v4751 = vpop.f32.mrb[0].mxu0
    %v4752 = vadd.f32 0.0, %v4751
    %v4753 = vpop.f32.mrb[0].mxu0
    %4754 = vmatprep.mubr.f32.mxu0 0.0
    %4755 = vmatmul.mubr.f32.gmra.mrb[0].mxu0 %v4484
    %v4756 = vpop.f32.mrb[0].mxu0
    %v4757 = vadd.f32 0.0, %v4756
    %v4758 = vpop.f32.mrb[0].mxu0
    %4759 = vmatprep.mubr.f32.mxu0 0.0
    %4760 = vmatmul.mubr.f32.gmra.mrb[0].mxu0 %v4487
    %v4761 = vpop.f32.mrb[0].mxu0
    %v4762 = vadd.f32 0.0, %v4761
    %v4763 = vpop.f32.mrb[0].mxu0
    %4764 = vmatprep.mubr.f32.mxu0 0.0
    %4765 = vmatmul.mubr.f32.gmra.mrb[0].mxu0 %v4490
    %v4766 = vpop.f32.mrb[0].mxu0
    %v4767 = vadd.f32 0.0, %v4766
    %v4768 = vpop.f32.mrb[0].mxu0
    %4769 = vmatprep.mubr.f32.mxu0 0.0
    %4770 = vmatmul.mubr.f32.gmra.mrb[0].mxu0 %v4493
    %v4771 = vpop.f32.mrb[0].mxu0
    %v4772 = vadd.f32 0.0, %v4771
    %v4773 = vpop.f32.mrb[0].mxu0
    %4774 = vmatprep.mubr.f32.mxu0 0.0
    %4775 = vmatmul.mubr.f32.gmra.mrb[0].mxu0 %v4496
    %v4776 = vpop.f32.mrb[0].mxu0
    %v4777 = vadd.f32 0.0, %v4776
    %v4778 = vpop.f32.mrb[0].mxu0
    %4779 = vmatprep.mubr.f32.mxu0 0.0
    %4780 = vmatmul.mubr.f32.gmra.mrb[0].mxu0 %v4499
    %v4781 = vpop.f32.mrb[0].mxu0
    %v4782 = vadd.f32 0.0, %v4781
    %v4783 = vpop.f32.mrb[0].mxu0
    %4784 = vmatprep.mubr.f32.mxu0 0.0
    %4785 = vmatmul.mubr.f32.gmra.mrb[0].mxu0 %v4502
    %v4786 = vpop.f32.mrb[0].mxu0
    %v4787 = vadd.f32 0.0, %v4786
    %v4788 = vpop.f32.mrb[0].mxu0
    %4789 = vmatprep.mubr.f32.mxu0 0.0
    %4790 = vmatmul.mubr.f32.gmra.mrb[0].mxu0 %v4505
    %v4791 = vpop.f32.mrb[0].mxu0
    %v4792 = vadd.f32 0.0, %v4791
    %v4793 = vpop.f32.mrb[0].mxu0
    %4794 = vmatprep.mubr.f32.mxu0 0.0
    %4795 = vmatmul.mubr.f32.gmra.mrb[0].mxu0 %v4508
    %v4796 = vpop.f32.mrb[0].mxu0
    %v4797 = vadd.f32 0.0, %v4796
    %v4798 = vpop.f32.mrb[0].mxu0
    %4799 = vmatprep.mubr.f32.mxu0 0.0
    %4800 = vmatmul.mubr.f32.gmra.mrb[0].mxu0 %v4511
    %v4801 = vpop.f32.mrb[0].mxu0
    %v4802 = vadd.f32 0.0, %v4801
    %v4803 = vpop.f32.mrb[0].mxu0
    %4804 = vmatprep.mubr.f32.mxu0 0.0
    %4805 = vmatmul.mubr.f32.gmra.mrb[0].mxu0 %v4514
    %v4806 = vpop.f32.mrb[0].mxu0
    %v4807 = vadd.f32 0.0, %v4806
    %v4808 = vpop.f32.mrb[0].mxu0
    %4809 = vmatprep.mubr.f32.mxu0 0.0
    %4810 = vmatmul.mubr.f32.gmra.mrb[0].mxu0 %v4517
    %v4811 = vpop.f32.mrb[0].mxu0
    %v4812 = vadd.f32 0.0, %v4811
    %v4813 = vpop.f32.mrb[0].mxu0
    %4814 = vmatprep.mubr.f32.mxu0 0.0
    %4815 = vmatmul.mubr.f32.gmra.mrb[0].mxu0 %v4520
    %v4816 = vpop.f32.mrb[0].mxu0
    %v4817 = vadd.f32 0.0, %v4816
    %v4818 = vpop.f32.mrb[0].mxu0
    %4819 = vmatprep.mubr.f32.mxu0 0.0
    %4820 = vmatmul.mubr.f32.gmra.mrb[0].mxu0 %v4523
    %v4821 = vpop.f32.mrb[0].mxu0
    %v4822 = vadd.f32 0.0, %v4821
    %v4823 = vpop.f32.mrb[0].mxu0
    %4824 = vmatprep.mubr.f32.mxu0 0.0
    %4825 = vmatmul.mubr.f32.gmra.mrb[0].mxu0 %v4526
    %v4826 = vpop.f32.mrb[0].mxu0
    %v4827 = vadd.f32 0.0, %v4826
    %v4828 = vpop.f32.mrb[0].mxu0
    %4829 = vmatprep.mubr.f32.mxu0 0.0
    %4830 = vmatmul.mubr.f32.gmra.mrb[0].mxu0 %v4529
    %v4831 = vpop.f32.mrb[0].mxu0
    %v4832 = vadd.f32 0.0, %v4831
    %v4833 = vpop.f32.mrb[0].mxu0
    %4834 = vmatprep.mubr.f32.mxu0 0.0
    %4835 = vmatmul.mubr.f32.gmra.mrb[0].mxu0 %v4532
    %v4836 = vpop.f32.mrb[0].mxu0
    %v4837 = vadd.f32 0.0, %v4836
    %v4838 = vpop.f32.mrb[0].mxu0
    %4839 = vmatprep.mubr.f32.mxu0 0.0
    %4840 = vmatmul.mubr.f32.gmra.mrb[0].mxu0 %v4535
    %v4841 = vpop.f32.mrb[0].mxu0
    %v4842 = vadd.f32 0.0, %v4841
    %v4843 = vpop.f32.mrb[0].mxu0
    %4844 = vmatprep.mubr.f32.mxu0 0.0
    %4845 = vmatmul.mubr.f32.gmra.mrb[0].mxu0 %v4538
    %v4846 = vpop.f32.mrb[0].mxu0
    %v4847 = vadd.f32 0.0, %v4846
    %v4848 = vpop.f32.mrb[0].mxu0
    %4849 = vmatprep.mubr.f32.mxu0 0.0
    %4850 = vmatmul.mubr.f32.gmra.mrb[0].mxu0 %v4541
    %v4851 = vpop.f32.mrb[0].mxu0
    %v4852 = vadd.f32 0.0, %v4851
    %v4853 = vpop.f32.mrb[0].mxu0
    %4854 = vmatprep.mubr.f32.mxu0 0.0
    %4855 = vmatmul.mubr.f32.gmra.mrb[0].mxu0 %v4544
    %v4856 = vpop.f32.mrb[0].mxu0
    %v4857 = vadd.f32 0.0, %v4856
    %v4858 = vpop.f32.mrb[0].mxu0
    %4859 = vmatprep.mubr.f32.mxu0 0.0
    %4860 = vmatmul.mubr.f32.gmra.mrb[0].mxu0 %v4547
    %v4861 = vpop.f32.mrb[0].mxu0
    %v4862 = vadd.f32 0.0, %v4861
    %v4863 = vpop.f32.mrb[0].mxu0
    %4864 = vmatprep.mubr.f32.mxu0 0.0
    %4865 = vmatmul.mubr.f32.gmra.mrb[0].mxu0 %v4550
    %v4866 = vpop.f32.mrb[0].mxu0
    %v4867 = vadd.f32 0.0, %v4866
    %v4868 = vpop.f32.mrb[0].mxu0
    %4869 = vmatprep.mubr.f32.mxu0 0.0
    %4870 = vmatmul.mubr.f32.gmra.mrb[0].mxu0 %v4553
    %v4871 = vpop.f32.mrb[0].mxu0
    %v4872 = vadd.f32 0.0, %v4871
    %v4873 = vpop.f32.mrb[0].mxu0
    %4874 = vmatprep.mubr.f32.mxu0 0.0
    %4875 = vmatmul.mubr.f32.gmra.mrb[0].mxu0 %v4556
    %v4876 = vpop.f32.mrb[0].mxu0
    %v4877 = vadd.f32 0.0, %v4876
    %v4878 = vpop.f32.mrb[0].mxu0
    %4879 = vmatprep.mubr.f32.mxu0 0.0
    %4880 = vmatmul.mubr.f32.gmra.mrb[0].mxu0 %v4559
    %v4881 = vpop.f32.mrb[0].mxu0
    %v4882 = vadd.f32 0.0, %v4881
    %v4883 = vpop.f32.mrb[0].mxu0
    %4884 = vmatprep.mubr.f32.mxu0 0.0
    %4885 = vmatmul.mubr.f32.gmra.mrb[0].mxu0 %v4562
    %v4886 = vpop.f32.mrb[0].mxu0
    %v4887 = vadd.f32 0.0, %v4886
    %v4888 = vpop.f32.mrb[0].mxu0
    %4889 = vmatprep.mubr.f32.mxu0 0.0
    %4890 = vmatmul.mubr.f32.gmra.mrb[0].mxu0 %v4565
    %v4891 = vpop.f32.mrb[0].mxu0
    %v4892 = vadd.f32 0.0, %v4891
    %v4893 = vpop.f32.mrb[0].mxu0
    %4894 = vmatprep.mubr.f32.mxu0 0.0
    %4895 = vmatmul.mubr.f32.gmra.mrb[0].mxu0 %v4568
    %v4896 = vpop.f32.mrb[0].mxu0
    %v4897 = vadd.f32 0.0, %v4896
    %v4898 = vpop.f32.mrb[0].mxu0
    %4899 = vmatprep.mubr.f32.mxu0 0.0
    %4900 = vmatmul.mubr.f32.gmra.mrb[0].mxu0 %v4571
    %v4901 = vpop.f32.mrb[0].mxu0
    %v4902 = vadd.f32 0.0, %v4901
    %v4903 = vpop.f32.mrb[0].mxu0
    %4904 = vmatprep.mubr.f32.mxu0 0.0
    %4905 = vmatmul.mubr.f32.gmra.mrb[0].mxu0 %v4574
    %v4906 = vpop.f32.mrb[0].mxu0
    %v4907 = vadd.f32 0.0, %v4906
    %v4908 = vpop.f32.mrb[0].mxu0
    %4909 = vmatprep.mubr.f32.mxu0 0.0
    %4910 = vmatmul.mubr.f32.gmra.mrb[0].mxu0 %v4577
    %v4911 = vpop.f32.mrb[0].mxu0
    %v4912 = vadd.f32 0.0, %v4911
    %v4913 = vpop.f32.mrb[0].mxu0
    %4914 = vmatprep.mubr.f32.mxu0 0.0
    %4915 = vmatmul.mubr.f32.gmra.mrb[0].mxu0 %v4580
    %v4916 = vpop.f32.mrb[0].mxu0
    %v4917 = vadd.f32 0.0, %v4916
    %v4918 = vpop.f32.mrb[0].mxu0
    %4919 = vmatprep.mubr.f32.mxu0 0.0
    %4920 = vmatmul.mubr.f32.gmra.mrb[0].mxu0 %v4583
    %v4921 = vpop.f32.mrb[0].mxu0
    %v4922 = vadd.f32 0.0, %v4921
    %v4923 = vpop.f32.mrb[0].mxu0
    %4924 = vmatprep.mubr.f32.mxu0 0.0
    %4925 = vmatmul.mubr.f32.gmra.mrb[0].mxu0 %v4586
    %v4926 = vpop.f32.mrb[0].mxu0
    %v4927 = vadd.f32 0.0, %v4926
    %v4928 = vpop.f32.mrb[0].mxu0
    %4929 = vmatprep.mubr.f32.mxu0 0.0
    %4930 = vmatmul.mubr.f32.gmra.mrb[0].mxu0 %v4589
    %v4931 = vpop.f32.mrb[0].mxu0
    %v4932 = vadd.f32 0.0, %v4931
    %v4933 = vpop.f32.mrb[0].mxu0
    %4934 = vmatprep.mubr.f32.mxu0 0.0
    %4935 = vmatmul.mubr.f32.gmra.mrb[0].mxu0 %v4592
    %v4936 = vpop.f32.mrb[0].mxu0
    %v4937 = vadd.f32 0.0, %v4936
    %v4938 = vpop.f32.mrb[0].mxu0
    %4939 = vmatprep.mubr.f32.mxu0 0.0
    %4940 = vmatmul.mubr.f32.gmra.mrb[0].mxu0 %v4595
    %v4941 = vpop.f32.mrb[0].mxu0
    %v4942 = vadd.f32 0.0, %v4941
    %v4943 = vpop.f32.mrb[0].mxu0
    %4944 = vmatprep.mubr.f32.mxu0 0.0
    %4945 = vmatmul.mubr.f32.gmra.mrb[0].mxu0 %v4598
    %v4946 = vpop.f32.mrb[0].mxu0
    %v4947 = vadd.f32 0.0, %v4946
    %v4948 = vpop.f32.mrb[0].mxu0
    %4949 = vmatprep.mubr.f32.mxu0 0.0
    %4950 = vmatmul.mubr.f32.gmra.mrb[0].mxu0 %v4601
    %v4951 = vpop.f32.mrb[0].mxu0
    %v4952 = vadd.f32 0.0, %v4951
    %v4953 = vpop.f32.mrb[0].mxu0
    %4954 = vmatprep.mubr.f32.mxu0 0.0
    %4955 = vmatmul.mubr.f32.gmra.mrb[0].mxu0 %v4604
    %v4956 = vpop.f32.mrb[0].mxu0
    %v4957 = vadd.f32 0.0, %v4956
    %v4958 = vpop.f32.mrb[0].mxu0
    %4959 = vmatprep.mubr.f32.mxu0 0.0
    %4960 = vmatmul.mubr.f32.gmra.mrb[0].mxu0 %v4607
    %v4961 = vpop.f32.mrb[0].mxu0
    %v4962 = vadd.f32 0.0, %v4961
    %v4963 = vpop.f32.mrb[0].mxu0
    %4964 = vmatprep.mubr.f32.mxu0 0.0
    %4965 = vmatmul.mubr.f32.gmra.mrb[0].mxu0 %v4610
    %v4966 = vpop.f32.mrb[0].mxu0
    %v4967 = vadd.f32 0.0, %v4966
    %v4968 = vpop.f32.mrb[0].mxu0
    %4969 = vmatprep.mubr.f32.mxu0 0.0
    %4970 = vmatmul.mubr.f32.gmra.mrb[0].mxu0 %v4613
    %v4971 = vpop.f32.mrb[0].mxu0
    %v4972 = vadd.f32 0.0, %v4971
    %v4973 = vpop.f32.mrb[0].mxu0
    %4974 = vmatprep.mubr.f32.mxu0 0.0
    %4975 = vmatmul.mubr.f32.gmra.mrb[0].mxu0 %v4616
    %v4976 = vpop.f32.mrb[0].mxu0
    %v4977 = vadd.f32 0.0, %v4976
    %v4978 = vpop.f32.mrb[0].mxu0
    %4979 = vmatprep.mubr.f32.mxu0 0.0
    %4980 = vmatmul.mubr.f32.gmra.mrb[0].mxu0 %v4619
    %v4981 = vpop.f32.mrb[0].mxu0
    %v4982 = vadd.f32 0.0, %v4981
    %v4983 = vpop.f32.mrb[0].mxu0
    %4984 = vmatprep.mubr.f32.mxu0 0.0
    %4985 = vmatmul.mubr.f32.gmra.mrb[0].mxu0 %v4622
    %v4986 = vpop.f32.mrb[0].mxu0
    %v4987 = vadd.f32 0.0, %v4986
    %v4988 = vpop.f32.mrb[0].mxu0
    %4989 = vmatprep.mubr.f32.mxu0 0.0
    %4990 = vmatmul.mubr.f32.gmra.mrb[0].mxu0 %v4625
    %v4991 = vpop.f32.mrb[0].mxu0
    %v4992 = vadd.f32 0.0, %v4991
    %v4993 = vpop.f32.mrb[0].mxu0
    %4994 = vmatprep.mubr.f32.mxu0 0.0
    %4995 = vmatmul.mubr.f32.gmra.mrb[0].mxu0 %v4628
    %v4996 = vpop.f32.mrb[0].mxu0
    %v4997 = vadd.f32 0.0, %v4996
    %v4998 = vpop.f32.mrb[0].mxu0
    %4999 = vmatprep.mubr.f32.mxu0 0.0
    %5000 = vmatmul.mubr.f32.gmra.mrb[0].mxu0 %v4631
    %v5001 = vpop.f32.mrb[0].mxu0
    %v5002 = vadd.f32 0.0, %v5001
    %v5003 = vpop.f32.mrb[0].mxu0
    %5004 = vmatprep.mubr.f32.mxu0 0.0
    %5005 = vmatmul.mubr.f32.gmra.mrb[0].mxu0 %v4634
    %v5006 = vpop.f32.mrb[0].mxu0
    %v5007 = vadd.f32 0.0, %v5006
    %v5008 = vpop.f32.mrb[0].mxu0
    %5009 = vmatprep.mubr.f32.mxu0 0.0
    %5010 = vmatmul.mubr.f32.gmra.mrb[0].mxu0 %v4637
    %v5011 = vpop.f32.mrb[0].mxu0
    %v5012 = vadd.f32 0.0, %v5011
    %v5013 = vpop.f32.mrb[0].mxu0
    %5014 = vmatprep.mubr.f32.mxu0 0.0
    %5015 = vmatmul.mubr.f32.gmra.mrb[0].mxu0 %v4640
    %v5016 = vpop.f32.mrb[0].mxu0
    %v5017 = vadd.f32 0.0, %v5016
    %v5018 = vpop.f32.mrb[0].mxu0
    %5019 = vmatprep.mubr.f32.mxu0 0.0
    %5020 = vmatmul.mubr.f32.gmra.mrb[0].mxu0 %v4643
    %v5021 = vpop.f32.mrb[0].mxu0
    %v5022 = vadd.f32 0.0, %v5021
    %v5023 = vpop.f32.mrb[0].mxu0
    %5024 = vmatprep.mubr.f32.mxu0 0.0
    %5025 = vmatmul.mubr.f32.gmra.mrb[0].mxu0 %v4646
    %v5026 = vpop.f32.mrb[0].mxu0
    %v5027 = vadd.f32 0.0, %v5026
    %v5028 = vpop.f32.mrb[0].mxu0
    %5029 = vmatprep.mubr.f32.mxu0 0.0
    %5030 = vmatmul.mubr.f32.gmra.mrb[0].mxu0 %v4649
    %v5031 = vpop.f32.mrb[0].mxu0
    %v5032 = vadd.f32 0.0, %v5031
    %v5033 = vpop.f32.mrb[0].mxu0
    %5034 = vmatprep.mubr.f32.mxu0 0.0
    %5035 = vmatmul.mubr.f32.gmra.mrb[0].mxu0 %v4652
    %v5036 = vpop.f32.mrb[0].mxu0
    %v5037 = vadd.f32 0.0, %v5036
    %v5038 = vpop.f32.mrb[0].mxu0
    %5039 = vmatprep.mubr.f32.mxu0 0.0
    %5040 = vmatmul.mubr.f32.gmra.mrb[0].mxu0 %v4655
    %v5041 = vpop.f32.mrb[0].mxu0
    %v5042 = vadd.f32 0.0, %v5041
    %v5043 = vpop.f32.mrb[0].mxu0
    %5044 = vdwg.mxu0
    %v5045 = vadd.f32 %v4334, %v4727
    %v5046 = vadd.f32 %v4335, %v4732
    %v5047 = vadd.f32 %v4336, %v4737
    %v5048 = vadd.f32 %v4337, %v4742
    %v5049 = vadd.f32 %v4338, %v4747
    %v5050 = vadd.f32 %v4339, %v4752
    %v5051 = vadd.f32 %v4340, %v4757
    %v5052 = vadd.f32 %v4341, %v4762
    %v5053 = vadd.f32 %v4342, %v4767
    %v5054 = vadd.f32 %v4343, %v4772
    %v5055 = vadd.f32 %v4344, %v4777
    %v5056 = vadd.f32 %v4345, %v4782
    %v5057 = vadd.f32 %v4346, %v4787
    %v5058 = vadd.f32 %v4347, %v4792
    %v5059 = vadd.f32 %v4348, %v4797
    %v5060 = vadd.f32 %v4349, %v4802
    %v5061 = vadd.f32 %v4350, %v4807
    %v5062 = vadd.f32 %v4351, %v4812
    %v5063 = vadd.f32 %v4352, %v4817
    %v5064 = vadd.f32 %v4353, %v4822
    %v5065 = vadd.f32 %v4354, %v4827
    %v5066 = vadd.f32 %v4355, %v4832
    %v5067 = vadd.f32 %v4356, %v4837
    %v5068 = vadd.f32 %v4357, %v4842
    %v5069 = vadd.f32 %v4358, %v4847
    %v5070 = vadd.f32 %v4359, %v4852
    %v5071 = vadd.f32 %v4360, %v4857
    %v5072 = vadd.f32 %v4361, %v4862
    %v5073 = vadd.f32 %v4362, %v4867
    %v5074 = vadd.f32 %v4363, %v4872
    %v5075 = vadd.f32 %v4364, %v4877
    %v5076 = vadd.f32 %v4365, %v4882
    %v5077 = vadd.f32 %v4366, %v4887
    %v5078 = vadd.f32 %v4367, %v4892
    %v5079 = vadd.f32 %v4368, %v4897
    %v5080 = vadd.f32 %v4369, %v4902
    %v5081 = vadd.f32 %v4370, %v4907
    %v5082 = vadd.f32 %v4371, %v4912
    %v5083 = vadd.f32 %v4372, %v4917
    %v5084 = vadd.f32 %v4373, %v4922
    %v5085 = vadd.f32 %v4374, %v4927
    %v5086 = vadd.f32 %v4375, %v4932
    %v5087 = vadd.f32 %v4376, %v4937
    %v5088 = vadd.f32 %v4377, %v4942
    %v5089 = vadd.f32 %v4378, %v4947
    %v5090 = vadd.f32 %v4379, %v4952
    %v5091 = vadd.f32 %v4380, %v4957
    %v5092 = vadd.f32 %v4381, %v4962
    %v5093 = vadd.f32 %v4382, %v4967
    %v5094 = vadd.f32 %v4383, %v4972
    %v5095 = vadd.f32 %v4384, %v4977
    %v5096 = vadd.f32 %v4385, %v4982
    %v5097 = vadd.f32 %v4386, %v4987
    %v5098 = vadd.f32 %v4387, %v4992
    %v5099 = vadd.f32 %v4388, %v4997
    %v5100 = vadd.f32 %v4389, %v5002
    %v5101 = vadd.f32 %v4390, %v5007
    %v5102 = vadd.f32 %v4391, %v5012
    %v5103 = vadd.f32 %v4392, %v5017
    %v5104 = vadd.f32 %v4393, %v5022
    %v5105 = vadd.f32 %v4394, %v5027
    %v5106 = vadd.f32 %v4395, %v5032
    %v5107 = vadd.f32 %v4396, %v5037
    %v5108 = vadd.f32 %v4397, %v5042
    %v5109 = vld [vmem:[%s4398 + $0x1] sm:$0xff]
    %v5110 = vld [vmem:[%s4398 + $0x9] sm:$0xff]
    %v5111 = vld [vmem:[%s4398 + $0x19] sm:$0xff]
    %v5112 = vld [vmem:[%s4398 + $0x21] sm:$0xff]
    %v5113 = vld [vmem:[%s4398 + $0x31] sm:$0xff]
    %v5114 = vld [vmem:[%s4398 + $0x39] sm:$0xff]
    %v5115 = vld [vmem:[%s4398 + $0x49] sm:$0xff]
    %v5116 = vld [vmem:[%s4398 + $0x51] sm:$0xff]
    %v5117 = vld [vmem:[%s4398 + $0x61] sm:$0xff]
    %v5118 = vld [vmem:[%s4398 + $0x69] sm:$0xff]
    %v5119 = vld [vmem:[%s4398 + $0x79] sm:$0xff]
    %v5120 = vld [vmem:[%s4398 + $0x81] sm:$0xff]
    %v5121 = vld [vmem:[%s4398 + $0x91] sm:$0xff]
    %v5122 = vld [vmem:[%s4398 + $0x99] sm:$0xff]
    %v5123 = vld [vmem:[%s4398 + $0xa9] sm:$0xff]
    %v5124 = vld [vmem:[%s4398 + $0xb1] sm:$0xff]
    %v5125 = vld [vmem:[%s4398 + $0xc1] sm:$0xff]
    %v5126 = vld [vmem:[%s4398 + $0xc9] sm:$0xff]
    %v5127 = vld [vmem:[%s4398 + $0xd9] sm:$0xff]
    %v5128 = vld [vmem:[%s4398 + $0xe1] sm:$0xff]
    %v5129 = vld [vmem:[%s4398 + $0xf1] sm:$0xff]
    %v5130 = vld [vmem:[%s4398 + $0xf9] sm:$0xff]
    %v5131 = vld [vmem:[%s4398 + $0x109] sm:$0xff]
    %v5132 = vld [vmem:[%s4398 + $0x111] sm:$0xff]
    %v5133 = vld [vmem:[%s4398 + $0x121] sm:$0xff]
    %v5134 = vld [vmem:[%s4398 + $0x129] sm:$0xff]
    %v5135 = vld [vmem:[%s4398 + $0x139] sm:$0xff]
    %v5136 = vld [vmem:[%s4398 + $0x141] sm:$0xff]
    %v5137 = vld [vmem:[%s4398 + $0x151] sm:$0xff]
    %v5138 = vld [vmem:[%s4398 + $0x159] sm:$0xff]
    %v5139 = vld [vmem:[%s4398 + $0x169] sm:$0xff]
    %v5140 = vld [vmem:[%s4398 + $0x171] sm:$0xff]
    %v5141 = vld [vmem:[%s4398 + $0x1b1] sm:$0xff]
    %v5142 = vld [vmem:[%s4398 + $0x1b9] sm:$0xff]
    %v5143 = vld [vmem:[%s4398 + $0x1c9] sm:$0xff]
    %v5144 = vld [vmem:[%s4398 + $0x1d1] sm:$0xff]
    %v5145 = vld [vmem:[%s4398 + $0x1e1] sm:$0xff]
    %v5146 = vld [vmem:[%s4398 + $0x1e9] sm:$0xff]
    %v5147 = vld [vmem:[%s4398 + $0x1f9] sm:$0xff]
    %v5148 = vld [vmem:[%s4398 + $0x201] sm:$0xff]
    %v5149 = vld [vmem:[%s4398 + $0x211] sm:$0xff]
    %v5150 = vld [vmem:[%s4398 + $0x219] sm:$0xff]
    %v5151 = vld [vmem:[%s4398 + $0x229] sm:$0xff]
    %v5152 = vld [vmem:[%s4398 + $0x231] sm:$0xff]
    %v5153 = vld [vmem:[%s4398 + $0x241] sm:$0xff]
    %v5154 = vld [vmem:[%s4398 + $0x249] sm:$0xff]
    %v5155 = vld [vmem:[%s4398 + $0x259] sm:$0xff]
    %v5156 = vld [vmem:[%s4398 + $0x261] sm:$0xff]
    %v5157 = vld [vmem:[%s4398 + $0x271] sm:$0xff]
    %v5158 = vld [vmem:[%s4398 + $0x279] sm:$0xff]
    %v5159 = vld [vmem:[%s4398 + $0x289] sm:$0xff]
    %v5160 = vld [vmem:[%s4398 + $0x291] sm:$0xff]
    %v5161 = vld [vmem:[%s4398 + $0x2a1] sm:$0xff]
    %v5162 = vld [vmem:[%s4398 + $0x2a9] sm:$0xff]
    %v5163 = vld [vmem:[%s4398 + $0x2b9] sm:$0xff]
    %v5164 = vld [vmem:[%s4398 + $0x2c1] sm:$0xff]
    %v5165 = vld [vmem:[%s4398 + $0x2d1] sm:$0xff]
    %v5166 = vld [vmem:[%s4398 + $0x2d9] sm:$0xff]
    %v5167 = vld [vmem:[%s4398 + $0x2e9] sm:$0xff]
    %v5168 = vld [vmem:[%s4398 + $0x2f1] sm:$0xff]
    %v5169 = vld [vmem:[%s4398 + $0x301] sm:$0xff]
    %v5170 = vld [vmem:[%s4398 + $0x309] sm:$0xff]
    %v5171 = vld [vmem:[%s4398 + $0x319] sm:$0xff]
    %v5172 = vld [vmem:[%s4398 + $0x321] sm:$0xff]
    %s5173 = scalar_lea.vmem %s1, 28
    %v5174 = vld [vmem:[%s5173] sm:$0x7]
    %v5176 = vsel %vm91, %v5109, 0
    %v5179 = vsel %vm91, %v5110, 0
    %v5182 = vsel %vm91, %v5111, 0
    %v5185 = vsel %vm91, %v5112, 0
    %v5188 = vsel %vm91, %v5113, 0
    %v5191 = vsel %vm91, %v5114, 0
    %v5194 = vsel %vm91, %v5115, 0
    %v5197 = vsel %vm91, %v5116, 0
    %v5200 = vsel %vm91, %v5117, 0
    %v5203 = vsel %vm91, %v5118, 0
    %v5206 = vsel %vm91, %v5119, 0
    %v5209 = vsel %vm91, %v5120, 0
    %v5212 = vsel %vm91, %v5121, 0
    %v5215 = vsel %vm91, %v5122, 0
    %v5218 = vsel %vm91, %v5123, 0
    %v5221 = vsel %vm91, %v5124, 0
    %v5224 = vsel %vm91, %v5125, 0
    %v5227 = vsel %vm91, %v5126, 0
    %v5230 = vsel %vm91, %v5127, 0
    %v5233 = vsel %vm91, %v5128, 0
    %v5236 = vsel %vm91, %v5129, 0
    %v5239 = vsel %vm91, %v5130, 0
    %v5242 = vsel %vm91, %v5131, 0
    %v5245 = vsel %vm91, %v5132, 0
    %v5248 = vsel %vm91, %v5133, 0
    %v5251 = vsel %vm91, %v5134, 0
    %v5254 = vsel %vm91, %v5135, 0
    %v5257 = vsel %vm91, %v5136, 0
    %v5260 = vsel %vm91, %v5137, 0
    %v5263 = vsel %vm91, %v5138, 0
    %v5266 = vsel %vm91, %v5139, 0
    %v5269 = vsel %vm91, %v5140, 0
    %v5272 = vsel %vm91, %v5141, 0
    %v5275 = vsel %vm91, %v5142, 0
    %v5278 = vsel %vm91, %v5143, 0
    %v5281 = vsel %vm91, %v5144, 0
    %v5284 = vsel %vm91, %v5145, 0
    %v5287 = vsel %vm91, %v5146, 0
    %v5290 = vsel %vm91, %v5147, 0
    %v5293 = vsel %vm91, %v5148, 0
    %v5296 = vsel %vm91, %v5149, 0
    %v5299 = vsel %vm91, %v5150, 0
    %v5302 = vsel %vm91, %v5151, 0
    %v5305 = vsel %vm91, %v5152, 0
    %v5308 = vsel %vm91, %v5153, 0
    %v5311 = vsel %vm91, %v5154, 0
    %v5314 = vsel %vm91, %v5155, 0
    %v5317 = vsel %vm91, %v5156, 0
    %v5320 = vsel %vm91, %v5157, 0
    %v5323 = vsel %vm91, %v5158, 0
    %v5326 = vsel %vm91, %v5159, 0
    %v5329 = vsel %vm91, %v5160, 0
    %v5332 = vsel %vm91, %v5161, 0
    %v5335 = vsel %vm91, %v5162, 0
    %v5338 = vsel %vm91, %v5163, 0
    %v5341 = vsel %vm91, %v5164, 0
    %v5344 = vsel %vm91, %v5165, 0
    %v5347 = vsel %vm91, %v5166, 0
    %v5350 = vsel %vm91, %v5167, 0
    %v5353 = vsel %vm91, %v5168, 0
    %v5356 = vsel %vm91, %v5169, 0
    %v5359 = vsel %vm91, %v5170, 0
    %v5362 = vsel %vm91, %v5171, 0
    %v5365 = vsel %vm91, %v5172, 0
    %v5368 = vsel %vm589, %v5174, 0
    %5370 = vmatprep.subr.mxu0 0.0
    %5371 = vmatpush1.msra.mxu0 %v5368
    %5372 = vmatprep.subr.mxu0 0.0
    %5373 = vmatpush1.msra.mxu0 0.0
    %5374 = vmatprep.subr.mxu0 0.0
    %5375 = vmatpush1.msra.mxu0 0.0
    %5376 = vmatprep.subr.mxu0 0.0
    %5377 = vmatpush1.msra.mxu0 0.0
    %5378 = vmatprep.subr.mxu0 0.0
    %5379 = vmatpush1.msra.mxu0 0.0
    %5380 = vmatprep.subr.mxu0 0.0
    %5381 = vmatpush1.msra.mxu0 0.0
    %5382 = vmatprep.subr.mxu0 0.0
    %5383 = vmatpush1.msra.mxu0 0.0
    %5384 = vmatprep.subr.mxu0 0.0
    %5385 = vmatpush1.msra.mxu0 0.0
    %5386 = vmatprep.subr.mxu0 0.0
    %5387 = vmatpush1.msra.mxu0 0.0
    %5388 = vmatprep.subr.mxu0 0.0
    %5389 = vmatpush1.msra.mxu0 0.0
    %5390 = vmatprep.subr.mxu0 0.0
    %5391 = vmatpush1.msra.mxu0 0.0
    %5392 = vmatprep.subr.mxu0 0.0
    %5393 = vmatpush1.msra.mxu0 0.0
    %5394 = vmatprep.subr.mxu0 0.0
    %5395 = vmatpush1.msra.mxu0 0.0
    %5396 = vmatprep.subr.mxu0 0.0
    %5397 = vmatpush1.msra.mxu0 0.0
    %5398 = vmatprep.subr.mxu0 0.0
    %5399 = vmatpush1.msra.mxu0 0.0
    %5400 = vmatprep.subr.mxu0 0.0
    %5401 = vmatpush1.msra.mxu0 0.0
    %5402 = vmatprep.subr.mxu0 0.0
    %5403 = vmatpush1.msra.mxu0 0.0
    %5404 = vmatprep.subr.mxu0 0.0
    %5405 = vmatpush1.msra.mxu0 0.0
    %5406 = vmatprep.subr.mxu0 0.0
    %5407 = vmatpush1.msra.mxu0 0.0
    %5408 = vmatprep.subr.mxu0 0.0
    %5409 = vmatpush1.msra.mxu0 0.0
    %5410 = vmatprep.subr.mxu0 0.0
    %5411 = vmatpush1.msra.mxu0 0.0
    %5412 = vmatprep.subr.mxu0 0.0
    %5413 = vmatpush1.msra.mxu0 0.0
    %5414 = vmatprep.subr.mxu0 0.0
    %5415 = vmatpush1.msra.mxu0 0.0
    %5416 = vmatprep.subr.mxu0 0.0
    %5417 = vmatpush1.msra.mxu0 0.0
    %5418 = vmatprep.subr.mxu0 0.0
    %5419 = vmatpush1.msra.mxu0 0.0
    %5420 = vmatprep.subr.mxu0 0.0
    %5421 = vmatpush1.msra.mxu0 0.0
    %5422 = vmatprep.subr.mxu0 0.0
    %5423 = vmatpush1.msra.mxu0 0.0
    %5424 = vmatprep.subr.mxu0 0.0
    %5425 = vmatpush1.msra.mxu0 0.0
    %5426 = vmatprep.subr.mxu0 0.0
    %5427 = vmatpush1.msra.mxu0 0.0
    %5428 = vmatprep.subr.mxu0 0.0
    %5429 = vmatpush1.msra.mxu0 0.0
    %5430 = vmatprep.subr.mxu0 0.0
    %5431 = vmatpush1.msra.mxu0 0.0
    %5432 = vmatprep.subr.mxu0 0.0
    %5433 = vmatpush1.msra.mxu0 0.0
    %5434 = vmatprep.mubr.f32.mxu0 0.0
    %5435 = vmatmul.mubr.f32.gmra.mrb[0].mxu0 %v5176
    %v5436 = vpop.f32.mrb[0].mxu0
    %v5437 = vadd.f32 0.0, %v5436
    %v5438 = vpop.f32.mrb[0].mxu0
    %5439 = vmatprep.mubr.f32.mxu0 0.0
    %5440 = vmatmul.mubr.f32.gmra.mrb[0].mxu0 %v5179
    %v5441 = vpop.f32.mrb[0].mxu0
    %v5442 = vadd.f32 0.0, %v5441
    %v5443 = vpop.f32.mrb[0].mxu0
    %5444 = vmatprep.mubr.f32.mxu0 0.0
    %5445 = vmatmul.mubr.f32.gmra.mrb[0].mxu0 %v5182
    %v5446 = vpop.f32.mrb[0].mxu0
    %v5447 = vadd.f32 0.0, %v5446
    %v5448 = vpop.f32.mrb[0].mxu0
    %5449 = vmatprep.mubr.f32.mxu0 0.0
    %5450 = vmatmul.mubr.f32.gmra.mrb[0].mxu0 %v5185
    %v5451 = vpop.f32.mrb[0].mxu0
    %v5452 = vadd.f32 0.0, %v5451
    %v5453 = vpop.f32.mrb[0].mxu0
    %5454 = vmatprep.mubr.f32.mxu0 0.0
    %5455 = vmatmul.mubr.f32.gmra.mrb[0].mxu0 %v5188
    %v5456 = vpop.f32.mrb[0].mxu0
    %v5457 = vadd.f32 0.0, %v5456
    %v5458 = vpop.f32.mrb[0].mxu0
    %5459 = vmatprep.mubr.f32.mxu0 0.0
    %5460 = vmatmul.mubr.f32.gmra.mrb[0].mxu0 %v5191
    %v5461 = vpop.f32.mrb[0].mxu0
    %v5462 = vadd.f32 0.0, %v5461
    %v5463 = vpop.f32.mrb[0].mxu0
    %5464 = vmatprep.mubr.f32.mxu0 0.0
    %5465 = vmatmul.mubr.f32.gmra.mrb[0].mxu0 %v5194
    %v5466 = vpop.f32.mrb[0].mxu0
    %v5467 = vadd.f32 0.0, %v5466
    %v5468 = vpop.f32.mrb[0].mxu0
    %5469 = vmatprep.mubr.f32.mxu0 0.0
    %5470 = vmatmul.mubr.f32.gmra.mrb[0].mxu0 %v5197
    %v5471 = vpop.f32.mrb[0].mxu0
    %v5472 = vadd.f32 0.0, %v5471
    %v5473 = vpop.f32.mrb[0].mxu0
    %5474 = vmatprep.mubr.f32.mxu0 0.0
    %5475 = vmatmul.mubr.f32.gmra.mrb[0].mxu0 %v5200
    %v5476 = vpop.f32.mrb[0].mxu0
    %v5477 = vadd.f32 0.0, %v5476
    %v5478 = vpop.f32.mrb[0].mxu0
    %5479 = vmatprep.mubr.f32.mxu0 0.0
    %5480 = vmatmul.mubr.f32.gmra.mrb[0].mxu0 %v5203
    %v5481 = vpop.f32.mrb[0].mxu0
    %v5482 = vadd.f32 0.0, %v5481
    %v5483 = vpop.f32.mrb[0].mxu0
    %5484 = vmatprep.mubr.f32.mxu0 0.0
    %5485 = vmatmul.mubr.f32.gmra.mrb[0].mxu0 %v5206
    %v5486 = vpop.f32.mrb[0].mxu0
    %v5487 = vadd.f32 0.0, %v5486
    %v5488 = vpop.f32.mrb[0].mxu0
    %5489 = vmatprep.mubr.f32.mxu0 0.0
    %5490 = vmatmul.mubr.f32.gmra.mrb[0].mxu0 %v5209
    %v5491 = vpop.f32.mrb[0].mxu0
    %v5492 = vadd.f32 0.0, %v5491
    %v5493 = vpop.f32.mrb[0].mxu0
    %5494 = vmatprep.mubr.f32.mxu0 0.0
    %5495 = vmatmul.mubr.f32.gmra.mrb[0].mxu0 %v5212
    %v5496 = vpop.f32.mrb[0].mxu0
    %v5497 = vadd.f32 0.0, %v5496
    %v5498 = vpop.f32.mrb[0].mxu0
    %5499 = vmatprep.mubr.f32.mxu0 0.0
    %5500 = vmatmul.mubr.f32.gmra.mrb[0].mxu0 %v5215
    %v5501 = vpop.f32.mrb[0].mxu0
    %v5502 = vadd.f32 0.0, %v5501
    %v5503 = vpop.f32.mrb[0].mxu0
    %5504 = vmatprep.mubr.f32.mxu0 0.0
    %5505 = vmatmul.mubr.f32.gmra.mrb[0].mxu0 %v5218
    %v5506 = vpop.f32.mrb[0].mxu0
    %v5507 = vadd.f32 0.0, %v5506
    %v5508 = vpop.f32.mrb[0].mxu0
    %5509 = vmatprep.mubr.f32.mxu0 0.0
    %5510 = vmatmul.mubr.f32.gmra.mrb[0].mxu0 %v5221
    %v5511 = vpop.f32.mrb[0].mxu0
    %v5512 = vadd.f32 0.0, %v5511
    %v5513 = vpop.f32.mrb[0].mxu0
    %5514 = vmatprep.mubr.f32.mxu0 0.0
    %5515 = vmatmul.mubr.f32.gmra.mrb[0].mxu0 %v5224
    %v5516 = vpop.f32.mrb[0].mxu0
    %v5517 = vadd.f32 0.0, %v5516
    %v5518 = vpop.f32.mrb[0].mxu0
    %5519 = vmatprep.mubr.f32.mxu0 0.0
    %5520 = vmatmul.mubr.f32.gmra.mrb[0].mxu0 %v5227
    %v5521 = vpop.f32.mrb[0].mxu0
    %v5522 = vadd.f32 0.0, %v5521
    %v5523 = vpop.f32.mrb[0].mxu0
    %5524 = vmatprep.mubr.f32.mxu0 0.0
    %5525 = vmatmul.mubr.f32.gmra.mrb[0].mxu0 %v5230
    %v5526 = vpop.f32.mrb[0].mxu0
    %v5527 = vadd.f32 0.0, %v5526
    %v5528 = vpop.f32.mrb[0].mxu0
    %5529 = vmatprep.mubr.f32.mxu0 0.0
    %5530 = vmatmul.mubr.f32.gmra.mrb[0].mxu0 %v5233
    %v5531 = vpop.f32.mrb[0].mxu0
    %v5532 = vadd.f32 0.0, %v5531
    %v5533 = vpop.f32.mrb[0].mxu0
    %5534 = vmatprep.mubr.f32.mxu0 0.0
    %5535 = vmatmul.mubr.f32.gmra.mrb[0].mxu0 %v5236
    %v5536 = vpop.f32.mrb[0].mxu0
    %v5537 = vadd.f32 0.0, %v5536
    %v5538 = vpop.f32.mrb[0].mxu0
    %5539 = vmatprep.mubr.f32.mxu0 0.0
    %5540 = vmatmul.mubr.f32.gmra.mrb[0].mxu0 %v5239
    %v5541 = vpop.f32.mrb[0].mxu0
    %v5542 = vadd.f32 0.0, %v5541
    %v5543 = vpop.f32.mrb[0].mxu0
    %5544 = vmatprep.mubr.f32.mxu0 0.0
    %5545 = vmatmul.mubr.f32.gmra.mrb[0].mxu0 %v5242
    %v5546 = vpop.f32.mrb[0].mxu0
    %v5547 = vadd.f32 0.0, %v5546
    %v5548 = vpop.f32.mrb[0].mxu0
    %5549 = vmatprep.mubr.f32.mxu0 0.0
    %5550 = vmatmul.mubr.f32.gmra.mrb[0].mxu0 %v5245
    %v5551 = vpop.f32.mrb[0].mxu0
    %v5552 = vadd.f32 0.0, %v5551
    %v5553 = vpop.f32.mrb[0].mxu0
    %5554 = vmatprep.mubr.f32.mxu0 0.0
    %5555 = vmatmul.mubr.f32.gmra.mrb[0].mxu0 %v5248
    %v5556 = vpop.f32.mrb[0].mxu0
    %v5557 = vadd.f32 0.0, %v5556
    %v5558 = vpop.f32.mrb[0].mxu0
    %5559 = vmatprep.mubr.f32.mxu0 0.0
    %5560 = vmatmul.mubr.f32.gmra.mrb[0].mxu0 %v5251
    %v5561 = vpop.f32.mrb[0].mxu0
    %v5562 = vadd.f32 0.0, %v5561
    %v5563 = vpop.f32.mrb[0].mxu0
    %5564 = vmatprep.mubr.f32.mxu0 0.0
    %5565 = vmatmul.mubr.f32.gmra.mrb[0].mxu0 %v5254
    %v5566 = vpop.f32.mrb[0].mxu0
    %v5567 = vadd.f32 0.0, %v5566
    %v5568 = vpop.f32.mrb[0].mxu0
    %5569 = vmatprep.mubr.f32.mxu0 0.0
    %5570 = vmatmul.mubr.f32.gmra.mrb[0].mxu0 %v5257
    %v5571 = vpop.f32.mrb[0].mxu0
    %v5572 = vadd.f32 0.0, %v5571
    %v5573 = vpop.f32.mrb[0].mxu0
    %5574 = vmatprep.mubr.f32.mxu0 0.0
    %5575 = vmatmul.mubr.f32.gmra.mrb[0].mxu0 %v5260
    %v5576 = vpop.f32.mrb[0].mxu0
    %v5577 = vadd.f32 0.0, %v5576
    %v5578 = vpop.f32.mrb[0].mxu0
    %5579 = vmatprep.mubr.f32.mxu0 0.0
    %5580 = vmatmul.mubr.f32.gmra.mrb[0].mxu0 %v5263
    %v5581 = vpop.f32.mrb[0].mxu0
    %v5582 = vadd.f32 0.0, %v5581
    %v5583 = vpop.f32.mrb[0].mxu0
    %5584 = vmatprep.mubr.f32.mxu0 0.0
    %5585 = vmatmul.mubr.f32.gmra.mrb[0].mxu0 %v5266
    %v5586 = vpop.f32.mrb[0].mxu0
    %v5587 = vadd.f32 0.0, %v5586
    %v5588 = vpop.f32.mrb[0].mxu0
    %5589 = vmatprep.mubr.f32.mxu0 0.0
    %5590 = vmatmul.mubr.f32.gmra.mrb[0].mxu0 %v5269
    %v5591 = vpop.f32.mrb[0].mxu0
    %v5592 = vadd.f32 0.0, %v5591
    %v5593 = vpop.f32.mrb[0].mxu0
    %5594 = vmatprep.mubr.f32.mxu0 0.0
    %5595 = vmatmul.mubr.f32.gmra.mrb[0].mxu0 %v5272
    %v5596 = vpop.f32.mrb[0].mxu0
    %v5597 = vadd.f32 0.0, %v5596
    %v5598 = vpop.f32.mrb[0].mxu0
    %5599 = vmatprep.mubr.f32.mxu0 0.0
    %5600 = vmatmul.mubr.f32.gmra.mrb[0].mxu0 %v5275
    %v5601 = vpop.f32.mrb[0].mxu0
    %v5602 = vadd.f32 0.0, %v5601
    %v5603 = vpop.f32.mrb[0].mxu0
    %5604 = vmatprep.mubr.f32.mxu0 0.0
    %5605 = vmatmul.mubr.f32.gmra.mrb[0].mxu0 %v5278
    %v5606 = vpop.f32.mrb[0].mxu0
    %v5607 = vadd.f32 0.0, %v5606
    %v5608 = vpop.f32.mrb[0].mxu0
    %5609 = vmatprep.mubr.f32.mxu0 0.0
    %5610 = vmatmul.mubr.f32.gmra.mrb[0].mxu0 %v5281
    %v5611 = vpop.f32.mrb[0].mxu0
    %v5612 = vadd.f32 0.0, %v5611
    %v5613 = vpop.f32.mrb[0].mxu0
    %5614 = vmatprep.mubr.f32.mxu0 0.0
    %5615 = vmatmul.mubr.f32.gmra.mrb[0].mxu0 %v5284
    %v5616 = vpop.f32.mrb[0].mxu0
    %v5617 = vadd.f32 0.0, %v5616
    %v5618 = vpop.f32.mrb[0].mxu0
    %5619 = vmatprep.mubr.f32.mxu0 0.0
    %5620 = vmatmul.mubr.f32.gmra.mrb[0].mxu0 %v5287
    %v5621 = vpop.f32.mrb[0].mxu0
    %v5622 = vadd.f32 0.0, %v5621
    %v5623 = vpop.f32.mrb[0].mxu0
    %5624 = vmatprep.mubr.f32.mxu0 0.0
    %5625 = vmatmul.mubr.f32.gmra.mrb[0].mxu0 %v5290
    %v5626 = vpop.f32.mrb[0].mxu0
    %v5627 = vadd.f32 0.0, %v5626
    %v5628 = vpop.f32.mrb[0].mxu0
    %5629 = vmatprep.mubr.f32.mxu0 0.0
    %5630 = vmatmul.mubr.f32.gmra.mrb[0].mxu0 %v5293
    %v5631 = vpop.f32.mrb[0].mxu0
    %v5632 = vadd.f32 0.0, %v5631
    %v5633 = vpop.f32.mrb[0].mxu0
    %5634 = vmatprep.mubr.f32.mxu0 0.0
    %5635 = vmatmul.mubr.f32.gmra.mrb[0].mxu0 %v5296
    %v5636 = vpop.f32.mrb[0].mxu0
    %v5637 = vadd.f32 0.0, %v5636
    %v5638 = vpop.f32.mrb[0].mxu0
    %5639 = vmatprep.mubr.f32.mxu0 0.0
    %5640 = vmatmul.mubr.f32.gmra.mrb[0].mxu0 %v5299
    %v5641 = vpop.f32.mrb[0].mxu0
    %v5642 = vadd.f32 0.0, %v5641
    %v5643 = vpop.f32.mrb[0].mxu0
    %5644 = vmatprep.mubr.f32.mxu0 0.0
    %5645 = vmatmul.mubr.f32.gmra.mrb[0].mxu0 %v5302
    %v5646 = vpop.f32.mrb[0].mxu0
    %v5647 = vadd.f32 0.0, %v5646
    %v5648 = vpop.f32.mrb[0].mxu0
    %5649 = vmatprep.mubr.f32.mxu0 0.0
    %5650 = vmatmul.mubr.f32.gmra.mrb[0].mxu0 %v5305
    %v5651 = vpop.f32.mrb[0].mxu0
    %v5652 = vadd.f32 0.0, %v5651
    %v5653 = vpop.f32.mrb[0].mxu0
    %5654 = vmatprep.mubr.f32.mxu0 0.0
    %5655 = vmatmul.mubr.f32.gmra.mrb[0].mxu0 %v5308
    %v5656 = vpop.f32.mrb[0].mxu0
    %v5657 = vadd.f32 0.0, %v5656
    %v5658 = vpop.f32.mrb[0].mxu0
    %5659 = vmatprep.mubr.f32.mxu0 0.0
    %5660 = vmatmul.mubr.f32.gmra.mrb[0].mxu0 %v5311
    %v5661 = vpop.f32.mrb[0].mxu0
    %v5662 = vadd.f32 0.0, %v5661
    %v5663 = vpop.f32.mrb[0].mxu0
    %5664 = vmatprep.mubr.f32.mxu0 0.0
    %5665 = vmatmul.mubr.f32.gmra.mrb[0].mxu0 %v5314
    %v5666 = vpop.f32.mrb[0].mxu0
    %v5667 = vadd.f32 0.0, %v5666
    %v5668 = vpop.f32.mrb[0].mxu0
    %5669 = vmatprep.mubr.f32.mxu0 0.0
    %5670 = vmatmul.mubr.f32.gmra.mrb[0].mxu0 %v5317
    %v5671 = vpop.f32.mrb[0].mxu0
    %v5672 = vadd.f32 0.0, %v5671
    %v5673 = vpop.f32.mrb[0].mxu0
    %5674 = vmatprep.mubr.f32.mxu0 0.0
    %5675 = vmatmul.mubr.f32.gmra.mrb[0].mxu0 %v5320
    %v5676 = vpop.f32.mrb[0].mxu0
    %v5677 = vadd.f32 0.0, %v5676
    %v5678 = vpop.f32.mrb[0].mxu0
    %5679 = vmatprep.mubr.f32.mxu0 0.0
    %5680 = vmatmul.mubr.f32.gmra.mrb[0].mxu0 %v5323
    %v5681 = vpop.f32.mrb[0].mxu0
    %v5682 = vadd.f32 0.0, %v5681
    %v5683 = vpop.f32.mrb[0].mxu0
    %5684 = vmatprep.mubr.f32.mxu0 0.0
    %5685 = vmatmul.mubr.f32.gmra.mrb[0].mxu0 %v5326
    %v5686 = vpop.f32.mrb[0].mxu0
    %v5687 = vadd.f32 0.0, %v5686
    %v5688 = vpop.f32.mrb[0].mxu0
    %5689 = vmatprep.mubr.f32.mxu0 0.0
    %5690 = vmatmul.mubr.f32.gmra.mrb[0].mxu0 %v5329
    %v5691 = vpop.f32.mrb[0].mxu0
    %v5692 = vadd.f32 0.0, %v5691
    %v5693 = vpop.f32.mrb[0].mxu0
    %5694 = vmatprep.mubr.f32.mxu0 0.0
    %5695 = vmatmul.mubr.f32.gmra.mrb[0].mxu0 %v5332
    %v5696 = vpop.f32.mrb[0].mxu0
    %v5697 = vadd.f32 0.0, %v5696
    %v5698 = vpop.f32.mrb[0].mxu0
    %5699 = vmatprep.mubr.f32.mxu0 0.0
    %5700 = vmatmul.mubr.f32.gmra.mrb[0].mxu0 %v5335
    %v5701 = vpop.f32.mrb[0].mxu0
    %v5702 = vadd.f32 0.0, %v5701
    %v5703 = vpop.f32.mrb[0].mxu0
    %5704 = vmatprep.mubr.f32.mxu0 0.0
    %5705 = vmatmul.mubr.f32.gmra.mrb[0].mxu0 %v5338
    %v5706 = vpop.f32.mrb[0].mxu0
    %v5707 = vadd.f32 0.0, %v5706
    %v5708 = vpop.f32.mrb[0].mxu0
    %5709 = vmatprep.mubr.f32.mxu0 0.0
    %5710 = vmatmul.mubr.f32.gmra.mrb[0].mxu0 %v5341
    %v5711 = vpop.f32.mrb[0].mxu0
    %v5712 = vadd.f32 0.0, %v5711
    %v5713 = vpop.f32.mrb[0].mxu0
    %5714 = vmatprep.mubr.f32.mxu0 0.0
    %5715 = vmatmul.mubr.f32.gmra.mrb[0].mxu0 %v5344
    %v5716 = vpop.f32.mrb[0].mxu0
    %v5717 = vadd.f32 0.0, %v5716
    %v5718 = vpop.f32.mrb[0].mxu0
    %5719 = vmatprep.mubr.f32.mxu0 0.0
    %5720 = vmatmul.mubr.f32.gmra.mrb[0].mxu0 %v5347
    %v5721 = vpop.f32.mrb[0].mxu0
    %v5722 = vadd.f32 0.0, %v5721
    %v5723 = vpop.f32.mrb[0].mxu0
    %5724 = vmatprep.mubr.f32.mxu0 0.0
    %5725 = vmatmul.mubr.f32.gmra.mrb[0].mxu0 %v5350
    %v5726 = vpop.f32.mrb[0].mxu0
    %v5727 = vadd.f32 0.0, %v5726
    %v5728 = vpop.f32.mrb[0].mxu0
    %5729 = vmatprep.mubr.f32.mxu0 0.0
    %5730 = vmatmul.mubr.f32.gmra.mrb[0].mxu0 %v5353
    %v5731 = vpop.f32.mrb[0].mxu0
    %v5732 = vadd.f32 0.0, %v5731
    %v5733 = vpop.f32.mrb[0].mxu0
    %5734 = vmatprep.mubr.f32.mxu0 0.0
    %5735 = vmatmul.mubr.f32.gmra.mrb[0].mxu0 %v5356
    %v5736 = vpop.f32.mrb[0].mxu0
    %v5737 = vadd.f32 0.0, %v5736
    %v5738 = vpop.f32.mrb[0].mxu0
    %5739 = vmatprep.mubr.f32.mxu0 0.0
    %5740 = vmatmul.mubr.f32.gmra.mrb[0].mxu0 %v5359
    %v5741 = vpop.f32.mrb[0].mxu0
    %v5742 = vadd.f32 0.0, %v5741
    %v5743 = vpop.f32.mrb[0].mxu0
    %5744 = vmatprep.mubr.f32.mxu0 0.0
    %5745 = vmatmul.mubr.f32.gmra.mrb[0].mxu0 %v5362
    %v5746 = vpop.f32.mrb[0].mxu0
    %v5747 = vadd.f32 0.0, %v5746
    %v5748 = vpop.f32.mrb[0].mxu0
    %5749 = vmatprep.mubr.f32.mxu0 0.0
    %5750 = vmatmul.mubr.f32.gmra.mrb[0].mxu0 %v5365
    %v5751 = vpop.f32.mrb[0].mxu0
    %v5752 = vadd.f32 0.0, %v5751
    %v5753 = vpop.f32.mrb[0].mxu0
    %5754 = vdwg.mxu0
    %v5755 = vadd.f32 %v5045, %v5437
    %v5756 = vadd.f32 %v5046, %v5442
    %v5757 = vadd.f32 %v5047, %v5447
    %v5758 = vadd.f32 %v5048, %v5452
    %v5759 = vadd.f32 %v5049, %v5457
    %v5760 = vadd.f32 %v5050, %v5462
    %v5761 = vadd.f32 %v5051, %v5467
    %v5762 = vadd.f32 %v5052, %v5472
    %v5763 = vadd.f32 %v5053, %v5477
    %v5764 = vadd.f32 %v5054, %v5482
    %v5765 = vadd.f32 %v5055, %v5487
    %v5766 = vadd.f32 %v5056, %v5492
    %v5767 = vadd.f32 %v5057, %v5497
    %v5768 = vadd.f32 %v5058, %v5502
    %v5769 = vadd.f32 %v5059, %v5507
    %v5770 = vadd.f32 %v5060, %v5512
    %v5771 = vadd.f32 %v5061, %v5517
    %v5772 = vadd.f32 %v5062, %v5522
    %v5773 = vadd.f32 %v5063, %v5527
    %v5774 = vadd.f32 %v5064, %v5532
    %v5775 = vadd.f32 %v5065, %v5537
    %v5776 = vadd.f32 %v5066, %v5542
    %v5777 = vadd.f32 %v5067, %v5547
    %v5778 = vadd.f32 %v5068, %v5552
    %v5779 = vadd.f32 %v5069, %v5557
    %v5780 = vadd.f32 %v5070, %v5562
    %v5781 = vadd.f32 %v5071, %v5567
    %v5782 = vadd.f32 %v5072, %v5572
    %v5783 = vadd.f32 %v5073, %v5577
    %v5784 = vadd.f32 %v5074, %v5582
    %v5785 = vadd.f32 %v5075, %v5587
    %v5786 = vadd.f32 %v5076, %v5592
    %v5787 = vadd.f32 %v5077, %v5597
    %v5788 = vadd.f32 %v5078, %v5602
    %v5789 = vadd.f32 %v5079, %v5607
    %v5790 = vadd.f32 %v5080, %v5612
    %v5791 = vadd.f32 %v5081, %v5617
    %v5792 = vadd.f32 %v5082, %v5622
    %v5793 = vadd.f32 %v5083, %v5627
    %v5794 = vadd.f32 %v5084, %v5632
    %v5795 = vadd.f32 %v5085, %v5637
    %v5796 = vadd.f32 %v5086, %v5642
    %v5797 = vadd.f32 %v5087, %v5647
    %v5798 = vadd.f32 %v5088, %v5652
    %v5799 = vadd.f32 %v5089, %v5657
    %v5800 = vadd.f32 %v5090, %v5662
    %v5801 = vadd.f32 %v5091, %v5667
    %v5802 = vadd.f32 %v5092, %v5672
    %v5803 = vadd.f32 %v5093, %v5677
    %v5804 = vadd.f32 %v5094, %v5682
    %v5805 = vadd.f32 %v5095, %v5687
    %v5806 = vadd.f32 %v5096, %v5692
    %v5807 = vadd.f32 %v5097, %v5697
    %v5808 = vadd.f32 %v5098, %v5702
    %v5809 = vadd.f32 %v5099, %v5707
    %v5810 = vadd.f32 %v5100, %v5712
    %v5811 = vadd.f32 %v5101, %v5717
    %v5812 = vadd.f32 %v5102, %v5722
    %v5813 = vadd.f32 %v5103, %v5727
    %v5814 = vadd.f32 %v5104, %v5732
    %v5815 = vadd.f32 %v5105, %v5737
    %v5816 = vadd.f32 %v5106, %v5742
    %v5817 = vadd.f32 %v5107, %v5747
    %v5818 = vadd.f32 %v5108, %v5752
    %v5819 = vld [vmem:[%s4398 + $0x2] sm:$0xff]
    %v5820 = vld [vmem:[%s4398 + $0xa] sm:$0xff]
    %v5821 = vld [vmem:[%s4398 + $0x1a] sm:$0xff]
    %v5822 = vld [vmem:[%s4398 + $0x22] sm:$0xff]
    %v5823 = vld [vmem:[%s4398 + $0x32] sm:$0xff]
    %v5824 = vld [vmem:[%s4398 + $0x3a] sm:$0xff]
    %v5825 = vld [vmem:[%s4398 + $0x4a] sm:$0xff]
    %v5826 = vld [vmem:[%s4398 + $0x52] sm:$0xff]
    %v5827 = vld [vmem:[%s4398 + $0x62] sm:$0xff]
    %v5828 = vld [vmem:[%s4398 + $0x6a] sm:$0xff]
    %v5829 = vld [vmem:[%s4398 + $0x7a] sm:$0xff]
    %v5830 = vld [vmem:[%s4398 + $0x82] sm:$0xff]
    %v5831 = vld [vmem:[%s4398 + $0x92] sm:$0xff]
    %v5832 = vld [vmem:[%s4398 + $0x9a] sm:$0xff]
    %v5833 = vld [vmem:[%s4398 + $0xaa] sm:$0xff]
    %v5834 = vld [vmem:[%s4398 + $0xb2] sm:$0xff]
    %v5835 = vld [vmem:[%s4398 + $0xc2] sm:$0xff]
    %v5836 = vld [vmem:[%s4398 + $0xca] sm:$0xff]
    %v5837 = vld [vmem:[%s4398 + $0xda] sm:$0xff]
    %v5838 = vld [vmem:[%s4398 + $0xe2] sm:$0xff]
    %v5839 = vld [vmem:[%s4398 + $0xf2] sm:$0xff]
    %v5840 = vld [vmem:[%s4398 + $0xfa] sm:$0xff]
    %v5841 = vld [vmem:[%s4398 + $0x10a] sm:$0xff]
    %v5842 = vld [vmem:[%s4398 + $0x112] sm:$0xff]
    %v5843 = vld [vmem:[%s4398 + $0x122] sm:$0xff]
    %v5844 = vld [vmem:[%s4398 + $0x12a] sm:$0xff]
    %v5845 = vld [vmem:[%s4398 + $0x13a] sm:$0xff]
    %v5846 = vld [vmem:[%s4398 + $0x142] sm:$0xff]
    %v5847 = vld [vmem:[%s4398 + $0x152] sm:$0xff]
    %v5848 = vld [vmem:[%s4398 + $0x15a] sm:$0xff]
    %v5849 = vld [vmem:[%s4398 + $0x16a] sm:$0xff]
    %v5850 = vld [vmem:[%s4398 + $0x172] sm:$0xff]
    %v5851 = vld [vmem:[%s4398 + $0x1b2] sm:$0xff]
    %v5852 = vld [vmem:[%s4398 + $0x1ba] sm:$0xff]
    %v5853 = vld [vmem:[%s4398 + $0x1ca] sm:$0xff]
    %v5854 = vld [vmem:[%s4398 + $0x1d2] sm:$0xff]
    %v5855 = vld [vmem:[%s4398 + $0x1e2] sm:$0xff]
    %v5856 = vld [vmem:[%s4398 + $0x1ea] sm:$0xff]
    %v5857 = vld [vmem:[%s4398 + $0x1fa] sm:$0xff]
    %v5858 = vld [vmem:[%s4398 + $0x202] sm:$0xff]
    %v5859 = vld [vmem:[%s4398 + $0x212] sm:$0xff]
    %v5860 = vld [vmem:[%s4398 + $0x21a] sm:$0xff]
    %v5861 = vld [vmem:[%s4398 + $0x22a] sm:$0xff]
    %v5862 = vld [vmem:[%s4398 + $0x232] sm:$0xff]
    %v5863 = vld [vmem:[%s4398 + $0x242] sm:$0xff]
    %v5864 = vld [vmem:[%s4398 + $0x24a] sm:$0xff]
    %v5865 = vld [vmem:[%s4398 + $0x25a] sm:$0xff]
    %v5866 = vld [vmem:[%s4398 + $0x262] sm:$0xff]
    %v5867 = vld [vmem:[%s4398 + $0x272] sm:$0xff]
    %v5868 = vld [vmem:[%s4398 + $0x27a] sm:$0xff]
    %v5869 = vld [vmem:[%s4398 + $0x28a] sm:$0xff]
    %v5870 = vld [vmem:[%s4398 + $0x292] sm:$0xff]
    %v5871 = vld [vmem:[%s4398 + $0x2a2] sm:$0xff]
    %v5872 = vld [vmem:[%s4398 + $0x2aa] sm:$0xff]
    %v5873 = vld [vmem:[%s4398 + $0x2ba] sm:$0xff]
    %v5874 = vld [vmem:[%s4398 + $0x2c2] sm:$0xff]
    %v5875 = vld [vmem:[%s4398 + $0x2d2] sm:$0xff]
    %v5876 = vld [vmem:[%s4398 + $0x2da] sm:$0xff]
    %v5877 = vld [vmem:[%s4398 + $0x2ea] sm:$0xff]
    %v5878 = vld [vmem:[%s4398 + $0x2f2] sm:$0xff]
    %v5879 = vld [vmem:[%s4398 + $0x302] sm:$0xff]
    %v5880 = vld [vmem:[%s4398 + $0x30a] sm:$0xff]
    %v5881 = vld [vmem:[%s4398 + $0x31a] sm:$0xff]
    %v5882 = vld [vmem:[%s4398 + $0x322] sm:$0xff]
    %s5883 = scalar_lea.vmem %s1, 32
    %v5884 = vld [vmem:[%s5883] sm:$0x7]
    %v5886 = vsel %vm91, %v5819, 0
    %v5889 = vsel %vm91, %v5820, 0
    %v5892 = vsel %vm91, %v5821, 0
    %v5895 = vsel %vm91, %v5822, 0
    %v5898 = vsel %vm91, %v5823, 0
    %v5901 = vsel %vm91, %v5824, 0
    %v5904 = vsel %vm91, %v5825, 0
    %v5907 = vsel %vm91, %v5826, 0
    %v5910 = vsel %vm91, %v5827, 0
    %v5913 = vsel %vm91, %v5828, 0
    %v5916 = vsel %vm91, %v5829, 0
    %v5919 = vsel %vm91, %v5830, 0
    %v5922 = vsel %vm91, %v5831, 0
    %v5925 = vsel %vm91, %v5832, 0
    %v5928 = vsel %vm91, %v5833, 0
    %v5931 = vsel %vm91, %v5834, 0
    %v5934 = vsel %vm91, %v5835, 0
    %v5937 = vsel %vm91, %v5836, 0
    %v5940 = vsel %vm91, %v5837, 0
    %v5943 = vsel %vm91, %v5838, 0
    %v5946 = vsel %vm91, %v5839, 0
    %v5949 = vsel %vm91, %v5840, 0
    %v5952 = vsel %vm91, %v5841, 0
    %v5955 = vsel %vm91, %v5842, 0
    %v5958 = vsel %vm91, %v5843, 0
    %v5961 = vsel %vm91, %v5844, 0
    %v5964 = vsel %vm91, %v5845, 0
    %v5967 = vsel %vm91, %v5846, 0
    %v5970 = vsel %vm91, %v5847, 0
    %v5973 = vsel %vm91, %v5848, 0
    %v5976 = vsel %vm91, %v5849, 0
    %v5979 = vsel %vm91, %v5850, 0
    %v5982 = vsel %vm91, %v5851, 0
    %v5985 = vsel %vm91, %v5852, 0
    %v5988 = vsel %vm91, %v5853, 0
    %v5991 = vsel %vm91, %v5854, 0
    %v5994 = vsel %vm91, %v5855, 0
    %v5997 = vsel %vm91, %v5856, 0
    %v6000 = vsel %vm91, %v5857, 0
    %v6003 = vsel %vm91, %v5858, 0
    %v6006 = vsel %vm91, %v5859, 0
    %v6009 = vsel %vm91, %v5860, 0
    %v6012 = vsel %vm91, %v5861, 0
    %v6015 = vsel %vm91, %v5862, 0
    %v6018 = vsel %vm91, %v5863, 0
    %v6021 = vsel %vm91, %v5864, 0
    %v6024 = vsel %vm91, %v5865, 0
    %v6027 = vsel %vm91, %v5866, 0
    %v6030 = vsel %vm91, %v5867, 0
    %v6033 = vsel %vm91, %v5868, 0
    %v6036 = vsel %vm91, %v5869, 0
    %v6039 = vsel %vm91, %v5870, 0
    %v6042 = vsel %vm91, %v5871, 0
    %v6045 = vsel %vm91, %v5872, 0
    %v6048 = vsel %vm91, %v5873, 0
    %v6051 = vsel %vm91, %v5874, 0
    %v6054 = vsel %vm91, %v5875, 0
    %v6057 = vsel %vm91, %v5876, 0
    %v6060 = vsel %vm91, %v5877, 0
    %v6063 = vsel %vm91, %v5878, 0
    %v6066 = vsel %vm91, %v5879, 0
    %v6069 = vsel %vm91, %v5880, 0
    %v6072 = vsel %vm91, %v5881, 0
    %v6075 = vsel %vm91, %v5882, 0
    %v6078 = vsel %vm589, %v5884, 0
    %6080 = vmatprep.subr.mxu0 0.0
    %6081 = vmatpush1.msra.mxu0 %v6078
    %6082 = vmatprep.subr.mxu0 0.0
    %6083 = vmatpush1.msra.mxu0 0.0
    %6084 = vmatprep.subr.mxu0 0.0
    %6085 = vmatpush1.msra.mxu0 0.0
    %6086 = vmatprep.subr.mxu0 0.0
    %6087 = vmatpush1.msra.mxu0 0.0
    %6088 = vmatprep.subr.mxu0 0.0
    %6089 = vmatpush1.msra.mxu0 0.0
    %6090 = vmatprep.subr.mxu0 0.0
    %6091 = vmatpush1.msra.mxu0 0.0
    %6092 = vmatprep.subr.mxu0 0.0
    %6093 = vmatpush1.msra.mxu0 0.0
    %6094 = vmatprep.subr.mxu0 0.0
    %6095 = vmatpush1.msra.mxu0 0.0
    %6096 = vmatprep.subr.mxu0 0.0
    %6097 = vmatpush1.msra.mxu0 0.0
    %6098 = vmatprep.subr.mxu0 0.0
    %6099 = vmatpush1.msra.mxu0 0.0
    %6100 = vmatprep.subr.mxu0 0.0
    %6101 = vmatpush1.msra.mxu0 0.0
    %6102 = vmatprep.subr.mxu0 0.0
    %6103 = vmatpush1.msra.mxu0 0.0
    %6104 = vmatprep.subr.mxu0 0.0
    %6105 = vmatpush1.msra.mxu0 0.0
    %6106 = vmatprep.subr.mxu0 0.0
    %6107 = vmatpush1.msra.mxu0 0.0
    %6108 = vmatprep.subr.mxu0 0.0
    %6109 = vmatpush1.msra.mxu0 0.0
    %6110 = vmatprep.subr.mxu0 0.0
    %6111 = vmatpush1.msra.mxu0 0.0
    %6112 = vmatprep.subr.mxu0 0.0
    %6113 = vmatpush1.msra.mxu0 0.0
    %6114 = vmatprep.subr.mxu0 0.0
    %6115 = vmatpush1.msra.mxu0 0.0
    %6116 = vmatprep.subr.mxu0 0.0
    %6117 = vmatpush1.msra.mxu0 0.0
    %6118 = vmatprep.subr.mxu0 0.0
    %6119 = vmatpush1.msra.mxu0 0.0
    %6120 = vmatprep.subr.mxu0 0.0
    %6121 = vmatpush1.msra.mxu0 0.0
    %6122 = vmatprep.subr.mxu0 0.0
    %6123 = vmatpush1.msra.mxu0 0.0
    %6124 = vmatprep.subr.mxu0 0.0
    %6125 = vmatpush1.msra.mxu0 0.0
    %6126 = vmatprep.subr.mxu0 0.0
    %6127 = vmatpush1.msra.mxu0 0.0
    %6128 = vmatprep.subr.mxu0 0.0
    %6129 = vmatpush1.msra.mxu0 0.0
    %6130 = vmatprep.subr.mxu0 0.0
    %6131 = vmatpush1.msra.mxu0 0.0
    %6132 = vmatprep.subr.mxu0 0.0
    %6133 = vmatpush1.msra.mxu0 0.0
    %6134 = vmatprep.subr.mxu0 0.0
    %6135 = vmatpush1.msra.mxu0 0.0
    %6136 = vmatprep.subr.mxu0 0.0
    %6137 = vmatpush1.msra.mxu0 0.0
    %6138 = vmatprep.subr.mxu0 0.0
    %6139 = vmatpush1.msra.mxu0 0.0
    %6140 = vmatprep.subr.mxu0 0.0
    %6141 = vmatpush1.msra.mxu0 0.0
    %6142 = vmatprep.subr.mxu0 0.0
    %6143 = vmatpush1.msra.mxu0 0.0
    %6144 = vmatprep.mubr.f32.mxu0 0.0
    %6145 = vmatmul.mubr.f32.gmra.mrb[0].mxu0 %v5886
    %v6146 = vpop.f32.mrb[0].mxu0
    %v6147 = vadd.f32 0.0, %v6146
    %v6148 = vpop.f32.mrb[0].mxu0
    %6149 = vmatprep.mubr.f32.mxu0 0.0
    %6150 = vmatmul.mubr.f32.gmra.mrb[0].mxu0 %v5889
    %v6151 = vpop.f32.mrb[0].mxu0
    %v6152 = vadd.f32 0.0, %v6151
    %v6153 = vpop.f32.mrb[0].mxu0
    %6154 = vmatprep.mubr.f32.mxu0 0.0
    %6155 = vmatmul.mubr.f32.gmra.mrb[0].mxu0 %v5892
    %v6156 = vpop.f32.mrb[0].mxu0
    %v6157 = vadd.f32 0.0, %v6156
    %v6158 = vpop.f32.mrb[0].mxu0
    %6159 = vmatprep.mubr.f32.mxu0 0.0
    %6160 = vmatmul.mubr.f32.gmra.mrb[0].mxu0 %v5895
    %v6161 = vpop.f32.mrb[0].mxu0
    %v6162 = vadd.f32 0.0, %v6161
    %v6163 = vpop.f32.mrb[0].mxu0
    %6164 = vmatprep.mubr.f32.mxu0 0.0
    %6165 = vmatmul.mubr.f32.gmra.mrb[0].mxu0 %v5898
    %v6166 = vpop.f32.mrb[0].mxu0
    %v6167 = vadd.f32 0.0, %v6166
    %v6168 = vpop.f32.mrb[0].mxu0
    %6169 = vmatprep.mubr.f32.mxu0 0.0
    %6170 = vmatmul.mubr.f32.gmra.mrb[0].mxu0 %v5901
    %v6171 = vpop.f32.mrb[0].mxu0
    %v6172 = vadd.f32 0.0, %v6171
    %v6173 = vpop.f32.mrb[0].mxu0
    %6174 = vmatprep.mubr.f32.mxu0 0.0
    %6175 = vmatmul.mubr.f32.gmra.mrb[0].mxu0 %v5904
    %v6176 = vpop.f32.mrb[0].mxu0
    %v6177 = vadd.f32 0.0, %v6176
    %v6178 = vpop.f32.mrb[0].mxu0
    %6179 = vmatprep.mubr.f32.mxu0 0.0
    %6180 = vmatmul.mubr.f32.gmra.mrb[0].mxu0 %v5907
    %v6181 = vpop.f32.mrb[0].mxu0
    %v6182 = vadd.f32 0.0, %v6181
    %v6183 = vpop.f32.mrb[0].mxu0
    %6184 = vmatprep.mubr.f32.mxu0 0.0
    %6185 = vmatmul.mubr.f32.gmra.mrb[0].mxu0 %v5910
    %v6186 = vpop.f32.mrb[0].mxu0
    %v6187 = vadd.f32 0.0, %v6186
    %v6188 = vpop.f32.mrb[0].mxu0
    %6189 = vmatprep.mubr.f32.mxu0 0.0
    %6190 = vmatmul.mubr.f32.gmra.mrb[0].mxu0 %v5913
    %v6191 = vpop.f32.mrb[0].mxu0
    %v6192 = vadd.f32 0.0, %v6191
    %v6193 = vpop.f32.mrb[0].mxu0
    %6194 = vmatprep.mubr.f32.mxu0 0.0
    %6195 = vmatmul.mubr.f32.gmra.mrb[0].mxu0 %v5916
    %v6196 = vpop.f32.mrb[0].mxu0
    %v6197 = vadd.f32 0.0, %v6196
    %v6198 = vpop.f32.mrb[0].mxu0
    %6199 = vmatprep.mubr.f32.mxu0 0.0
    %6200 = vmatmul.mubr.f32.gmra.mrb[0].mxu0 %v5919
    %v6201 = vpop.f32.mrb[0].mxu0
    %v6202 = vadd.f32 0.0, %v6201
    %v6203 = vpop.f32.mrb[0].mxu0
    %6204 = vmatprep.mubr.f32.mxu0 0.0
    %6205 = vmatmul.mubr.f32.gmra.mrb[0].mxu0 %v5922
    %v6206 = vpop.f32.mrb[0].mxu0
    %v6207 = vadd.f32 0.0, %v6206
    %v6208 = vpop.f32.mrb[0].mxu0
    %6209 = vmatprep.mubr.f32.mxu0 0.0
    %6210 = vmatmul.mubr.f32.gmra.mrb[0].mxu0 %v5925
    %v6211 = vpop.f32.mrb[0].mxu0
    %v6212 = vadd.f32 0.0, %v6211
    %v6213 = vpop.f32.mrb[0].mxu0
    %6214 = vmatprep.mubr.f32.mxu0 0.0
    %6215 = vmatmul.mubr.f32.gmra.mrb[0].mxu0 %v5928
    %v6216 = vpop.f32.mrb[0].mxu0
    %v6217 = vadd.f32 0.0, %v6216
    %v6218 = vpop.f32.mrb[0].mxu0
    %6219 = vmatprep.mubr.f32.mxu0 0.0
    %6220 = vmatmul.mubr.f32.gmra.mrb[0].mxu0 %v5931
    %v6221 = vpop.f32.mrb[0].mxu0
    %v6222 = vadd.f32 0.0, %v6221
    %v6223 = vpop.f32.mrb[0].mxu0
    %6224 = vmatprep.mubr.f32.mxu0 0.0
    %6225 = vmatmul.mubr.f32.gmra.mrb[0].mxu0 %v5934
    %v6226 = vpop.f32.mrb[0].mxu0
    %v6227 = vadd.f32 0.0, %v6226
    %v6228 = vpop.f32.mrb[0].mxu0
    %6229 = vmatprep.mubr.f32.mxu0 0.0
    %6230 = vmatmul.mubr.f32.gmra.mrb[0].mxu0 %v5937
    %v6231 = vpop.f32.mrb[0].mxu0
    %v6232 = vadd.f32 0.0, %v6231
    %v6233 = vpop.f32.mrb[0].mxu0
    %6234 = vmatprep.mubr.f32.mxu0 0.0
    %6235 = vmatmul.mubr.f32.gmra.mrb[0].mxu0 %v5940
    %v6236 = vpop.f32.mrb[0].mxu0
    %v6237 = vadd.f32 0.0, %v6236
    %v6238 = vpop.f32.mrb[0].mxu0
    %6239 = vmatprep.mubr.f32.mxu0 0.0
    %6240 = vmatmul.mubr.f32.gmra.mrb[0].mxu0 %v5943
    %v6241 = vpop.f32.mrb[0].mxu0
    %v6242 = vadd.f32 0.0, %v6241
    %v6243 = vpop.f32.mrb[0].mxu0
    %6244 = vmatprep.mubr.f32.mxu0 0.0
    %6245 = vmatmul.mubr.f32.gmra.mrb[0].mxu0 %v5946
    %v6246 = vpop.f32.mrb[0].mxu0
    %v6247 = vadd.f32 0.0, %v6246
    %v6248 = vpop.f32.mrb[0].mxu0
    %6249 = vmatprep.mubr.f32.mxu0 0.0
    %6250 = vmatmul.mubr.f32.gmra.mrb[0].mxu0 %v5949
    %v6251 = vpop.f32.mrb[0].mxu0
    %v6252 = vadd.f32 0.0, %v6251
    %v6253 = vpop.f32.mrb[0].mxu0
    %6254 = vmatprep.mubr.f32.mxu0 0.0
    %6255 = vmatmul.mubr.f32.gmra.mrb[0].mxu0 %v5952
    %v6256 = vpop.f32.mrb[0].mxu0
    %v6257 = vadd.f32 0.0, %v6256
    %v6258 = vpop.f32.mrb[0].mxu0
    %6259 = vmatprep.mubr.f32.mxu0 0.0
    %6260 = vmatmul.mubr.f32.gmra.mrb[0].mxu0 %v5955
    %v6261 = vpop.f32.mrb[0].mxu0
    %v6262 = vadd.f32 0.0, %v6261
    %v6263 = vpop.f32.mrb[0].mxu0
    %6264 = vmatprep.mubr.f32.mxu0 0.0
    %6265 = vmatmul.mubr.f32.gmra.mrb[0].mxu0 %v5958
    %v6266 = vpop.f32.mrb[0].mxu0
    %v6267 = vadd.f32 0.0, %v6266
    %v6268 = vpop.f32.mrb[0].mxu0
    %6269 = vmatprep.mubr.f32.mxu0 0.0
    %6270 = vmatmul.mubr.f32.gmra.mrb[0].mxu0 %v5961
    %v6271 = vpop.f32.mrb[0].mxu0
    %v6272 = vadd.f32 0.0, %v6271
    %v6273 = vpop.f32.mrb[0].mxu0
    %6274 = vmatprep.mubr.f32.mxu0 0.0
    %6275 = vmatmul.mubr.f32.gmra.mrb[0].mxu0 %v5964
    %v6276 = vpop.f32.mrb[0].mxu0
    %v6277 = vadd.f32 0.0, %v6276
    %v6278 = vpop.f32.mrb[0].mxu0
    %6279 = vmatprep.mubr.f32.mxu0 0.0
    %6280 = vmatmul.mubr.f32.gmra.mrb[0].mxu0 %v5967
    %v6281 = vpop.f32.mrb[0].mxu0
    %v6282 = vadd.f32 0.0, %v6281
    %v6283 = vpop.f32.mrb[0].mxu0
    %6284 = vmatprep.mubr.f32.mxu0 0.0
    %6285 = vmatmul.mubr.f32.gmra.mrb[0].mxu0 %v5970
    %v6286 = vpop.f32.mrb[0].mxu0
    %v6287 = vadd.f32 0.0, %v6286
    %v6288 = vpop.f32.mrb[0].mxu0
    %6289 = vmatprep.mubr.f32.mxu0 0.0
    %6290 = vmatmul.mubr.f32.gmra.mrb[0].mxu0 %v5973
    %v6291 = vpop.f32.mrb[0].mxu0
    %v6292 = vadd.f32 0.0, %v6291
    %v6293 = vpop.f32.mrb[0].mxu0
    %6294 = vmatprep.mubr.f32.mxu0 0.0
    %6295 = vmatmul.mubr.f32.gmra.mrb[0].mxu0 %v5976
    %v6296 = vpop.f32.mrb[0].mxu0
    %v6297 = vadd.f32 0.0, %v6296
    %v6298 = vpop.f32.mrb[0].mxu0
    %6299 = vmatprep.mubr.f32.mxu0 0.0
    %6300 = vmatmul.mubr.f32.gmra.mrb[0].mxu0 %v5979
    %v6301 = vpop.f32.mrb[0].mxu0
    %v6302 = vadd.f32 0.0, %v6301
    %v6303 = vpop.f32.mrb[0].mxu0
    %6304 = vmatprep.mubr.f32.mxu0 0.0
    %6305 = vmatmul.mubr.f32.gmra.mrb[0].mxu0 %v5982
    %v6306 = vpop.f32.mrb[0].mxu0
    %v6307 = vadd.f32 0.0, %v6306
    %v6308 = vpop.f32.mrb[0].mxu0
    %6309 = vmatprep.mubr.f32.mxu0 0.0
    %6310 = vmatmul.mubr.f32.gmra.mrb[0].mxu0 %v5985
    %v6311 = vpop.f32.mrb[0].mxu0
    %v6312 = vadd.f32 0.0, %v6311
    %v6313 = vpop.f32.mrb[0].mxu0
    %6314 = vmatprep.mubr.f32.mxu0 0.0
    %6315 = vmatmul.mubr.f32.gmra.mrb[0].mxu0 %v5988
    %v6316 = vpop.f32.mrb[0].mxu0
    %v6317 = vadd.f32 0.0, %v6316
    %v6318 = vpop.f32.mrb[0].mxu0
    %6319 = vmatprep.mubr.f32.mxu0 0.0
    %6320 = vmatmul.mubr.f32.gmra.mrb[0].mxu0 %v5991
    %v6321 = vpop.f32.mrb[0].mxu0
    %v6322 = vadd.f32 0.0, %v6321
    %v6323 = vpop.f32.mrb[0].mxu0
    %6324 = vmatprep.mubr.f32.mxu0 0.0
    %6325 = vmatmul.mubr.f32.gmra.mrb[0].mxu0 %v5994
    %v6326 = vpop.f32.mrb[0].mxu0
    %v6327 = vadd.f32 0.0, %v6326
    %v6328 = vpop.f32.mrb[0].mxu0
    %6329 = vmatprep.mubr.f32.mxu0 0.0
    %6330 = vmatmul.mubr.f32.gmra.mrb[0].mxu0 %v5997
    %v6331 = vpop.f32.mrb[0].mxu0
    %v6332 = vadd.f32 0.0, %v6331
    %v6333 = vpop.f32.mrb[0].mxu0
    %6334 = vmatprep.mubr.f32.mxu0 0.0
    %6335 = vmatmul.mubr.f32.gmra.mrb[0].mxu0 %v6000
    %v6336 = vpop.f32.mrb[0].mxu0
    %v6337 = vadd.f32 0.0, %v6336
    %v6338 = vpop.f32.mrb[0].mxu0
    %6339 = vmatprep.mubr.f32.mxu0 0.0
    %6340 = vmatmul.mubr.f32.gmra.mrb[0].mxu0 %v6003
    %v6341 = vpop.f32.mrb[0].mxu0
    %v6342 = vadd.f32 0.0, %v6341
    %v6343 = vpop.f32.mrb[0].mxu0
    %6344 = vmatprep.mubr.f32.mxu0 0.0
    %6345 = vmatmul.mubr.f32.gmra.mrb[0].mxu0 %v6006
    %v6346 = vpop.f32.mrb[0].mxu0
    %v6347 = vadd.f32 0.0, %v6346
    %v6348 = vpop.f32.mrb[0].mxu0
    %6349 = vmatprep.mubr.f32.mxu0 0.0
    %6350 = vmatmul.mubr.f32.gmra.mrb[0].mxu0 %v6009
    %v6351 = vpop.f32.mrb[0].mxu0
    %v6352 = vadd.f32 0.0, %v6351
    %v6353 = vpop.f32.mrb[0].mxu0
    %6354 = vmatprep.mubr.f32.mxu0 0.0
    %6355 = vmatmul.mubr.f32.gmra.mrb[0].mxu0 %v6012
    %v6356 = vpop.f32.mrb[0].mxu0
    %v6357 = vadd.f32 0.0, %v6356
    %v6358 = vpop.f32.mrb[0].mxu0
    %6359 = vmatprep.mubr.f32.mxu0 0.0
    %6360 = vmatmul.mubr.f32.gmra.mrb[0].mxu0 %v6015
    %v6361 = vpop.f32.mrb[0].mxu0
    %v6362 = vadd.f32 0.0, %v6361
    %v6363 = vpop.f32.mrb[0].mxu0
    %6364 = vmatprep.mubr.f32.mxu0 0.0
    %6365 = vmatmul.mubr.f32.gmra.mrb[0].mxu0 %v6018
    %v6366 = vpop.f32.mrb[0].mxu0
    %v6367 = vadd.f32 0.0, %v6366
    %v6368 = vpop.f32.mrb[0].mxu0
    %6369 = vmatprep.mubr.f32.mxu0 0.0
    %6370 = vmatmul.mubr.f32.gmra.mrb[0].mxu0 %v6021
    %v6371 = vpop.f32.mrb[0].mxu0
    %v6372 = vadd.f32 0.0, %v6371
    %v6373 = vpop.f32.mrb[0].mxu0
    %6374 = vmatprep.mubr.f32.mxu0 0.0
    %6375 = vmatmul.mubr.f32.gmra.mrb[0].mxu0 %v6024
    %v6376 = vpop.f32.mrb[0].mxu0
    %v6377 = vadd.f32 0.0, %v6376
    %v6378 = vpop.f32.mrb[0].mxu0
    %6379 = vmatprep.mubr.f32.mxu0 0.0
    %6380 = vmatmul.mubr.f32.gmra.mrb[0].mxu0 %v6027
    %v6381 = vpop.f32.mrb[0].mxu0
    %v6382 = vadd.f32 0.0, %v6381
    %v6383 = vpop.f32.mrb[0].mxu0
    %6384 = vmatprep.mubr.f32.mxu0 0.0
    %6385 = vmatmul.mubr.f32.gmra.mrb[0].mxu0 %v6030
    %v6386 = vpop.f32.mrb[0].mxu0
    %v6387 = vadd.f32 0.0, %v6386
    %v6388 = vpop.f32.mrb[0].mxu0
    %6389 = vmatprep.mubr.f32.mxu0 0.0
    %6390 = vmatmul.mubr.f32.gmra.mrb[0].mxu0 %v6033
    %v6391 = vpop.f32.mrb[0].mxu0
    %v6392 = vadd.f32 0.0, %v6391
    %v6393 = vpop.f32.mrb[0].mxu0
    %6394 = vmatprep.mubr.f32.mxu0 0.0
    %6395 = vmatmul.mubr.f32.gmra.mrb[0].mxu0 %v6036
    %v6396 = vpop.f32.mrb[0].mxu0
    %v6397 = vadd.f32 0.0, %v6396
    %v6398 = vpop.f32.mrb[0].mxu0
    %6399 = vmatprep.mubr.f32.mxu0 0.0
    %6400 = vmatmul.mubr.f32.gmra.mrb[0].mxu0 %v6039
    %v6401 = vpop.f32.mrb[0].mxu0
    %v6402 = vadd.f32 0.0, %v6401
    %v6403 = vpop.f32.mrb[0].mxu0
    %6404 = vmatprep.mubr.f32.mxu0 0.0
    %6405 = vmatmul.mubr.f32.gmra.mrb[0].mxu0 %v6042
    %v6406 = vpop.f32.mrb[0].mxu0
    %v6407 = vadd.f32 0.0, %v6406
    %v6408 = vpop.f32.mrb[0].mxu0
    %6409 = vmatprep.mubr.f32.mxu0 0.0
    %6410 = vmatmul.mubr.f32.gmra.mrb[0].mxu0 %v6045
    %v6411 = vpop.f32.mrb[0].mxu0
    %v6412 = vadd.f32 0.0, %v6411
    %v6413 = vpop.f32.mrb[0].mxu0
    %6414 = vmatprep.mubr.f32.mxu0 0.0
    %6415 = vmatmul.mubr.f32.gmra.mrb[0].mxu0 %v6048
    %v6416 = vpop.f32.mrb[0].mxu0
    %v6417 = vadd.f32 0.0, %v6416
    %v6418 = vpop.f32.mrb[0].mxu0
    %6419 = vmatprep.mubr.f32.mxu0 0.0
    %6420 = vmatmul.mubr.f32.gmra.mrb[0].mxu0 %v6051
    %v6421 = vpop.f32.mrb[0].mxu0
    %v6422 = vadd.f32 0.0, %v6421
    %v6423 = vpop.f32.mrb[0].mxu0
    %6424 = vmatprep.mubr.f32.mxu0 0.0
    %6425 = vmatmul.mubr.f32.gmra.mrb[0].mxu0 %v6054
    %v6426 = vpop.f32.mrb[0].mxu0
    %v6427 = vadd.f32 0.0, %v6426
    %v6428 = vpop.f32.mrb[0].mxu0
    %6429 = vmatprep.mubr.f32.mxu0 0.0
    %6430 = vmatmul.mubr.f32.gmra.mrb[0].mxu0 %v6057
    %v6431 = vpop.f32.mrb[0].mxu0
    %v6432 = vadd.f32 0.0, %v6431
    %v6433 = vpop.f32.mrb[0].mxu0
    %6434 = vmatprep.mubr.f32.mxu0 0.0
    %6435 = vmatmul.mubr.f32.gmra.mrb[0].mxu0 %v6060
    %v6436 = vpop.f32.mrb[0].mxu0
    %v6437 = vadd.f32 0.0, %v6436
    %v6438 = vpop.f32.mrb[0].mxu0
    %6439 = vmatprep.mubr.f32.mxu0 0.0
    %6440 = vmatmul.mubr.f32.gmra.mrb[0].mxu0 %v6063
    %v6441 = vpop.f32.mrb[0].mxu0
    %v6442 = vadd.f32 0.0, %v6441
    %v6443 = vpop.f32.mrb[0].mxu0
    %6444 = vmatprep.mubr.f32.mxu0 0.0
    %6445 = vmatmul.mubr.f32.gmra.mrb[0].mxu0 %v6066
    %v6446 = vpop.f32.mrb[0].mxu0
    %v6447 = vadd.f32 0.0, %v6446
    %v6448 = vpop.f32.mrb[0].mxu0
    %6449 = vmatprep.mubr.f32.mxu0 0.0
    %6450 = vmatmul.mubr.f32.gmra.mrb[0].mxu0 %v6069
    %v6451 = vpop.f32.mrb[0].mxu0
    %v6452 = vadd.f32 0.0, %v6451
    %v6453 = vpop.f32.mrb[0].mxu0
    %6454 = vmatprep.mubr.f32.mxu0 0.0
    %6455 = vmatmul.mubr.f32.gmra.mrb[0].mxu0 %v6072
    %v6456 = vpop.f32.mrb[0].mxu0
    %v6457 = vadd.f32 0.0, %v6456
    %v6458 = vpop.f32.mrb[0].mxu0
    %6459 = vmatprep.mubr.f32.mxu0 0.0
    %6460 = vmatmul.mubr.f32.gmra.mrb[0].mxu0 %v6075
    %v6461 = vpop.f32.mrb[0].mxu0
    %v6462 = vadd.f32 0.0, %v6461
    %v6463 = vpop.f32.mrb[0].mxu0
    %6464 = vdwg.mxu0
    %v6465 = vadd.f32 %v5755, %v6147
    %v6466 = vadd.f32 %v5756, %v6152
    %v6467 = vadd.f32 %v5757, %v6157
    %v6468 = vadd.f32 %v5758, %v6162
    %v6469 = vadd.f32 %v5759, %v6167
    %v6470 = vadd.f32 %v5760, %v6172
    %v6471 = vadd.f32 %v5761, %v6177
    %v6472 = vadd.f32 %v5762, %v6182
    %v6473 = vadd.f32 %v5763, %v6187
    %v6474 = vadd.f32 %v5764, %v6192
    %v6475 = vadd.f32 %v5765, %v6197
    %v6476 = vadd.f32 %v5766, %v6202
    %v6477 = vadd.f32 %v5767, %v6207
    %v6478 = vadd.f32 %v5768, %v6212
    %v6479 = vadd.f32 %v5769, %v6217
    %v6480 = vadd.f32 %v5770, %v6222
    %v6481 = vadd.f32 %v5771, %v6227
    %v6482 = vadd.f32 %v5772, %v6232
    %v6483 = vadd.f32 %v5773, %v6237
    %v6484 = vadd.f32 %v5774, %v6242
    %v6485 = vadd.f32 %v5775, %v6247
    %v6486 = vadd.f32 %v5776, %v6252
    %v6487 = vadd.f32 %v5777, %v6257
    %v6488 = vadd.f32 %v5778, %v6262
    %v6489 = vadd.f32 %v5779, %v6267
    %v6490 = vadd.f32 %v5780, %v6272
    %v6491 = vadd.f32 %v5781, %v6277
    %v6492 = vadd.f32 %v5782, %v6282
    %v6493 = vadd.f32 %v5783, %v6287
    %v6494 = vadd.f32 %v5784, %v6292
    %v6495 = vadd.f32 %v5785, %v6297
    %v6496 = vadd.f32 %v5786, %v6302
    %v6497 = vadd.f32 %v5787, %v6307
    %v6498 = vadd.f32 %v5788, %v6312
    %v6499 = vadd.f32 %v5789, %v6317
    %v6500 = vadd.f32 %v5790, %v6322
    %v6501 = vadd.f32 %v5791, %v6327
    %v6502 = vadd.f32 %v5792, %v6332
    %v6503 = vadd.f32 %v5793, %v6337
    %v6504 = vadd.f32 %v5794, %v6342
    %v6505 = vadd.f32 %v5795, %v6347
    %v6506 = vadd.f32 %v5796, %v6352
    %v6507 = vadd.f32 %v5797, %v6357
    %v6508 = vadd.f32 %v5798, %v6362
    %v6509 = vadd.f32 %v5799, %v6367
    %v6510 = vadd.f32 %v5800, %v6372
    %v6511 = vadd.f32 %v5801, %v6377
    %v6512 = vadd.f32 %v5802, %v6382
    %v6513 = vadd.f32 %v5803, %v6387
    %v6514 = vadd.f32 %v5804, %v6392
    %v6515 = vadd.f32 %v5805, %v6397
    %v6516 = vadd.f32 %v5806, %v6402
    %v6517 = vadd.f32 %v5807, %v6407
    %v6518 = vadd.f32 %v5808, %v6412
    %v6519 = vadd.f32 %v5809, %v6417
    %v6520 = vadd.f32 %v5810, %v6422
    %v6521 = vadd.f32 %v5811, %v6427
    %v6522 = vadd.f32 %v5812, %v6432
    %v6523 = vadd.f32 %v5813, %v6437
    %v6524 = vadd.f32 %v5814, %v6442
    %v6525 = vadd.f32 %v5815, %v6447
    %v6526 = vadd.f32 %v5816, %v6452
    %v6527 = vadd.f32 %v5817, %v6457
    %v6528 = vadd.f32 %v5818, %v6462
    %v6529 = vld [vmem:[%s2] sm:$0x1]
    %v6531 = vlaneseq
    %v6532 = vshrl.u32 %v6531, 7
    %v6533 = vsub.s32 0, %v6532
    %v6534 = vrot.slane %v6529, %v6533
    %v6536 = vadd.f32 %v6465, %v6534
    %v6537 = vadd.f32 %v6466, %v6534
    %v6538 = vadd.f32 %v6467, %v6534
    %v6539 = vadd.f32 %v6468, %v6534
    %v6540 = vadd.f32 %v6469, %v6534
    %v6541 = vadd.f32 %v6470, %v6534
    %v6542 = vadd.f32 %v6471, %v6534
    %v6543 = vadd.f32 %v6472, %v6534
    %v6544 = vadd.f32 %v6473, %v6534
    %v6545 = vadd.f32 %v6474, %v6534
    %v6546 = vadd.f32 %v6475, %v6534
    %v6547 = vadd.f32 %v6476, %v6534
    %v6548 = vadd.f32 %v6477, %v6534
    %v6549 = vadd.f32 %v6478, %v6534
    %v6550 = vadd.f32 %v6479, %v6534
    %v6551 = vadd.f32 %v6480, %v6534
    %v6552 = vadd.f32 %v6481, %v6534
    %v6553 = vadd.f32 %v6482, %v6534
    %v6554 = vadd.f32 %v6483, %v6534
    %v6555 = vadd.f32 %v6484, %v6534
    %v6556 = vadd.f32 %v6485, %v6534
    %v6557 = vadd.f32 %v6486, %v6534
    %v6558 = vadd.f32 %v6487, %v6534
    %v6559 = vadd.f32 %v6488, %v6534
    %v6560 = vadd.f32 %v6489, %v6534
    %v6561 = vadd.f32 %v6490, %v6534
    %v6562 = vadd.f32 %v6491, %v6534
    %v6563 = vadd.f32 %v6492, %v6534
    %v6564 = vadd.f32 %v6493, %v6534
    %v6565 = vadd.f32 %v6494, %v6534
    %v6566 = vadd.f32 %v6495, %v6534
    %v6567 = vadd.f32 %v6496, %v6534
    %v6568 = vadd.f32 %v6497, %v6534
    %v6569 = vadd.f32 %v6498, %v6534
    %v6570 = vadd.f32 %v6499, %v6534
    %v6571 = vadd.f32 %v6500, %v6534
    %v6572 = vadd.f32 %v6501, %v6534
    %v6573 = vadd.f32 %v6502, %v6534
    %v6574 = vadd.f32 %v6503, %v6534
    %v6575 = vadd.f32 %v6504, %v6534
    %v6576 = vadd.f32 %v6505, %v6534
    %v6577 = vadd.f32 %v6506, %v6534
    %v6578 = vadd.f32 %v6507, %v6534
    %v6579 = vadd.f32 %v6508, %v6534
    %v6580 = vadd.f32 %v6509, %v6534
    %v6581 = vadd.f32 %v6510, %v6534
    %v6582 = vadd.f32 %v6511, %v6534
    %v6583 = vadd.f32 %v6512, %v6534
    %v6584 = vadd.f32 %v6513, %v6534
    %v6585 = vadd.f32 %v6514, %v6534
    %v6586 = vadd.f32 %v6515, %v6534
    %v6587 = vadd.f32 %v6516, %v6534
    %v6588 = vadd.f32 %v6517, %v6534
    %v6589 = vadd.f32 %v6518, %v6534
    %v6590 = vadd.f32 %v6519, %v6534
    %v6591 = vadd.f32 %v6520, %v6534
    %v6592 = vadd.f32 %v6521, %v6534
    %v6593 = vadd.f32 %v6522, %v6534
    %v6594 = vadd.f32 %v6523, %v6534
    %v6595 = vadd.f32 %v6524, %v6534
    %v6596 = vadd.f32 %v6525, %v6534
    %v6597 = vadd.f32 %v6526, %v6534
    %v6598 = vadd.f32 %v6527, %v6534
    %v6599 = vadd.f32 %v6528, %v6534
    %v6600 = vmax.f32 %v6536, 0.0
    %v6601 = vmax.f32 %v6537, 0.0
    %v6602 = vmax.f32 %v6538, 0.0
    %v6603 = vmax.f32 %v6539, 0.0
    %v6604 = vmax.f32 %v6540, 0.0
    %v6605 = vmax.f32 %v6541, 0.0
    %v6606 = vmax.f32 %v6542, 0.0
    %v6607 = vmax.f32 %v6543, 0.0
    %v6608 = vmax.f32 %v6544, 0.0
    %v6609 = vmax.f32 %v6545, 0.0
    %v6610 = vmax.f32 %v6546, 0.0
    %v6611 = vmax.f32 %v6547, 0.0
    %v6612 = vmax.f32 %v6548, 0.0
    %v6613 = vmax.f32 %v6549, 0.0
    %v6614 = vmax.f32 %v6550, 0.0
    %v6615 = vmax.f32 %v6551, 0.0
    %v6616 = vmax.f32 %v6552, 0.0
    %v6617 = vmax.f32 %v6553, 0.0
    %v6618 = vmax.f32 %v6554, 0.0
    %v6619 = vmax.f32 %v6555, 0.0
    %v6620 = vmax.f32 %v6556, 0.0
    %v6621 = vmax.f32 %v6557, 0.0
    %v6622 = vmax.f32 %v6558, 0.0
    %v6623 = vmax.f32 %v6559, 0.0
    %v6624 = vmax.f32 %v6560, 0.0
    %v6625 = vmax.f32 %v6561, 0.0
    %v6626 = vmax.f32 %v6562, 0.0
    %v6627 = vmax.f32 %v6563, 0.0
    %v6628 = vmax.f32 %v6564, 0.0
    %v6629 = vmax.f32 %v6565, 0.0
    %v6630 = vmax.f32 %v6566, 0.0
    %v6631 = vmax.f32 %v6567, 0.0
    %v6632 = vmax.f32 %v6568, 0.0
    %v6633 = vmax.f32 %v6569, 0.0
    %v6634 = vmax.f32 %v6570, 0.0
    %v6635 = vmax.f32 %v6571, 0.0
    %v6636 = vmax.f32 %v6572, 0.0
    %v6637 = vmax.f32 %v6573, 0.0
    %v6638 = vmax.f32 %v6574, 0.0
    %v6639 = vmax.f32 %v6575, 0.0
    %v6640 = vmax.f32 %v6576, 0.0
    %v6641 = vmax.f32 %v6577, 0.0
    %v6642 = vmax.f32 %v6578, 0.0
    %v6643 = vmax.f32 %v6579, 0.0
    %v6644 = vmax.f32 %v6580, 0.0
    %v6645 = vmax.f32 %v6581, 0.0
    %v6646 = vmax.f32 %v6582, 0.0
    %v6647 = vmax.f32 %v6583, 0.0
    %v6648 = vmax.f32 %v6584, 0.0
    %v6649 = vmax.f32 %v6585, 0.0
    %v6650 = vmax.f32 %v6586, 0.0
    %v6651 = vmax.f32 %v6587, 0.0
    %v6652 = vmax.f32 %v6588, 0.0
    %v6653 = vmax.f32 %v6589, 0.0
    %v6654 = vmax.f32 %v6590, 0.0
    %v6655 = vmax.f32 %v6591, 0.0
    %v6656 = vmax.f32 %v6592, 0.0
    %v6657 = vmax.f32 %v6593, 0.0
    %v6658 = vmax.f32 %v6594, 0.0
    %v6659 = vmax.f32 %v6595, 0.0
    %v6660 = vmax.f32 %v6596, 0.0
    %v6661 = vmax.f32 %v6597, 0.0
    %v6662 = vmax.f32 %v6598, 0.0
    %v6663 = vmax.f32 %v6599, 0.0
    %v6664 = vmax.f32 %v6600, %v6602
    %v6665 = vmax.f32 %v6601, %v6603
    %v6666 = vmax.f32 %v6632, %v6634
    %v6667 = vmax.f32 %v6633, %v6635
    %vm6668 = vcmask 64512
    %6669 = vst.msk [vmem:[#allocation3] sm:$0xff] %vm6668, %v6664
    %6670 = vst.msk [vmem:[#allocation3 + $0x8] sm:$0xff] %vm6668, %v6665
    %6671 = vst.msk [vmem:[#allocation3 + $0x80] sm:$0xff] %vm6668, %v6666
    %6672 = vst.msk [vmem:[#allocation3 + $0x88] sm:$0xff] %vm6668, %v6667
    %v6673 = vmax.f32 %v6604, %v6606
    %v6674 = vmax.f32 %v6605, %v6607
    %v6675 = vmax.f32 %v6636, %v6638
    %v6676 = vmax.f32 %v6637, %v6639
    %s6677 = scalar_lea.vmem [#allocation3], 16
    %6678 = vst.msk [vmem:[%s6677] sm:$0xff] %vm6668, %v6673
    %6679 = vst.msk [vmem:[%s6677 + $0x8] sm:$0xff] %vm6668, %v6674
    %6680 = vst.msk [vmem:[%s6677 + $0x80] sm:$0xff] %vm6668, %v6675
    %6681 = vst.msk [vmem:[%s6677 + $0x88] sm:$0xff] %vm6668, %v6676
    %v6682 = vmax.f32 %v6608, %v6610
    %v6683 = vmax.f32 %v6609, %v6611
    %v6684 = vmax.f32 %v6640, %v6642
    %v6685 = vmax.f32 %v6641, %v6643
    %s6686 = scalar_lea.vmem [#allocation3], 32
    %6687 = vst.msk [vmem:[%s6686] sm:$0xff] %vm6668, %v6682
    %6688 = vst.msk [vmem:[%s6686 + $0x8] sm:$0xff] %vm6668, %v6683
    %6689 = vst.msk [vmem:[%s6686 + $0x80] sm:$0xff] %vm6668, %v6684
    %6690 = vst.msk [vmem:[%s6686 + $0x88] sm:$0xff] %vm6668, %v6685
    %v6691 = vmax.f32 %v6612, %v6614
    %v6692 = vmax.f32 %v6613, %v6615
    %v6693 = vmax.f32 %v6644, %v6646
    %v6694 = vmax.f32 %v6645, %v6647
    %s6695 = scalar_lea.vmem [#allocation3], 48
    %6696 = vst.msk [vmem:[%s6695] sm:$0xff] %vm6668, %v6691
    %6697 = vst.msk [vmem:[%s6695 + $0x8] sm:$0xff] %vm6668, %v6692
    %6698 = vst.msk [vmem:[%s6695 + $0x80] sm:$0xff] %vm6668, %v6693
    %6699 = vst.msk [vmem:[%s6695 + $0x88] sm:$0xff] %vm6668, %v6694
    %v6700 = vmax.f32 %v6616, %v6618
    %v6701 = vmax.f32 %v6617, %v6619
    %v6702 = vmax.f32 %v6648, %v6650
    %v6703 = vmax.f32 %v6649, %v6651
    %s6704 = scalar_lea.vmem [#allocation3], 64
    %6705 = vst.msk [vmem:[%s6704] sm:$0xff] %vm6668, %v6700
    %6706 = vst.msk [vmem:[%s6704 + $0x8] sm:$0xff] %vm6668, %v6701
    %6707 = vst.msk [vmem:[%s6704 + $0x80] sm:$0xff] %vm6668, %v6702
    %6708 = vst.msk [vmem:[%s6704 + $0x88] sm:$0xff] %vm6668, %v6703
    %v6709 = vmax.f32 %v6620, %v6622
    %v6710 = vmax.f32 %v6621, %v6623
    %v6711 = vmax.f32 %v6652, %v6654
    %v6712 = vmax.f32 %v6653, %v6655
    %s6713 = scalar_lea.vmem [#allocation3], 80
    %6714 = vst.msk [vmem:[%s6713] sm:$0xff] %vm6668, %v6709
    %6715 = vst.msk [vmem:[%s6713 + $0x8] sm:$0xff] %vm6668, %v6710
    %6716 = vst.msk [vmem:[%s6713 + $0x80] sm:$0xff] %vm6668, %v6711
    %6717 = vst.msk [vmem:[%s6713 + $0x88] sm:$0xff] %vm6668, %v6712
    %v6718 = vmax.f32 %v6624, %v6626
    %v6719 = vmax.f32 %v6625, %v6627
    %v6720 = vmax.f32 %v6656, %v6658
    %v6721 = vmax.f32 %v6657, %v6659
    %s6722 = scalar_lea.vmem [#allocation3], 96
    %6723 = vst.msk [vmem:[%s6722] sm:$0xff] %vm6668, %v6718
    %6724 = vst.msk [vmem:[%s6722 + $0x8] sm:$0xff] %vm6668, %v6719
    %6725 = vst.msk [vmem:[%s6722 + $0x80] sm:$0xff] %vm6668, %v6720
    %6726 = vst.msk [vmem:[%s6722 + $0x88] sm:$0xff] %vm6668, %v6721
    %v6727 = vmax.f32 %v6628, %v6630
    %v6728 = vmax.f32 %v6629, %v6631
    %v6729 = vmax.f32 %v6660, %v6662
    %v6730 = vmax.f32 %v6661, %v6663
    %s6731 = scalar_lea.vmem [#allocation3], 112
    %6732 = vst.msk [vmem:[%s6731] sm:$0xff] %vm6668, %v6727
    %6733 = vst.msk [vmem:[%s6731 + $0x8] sm:$0xff] %vm6668, %v6728
    %6734 = vst.msk [vmem:[%s6731 + $0x80] sm:$0xff] %vm6668, %v6729
    %6735 = vst.msk [vmem:[%s6731 + $0x88] sm:$0xff] %vm6668, %v6730
    %v6736 = vld [vmem:[#allocation3] sm:$0x1]
    %v6737 = vld [vmem:[#allocation3 + $0x10] sm:$0x1]
    %v6738 = vld [vmem:[#allocation3 + $0x20] sm:$0x1]
    %v6739 = vld [vmem:[#allocation3 + $0x30] sm:$0x1]
    %v6740 = vld [vmem:[#allocation3 + $0x40] sm:$0x1]
    %v6741 = vld [vmem:[#allocation3 + $0x50] sm:$0x1]
    %v6742 = vld [vmem:[#allocation3 + $0x60] sm:$0x1]
    %v6743 = vld [vmem:[#allocation3 + $0x70] sm:$0x1]
    %v6744 = vld [vmem:[#allocation3 + $0x80] sm:$0x1]
    %v6745 = vld [vmem:[#allocation3 + $0x90] sm:$0x1]
    %v6746 = vld [vmem:[#allocation3 + $0xa0] sm:$0x1]
    %v6747 = vld [vmem:[#allocation3 + $0xb0] sm:$0x1]
    %v6748 = vld [vmem:[#allocation3 + $0xc0] sm:$0x1]
    %v6749 = vld [vmem:[#allocation3 + $0xd0] sm:$0x1]
    %v6750 = vld [vmem:[#allocation3 + $0xe0] sm:$0x1]
    %v6751 = vld [vmem:[#allocation3 + $0xf0] sm:$0x1]
    %v6752 = vld [vmem:[#allocation3 + $0x1] sm:$0x1]
    %v6753 = vld [vmem:[#allocation3 + $0x11] sm:$0x1]
    %v6754 = vld [vmem:[#allocation3 + $0x21] sm:$0x1]
    %v6755 = vld [vmem:[#allocation3 + $0x31] sm:$0x1]
    %v6756 = vld [vmem:[#allocation3 + $0x41] sm:$0x1]
    %v6757 = vld [vmem:[#allocation3 + $0x51] sm:$0x1]
    %v6758 = vld [vmem:[#allocation3 + $0x61] sm:$0x1]
    %v6759 = vld [vmem:[#allocation3 + $0x71] sm:$0x1]
    %v6760 = vld [vmem:[#allocation3 + $0x81] sm:$0x1]
    %v6761 = vld [vmem:[#allocation3 + $0x91] sm:$0x1]
    %v6762 = vld [vmem:[#allocation3 + $0xa1] sm:$0x1]
    %v6763 = vld [vmem:[#allocation3 + $0xb1] sm:$0x1]
    %v6764 = vld [vmem:[#allocation3 + $0xc1] sm:$0x1]
    %v6765 = vld [vmem:[#allocation3 + $0xd1] sm:$0x1]
    %v6766 = vld [vmem:[#allocation3 + $0xe1] sm:$0x1]
    %v6767 = vld [vmem:[#allocation3 + $0xf1] sm:$0x1]
    %v6768 = vmax.f32 %v6736, %v6752
    %v6769 = vmax.f32 %v6737, %v6753
    %v6770 = vmax.f32 %v6738, %v6754
    %v6771 = vmax.f32 %v6739, %v6755
    %v6772 = vmax.f32 %v6740, %v6756
    %v6773 = vmax.f32 %v6741, %v6757
    %v6774 = vmax.f32 %v6742, %v6758
    %v6775 = vmax.f32 %v6743, %v6759
    %v6776 = vmax.f32 %v6744, %v6760
    %v6777 = vmax.f32 %v6745, %v6761
    %v6778 = vmax.f32 %v6746, %v6762
    %v6779 = vmax.f32 %v6747, %v6763
    %v6780 = vmax.f32 %v6748, %v6764
    %v6781 = vmax.f32 %v6749, %v6765
    %v6782 = vmax.f32 %v6750, %v6766
    %v6783 = vmax.f32 %v6751, %v6767
    %vm6784 = vcmask 57344
    %6785 = vst.msk [vmem:[#allocation4] sm:$0x1] %vm6784, %v6768
    %6786 = vst.msk [vmem:[#allocation4 + $0x8] sm:$0x1] %vm6784, %v6769
    %6787 = vst.msk [vmem:[#allocation4 + $0x10] sm:$0x1] %vm6784, %v6770
    %6788 = vst.msk [vmem:[#allocation4 + $0x18] sm:$0x1] %vm6784, %v6771
    %6789 = vst.msk [vmem:[#allocation4 + $0x20] sm:$0x1] %vm6784, %v6772
    %6790 = vst.msk [vmem:[#allocation4 + $0x28] sm:$0x1] %vm6784, %v6773
    %6791 = vst.msk [vmem:[#allocation4 + $0x30] sm:$0x1] %vm6784, %v6774
    %6792 = vst.msk [vmem:[#allocation4 + $0x38] sm:$0x1] %vm6784, %v6775
    %6793 = vst.msk [vmem:[#allocation4 + $0x40] sm:$0x1] %vm6784, %v6776
    %6794 = vst.msk [vmem:[#allocation4 + $0x48] sm:$0x1] %vm6784, %v6777
    %6795 = vst.msk [vmem:[#allocation4 + $0x50] sm:$0x1] %vm6784, %v6778
    %6796 = vst.msk [vmem:[#allocation4 + $0x58] sm:$0x1] %vm6784, %v6779
    %6797 = vst.msk [vmem:[#allocation4 + $0x60] sm:$0x1] %vm6784, %v6780
    %6798 = vst.msk [vmem:[#allocation4 + $0x68] sm:$0x1] %vm6784, %v6781
    %6799 = vst.msk [vmem:[#allocation4 + $0x70] sm:$0x1] %vm6784, %v6782
    %6800 = vst.msk [vmem:[#allocation4 + $0x78] sm:$0x1] %vm6784, %v6783
    %v6801 = vld [vmem:[#allocation3 + $0x2] sm:$0x1]
    %v6802 = vld [vmem:[#allocation3 + $0x12] sm:$0x1]
    %v6803 = vld [vmem:[#allocation3 + $0x22] sm:$0x1]
    %v6804 = vld [vmem:[#allocation3 + $0x32] sm:$0x1]
    %v6805 = vld [vmem:[#allocation3 + $0x42] sm:$0x1]
    %v6806 = vld [vmem:[#allocation3 + $0x52] sm:$0x1]
    %v6807 = vld [vmem:[#allocation3 + $0x62] sm:$0x1]
    %v6808 = vld [vmem:[#allocation3 + $0x72] sm:$0x1]
    %v6809 = vld [vmem:[#allocation3 + $0x82] sm:$0x1]
    %v6810 = vld [vmem:[#allocation3 + $0x92] sm:$0x1]
    %v6811 = vld [vmem:[#allocation3 + $0xa2] sm:$0x1]
    %v6812 = vld [vmem:[#allocation3 + $0xb2] sm:$0x1]
    %v6813 = vld [vmem:[#allocation3 + $0xc2] sm:$0x1]
    %v6814 = vld [vmem:[#allocation3 + $0xd2] sm:$0x1]
    %v6815 = vld [vmem:[#allocation3 + $0xe2] sm:$0x1]
    %v6816 = vld [vmem:[#allocation3 + $0xf2] sm:$0x1]
    %v6817 = vld [vmem:[#allocation3 + $0x3] sm:$0x1]
    %v6818 = vld [vmem:[#allocation3 + $0x13] sm:$0x1]
    %v6819 = vld [vmem:[#allocation3 + $0x23] sm:$0x1]
    %v6820 = vld [vmem:[#allocation3 + $0x33] sm:$0x1]
    %v6821 = vld [vmem:[#allocation3 + $0x43] sm:$0x1]
    %v6822 = vld [vmem:[#allocation3 + $0x53] sm:$0x1]
    %v6823 = vld [vmem:[#allocation3 + $0x63] sm:$0x1]
    %v6824 = vld [vmem:[#allocation3 + $0x73] sm:$0x1]
    %v6825 = vld [vmem:[#allocation3 + $0x83] sm:$0x1]
    %v6826 = vld [vmem:[#allocation3 + $0x93] sm:$0x1]
    %v6827 = vld [vmem:[#allocation3 + $0xa3] sm:$0x1]
    %v6828 = vld [vmem:[#allocation3 + $0xb3] sm:$0x1]
    %v6829 = vld [vmem:[#allocation3 + $0xc3] sm:$0x1]
    %v6830 = vld [vmem:[#allocation3 + $0xd3] sm:$0x1]
    %v6831 = vld [vmem:[#allocation3 + $0xe3] sm:$0x1]
    %v6832 = vld [vmem:[#allocation3 + $0xf3] sm:$0x1]
    %v6833 = vmax.f32 %v6801, %v6817
    %v6834 = vmax.f32 %v6802, %v6818
    %v6835 = vmax.f32 %v6803, %v6819
    %v6836 = vmax.f32 %v6804, %v6820
    %v6837 = vmax.f32 %v6805, %v6821
    %v6838 = vmax.f32 %v6806, %v6822
    %v6839 = vmax.f32 %v6807, %v6823
    %v6840 = vmax.f32 %v6808, %v6824
    %v6841 = vmax.f32 %v6809, %v6825
    %v6842 = vmax.f32 %v6810, %v6826
    %v6843 = vmax.f32 %v6811, %v6827
    %v6844 = vmax.f32 %v6812, %v6828
    %v6845 = vmax.f32 %v6813, %v6829
    %v6846 = vmax.f32 %v6814, %v6830
    %v6847 = vmax.f32 %v6815, %v6831
    %v6848 = vmax.f32 %v6816, %v6832
    %6849 = vst.msk [vmem:[#allocation4 + $0x1] sm:$0x1] %vm6784, %v6833
    %6850 = vst.msk [vmem:[#allocation4 + $0x9] sm:$0x1] %vm6784, %v6834
    %6851 = vst.msk [vmem:[#allocation4 + $0x11] sm:$0x1] %vm6784, %v6835
    %6852 = vst.msk [vmem:[#allocation4 + $0x19] sm:$0x1] %vm6784, %v6836
    %6853 = vst.msk [vmem:[#allocation4 + $0x21] sm:$0x1] %vm6784, %v6837
    %6854 = vst.msk [vmem:[#allocation4 + $0x29] sm:$0x1] %vm6784, %v6838
    %6855 = vst.msk [vmem:[#allocation4 + $0x31] sm:$0x1] %vm6784, %v6839
    %6856 = vst.msk [vmem:[#allocation4 + $0x39] sm:$0x1] %vm6784, %v6840
    %6857 = vst.msk [vmem:[#allocation4 + $0x41] sm:$0x1] %vm6784, %v6841
    %6858 = vst.msk [vmem:[#allocation4 + $0x49] sm:$0x1] %vm6784, %v6842
    %6859 = vst.msk [vmem:[#allocation4 + $0x51] sm:$0x1] %vm6784, %v6843
    %6860 = vst.msk [vmem:[#allocation4 + $0x59] sm:$0x1] %vm6784, %v6844
    %6861 = vst.msk [vmem:[#allocation4 + $0x61] sm:$0x1] %vm6784, %v6845
    %6862 = vst.msk [vmem:[#allocation4 + $0x69] sm:$0x1] %vm6784, %v6846
    %6863 = vst.msk [vmem:[#allocation4 + $0x71] sm:$0x1] %vm6784, %v6847
    %6864 = vst.msk [vmem:[#allocation4 + $0x79] sm:$0x1] %vm6784, %v6848
    %v6865 = vld [vmem:[#allocation3 + $0x4] sm:$0x1]
    %v6866 = vld [vmem:[#allocation3 + $0x14] sm:$0x1]
    %v6867 = vld [vmem:[#allocation3 + $0x24] sm:$0x1]
    %v6868 = vld [vmem:[#allocation3 + $0x34] sm:$0x1]
    %v6869 = vld [vmem:[#allocation3 + $0x44] sm:$0x1]
    %v6870 = vld [vmem:[#allocation3 + $0x54] sm:$0x1]
    %v6871 = vld [vmem:[#allocation3 + $0x64] sm:$0x1]
    %v6872 = vld [vmem:[#allocation3 + $0x74] sm:$0x1]
    %v6873 = vld [vmem:[#allocation3 + $0x84] sm:$0x1]
    %v6874 = vld [vmem:[#allocation3 + $0x94] sm:$0x1]
    %v6875 = vld [vmem:[#allocation3 + $0xa4] sm:$0x1]
    %v6876 = vld [vmem:[#allocation3 + $0xb4] sm:$0x1]
    %v6877 = vld [vmem:[#allocation3 + $0xc4] sm:$0x1]
    %v6878 = vld [vmem:[#allocation3 + $0xd4] sm:$0x1]
    %v6879 = vld [vmem:[#allocation3 + $0xe4] sm:$0x1]
    %v6880 = vld [vmem:[#allocation3 + $0xf4] sm:$0x1]
    %v6881 = vld [vmem:[#allocation3 + $0x5] sm:$0x1]
    %v6882 = vld [vmem:[#allocation3 + $0x15] sm:$0x1]
    %v6883 = vld [vmem:[#allocation3 + $0x25] sm:$0x1]
    %v6884 = vld [vmem:[#allocation3 + $0x35] sm:$0x1]
    %v6885 = vld [vmem:[#allocation3 + $0x45] sm:$0x1]
    %v6886 = vld [vmem:[#allocation3 + $0x55] sm:$0x1]
    %v6887 = vld [vmem:[#allocation3 + $0x65] sm:$0x1]
    %v6888 = vld [vmem:[#allocation3 + $0x75] sm:$0x1]
    %v6889 = vld [vmem:[#allocation3 + $0x85] sm:$0x1]
    %v6890 = vld [vmem:[#allocation3 + $0x95] sm:$0x1]
    %v6891 = vld [vmem:[#allocation3 + $0xa5] sm:$0x1]
    %v6892 = vld [vmem:[#allocation3 + $0xb5] sm:$0x1]
    %v6893 = vld [vmem:[#allocation3 + $0xc5] sm:$0x1]
    %v6894 = vld [vmem:[#allocation3 + $0xd5] sm:$0x1]
    %v6895 = vld [vmem:[#allocation3 + $0xe5] sm:$0x1]
    %v6896 = vld [vmem:[#allocation3 + $0xf5] sm:$0x1]
    %v6897 = vmax.f32 %v6865, %v6881
    %v6898 = vmax.f32 %v6866, %v6882
    %v6899 = vmax.f32 %v6867, %v6883
    %v6900 = vmax.f32 %v6868, %v6884
    %v6901 = vmax.f32 %v6869, %v6885
    %v6902 = vmax.f32 %v6870, %v6886
    %v6903 = vmax.f32 %v6871, %v6887
    %v6904 = vmax.f32 %v6872, %v6888
    %v6905 = vmax.f32 %v6873, %v6889
    %v6906 = vmax.f32 %v6874, %v6890
    %v6907 = vmax.f32 %v6875, %v6891
    %v6908 = vmax.f32 %v6876, %v6892
    %v6909 = vmax.f32 %v6877, %v6893
    %v6910 = vmax.f32 %v6878, %v6894
    %v6911 = vmax.f32 %v6879, %v6895
    %v6912 = vmax.f32 %v6880, %v6896
    %6913 = vst.msk [vmem:[#allocation4 + $0x2] sm:$0x1] %vm6784, %v6897
    %6914 = vst.msk [vmem:[#allocation4 + $0xa] sm:$0x1] %vm6784, %v6898
    %6915 = vst.msk [vmem:[#allocation4 + $0x12] sm:$0x1] %vm6784, %v6899
    %6916 = vst.msk [vmem:[#allocation4 + $0x1a] sm:$0x1] %vm6784, %v6900
    %6917 = vst.msk [vmem:[#allocation4 + $0x22] sm:$0x1] %vm6784, %v6901
    %6918 = vst.msk [vmem:[#allocation4 + $0x2a] sm:$0x1] %vm6784, %v6902
    %6919 = vst.msk [vmem:[#allocation4 + $0x32] sm:$0x1] %vm6784, %v6903
    %6920 = vst.msk [vmem:[#allocation4 + $0x3a] sm:$0x1] %vm6784, %v6904
    %6921 = vst.msk [vmem:[#allocation4 + $0x42] sm:$0x1] %vm6784, %v6905
    %6922 = vst.msk [vmem:[#allocation4 + $0x4a] sm:$0x1] %vm6784, %v6906
    %6923 = vst.msk [vmem:[#allocation4 + $0x52] sm:$0x1] %vm6784, %v6907
    %6924 = vst.msk [vmem:[#allocation4 + $0x5a] sm:$0x1] %vm6784, %v6908
    %6925 = vst.msk [vmem:[#allocation4 + $0x62] sm:$0x1] %vm6784, %v6909
    %6926 = vst.msk [vmem:[#allocation4 + $0x6a] sm:$0x1] %vm6784, %v6910
    %6927 = vst.msk [vmem:[#allocation4 + $0x72] sm:$0x1] %vm6784, %v6911
    %6928 = vst.msk [vmem:[#allocation4 + $0x7a] sm:$0x1] %vm6784, %v6912
    %v6929 = vld [vmem:[#allocation3 + $0x6] sm:$0x1]
    %v6930 = vld [vmem:[#allocation3 + $0x16] sm:$0x1]
    %v6931 = vld [vmem:[#allocation3 + $0x26] sm:$0x1]
    %v6932 = vld [vmem:[#allocation3 + $0x36] sm:$0x1]
    %v6933 = vld [vmem:[#allocation3 + $0x46] sm:$0x1]
    %v6934 = vld [vmem:[#allocation3 + $0x56] sm:$0x1]
    %v6935 = vld [vmem:[#allocation3 + $0x66] sm:$0x1]
    %v6936 = vld [vmem:[#allocation3 + $0x76] sm:$0x1]
    %v6937 = vld [vmem:[#allocation3 + $0x86] sm:$0x1]
    %v6938 = vld [vmem:[#allocation3 + $0x96] sm:$0x1]
    %v6939 = vld [vmem:[#allocation3 + $0xa6] sm:$0x1]
    %v6940 = vld [vmem:[#allocation3 + $0xb6] sm:$0x1]
    %v6941 = vld [vmem:[#allocation3 + $0xc6] sm:$0x1]
    %v6942 = vld [vmem:[#allocation3 + $0xd6] sm:$0x1]
    %v6943 = vld [vmem:[#allocation3 + $0xe6] sm:$0x1]
    %v6944 = vld [vmem:[#allocation3 + $0xf6] sm:$0x1]
    %v6945 = vld [vmem:[#allocation3 + $0x7] sm:$0x1]
    %v6946 = vld [vmem:[#allocation3 + $0x17] sm:$0x1]
    %v6947 = vld [vmem:[#allocation3 + $0x27] sm:$0x1]
    %v6948 = vld [vmem:[#allocation3 + $0x37] sm:$0x1]
    %v6949 = vld [vmem:[#allocation3 + $0x47] sm:$0x1]
    %v6950 = vld [vmem:[#allocation3 + $0x57] sm:$0x1]
    %v6951 = vld [vmem:[#allocation3 + $0x67] sm:$0x1]
    %v6952 = vld [vmem:[#allocation3 + $0x77] sm:$0x1]
    %v6953 = vld [vmem:[#allocation3 + $0x87] sm:$0x1]
    %v6954 = vld [vmem:[#allocation3 + $0x97] sm:$0x1]
    %v6955 = vld [vmem:[#allocation3 + $0xa7] sm:$0x1]
    %v6956 = vld [vmem:[#allocation3 + $0xb7] sm:$0x1]
    %v6957 = vld [vmem:[#allocation3 + $0xc7] sm:$0x1]
    %v6958 = vld [vmem:[#allocation3 + $0xd7] sm:$0x1]
    %v6959 = vld [vmem:[#allocation3 + $0xe7] sm:$0x1]
    %v6960 = vld [vmem:[#allocation3 + $0xf7] sm:$0x1]
    %v6961 = vmax.f32 %v6929, %v6945
    %v6962 = vmax.f32 %v6930, %v6946
    %v6963 = vmax.f32 %v6931, %v6947
    %v6964 = vmax.f32 %v6932, %v6948
    %v6965 = vmax.f32 %v6933, %v6949
    %v6966 = vmax.f32 %v6934, %v6950
    %v6967 = vmax.f32 %v6935, %v6951
    %v6968 = vmax.f32 %v6936, %v6952
    %v6969 = vmax.f32 %v6937, %v6953
    %v6970 = vmax.f32 %v6938, %v6954
    %v6971 = vmax.f32 %v6939, %v6955
    %v6972 = vmax.f32 %v6940, %v6956
    %v6973 = vmax.f32 %v6941, %v6957
    %v6974 = vmax.f32 %v6942, %v6958
    %v6975 = vmax.f32 %v6943, %v6959
    %v6976 = vmax.f32 %v6944, %v6960
    %6977 = vst.msk [vmem:[#allocation4 + $0x3] sm:$0x1] %vm6784, %v6961
    %6978 = vst.msk [vmem:[#allocation4 + $0xb] sm:$0x1] %vm6784, %v6962
    %6979 = vst.msk [vmem:[#allocation4 + $0x13] sm:$0x1] %vm6784, %v6963
    %6980 = vst.msk [vmem:[#allocation4 + $0x1b] sm:$0x1] %vm6784, %v6964
    %6981 = vst.msk [vmem:[#allocation4 + $0x23] sm:$0x1] %vm6784, %v6965
    %6982 = vst.msk [vmem:[#allocation4 + $0x2b] sm:$0x1] %vm6784, %v6966
    %6983 = vst.msk [vmem:[#allocation4 + $0x33] sm:$0x1] %vm6784, %v6967
    %6984 = vst.msk [vmem:[#allocation4 + $0x3b] sm:$0x1] %vm6784, %v6968
    %6985 = vst.msk [vmem:[#allocation4 + $0x43] sm:$0x1] %vm6784, %v6969
    %6986 = vst.msk [vmem:[#allocation4 + $0x4b] sm:$0x1] %vm6784, %v6970
    %6987 = vst.msk [vmem:[#allocation4 + $0x53] sm:$0x1] %vm6784, %v6971
    %6988 = vst.msk [vmem:[#allocation4 + $0x5b] sm:$0x1] %vm6784, %v6972
    %6989 = vst.msk [vmem:[#allocation4 + $0x63] sm:$0x1] %vm6784, %v6973
    %6990 = vst.msk [vmem:[#allocation4 + $0x6b] sm:$0x1] %vm6784, %v6974
    %6991 = vst.msk [vmem:[#allocation4 + $0x73] sm:$0x1] %vm6784, %v6975
    %6992 = vst.msk [vmem:[#allocation4 + $0x7b] sm:$0x1] %vm6784, %v6976
    %v6993 = vld [vmem:[#allocation3 + $0x8] sm:$0x1]
    %v6994 = vld [vmem:[#allocation3 + $0x18] sm:$0x1]
    %v6995 = vld [vmem:[#allocation3 + $0x28] sm:$0x1]
    %v6996 = vld [vmem:[#allocation3 + $0x38] sm:$0x1]
    %v6997 = vld [vmem:[#allocation3 + $0x48] sm:$0x1]
    %v6998 = vld [vmem:[#allocation3 + $0x58] sm:$0x1]
    %v6999 = vld [vmem:[#allocation3 + $0x68] sm:$0x1]
    %v7000 = vld [vmem:[#allocation3 + $0x78] sm:$0x1]
    %v7001 = vld [vmem:[#allocation3 + $0x88] sm:$0x1]
    %v7002 = vld [vmem:[#allocation3 + $0x98] sm:$0x1]
    %v7003 = vld [vmem:[#allocation3 + $0xa8] sm:$0x1]
    %v7004 = vld [vmem:[#allocation3 + $0xb8] sm:$0x1]
    %v7005 = vld [vmem:[#allocation3 + $0xc8] sm:$0x1]
    %v7006 = vld [vmem:[#allocation3 + $0xd8] sm:$0x1]
    %v7007 = vld [vmem:[#allocation3 + $0xe8] sm:$0x1]
    %v7008 = vld [vmem:[#allocation3 + $0xf8] sm:$0x1]
    %v7009 = vld [vmem:[#allocation3 + $0x9] sm:$0x1]
    %v7010 = vld [vmem:[#allocation3 + $0x19] sm:$0x1]
    %v7011 = vld [vmem:[#allocation3 + $0x29] sm:$0x1]
    %v7012 = vld [vmem:[#allocation3 + $0x39] sm:$0x1]
    %v7013 = vld [vmem:[#allocation3 + $0x49] sm:$0x1]
    %v7014 = vld [vmem:[#allocation3 + $0x59] sm:$0x1]
    %v7015 = vld [vmem:[#allocation3 + $0x69] sm:$0x1]
    %v7016 = vld [vmem:[#allocation3 + $0x79] sm:$0x1]
    %v7017 = vld [vmem:[#allocation3 + $0x89] sm:$0x1]
    %v7018 = vld [vmem:[#allocation3 + $0x99] sm:$0x1]
    %v7019 = vld [vmem:[#allocation3 + $0xa9] sm:$0x1]
    %v7020 = vld [vmem:[#allocation3 + $0xb9] sm:$0x1]
    %v7021 = vld [vmem:[#allocation3 + $0xc9] sm:$0x1]
    %v7022 = vld [vmem:[#allocation3 + $0xd9] sm:$0x1]
    %v7023 = vld [vmem:[#allocation3 + $0xe9] sm:$0x1]
    %v7024 = vld [vmem:[#allocation3 + $0xf9] sm:$0x1]
    %v7025 = vmax.f32 %v6993, %v7009
    %v7026 = vmax.f32 %v6994, %v7010
    %v7027 = vmax.f32 %v6995, %v7011
    %v7028 = vmax.f32 %v6996, %v7012
    %v7029 = vmax.f32 %v6997, %v7013
    %v7030 = vmax.f32 %v6998, %v7014
    %v7031 = vmax.f32 %v6999, %v7015
    %v7032 = vmax.f32 %v7000, %v7016
    %v7033 = vmax.f32 %v7001, %v7017
    %v7034 = vmax.f32 %v7002, %v7018
    %v7035 = vmax.f32 %v7003, %v7019
    %v7036 = vmax.f32 %v7004, %v7020
    %v7037 = vmax.f32 %v7005, %v7021
    %v7038 = vmax.f32 %v7006, %v7022
    %v7039 = vmax.f32 %v7007, %v7023
    %v7040 = vmax.f32 %v7008, %v7024
    %7041 = vst.msk [vmem:[#allocation4 + $0x4] sm:$0x1] %vm6784, %v7025
    %7042 = vst.msk [vmem:[#allocation4 + $0xc] sm:$0x1] %vm6784, %v7026
    %7043 = vst.msk [vmem:[#allocation4 + $0x14] sm:$0x1] %vm6784, %v7027
    %7044 = vst.msk [vmem:[#allocation4 + $0x1c] sm:$0x1] %vm6784, %v7028
    %7045 = vst.msk [vmem:[#allocation4 + $0x24] sm:$0x1] %vm6784, %v7029
    %7046 = vst.msk [vmem:[#allocation4 + $0x2c] sm:$0x1] %vm6784, %v7030
    %7047 = vst.msk [vmem:[#allocation4 + $0x34] sm:$0x1] %vm6784, %v7031
    %7048 = vst.msk [vmem:[#allocation4 + $0x3c] sm:$0x1] %vm6784, %v7032
    %7049 = vst.msk [vmem:[#allocation4 + $0x44] sm:$0x1] %vm6784, %v7033
    %7050 = vst.msk [vmem:[#allocation4 + $0x4c] sm:$0x1] %vm6784, %v7034
    %7051 = vst.msk [vmem:[#allocation4 + $0x54] sm:$0x1] %vm6784, %v7035
    %7052 = vst.msk [vmem:[#allocation4 + $0x5c] sm:$0x1] %vm6784, %v7036
    %7053 = vst.msk [vmem:[#allocation4 + $0x64] sm:$0x1] %vm6784, %v7037
    %7054 = vst.msk [vmem:[#allocation4 + $0x6c] sm:$0x1] %vm6784, %v7038
    %7055 = vst.msk [vmem:[#allocation4 + $0x74] sm:$0x1] %vm6784, %v7039
    %7056 = vst.msk [vmem:[#allocation4 + $0x7c] sm:$0x1] %vm6784, %v7040
    %v7057 = vld [vmem:[#allocation3 + $0xa] sm:$0x1]
    %v7058 = vld [vmem:[#allocation3 + $0x1a] sm:$0x1]
    %v7059 = vld [vmem:[#allocation3 + $0x2a] sm:$0x1]
    %v7060 = vld [vmem:[#allocation3 + $0x3a] sm:$0x1]
    %v7061 = vld [vmem:[#allocation3 + $0x4a] sm:$0x1]
    %v7062 = vld [vmem:[#allocation3 + $0x5a] sm:$0x1]
    %v7063 = vld [vmem:[#allocation3 + $0x6a] sm:$0x1]
    %v7064 = vld [vmem:[#allocation3 + $0x7a] sm:$0x1]
    %v7065 = vld [vmem:[#allocation3 + $0x8a] sm:$0x1]
    %v7066 = vld [vmem:[#allocation3 + $0x9a] sm:$0x1]
    %v7067 = vld [vmem:[#allocation3 + $0xaa] sm:$0x1]
    %v7068 = vld [vmem:[#allocation3 + $0xba] sm:$0x1]
    %v7069 = vld [vmem:[#allocation3 + $0xca] sm:$0x1]
    %v7070 = vld [vmem:[#allocation3 + $0xda] sm:$0x1]
    %v7071 = vld [vmem:[#allocation3 + $0xea] sm:$0x1]
    %v7072 = vld [vmem:[#allocation3 + $0xfa] sm:$0x1]
    %v7073 = vld [vmem:[#allocation3 + $0xb] sm:$0x1]
    %v7074 = vld [vmem:[#allocation3 + $0x1b] sm:$0x1]
    %v7075 = vld [vmem:[#allocation3 + $0x2b] sm:$0x1]
    %v7076 = vld [vmem:[#allocation3 + $0x3b] sm:$0x1]
    %v7077 = vld [vmem:[#allocation3 + $0x4b] sm:$0x1]
    %v7078 = vld [vmem:[#allocation3 + $0x5b] sm:$0x1]
    %v7079 = vld [vmem:[#allocation3 + $0x6b] sm:$0x1]
    %v7080 = vld [vmem:[#allocation3 + $0x7b] sm:$0x1]
    %v7081 = vld [vmem:[#allocation3 + $0x8b] sm:$0x1]
    %v7082 = vld [vmem:[#allocation3 + $0x9b] sm:$0x1]
    %v7083 = vld [vmem:[#allocation3 + $0xab] sm:$0x1]
    %v7084 = vld [vmem:[#allocation3 + $0xbb] sm:$0x1]
    %v7085 = vld [vmem:[#allocation3 + $0xcb] sm:$0x1]
    %v7086 = vld [vmem:[#allocation3 + $0xdb] sm:$0x1]
    %v7087 = vld [vmem:[#allocation3 + $0xeb] sm:$0x1]
    %v7088 = vld [vmem:[#allocation3 + $0xfb] sm:$0x1]
    %v7089 = vmax.f32 %v7057, %v7073
    %v7090 = vmax.f32 %v7058, %v7074
    %v7091 = vmax.f32 %v7059, %v7075
    %v7092 = vmax.f32 %v7060, %v7076
    %v7093 = vmax.f32 %v7061, %v7077
    %v7094 = vmax.f32 %v7062, %v7078
    %v7095 = vmax.f32 %v7063, %v7079
    %v7096 = vmax.f32 %v7064, %v7080
    %v7097 = vmax.f32 %v7065, %v7081
    %v7098 = vmax.f32 %v7066, %v7082
    %v7099 = vmax.f32 %v7067, %v7083
    %v7100 = vmax.f32 %v7068, %v7084
    %v7101 = vmax.f32 %v7069, %v7085
    %v7102 = vmax.f32 %v7070, %v7086
    %v7103 = vmax.f32 %v7071, %v7087
    %v7104 = vmax.f32 %v7072, %v7088
    %7105 = vst.msk [vmem:[#allocation4 + $0x5] sm:$0x1] %vm6784, %v7089
    %7106 = vst.msk [vmem:[#allocation4 + $0xd] sm:$0x1] %vm6784, %v7090
    %7107 = vst.msk [vmem:[#allocation4 + $0x15] sm:$0x1] %vm6784, %v7091
    %7108 = vst.msk [vmem:[#allocation4 + $0x1d] sm:$0x1] %vm6784, %v7092
    %7109 = vst.msk [vmem:[#allocation4 + $0x25] sm:$0x1] %vm6784, %v7093
    %7110 = vst.msk [vmem:[#allocation4 + $0x2d] sm:$0x1] %vm6784, %v7094
    %7111 = vst.msk [vmem:[#allocation4 + $0x35] sm:$0x1] %vm6784, %v7095
    %7112 = vst.msk [vmem:[#allocation4 + $0x3d] sm:$0x1] %vm6784, %v7096
    %7113 = vst.msk [vmem:[#allocation4 + $0x45] sm:$0x1] %vm6784, %v7097
    %7114 = vst.msk [vmem:[#allocation4 + $0x4d] sm:$0x1] %vm6784, %v7098
    %7115 = vst.msk [vmem:[#allocation4 + $0x55] sm:$0x1] %vm6784, %v7099
    %7116 = vst.msk [vmem:[#allocation4 + $0x5d] sm:$0x1] %vm6784, %v7100
    %7117 = vst.msk [vmem:[#allocation4 + $0x65] sm:$0x1] %vm6784, %v7101
    %7118 = vst.msk [vmem:[#allocation4 + $0x6d] sm:$0x1] %vm6784, %v7102
    %7119 = vst.msk [vmem:[#allocation4 + $0x75] sm:$0x1] %vm6784, %v7103
    %7120 = vst.msk [vmem:[#allocation4 + $0x7d] sm:$0x1] %vm6784, %v7104
    %v7121 = vld [vmem:[#allocation3 + $0xc] sm:$0x1]
    %v7122 = vld [vmem:[#allocation3 + $0x1c] sm:$0x1]
    %v7123 = vld [vmem:[#allocation3 + $0x2c] sm:$0x1]
    %v7124 = vld [vmem:[#allocation3 + $0x3c] sm:$0x1]
    %v7125 = vld [vmem:[#allocation3 + $0x4c] sm:$0x1]
    %v7126 = vld [vmem:[#allocation3 + $0x5c] sm:$0x1]
    %v7127 = vld [vmem:[#allocation3 + $0x6c] sm:$0x1]
    %v7128 = vld [vmem:[#allocation3 + $0x7c] sm:$0x1]
    %v7129 = vld [vmem:[#allocation3 + $0x8c] sm:$0x1]
    %v7130 = vld [vmem:[#allocation3 + $0x9c] sm:$0x1]
    %v7131 = vld [vmem:[#allocation3 + $0xac] sm:$0x1]
    %v7132 = vld [vmem:[#allocation3 + $0xbc] sm:$0x1]
    %v7133 = vld [vmem:[#allocation3 + $0xcc] sm:$0x1]
    %v7134 = vld [vmem:[#allocation3 + $0xdc] sm:$0x1]
    %v7135 = vld [vmem:[#allocation3 + $0xec] sm:$0x1]
    %v7136 = vld [vmem:[#allocation3 + $0xfc] sm:$0x1]
    %v7137 = vld [vmem:[#allocation3 + $0xd] sm:$0x1]
    %v7138 = vld [vmem:[#allocation3 + $0x1d] sm:$0x1]
    %v7139 = vld [vmem:[#allocation3 + $0x2d] sm:$0x1]
    %v7140 = vld [vmem:[#allocation3 + $0x3d] sm:$0x1]
    %v7141 = vld [vmem:[#allocation3 + $0x4d] sm:$0x1]
    %v7142 = vld [vmem:[#allocation3 + $0x5d] sm:$0x1]
    %v7143 = vld [vmem:[#allocation3 + $0x6d] sm:$0x1]
    %v7144 = vld [vmem:[#allocation3 + $0x7d] sm:$0x1]
    %v7145 = vld [vmem:[#allocation3 + $0x8d] sm:$0x1]
    %v7146 = vld [vmem:[#allocation3 + $0x9d] sm:$0x1]
    %v7147 = vld [vmem:[#allocation3 + $0xad] sm:$0x1]
    %v7148 = vld [vmem:[#allocation3 + $0xbd] sm:$0x1]
    %v7149 = vld [vmem:[#allocation3 + $0xcd] sm:$0x1]
    %v7150 = vld [vmem:[#allocation3 + $0xdd] sm:$0x1]
    %v7151 = vld [vmem:[#allocation3 + $0xed] sm:$0x1]
    %v7152 = vld [vmem:[#allocation3 + $0xfd] sm:$0x1]
    %v7153 = vmax.f32 %v7121, %v7137
    %v7154 = vmax.f32 %v7122, %v7138
    %v7155 = vmax.f32 %v7123, %v7139
    %v7156 = vmax.f32 %v7124, %v7140
    %v7157 = vmax.f32 %v7125, %v7141
    %v7158 = vmax.f32 %v7126, %v7142
    %v7159 = vmax.f32 %v7127, %v7143
    %v7160 = vmax.f32 %v7128, %v7144
    %v7161 = vmax.f32 %v7129, %v7145
    %v7162 = vmax.f32 %v7130, %v7146
    %v7163 = vmax.f32 %v7131, %v7147
    %v7164 = vmax.f32 %v7132, %v7148
    %v7165 = vmax.f32 %v7133, %v7149
    %v7166 = vmax.f32 %v7134, %v7150
    %v7167 = vmax.f32 %v7135, %v7151
    %v7168 = vmax.f32 %v7136, %v7152
    %7169 = vst.msk [vmem:[#allocation4 + $0x6] sm:$0x1] %vm6784, %v7153
    %7170 = vst.msk [vmem:[#allocation4 + $0xe] sm:$0x1] %vm6784, %v7154
    %7171 = vst.msk [vmem:[#allocation4 + $0x16] sm:$0x1] %vm6784, %v7155
    %7172 = vst.msk [vmem:[#allocation4 + $0x1e] sm:$0x1] %vm6784, %v7156
    %7173 = vst.msk [vmem:[#allocation4 + $0x26] sm:$0x1] %vm6784, %v7157
    %7174 = vst.msk [vmem:[#allocation4 + $0x2e] sm:$0x1] %vm6784, %v7158
    %7175 = vst.msk [vmem:[#allocation4 + $0x36] sm:$0x1] %vm6784, %v7159
    %7176 = vst.msk [vmem:[#allocation4 + $0x3e] sm:$0x1] %vm6784, %v7160
    %7177 = vst.msk [vmem:[#allocation4 + $0x46] sm:$0x1] %vm6784, %v7161
    %7178 = vst.msk [vmem:[#allocation4 + $0x4e] sm:$0x1] %vm6784, %v7162
    %7179 = vst.msk [vmem:[#allocation4 + $0x56] sm:$0x1] %vm6784, %v7163
    %7180 = vst.msk [vmem:[#allocation4 + $0x5e] sm:$0x1] %vm6784, %v7164
    %7181 = vst.msk [vmem:[#allocation4 + $0x66] sm:$0x1] %vm6784, %v7165
    %7182 = vst.msk [vmem:[#allocation4 + $0x6e] sm:$0x1] %vm6784, %v7166
    %7183 = vst.msk [vmem:[#allocation4 + $0x76] sm:$0x1] %vm6784, %v7167
    %7184 = vst.msk [vmem:[#allocation4 + $0x7e] sm:$0x1] %vm6784, %v7168
    %v7185 = vld [vmem:[#allocation3 + $0xe] sm:$0x1]
    %v7186 = vld [vmem:[#allocation3 + $0x1e] sm:$0x1]
    %v7187 = vld [vmem:[#allocation3 + $0x2e] sm:$0x1]
    %v7188 = vld [vmem:[#allocation3 + $0x3e] sm:$0x1]
    %v7189 = vld [vmem:[#allocation3 + $0x4e] sm:$0x1]
    %v7190 = vld [vmem:[#allocation3 + $0x5e] sm:$0x1]
    %v7191 = vld [vmem:[#allocation3 + $0x6e] sm:$0x1]
    %v7192 = vld [vmem:[#allocation3 + $0x7e] sm:$0x1]
    %v7193 = vld [vmem:[#allocation3 + $0x8e] sm:$0x1]
    %v7194 = vld [vmem:[#allocation3 + $0x9e] sm:$0x1]
    %v7195 = vld [vmem:[#allocation3 + $0xae] sm:$0x1]
    %v7196 = vld [vmem:[#allocation3 + $0xbe] sm:$0x1]
    %v7197 = vld [vmem:[#allocation3 + $0xce] sm:$0x1]
    %v7198 = vld [vmem:[#allocation3 + $0xde] sm:$0x1]
    %v7199 = vld [vmem:[#allocation3 + $0xee] sm:$0x1]
    %v7200 = vld [vmem:[#allocation3 + $0xfe] sm:$0x1]
    %v7201 = vld [vmem:[#allocation3 + $0xf] sm:$0x1]
    %v7202 = vld [vmem:[#allocation3 + $0x1f] sm:$0x1]
    %v7203 = vld [vmem:[#allocation3 + $0x2f] sm:$0x1]
    %v7204 = vld [vmem:[#allocation3 + $0x3f] sm:$0x1]
    %v7205 = vld [vmem:[#allocation3 + $0x4f] sm:$0x1]
    %v7206 = vld [vmem:[#allocation3 + $0x5f] sm:$0x1]
    %v7207 = vld [vmem:[#allocation3 + $0x6f] sm:$0x1]
    %v7208 = vld [vmem:[#allocation3 + $0x7f] sm:$0x1]
    %v7209 = vld [vmem:[#allocation3 + $0x8f] sm:$0x1]
    %v7210 = vld [vmem:[#allocation3 + $0x9f] sm:$0x1]
    %v7211 = vld [vmem:[#allocation3 + $0xaf] sm:$0x1]
    %v7212 = vld [vmem:[#allocation3 + $0xbf] sm:$0x1]
    %v7213 = vld [vmem:[#allocation3 + $0xcf] sm:$0x1]
    %v7214 = vld [vmem:[#allocation3 + $0xdf] sm:$0x1]
    %v7215 = vld [vmem:[#allocation3 + $0xef] sm:$0x1]
    %v7216 = vld [vmem:[#allocation3 + $0xff] sm:$0x1]
    %v7217 = vmax.f32 %v7185, %v7201
    %v7218 = vmax.f32 %v7186, %v7202
    %v7219 = vmax.f32 %v7187, %v7203
    %v7220 = vmax.f32 %v7188, %v7204
    %v7221 = vmax.f32 %v7189, %v7205
    %v7222 = vmax.f32 %v7190, %v7206
    %v7223 = vmax.f32 %v7191, %v7207
    %v7224 = vmax.f32 %v7192, %v7208
    %v7225 = vmax.f32 %v7193, %v7209
    %v7226 = vmax.f32 %v7194, %v7210
    %v7227 = vmax.f32 %v7195, %v7211
    %v7228 = vmax.f32 %v7196, %v7212
    %v7229 = vmax.f32 %v7197, %v7213
    %v7230 = vmax.f32 %v7198, %v7214
    %v7231 = vmax.f32 %v7199, %v7215
    %v7232 = vmax.f32 %v7200, %v7216
    %7233 = vst.msk [vmem:[#allocation4 + $0x7] sm:$0x1] %vm6784, %v7217
    %7234 = vst.msk [vmem:[#allocation4 + $0xf] sm:$0x1] %vm6784, %v7218
    %7235 = vst.msk [vmem:[#allocation4 + $0x17] sm:$0x1] %vm6784, %v7219
    %7236 = vst.msk [vmem:[#allocation4 + $0x1f] sm:$0x1] %vm6784, %v7220
    %7237 = vst.msk [vmem:[#allocation4 + $0x27] sm:$0x1] %vm6784, %v7221
    %7238 = vst.msk [vmem:[#allocation4 + $0x2f] sm:$0x1] %vm6784, %v7222
    %7239 = vst.msk [vmem:[#allocation4 + $0x37] sm:$0x1] %vm6784, %v7223
    %7240 = vst.msk [vmem:[#allocation4 + $0x3f] sm:$0x1] %vm6784, %v7224
    %7241 = vst.msk [vmem:[#allocation4 + $0x47] sm:$0x1] %vm6784, %v7225
    %7242 = vst.msk [vmem:[#allocation4 + $0x4f] sm:$0x1] %vm6784, %v7226
    %7243 = vst.msk [vmem:[#allocation4 + $0x57] sm:$0x1] %vm6784, %v7227
    %7244 = vst.msk [vmem:[#allocation4 + $0x5f] sm:$0x1] %vm6784, %v7228
    %7245 = vst.msk [vmem:[#allocation4 + $0x67] sm:$0x1] %vm6784, %v7229
    %7246 = vst.msk [vmem:[#allocation4 + $0x6f] sm:$0x1] %vm6784, %v7230
    %7247 = vst.msk [vmem:[#allocation4 + $0x77] sm:$0x1] %vm6784, %v7231
    %7248 = vst.msk [vmem:[#allocation4 + $0x7f] sm:$0x1] %vm6784, %v7232
    %v7249 = vld [vmem:[#allocation4] sm:$0xff]
    %v7250 = vld [vmem:[#allocation4 + $0x8] sm:$0xff]
    %v7251 = vld [vmem:[#allocation4 + $0x10] sm:$0xff]
    %v7252 = vld [vmem:[#allocation4 + $0x18] sm:$0xff]
    %v7253 = vld [vmem:[#allocation4 + $0x20] sm:$0xff]
    %v7254 = vld [vmem:[#allocation4 + $0x28] sm:$0xff]
    %v7255 = vld [vmem:[#allocation4 + $0x30] sm:$0xff]
    %v7256 = vld [vmem:[#allocation4 + $0x38] sm:$0xff]
    %v7257 = vld [vmem:[#allocation4 + $0x40] sm:$0xff]
    %v7258 = vld [vmem:[#allocation4 + $0x48] sm:$0xff]
    %v7259 = vld [vmem:[#allocation4 + $0x50] sm:$0xff]
    %v7260 = vld [vmem:[#allocation4 + $0x58] sm:$0xff]
    %v7261 = vld [vmem:[#allocation4 + $0x60] sm:$0xff]
    %v7262 = vld [vmem:[#allocation4 + $0x68] sm:$0xff]
    %v7263 = vld [vmem:[#allocation4 + $0x70] sm:$0xff]
    %v7264 = vld [vmem:[#allocation4 + $0x78] sm:$0xff]
    %7265 = vst.msk [vmem:[#allocation5] sm:$0xff] %vm6668, 0.0
    %vm7266 = vcmask 58368
    %7267 = vst.msk [vmem:[#allocation5 + $0x8] sm:$0x3] %vm7266, 0.0
    %7268 = vst.msk [vmem:[#allocation5 + $0x10] sm:$0xff] %vm6668, 0.0
    %7269 = vst.msk [vmem:[#allocation5 + $0x18] sm:$0x3] %vm7266, 0.0
    %7270 = vst.msk [vmem:[#allocation5 + $0x20] sm:$0xff] %vm6668, 0.0
    %7271 = vst.msk [vmem:[#allocation5 + $0x28] sm:$0x3] %vm7266, 0.0
    %7272 = vst.msk [vmem:[#allocation5 + $0x30] sm:$0xff] %vm6668, 0.0
    %7273 = vst.msk [vmem:[#allocation5 + $0x38] sm:$0x3] %vm7266, 0.0
    %7274 = vst.msk [vmem:[#allocation5 + $0x40] sm:$0xff] %vm6668, 0.0
    %7275 = vst.msk [vmem:[#allocation5 + $0x48] sm:$0x3] %vm7266, 0.0
    %7276 = vst.msk [vmem:[#allocation5 + $0x50] sm:$0xff] %vm6668, 0.0
    %7277 = vst.msk [vmem:[#allocation5 + $0x58] sm:$0x3] %vm7266, 0.0
    %7278 = vst.msk [vmem:[#allocation5 + $0x60] sm:$0xff] %vm6668, 0.0
    %7279 = vst.msk [vmem:[#allocation5 + $0x68] sm:$0x3] %vm7266, 0.0
    %7280 = vst.msk [vmem:[#allocation5 + $0x70] sm:$0xff] %vm6668, 0.0
    %7281 = vst.msk [vmem:[#allocation5 + $0x78] sm:$0x3] %vm7266, 0.0
    %7282 = vst.msk [vmem:[#allocation5 + $0x80] sm:$0xff] %vm6668, 0.0
    %7283 = vst.msk [vmem:[#allocation5 + $0x88] sm:$0x3] %vm7266, 0.0
    %7284 = vst.msk [vmem:[#allocation5 + $0x90] sm:$0xff] %vm6668, 0.0
    %7285 = vst.msk [vmem:[#allocation5 + $0x98] sm:$0x3] %vm7266, 0.0
    %7286 = vst.msk [vmem:[#allocation5 + $0xa0] sm:$0xff] %vm6668, 0.0
    %7287 = vst.msk [vmem:[#allocation5 + $0xa8] sm:$0x3] %vm7266, 0.0
    %7288 = vst.msk [vmem:[#allocation5 + $0xb0] sm:$0xff] %vm6668, 0.0
    %7289 = vst.msk [vmem:[#allocation5 + $0xb8] sm:$0x3] %vm7266, 0.0
    %7290 = vst.msk [vmem:[#allocation5 + $0xc0] sm:$0xff] %vm6668, 0.0
    %7291 = vst.msk [vmem:[#allocation5 + $0xc8] sm:$0x3] %vm7266, 0.0
    %7292 = vst.msk [vmem:[#allocation5 + $0xd0] sm:$0xff] %vm6668, 0.0
    %7293 = vst.msk [vmem:[#allocation5 + $0xd8] sm:$0x3] %vm7266, 0.0
    %7294 = vst.msk [vmem:[#allocation5 + $0xe0] sm:$0xff] %vm6668, 0.0
    %7295 = vst.msk [vmem:[#allocation5 + $0xe8] sm:$0x3] %vm7266, 0.0
    %7296 = vst.msk [vmem:[#allocation5 + $0xf0] sm:$0xff] %vm6668, 0.0
    %7297 = vst.msk [vmem:[#allocation5 + $0xf8] sm:$0x3] %vm7266, 0.0
    %7298 = vst.msk [vmem:[#allocation5 + $0x100] sm:$0xff] %vm6668, 0.0
    %7299 = vst.msk [vmem:[#allocation5 + $0x108] sm:$0x3] %vm7266, 0.0
    %7300 = vst.msk [vmem:[#allocation5 + $0x110] sm:$0xff] %vm6668, 0.0
    %7301 = vst.msk [vmem:[#allocation5 + $0x118] sm:$0x3] %vm7266, 0.0
    %7302 = vst.msk [vmem:[#allocation5 + $0x120] sm:$0xff] %vm6668, 0.0
    %7303 = vst.msk [vmem:[#allocation5 + $0x128] sm:$0x3] %vm7266, 0.0
    %7304 = vst.msk [vmem:[#allocation5 + $0x130] sm:$0xff] %vm6668, 0.0
    %7305 = vst.msk [vmem:[#allocation5 + $0x138] sm:$0x3] %vm7266, 0.0
    %s7306 = scalar_lea.vmem [#allocation5], 16
    %7307 = vst.msk [vmem:[%s7306 + $0x1] sm:$0xff] %vm6668, %v7249
    %7308 = vst.msk [vmem:[%s7306 + $0x11] sm:$0xff] %vm6668, %v7250
    %7309 = vst.msk [vmem:[%s7306 + $0x21] sm:$0xff] %vm6668, %v7251
    %7310 = vst.msk [vmem:[%s7306 + $0x31] sm:$0xff] %vm6668, %v7252
    %7311 = vst.msk [vmem:[%s7306 + $0x41] sm:$0xff] %vm6668, %v7253
    %7312 = vst.msk [vmem:[%s7306 + $0x51] sm:$0xff] %vm6668, %v7254
    %7313 = vst.msk [vmem:[%s7306 + $0x61] sm:$0xff] %vm6668, %v7255
    %7314 = vst.msk [vmem:[%s7306 + $0x71] sm:$0xff] %vm6668, %v7256
    %7315 = vst.msk [vmem:[%s7306 + $0xa1] sm:$0xff] %vm6668, %v7257
    %7316 = vst.msk [vmem:[%s7306 + $0xb1] sm:$0xff] %vm6668, %v7258
    %7317 = vst.msk [vmem:[%s7306 + $0xc1] sm:$0xff] %vm6668, %v7259
    %7318 = vst.msk [vmem:[%s7306 + $0xd1] sm:$0xff] %vm6668, %v7260
    %7319 = vst.msk [vmem:[%s7306 + $0xe1] sm:$0xff] %vm6668, %v7261
    %7320 = vst.msk [vmem:[%s7306 + $0xf1] sm:$0xff] %vm6668, %v7262
    %7321 = vst.msk [vmem:[%s7306 + $0x101] sm:$0xff] %vm6668, %v7263
    %7322 = vst.msk [vmem:[%s7306 + $0x111] sm:$0xff] %vm6668, %v7264
    %v7323 = vld [vmem:[#allocation5] sm:$0xff]
    %v7324 = vld [vmem:[#allocation5 + $0x10] sm:$0xff]
    %v7325 = vld [vmem:[#allocation5 + $0x20] sm:$0xff]
    %v7326 = vld [vmem:[#allocation5 + $0x30] sm:$0xff]
    %v7327 = vld [vmem:[#allocation5 + $0x40] sm:$0xff]
    %v7328 = vld [vmem:[#allocation5 + $0x50] sm:$0xff]
    %v7329 = vld [vmem:[#allocation5 + $0x60] sm:$0xff]
    %v7330 = vld [vmem:[#allocation5 + $0x70] sm:$0xff]
    %v7331 = vld [vmem:[#allocation5 + $0xa0] sm:$0xff]
    %v7332 = vld [vmem:[#allocation5 + $0xb0] sm:$0xff]
    %v7333 = vld [vmem:[#allocation5 + $0xc0] sm:$0xff]
    %v7334 = vld [vmem:[#allocation5 + $0xd0] sm:$0xff]
    %v7335 = vld [vmem:[#allocation5 + $0xe0] sm:$0xff]
    %v7336 = vld [vmem:[#allocation5 + $0xf0] sm:$0xff]
    %v7337 = vld [vmem:[#allocation5 + $0x100] sm:$0xff]
    %v7338 = vld [vmem:[#allocation5 + $0x110] sm:$0xff]
    %v7339 = vld [vmem:[%s3] sm:$0xff]
    %v7340 = vld [vmem:[#allocation5 + $0x1] sm:$0xff]
    %v7341 = vld [vmem:[#allocation5 + $0x11] sm:$0xff]
    %v7342 = vld [vmem:[#allocation5 + $0x21] sm:$0xff]
    %v7343 = vld [vmem:[#allocation5 + $0x31] sm:$0xff]
    %v7344 = vld [vmem:[#allocation5 + $0x41] sm:$0xff]
    %v7345 = vld [vmem:[#allocation5 + $0x51] sm:$0xff]
    %v7346 = vld [vmem:[#allocation5 + $0x61] sm:$0xff]
    %v7347 = vld [vmem:[#allocation5 + $0x71] sm:$0xff]
    %v7348 = vld [vmem:[#allocation5 + $0xa1] sm:$0xff]
    %v7349 = vld [vmem:[#allocation5 + $0xb1] sm:$0xff]
    %v7350 = vld [vmem:[#allocation5 + $0xc1] sm:$0xff]
    %v7351 = vld [vmem:[#allocation5 + $0xd1] sm:$0xff]
    %v7352 = vld [vmem:[#allocation5 + $0xe1] sm:$0xff]
    %v7353 = vld [vmem:[#allocation5 + $0xf1] sm:$0xff]
    %v7354 = vld [vmem:[#allocation5 + $0x101] sm:$0xff]
    %v7355 = vld [vmem:[#allocation5 + $0x111] sm:$0xff]
    %s7356 = scalar_lea.vmem %s3, 8
    %v7357 = vld [vmem:[%s7356] sm:$0xff]
    %v7359 = vsel %vm6668, %v7340, 0
    %v7362 = vsel %vm6668, %v7341, 0
    %v7365 = vsel %vm6668, %v7342, 0
    %v7368 = vsel %vm6668, %v7343, 0
    %v7371 = vsel %vm6668, %v7344, 0
    %v7374 = vsel %vm6668, %v7345, 0
    %v7377 = vsel %vm6668, %v7346, 0
    %v7380 = vsel %vm6668, %v7347, 0
    %v7383 = vsel %vm6668, %v7348, 0
    %v7386 = vsel %vm6668, %v7349, 0
    %v7389 = vsel %vm6668, %v7350, 0
    %v7392 = vsel %vm6668, %v7351, 0
    %v7395 = vsel %vm6668, %v7352, 0
    %v7398 = vsel %vm6668, %v7353, 0
    %v7401 = vsel %vm6668, %v7354, 0
    %v7404 = vsel %vm6668, %v7355, 0
    %7406 = vmatprep.subr.mxu0 0.0
    %7407 = vmatpush1.msra.mxu0 %v7357
    %7408 = vmatprep.subr.mxu0 0.0
    %7409 = vmatpush1.msra.mxu0 0.0
    %7410 = vmatprep.subr.mxu0 0.0
    %7411 = vmatpush1.msra.mxu0 0.0
    %7412 = vmatprep.subr.mxu0 0.0
    %7413 = vmatpush1.msra.mxu0 0.0
    %7414 = vmatprep.subr.mxu0 0.0
    %7415 = vmatpush1.msra.mxu0 0.0
    %7416 = vmatprep.subr.mxu0 0.0
    %7417 = vmatpush1.msra.mxu0 0.0
    %7418 = vmatprep.subr.mxu0 0.0
    %7419 = vmatpush1.msra.mxu0 0.0
    %7420 = vmatprep.subr.mxu0 0.0
    %7421 = vmatpush1.msra.mxu0 0.0
    %7422 = vmatprep.subr.mxu0 0.0
    %7423 = vmatpush1.msra.mxu0 0.0
    %7424 = vmatprep.subr.mxu0 0.0
    %7425 = vmatpush1.msra.mxu0 0.0
    %7426 = vmatprep.subr.mxu0 0.0
    %7427 = vmatpush1.msra.mxu0 0.0
    %7428 = vmatprep.subr.mxu0 0.0
    %7429 = vmatpush1.msra.mxu0 0.0
    %7430 = vmatprep.subr.mxu0 0.0
    %7431 = vmatpush1.msra.mxu0 0.0
    %7432 = vmatprep.subr.mxu0 0.0
    %7433 = vmatpush1.msra.mxu0 0.0
    %7434 = vmatprep.subr.mxu0 0.0
    %7435 = vmatpush1.msra.mxu0 0.0
    %7436 = vmatprep.subr.mxu0 0.0
    %7437 = vmatpush1.msra.mxu0 0.0
    %7438 = vmatprep.subr.mxu0 0.0
    %7439 = vmatpush1.msra.mxu0 0.0
    %7440 = vmatprep.subr.mxu0 0.0
    %7441 = vmatpush1.msra.mxu0 0.0
    %7442 = vmatprep.subr.mxu0 0.0
    %7443 = vmatpush1.msra.mxu0 0.0
    %7444 = vmatprep.subr.mxu0 0.0
    %7445 = vmatpush1.msra.mxu0 0.0
    %7446 = vmatprep.subr.mxu0 0.0
    %7447 = vmatpush1.msra.mxu0 0.0
    %7448 = vmatprep.subr.mxu0 0.0
    %7449 = vmatpush1.msra.mxu0 0.0
    %7450 = vmatprep.subr.mxu0 0.0
    %7451 = vmatpush1.msra.mxu0 0.0
    %7452 = vmatprep.subr.mxu0 0.0
    %7453 = vmatpush1.msra.mxu0 0.0
    %7454 = vmatprep.subr.mxu0 0.0
    %7455 = vmatpush1.msra.mxu0 0.0
    %7456 = vmatprep.subr.mxu0 0.0
    %7457 = vmatpush1.msra.mxu0 0.0
    %7458 = vmatprep.subr.mxu0 0.0
    %7459 = vmatpush1.msra.mxu0 0.0
    %7460 = vmatprep.subr.mxu0 0.0
    %7461 = vmatpush1.msra.mxu0 0.0
    %7462 = vmatprep.subr.mxu0 0.0
    %7463 = vmatpush1.msra.mxu0 0.0
    %7464 = vmatprep.subr.mxu0 0.0
    %7465 = vmatpush1.msra.mxu0 0.0
    %7466 = vmatprep.subr.mxu0 0.0
    %7467 = vmatpush1.msra.mxu0 0.0
    %7468 = vmatprep.subr.mxu0 0.0
    %7469 = vmatpush1.msra.mxu0 0.0
    %7470 = vmatprep.mubr.f32.mxu0 0.0
    %7471 = vmatmul.mubr.f32.gmra.mrb[0].mxu0 %v7359
    %v7472 = vpop.f32.mrb[0].mxu0
    %v7473 = vadd.f32 0.0, %v7472
    %v7474 = vpop.f32.mrb[0].mxu0
    %7475 = vmatprep.mubr.f32.mxu0 0.0
    %7476 = vmatmul.mubr.f32.gmra.mrb[0].mxu0 %v7362
    %v7477 = vpop.f32.mrb[0].mxu0
    %v7478 = vadd.f32 0.0, %v7477
    %v7479 = vpop.f32.mrb[0].mxu0
    %7480 = vmatprep.mubr.f32.mxu0 0.0
    %7481 = vmatmul.mubr.f32.gmra.mrb[0].mxu0 %v7365
    %v7482 = vpop.f32.mrb[0].mxu0
    %v7483 = vadd.f32 0.0, %v7482
    %v7484 = vpop.f32.mrb[0].mxu0
    %7485 = vmatprep.mubr.f32.mxu0 0.0
    %7486 = vmatmul.mubr.f32.gmra.mrb[0].mxu0 %v7368
    %v7487 = vpop.f32.mrb[0].mxu0
    %v7488 = vadd.f32 0.0, %v7487
    %v7489 = vpop.f32.mrb[0].mxu0
    %7490 = vmatprep.mubr.f32.mxu0 0.0
    %7491 = vmatmul.mubr.f32.gmra.mrb[0].mxu0 %v7371
    %v7492 = vpop.f32.mrb[0].mxu0
    %v7493 = vadd.f32 0.0, %v7492
    %v7494 = vpop.f32.mrb[0].mxu0
    %7495 = vmatprep.mubr.f32.mxu0 0.0
    %7496 = vmatmul.mubr.f32.gmra.mrb[0].mxu0 %v7374
    %v7497 = vpop.f32.mrb[0].mxu0
    %v7498 = vadd.f32 0.0, %v7497
    %v7499 = vpop.f32.mrb[0].mxu0
    %7500 = vmatprep.mubr.f32.mxu0 0.0
    %7501 = vmatmul.mubr.f32.gmra.mrb[0].mxu0 %v7377
    %v7502 = vpop.f32.mrb[0].mxu0
    %v7503 = vadd.f32 0.0, %v7502
    %v7504 = vpop.f32.mrb[0].mxu0
    %7505 = vmatprep.mubr.f32.mxu0 0.0
    %7506 = vmatmul.mubr.f32.gmra.mrb[0].mxu0 %v7380
    %v7507 = vpop.f32.mrb[0].mxu0
    %v7508 = vadd.f32 0.0, %v7507
    %v7509 = vpop.f32.mrb[0].mxu0
    %7510 = vmatprep.mubr.f32.mxu0 0.0
    %7511 = vmatmul.mubr.f32.gmra.mrb[0].mxu0 %v7383
    %v7512 = vpop.f32.mrb[0].mxu0
    %v7513 = vadd.f32 0.0, %v7512
    %v7514 = vpop.f32.mrb[0].mxu0
    %7515 = vmatprep.mubr.f32.mxu0 0.0
    %7516 = vmatmul.mubr.f32.gmra.mrb[0].mxu0 %v7386
    %v7517 = vpop.f32.mrb[0].mxu0
    %v7518 = vadd.f32 0.0, %v7517
    %v7519 = vpop.f32.mrb[0].mxu0
    %7520 = vmatprep.mubr.f32.mxu0 0.0
    %7521 = vmatmul.mubr.f32.gmra.mrb[0].mxu0 %v7389
    %v7522 = vpop.f32.mrb[0].mxu0
    %v7523 = vadd.f32 0.0, %v7522
    %v7524 = vpop.f32.mrb[0].mxu0
    %7525 = vmatprep.mubr.f32.mxu0 0.0
    %7526 = vmatmul.mubr.f32.gmra.mrb[0].mxu0 %v7392
    %v7527 = vpop.f32.mrb[0].mxu0
    %v7528 = vadd.f32 0.0, %v7527
    %v7529 = vpop.f32.mrb[0].mxu0
    %7530 = vmatprep.mubr.f32.mxu0 0.0
    %7531 = vmatmul.mubr.f32.gmra.mrb[0].mxu0 %v7395
    %v7532 = vpop.f32.mrb[0].mxu0
    %v7533 = vadd.f32 0.0, %v7532
    %v7534 = vpop.f32.mrb[0].mxu0
    %7535 = vmatprep.mubr.f32.mxu0 0.0
    %7536 = vmatmul.mubr.f32.gmra.mrb[0].mxu0 %v7398
    %v7537 = vpop.f32.mrb[0].mxu0
    %v7538 = vadd.f32 0.0, %v7537
    %v7539 = vpop.f32.mrb[0].mxu0
    %7540 = vmatprep.mubr.f32.mxu0 0.0
    %7541 = vmatmul.mubr.f32.gmra.mrb[0].mxu0 %v7401
    %v7542 = vpop.f32.mrb[0].mxu0
    %v7543 = vadd.f32 0.0, %v7542
    %v7544 = vpop.f32.mrb[0].mxu0
    %7545 = vmatprep.mubr.f32.mxu0 0.0
    %7546 = vmatmul.mubr.f32.gmra.mrb[0].mxu0 %v7404
    %v7547 = vpop.f32.mrb[0].mxu0
    %v7548 = vadd.f32 0.0, %v7547
    %v7549 = vpop.f32.mrb[0].mxu0
    %7550 = vdwg.mxu0
    %v7552 = vsel %vm6668, %v7323, 0
    %v7555 = vsel %vm6668, %v7324, 0
    %v7558 = vsel %vm6668, %v7325, 0
    %v7561 = vsel %vm6668, %v7326, 0
    %v7564 = vsel %vm6668, %v7327, 0
    %v7567 = vsel %vm6668, %v7328, 0
    %v7570 = vsel %vm6668, %v7329, 0
    %v7573 = vsel %vm6668, %v7330, 0
    %v7576 = vsel %vm6668, %v7331, 0
    %v7579 = vsel %vm6668, %v7332, 0
    %v7582 = vsel %vm6668, %v7333, 0
    %v7585 = vsel %vm6668, %v7334, 0
    %v7588 = vsel %vm6668, %v7335, 0
    %v7591 = vsel %vm6668, %v7336, 0
    %v7594 = vsel %vm6668, %v7337, 0
    %v7597 = vsel %vm6668, %v7338, 0
    %7599 = vmatprep.subr.mxu0 0.0
    %7600 = vmatpush1.msra.mxu0 %v7339
    %7601 = vmatprep.subr.mxu0 0.0
    %7602 = vmatpush1.msra.mxu0 0.0
    %7603 = vmatprep.subr.mxu0 0.0
    %7604 = vmatpush1.msra.mxu0 0.0
    %7605 = vmatprep.subr.mxu0 0.0
    %7606 = vmatpush1.msra.mxu0 0.0
    %7607 = vmatprep.subr.mxu0 0.0
    %7608 = vmatpush1.msra.mxu0 0.0
    %7609 = vmatprep.subr.mxu0 0.0
    %7610 = vmatpush1.msra.mxu0 0.0
    %7611 = vmatprep.subr.mxu0 0.0
    %7612 = vmatpush1.msra.mxu0 0.0
    %7613 = vmatprep.subr.mxu0 0.0
    %7614 = vmatpush1.msra.mxu0 0.0
    %7615 = vmatprep.subr.mxu0 0.0
    %7616 = vmatpush1.msra.mxu0 0.0
    %7617 = vmatprep.subr.mxu0 0.0
    %7618 = vmatpush1.msra.mxu0 0.0
    %7619 = vmatprep.subr.mxu0 0.0
    %7620 = vmatpush1.msra.mxu0 0.0
    %7621 = vmatprep.subr.mxu0 0.0
    %7622 = vmatpush1.msra.mxu0 0.0
    %7623 = vmatprep.subr.mxu0 0.0
    %7624 = vmatpush1.msra.mxu0 0.0
    %7625 = vmatprep.subr.mxu0 0.0
    %7626 = vmatpush1.msra.mxu0 0.0
    %7627 = vmatprep.subr.mxu0 0.0
    %7628 = vmatpush1.msra.mxu0 0.0
    %7629 = vmatprep.subr.mxu0 0.0
    %7630 = vmatpush1.msra.mxu0 0.0
    %7631 = vmatprep.subr.mxu0 0.0
    %7632 = vmatpush1.msra.mxu0 0.0
    %7633 = vmatprep.subr.mxu0 0.0
    %7634 = vmatpush1.msra.mxu0 0.0
    %7635 = vmatprep.subr.mxu0 0.0
    %7636 = vmatpush1.msra.mxu0 0.0
    %7637 = vmatprep.subr.mxu0 0.0
    %7638 = vmatpush1.msra.mxu0 0.0
    %7639 = vmatprep.subr.mxu0 0.0
    %7640 = vmatpush1.msra.mxu0 0.0
    %7641 = vmatprep.subr.mxu0 0.0
    %7642 = vmatpush1.msra.mxu0 0.0
    %7643 = vmatprep.subr.mxu0 0.0
    %7644 = vmatpush1.msra.mxu0 0.0
    %7645 = vmatprep.subr.mxu0 0.0
    %7646 = vmatpush1.msra.mxu0 0.0
    %7647 = vmatprep.subr.mxu0 0.0
    %7648 = vmatpush1.msra.mxu0 0.0
    %7649 = vmatprep.subr.mxu0 0.0
    %7650 = vmatpush1.msra.mxu0 0.0
    %7651 = vmatprep.subr.mxu0 0.0
    %7652 = vmatpush1.msra.mxu0 0.0
    %7653 = vmatprep.subr.mxu0 0.0
    %7654 = vmatpush1.msra.mxu0 0.0
    %7655 = vmatprep.subr.mxu0 0.0
    %7656 = vmatpush1.msra.mxu0 0.0
    %7657 = vmatprep.subr.mxu0 0.0
    %7658 = vmatpush1.msra.mxu0 0.0
    %7659 = vmatprep.subr.mxu0 0.0
    %7660 = vmatpush1.msra.mxu0 0.0
    %7661 = vmatprep.subr.mxu0 0.0
    %7662 = vmatpush1.msra.mxu0 0.0
    %7663 = vmatprep.mubr.f32.mxu0 0.0
    %7664 = vmatmul.mubr.f32.gmra.mrb[0].mxu0 %v7552
    %v7665 = vpop.f32.mrb[0].mxu0
    %v7666 = vadd.f32 %v7473, %v7665
    %v7667 = vpop.f32.mrb[0].mxu0
    %7668 = vmatprep.mubr.f32.mxu0 0.0
    %7669 = vmatmul.mubr.f32.gmra.mrb[0].mxu0 %v7555
    %v7670 = vpop.f32.mrb[0].mxu0
    %v7671 = vadd.f32 %v7478, %v7670
    %v7672 = vpop.f32.mrb[0].mxu0
    %7673 = vmatprep.mubr.f32.mxu0 0.0
    %7674 = vmatmul.mubr.f32.gmra.mrb[0].mxu0 %v7558
    %v7675 = vpop.f32.mrb[0].mxu0
    %v7676 = vadd.f32 %v7483, %v7675
    %v7677 = vpop.f32.mrb[0].mxu0
    %7678 = vmatprep.mubr.f32.mxu0 0.0
    %7679 = vmatmul.mubr.f32.gmra.mrb[0].mxu0 %v7561
    %v7680 = vpop.f32.mrb[0].mxu0
    %v7681 = vadd.f32 %v7488, %v7680
    %v7682 = vpop.f32.mrb[0].mxu0
    %7683 = vmatprep.mubr.f32.mxu0 0.0
    %7684 = vmatmul.mubr.f32.gmra.mrb[0].mxu0 %v7564
    %v7685 = vpop.f32.mrb[0].mxu0
    %v7686 = vadd.f32 %v7493, %v7685
    %v7687 = vpop.f32.mrb[0].mxu0
    %7688 = vmatprep.mubr.f32.mxu0 0.0
    %7689 = vmatmul.mubr.f32.gmra.mrb[0].mxu0 %v7567
    %v7690 = vpop.f32.mrb[0].mxu0
    %v7691 = vadd.f32 %v7498, %v7690
    %v7692 = vpop.f32.mrb[0].mxu0
    %7693 = vmatprep.mubr.f32.mxu0 0.0
    %7694 = vmatmul.mubr.f32.gmra.mrb[0].mxu0 %v7570
    %v7695 = vpop.f32.mrb[0].mxu0
    %v7696 = vadd.f32 %v7503, %v7695
    %v7697 = vpop.f32.mrb[0].mxu0
    %7698 = vmatprep.mubr.f32.mxu0 0.0
    %7699 = vmatmul.mubr.f32.gmra.mrb[0].mxu0 %v7573
    %v7700 = vpop.f32.mrb[0].mxu0
    %v7701 = vadd.f32 %v7508, %v7700
    %v7702 = vpop.f32.mrb[0].mxu0
    %7703 = vmatprep.mubr.f32.mxu0 0.0
    %7704 = vmatmul.mubr.f32.gmra.mrb[0].mxu0 %v7576
    %v7705 = vpop.f32.mrb[0].mxu0
    %v7706 = vadd.f32 %v7513, %v7705
    %v7707 = vpop.f32.mrb[0].mxu0
    %7708 = vmatprep.mubr.f32.mxu0 0.0
    %7709 = vmatmul.mubr.f32.gmra.mrb[0].mxu0 %v7579
    %v7710 = vpop.f32.mrb[0].mxu0
    %v7711 = vadd.f32 %v7518, %v7710
    %v7712 = vpop.f32.mrb[0].mxu0
    %7713 = vmatprep.mubr.f32.mxu0 0.0
    %7714 = vmatmul.mubr.f32.gmra.mrb[0].mxu0 %v7582
    %v7715 = vpop.f32.mrb[0].mxu0
    %v7716 = vadd.f32 %v7523, %v7715
    %v7717 = vpop.f32.mrb[0].mxu0
    %7718 = vmatprep.mubr.f32.mxu0 0.0
    %7719 = vmatmul.mubr.f32.gmra.mrb[0].mxu0 %v7585
    %v7720 = vpop.f32.mrb[0].mxu0
    %v7721 = vadd.f32 %v7528, %v7720
    %v7722 = vpop.f32.mrb[0].mxu0
    %7723 = vmatprep.mubr.f32.mxu0 0.0
    %7724 = vmatmul.mubr.f32.gmra.mrb[0].mxu0 %v7588
    %v7725 = vpop.f32.mrb[0].mxu0
    %v7726 = vadd.f32 %v7533, %v7725
    %v7727 = vpop.f32.mrb[0].mxu0
    %7728 = vmatprep.mubr.f32.mxu0 0.0
    %7729 = vmatmul.mubr.f32.gmra.mrb[0].mxu0 %v7591
    %v7730 = vpop.f32.mrb[0].mxu0
    %v7731 = vadd.f32 %v7538, %v7730
    %v7732 = vpop.f32.mrb[0].mxu0
    %7733 = vmatprep.mubr.f32.mxu0 0.0
    %7734 = vmatmul.mubr.f32.gmra.mrb[0].mxu0 %v7594
    %v7735 = vpop.f32.mrb[0].mxu0
    %v7736 = vadd.f32 %v7543, %v7735
    %v7737 = vpop.f32.mrb[0].mxu0
    %7738 = vmatprep.mubr.f32.mxu0 0.0
    %7739 = vmatmul.mubr.f32.gmra.mrb[0].mxu0 %v7597
    %v7740 = vpop.f32.mrb[0].mxu0
    %v7741 = vadd.f32 %v7548, %v7740
    %v7742 = vpop.f32.mrb[0].mxu0
    %7743 = vdwg.mxu0
    %v7744 = vld [vmem:[#allocation5 + $0x2] sm:$0xff]
    %v7745 = vld [vmem:[#allocation5 + $0x12] sm:$0xff]
    %v7746 = vld [vmem:[#allocation5 + $0x22] sm:$0xff]
    %v7747 = vld [vmem:[#allocation5 + $0x32] sm:$0xff]
    %v7748 = vld [vmem:[#allocation5 + $0x42] sm:$0xff]
    %v7749 = vld [vmem:[#allocation5 + $0x52] sm:$0xff]
    %v7750 = vld [vmem:[#allocation5 + $0x62] sm:$0xff]
    %v7751 = vld [vmem:[#allocation5 + $0x72] sm:$0xff]
    %v7752 = vld [vmem:[#allocation5 + $0xa2] sm:$0xff]
    %v7753 = vld [vmem:[#allocation5 + $0xb2] sm:$0xff]
    %v7754 = vld [vmem:[#allocation5 + $0xc2] sm:$0xff]
    %v7755 = vld [vmem:[#allocation5 + $0xd2] sm:$0xff]
    %v7756 = vld [vmem:[#allocation5 + $0xe2] sm:$0xff]
    %v7757 = vld [vmem:[#allocation5 + $0xf2] sm:$0xff]
    %v7758 = vld [vmem:[#allocation5 + $0x102] sm:$0xff]
    %v7759 = vld [vmem:[#allocation5 + $0x112] sm:$0xff]
    %s7760 = scalar_lea.vmem %s3, 16
    %v7761 = vld [vmem:[%s7760] sm:$0xff]
    %v7763 = vsel %vm6668, %v7744, 0
    %v7766 = vsel %vm6668, %v7745, 0
    %v7769 = vsel %vm6668, %v7746, 0
    %v7772 = vsel %vm6668, %v7747, 0
    %v7775 = vsel %vm6668, %v7748, 0
    %v7778 = vsel %vm6668, %v7749, 0
    %v7781 = vsel %vm6668, %v7750, 0
    %v7784 = vsel %vm6668, %v7751, 0
    %v7787 = vsel %vm6668, %v7752, 0
    %v7790 = vsel %vm6668, %v7753, 0
    %v7793 = vsel %vm6668, %v7754, 0
    %v7796 = vsel %vm6668, %v7755, 0
    %v7799 = vsel %vm6668, %v7756, 0
    %v7802 = vsel %vm6668, %v7757, 0
    %v7805 = vsel %vm6668, %v7758, 0
    %v7808 = vsel %vm6668, %v7759, 0
    %7810 = vmatprep.subr.mxu0 0.0
    %7811 = vmatpush1.msra.mxu0 %v7761
    %7812 = vmatprep.subr.mxu0 0.0
    %7813 = vmatpush1.msra.mxu0 0.0
    %7814 = vmatprep.subr.mxu0 0.0
    %7815 = vmatpush1.msra.mxu0 0.0
    %7816 = vmatprep.subr.mxu0 0.0
    %7817 = vmatpush1.msra.mxu0 0.0
    %7818 = vmatprep.subr.mxu0 0.0
    %7819 = vmatpush1.msra.mxu0 0.0
    %7820 = vmatprep.subr.mxu0 0.0
    %7821 = vmatpush1.msra.mxu0 0.0
    %7822 = vmatprep.subr.mxu0 0.0
    %7823 = vmatpush1.msra.mxu0 0.0
    %7824 = vmatprep.subr.mxu0 0.0
    %7825 = vmatpush1.msra.mxu0 0.0
    %7826 = vmatprep.subr.mxu0 0.0
    %7827 = vmatpush1.msra.mxu0 0.0
    %7828 = vmatprep.subr.mxu0 0.0
    %7829 = vmatpush1.msra.mxu0 0.0
    %7830 = vmatprep.subr.mxu0 0.0
    %7831 = vmatpush1.msra.mxu0 0.0
    %7832 = vmatprep.subr.mxu0 0.0
    %7833 = vmatpush1.msra.mxu0 0.0
    %7834 = vmatprep.subr.mxu0 0.0
    %7835 = vmatpush1.msra.mxu0 0.0
    %7836 = vmatprep.subr.mxu0 0.0
    %7837 = vmatpush1.msra.mxu0 0.0
    %7838 = vmatprep.subr.mxu0 0.0
    %7839 = vmatpush1.msra.mxu0 0.0
    %7840 = vmatprep.subr.mxu0 0.0
    %7841 = vmatpush1.msra.mxu0 0.0
    %7842 = vmatprep.subr.mxu0 0.0
    %7843 = vmatpush1.msra.mxu0 0.0
    %7844 = vmatprep.subr.mxu0 0.0
    %7845 = vmatpush1.msra.mxu0 0.0
    %7846 = vmatprep.subr.mxu0 0.0
    %7847 = vmatpush1.msra.mxu0 0.0
    %7848 = vmatprep.subr.mxu0 0.0
    %7849 = vmatpush1.msra.mxu0 0.0
    %7850 = vmatprep.subr.mxu0 0.0
    %7851 = vmatpush1.msra.mxu0 0.0
    %7852 = vmatprep.subr.mxu0 0.0
    %7853 = vmatpush1.msra.mxu0 0.0
    %7854 = vmatprep.subr.mxu0 0.0
    %7855 = vmatpush1.msra.mxu0 0.0
    %7856 = vmatprep.subr.mxu0 0.0
    %7857 = vmatpush1.msra.mxu0 0.0
    %7858 = vmatprep.subr.mxu0 0.0
    %7859 = vmatpush1.msra.mxu0 0.0
    %7860 = vmatprep.subr.mxu0 0.0
    %7861 = vmatpush1.msra.mxu0 0.0
    %7862 = vmatprep.subr.mxu0 0.0
    %7863 = vmatpush1.msra.mxu0 0.0
    %7864 = vmatprep.subr.mxu0 0.0
    %7865 = vmatpush1.msra.mxu0 0.0
    %7866 = vmatprep.subr.mxu0 0.0
    %7867 = vmatpush1.msra.mxu0 0.0
    %7868 = vmatprep.subr.mxu0 0.0
    %7869 = vmatpush1.msra.mxu0 0.0
    %7870 = vmatprep.subr.mxu0 0.0
    %7871 = vmatpush1.msra.mxu0 0.0
    %7872 = vmatprep.subr.mxu0 0.0
    %7873 = vmatpush1.msra.mxu0 0.0
    %7874 = vmatprep.mubr.f32.mxu0 0.0
    %7875 = vmatmul.mubr.f32.gmra.mrb[0].mxu0 %v7763
    %v7876 = vpop.f32.mrb[0].mxu0
    %v7877 = vadd.f32 0.0, %v7876
    %v7878 = vpop.f32.mrb[0].mxu0
    %7879 = vmatprep.mubr.f32.mxu0 0.0
    %7880 = vmatmul.mubr.f32.gmra.mrb[0].mxu0 %v7766
    %v7881 = vpop.f32.mrb[0].mxu0
    %v7882 = vadd.f32 0.0, %v7881
    %v7883 = vpop.f32.mrb[0].mxu0
    %7884 = vmatprep.mubr.f32.mxu0 0.0
    %7885 = vmatmul.mubr.f32.gmra.mrb[0].mxu0 %v7769
    %v7886 = vpop.f32.mrb[0].mxu0
    %v7887 = vadd.f32 0.0, %v7886
    %v7888 = vpop.f32.mrb[0].mxu0
    %7889 = vmatprep.mubr.f32.mxu0 0.0
    %7890 = vmatmul.mubr.f32.gmra.mrb[0].mxu0 %v7772
    %v7891 = vpop.f32.mrb[0].mxu0
    %v7892 = vadd.f32 0.0, %v7891
    %v7893 = vpop.f32.mrb[0].mxu0
    %7894 = vmatprep.mubr.f32.mxu0 0.0
    %7895 = vmatmul.mubr.f32.gmra.mrb[0].mxu0 %v7775
    %v7896 = vpop.f32.mrb[0].mxu0
    %v7897 = vadd.f32 0.0, %v7896
    %v7898 = vpop.f32.mrb[0].mxu0
    %7899 = vmatprep.mubr.f32.mxu0 0.0
    %7900 = vmatmul.mubr.f32.gmra.mrb[0].mxu0 %v7778
    %v7901 = vpop.f32.mrb[0].mxu0
    %v7902 = vadd.f32 0.0, %v7901
    %v7903 = vpop.f32.mrb[0].mxu0
    %7904 = vmatprep.mubr.f32.mxu0 0.0
    %7905 = vmatmul.mubr.f32.gmra.mrb[0].mxu0 %v7781
    %v7906 = vpop.f32.mrb[0].mxu0
    %v7907 = vadd.f32 0.0, %v7906
    %v7908 = vpop.f32.mrb[0].mxu0
    %7909 = vmatprep.mubr.f32.mxu0 0.0
    %7910 = vmatmul.mubr.f32.gmra.mrb[0].mxu0 %v7784
    %v7911 = vpop.f32.mrb[0].mxu0
    %v7912 = vadd.f32 0.0, %v7911
    %v7913 = vpop.f32.mrb[0].mxu0
    %7914 = vmatprep.mubr.f32.mxu0 0.0
    %7915 = vmatmul.mubr.f32.gmra.mrb[0].mxu0 %v7787
    %v7916 = vpop.f32.mrb[0].mxu0
    %v7917 = vadd.f32 0.0, %v7916
    %v7918 = vpop.f32.mrb[0].mxu0
    %7919 = vmatprep.mubr.f32.mxu0 0.0
    %7920 = vmatmul.mubr.f32.gmra.mrb[0].mxu0 %v7790
    %v7921 = vpop.f32.mrb[0].mxu0
    %v7922 = vadd.f32 0.0, %v7921
    %v7923 = vpop.f32.mrb[0].mxu0
    %7924 = vmatprep.mubr.f32.mxu0 0.0
    %7925 = vmatmul.mubr.f32.gmra.mrb[0].mxu0 %v7793
    %v7926 = vpop.f32.mrb[0].mxu0
    %v7927 = vadd.f32 0.0, %v7926
    %v7928 = vpop.f32.mrb[0].mxu0
    %7929 = vmatprep.mubr.f32.mxu0 0.0
    %7930 = vmatmul.mubr.f32.gmra.mrb[0].mxu0 %v7796
    %v7931 = vpop.f32.mrb[0].mxu0
    %v7932 = vadd.f32 0.0, %v7931
    %v7933 = vpop.f32.mrb[0].mxu0
    %7934 = vmatprep.mubr.f32.mxu0 0.0
    %7935 = vmatmul.mubr.f32.gmra.mrb[0].mxu0 %v7799
    %v7936 = vpop.f32.mrb[0].mxu0
    %v7937 = vadd.f32 0.0, %v7936
    %v7938 = vpop.f32.mrb[0].mxu0
    %7939 = vmatprep.mubr.f32.mxu0 0.0
    %7940 = vmatmul.mubr.f32.gmra.mrb[0].mxu0 %v7802
    %v7941 = vpop.f32.mrb[0].mxu0
    %v7942 = vadd.f32 0.0, %v7941
    %v7943 = vpop.f32.mrb[0].mxu0
    %7944 = vmatprep.mubr.f32.mxu0 0.0
    %7945 = vmatmul.mubr.f32.gmra.mrb[0].mxu0 %v7805
    %v7946 = vpop.f32.mrb[0].mxu0
    %v7947 = vadd.f32 0.0, %v7946
    %v7948 = vpop.f32.mrb[0].mxu0
    %7949 = vmatprep.mubr.f32.mxu0 0.0
    %7950 = vmatmul.mubr.f32.gmra.mrb[0].mxu0 %v7808
    %v7951 = vpop.f32.mrb[0].mxu0
    %v7952 = vadd.f32 0.0, %v7951
    %v7953 = vpop.f32.mrb[0].mxu0
    %7954 = vdwg.mxu0
    %v7955 = vadd.f32 %v7666, %v7877
    %v7956 = vadd.f32 %v7671, %v7882
    %v7957 = vadd.f32 %v7676, %v7887
    %v7958 = vadd.f32 %v7681, %v7892
    %v7959 = vadd.f32 %v7686, %v7897
    %v7960 = vadd.f32 %v7691, %v7902
    %v7961 = vadd.f32 %v7696, %v7907
    %v7962 = vadd.f32 %v7701, %v7912
    %v7963 = vadd.f32 %v7706, %v7917
    %v7964 = vadd.f32 %v7711, %v7922
    %v7965 = vadd.f32 %v7716, %v7927
    %v7966 = vadd.f32 %v7721, %v7932
    %v7967 = vadd.f32 %v7726, %v7937
    %v7968 = vadd.f32 %v7731, %v7942
    %v7969 = vadd.f32 %v7736, %v7947
    %v7970 = vadd.f32 %v7741, %v7952
    %v7971 = vld [vmem:[%s7306] sm:$0xff]
    %v7972 = vld [vmem:[%s7306 + $0x10] sm:$0xff]
    %v7973 = vld [vmem:[%s7306 + $0x20] sm:$0xff]
    %v7974 = vld [vmem:[%s7306 + $0x30] sm:$0xff]
    %v7975 = vld [vmem:[%s7306 + $0x40] sm:$0xff]
    %v7976 = vld [vmem:[%s7306 + $0x50] sm:$0xff]
    %v7977 = vld [vmem:[%s7306 + $0x60] sm:$0xff]
    %v7978 = vld [vmem:[%s7306 + $0x70] sm:$0xff]
    %v7979 = vld [vmem:[%s7306 + $0xa0] sm:$0xff]
    %v7980 = vld [vmem:[%s7306 + $0xb0] sm:$0xff]
    %v7981 = vld [vmem:[%s7306 + $0xc0] sm:$0xff]
    %v7982 = vld [vmem:[%s7306 + $0xd0] sm:$0xff]
    %v7983 = vld [vmem:[%s7306 + $0xe0] sm:$0xff]
    %v7984 = vld [vmem:[%s7306 + $0xf0] sm:$0xff]
    %v7985 = vld [vmem:[%s7306 + $0x100] sm:$0xff]
    %v7986 = vld [vmem:[%s7306 + $0x110] sm:$0xff]
    %s7987 = scalar_lea.vmem %s3, 24
    %v7988 = vld [vmem:[%s7987] sm:$0xff]
    %v7990 = vsel %vm6668, %v7971, 0
    %v7993 = vsel %vm6668, %v7972, 0
    %v7996 = vsel %vm6668, %v7973, 0
    %v7999 = vsel %vm6668, %v7974, 0
    %v8002 = vsel %vm6668, %v7975, 0
    %v8005 = vsel %vm6668, %v7976, 0
    %v8008 = vsel %vm6668, %v7977, 0
    %v8011 = vsel %vm6668, %v7978, 0
    %v8014 = vsel %vm6668, %v7979, 0
    %v8017 = vsel %vm6668, %v7980, 0
    %v8020 = vsel %vm6668, %v7981, 0
    %v8023 = vsel %vm6668, %v7982, 0
    %v8026 = vsel %vm6668, %v7983, 0
    %v8029 = vsel %vm6668, %v7984, 0
    %v8032 = vsel %vm6668, %v7985, 0
    %v8035 = vsel %vm6668, %v7986, 0
    %8037 = vmatprep.subr.mxu0 0.0
    %8038 = vmatpush1.msra.mxu0 %v7988
    %8039 = vmatprep.subr.mxu0 0.0
    %8040 = vmatpush1.msra.mxu0 0.0
    %8041 = vmatprep.subr.mxu0 0.0
    %8042 = vmatpush1.msra.mxu0 0.0
    %8043 = vmatprep.subr.mxu0 0.0
    %8044 = vmatpush1.msra.mxu0 0.0
    %8045 = vmatprep.subr.mxu0 0.0
    %8046 = vmatpush1.msra.mxu0 0.0
    %8047 = vmatprep.subr.mxu0 0.0
    %8048 = vmatpush1.msra.mxu0 0.0
    %8049 = vmatprep.subr.mxu0 0.0
    %8050 = vmatpush1.msra.mxu0 0.0
    %8051 = vmatprep.subr.mxu0 0.0
    %8052 = vmatpush1.msra.mxu0 0.0
    %8053 = vmatprep.subr.mxu0 0.0
    %8054 = vmatpush1.msra.mxu0 0.0
    %8055 = vmatprep.subr.mxu0 0.0
    %8056 = vmatpush1.msra.mxu0 0.0
    %8057 = vmatprep.subr.mxu0 0.0
    %8058 = vmatpush1.msra.mxu0 0.0
    %8059 = vmatprep.subr.mxu0 0.0
    %8060 = vmatpush1.msra.mxu0 0.0
    %8061 = vmatprep.subr.mxu0 0.0
    %8062 = vmatpush1.msra.mxu0 0.0
    %8063 = vmatprep.subr.mxu0 0.0
    %8064 = vmatpush1.msra.mxu0 0.0
    %8065 = vmatprep.subr.mxu0 0.0
    %8066 = vmatpush1.msra.mxu0 0.0
    %8067 = vmatprep.subr.mxu0 0.0
    %8068 = vmatpush1.msra.mxu0 0.0
    %8069 = vmatprep.subr.mxu0 0.0
    %8070 = vmatpush1.msra.mxu0 0.0
    %8071 = vmatprep.subr.mxu0 0.0
    %8072 = vmatpush1.msra.mxu0 0.0
    %8073 = vmatprep.subr.mxu0 0.0
    %8074 = vmatpush1.msra.mxu0 0.0
    %8075 = vmatprep.subr.mxu0 0.0
    %8076 = vmatpush1.msra.mxu0 0.0
    %8077 = vmatprep.subr.mxu0 0.0
    %8078 = vmatpush1.msra.mxu0 0.0
    %8079 = vmatprep.subr.mxu0 0.0
    %8080 = vmatpush1.msra.mxu0 0.0
    %8081 = vmatprep.subr.mxu0 0.0
    %8082 = vmatpush1.msra.mxu0 0.0
    %8083 = vmatprep.subr.mxu0 0.0
    %8084 = vmatpush1.msra.mxu0 0.0
    %8085 = vmatprep.subr.mxu0 0.0
    %8086 = vmatpush1.msra.mxu0 0.0
    %8087 = vmatprep.subr.mxu0 0.0
    %8088 = vmatpush1.msra.mxu0 0.0
    %8089 = vmatprep.subr.mxu0 0.0
    %8090 = vmatpush1.msra.mxu0 0.0
    %8091 = vmatprep.subr.mxu0 0.0
    %8092 = vmatpush1.msra.mxu0 0.0
    %8093 = vmatprep.subr.mxu0 0.0
    %8094 = vmatpush1.msra.mxu0 0.0
    %8095 = vmatprep.subr.mxu0 0.0
    %8096 = vmatpush1.msra.mxu0 0.0
    %8097 = vmatprep.subr.mxu0 0.0
    %8098 = vmatpush1.msra.mxu0 0.0
    %8099 = vmatprep.subr.mxu0 0.0
    %8100 = vmatpush1.msra.mxu0 0.0
    %8101 = vmatprep.mubr.f32.mxu0 0.0
    %8102 = vmatmul.mubr.f32.gmra.mrb[0].mxu0 %v7990
    %v8103 = vpop.f32.mrb[0].mxu0
    %v8104 = vadd.f32 0.0, %v8103
    %v8105 = vpop.f32.mrb[0].mxu0
    %8106 = vmatprep.mubr.f32.mxu0 0.0
    %8107 = vmatmul.mubr.f32.gmra.mrb[0].mxu0 %v7993
    %v8108 = vpop.f32.mrb[0].mxu0
    %v8109 = vadd.f32 0.0, %v8108
    %v8110 = vpop.f32.mrb[0].mxu0
    %8111 = vmatprep.mubr.f32.mxu0 0.0
    %8112 = vmatmul.mubr.f32.gmra.mrb[0].mxu0 %v7996
    %v8113 = vpop.f32.mrb[0].mxu0
    %v8114 = vadd.f32 0.0, %v8113
    %v8115 = vpop.f32.mrb[0].mxu0
    %8116 = vmatprep.mubr.f32.mxu0 0.0
    %8117 = vmatmul.mubr.f32.gmra.mrb[0].mxu0 %v7999
    %v8118 = vpop.f32.mrb[0].mxu0
    %v8119 = vadd.f32 0.0, %v8118
    %v8120 = vpop.f32.mrb[0].mxu0
    %8121 = vmatprep.mubr.f32.mxu0 0.0
    %8122 = vmatmul.mubr.f32.gmra.mrb[0].mxu0 %v8002
    %v8123 = vpop.f32.mrb[0].mxu0
    %v8124 = vadd.f32 0.0, %v8123
    %v8125 = vpop.f32.mrb[0].mxu0
    %8126 = vmatprep.mubr.f32.mxu0 0.0
    %8127 = vmatmul.mubr.f32.gmra.mrb[0].mxu0 %v8005
    %v8128 = vpop.f32.mrb[0].mxu0
    %v8129 = vadd.f32 0.0, %v8128
    %v8130 = vpop.f32.mrb[0].mxu0
    %8131 = vmatprep.mubr.f32.mxu0 0.0
    %8132 = vmatmul.mubr.f32.gmra.mrb[0].mxu0 %v8008
    %v8133 = vpop.f32.mrb[0].mxu0
    %v8134 = vadd.f32 0.0, %v8133
    %v8135 = vpop.f32.mrb[0].mxu0
    %8136 = vmatprep.mubr.f32.mxu0 0.0
    %8137 = vmatmul.mubr.f32.gmra.mrb[0].mxu0 %v8011
    %v8138 = vpop.f32.mrb[0].mxu0
    %v8139 = vadd.f32 0.0, %v8138
    %v8140 = vpop.f32.mrb[0].mxu0
    %8141 = vmatprep.mubr.f32.mxu0 0.0
    %8142 = vmatmul.mubr.f32.gmra.mrb[0].mxu0 %v8014
    %v8143 = vpop.f32.mrb[0].mxu0
    %v8144 = vadd.f32 0.0, %v8143
    %v8145 = vpop.f32.mrb[0].mxu0
    %8146 = vmatprep.mubr.f32.mxu0 0.0
    %8147 = vmatmul.mubr.f32.gmra.mrb[0].mxu0 %v8017
    %v8148 = vpop.f32.mrb[0].mxu0
    %v8149 = vadd.f32 0.0, %v8148
    %v8150 = vpop.f32.mrb[0].mxu0
    %8151 = vmatprep.mubr.f32.mxu0 0.0
    %8152 = vmatmul.mubr.f32.gmra.mrb[0].mxu0 %v8020
    %v8153 = vpop.f32.mrb[0].mxu0
    %v8154 = vadd.f32 0.0, %v8153
    %v8155 = vpop.f32.mrb[0].mxu0
    %8156 = vmatprep.mubr.f32.mxu0 0.0
    %8157 = vmatmul.mubr.f32.gmra.mrb[0].mxu0 %v8023
    %v8158 = vpop.f32.mrb[0].mxu0
    %v8159 = vadd.f32 0.0, %v8158
    %v8160 = vpop.f32.mrb[0].mxu0
    %8161 = vmatprep.mubr.f32.mxu0 0.0
    %8162 = vmatmul.mubr.f32.gmra.mrb[0].mxu0 %v8026
    %v8163 = vpop.f32.mrb[0].mxu0
    %v8164 = vadd.f32 0.0, %v8163
    %v8165 = vpop.f32.mrb[0].mxu0
    %8166 = vmatprep.mubr.f32.mxu0 0.0
    %8167 = vmatmul.mubr.f32.gmra.mrb[0].mxu0 %v8029
    %v8168 = vpop.f32.mrb[0].mxu0
    %v8169 = vadd.f32 0.0, %v8168
    %v8170 = vpop.f32.mrb[0].mxu0
    %8171 = vmatprep.mubr.f32.mxu0 0.0
    %8172 = vmatmul.mubr.f32.gmra.mrb[0].mxu0 %v8032
    %v8173 = vpop.f32.mrb[0].mxu0
    %v8174 = vadd.f32 0.0, %v8173
    %v8175 = vpop.f32.mrb[0].mxu0
    %8176 = vmatprep.mubr.f32.mxu0 0.0
    %8177 = vmatmul.mubr.f32.gmra.mrb[0].mxu0 %v8035
    %v8178 = vpop.f32.mrb[0].mxu0
    %v8179 = vadd.f32 0.0, %v8178
    %v8180 = vpop.f32.mrb[0].mxu0
    %8181 = vdwg.mxu0
    %v8182 = vadd.f32 %v7955, %v8104
    %v8183 = vadd.f32 %v7956, %v8109
    %v8184 = vadd.f32 %v7957, %v8114
    %v8185 = vadd.f32 %v7958, %v8119
    %v8186 = vadd.f32 %v7959, %v8124
    %v8187 = vadd.f32 %v7960, %v8129
    %v8188 = vadd.f32 %v7961, %v8134
    %v8189 = vadd.f32 %v7962, %v8139
    %v8190 = vadd.f32 %v7963, %v8144
    %v8191 = vadd.f32 %v7964, %v8149
    %v8192 = vadd.f32 %v7965, %v8154
    %v8193 = vadd.f32 %v7966, %v8159
    %v8194 = vadd.f32 %v7967, %v8164
    %v8195 = vadd.f32 %v7968, %v8169
    %v8196 = vadd.f32 %v7969, %v8174
    %v8197 = vadd.f32 %v7970, %v8179
    %v8198 = vld [vmem:[%s7306 + $0x1] sm:$0xff]
    %v8199 = vld [vmem:[%s7306 + $0x11] sm:$0xff]
    %v8200 = vld [vmem:[%s7306 + $0x21] sm:$0xff]
    %v8201 = vld [vmem:[%s7306 + $0x31] sm:$0xff]
    %v8202 = vld [vmem:[%s7306 + $0x41] sm:$0xff]
    %v8203 = vld [vmem:[%s7306 + $0x51] sm:$0xff]
    %v8204 = vld [vmem:[%s7306 + $0x61] sm:$0xff]
    %v8205 = vld [vmem:[%s7306 + $0x71] sm:$0xff]
    %v8206 = vld [vmem:[%s7306 + $0xa1] sm:$0xff]
    %v8207 = vld [vmem:[%s7306 + $0xb1] sm:$0xff]
    %v8208 = vld [vmem:[%s7306 + $0xc1] sm:$0xff]
    %v8209 = vld [vmem:[%s7306 + $0xd1] sm:$0xff]
    %v8210 = vld [vmem:[%s7306 + $0xe1] sm:$0xff]
    %v8211 = vld [vmem:[%s7306 + $0xf1] sm:$0xff]
    %v8212 = vld [vmem:[%s7306 + $0x101] sm:$0xff]
    %v8213 = vld [vmem:[%s7306 + $0x111] sm:$0xff]
    %s8214 = scalar_lea.vmem %s3, 32
    %v8215 = vld [vmem:[%s8214] sm:$0xff]
    %v8217 = vsel %vm6668, %v8198, 0
    %v8220 = vsel %vm6668, %v8199, 0
    %v8223 = vsel %vm6668, %v8200, 0
    %v8226 = vsel %vm6668, %v8201, 0
    %v8229 = vsel %vm6668, %v8202, 0
    %v8232 = vsel %vm6668, %v8203, 0
    %v8235 = vsel %vm6668, %v8204, 0
    %v8238 = vsel %vm6668, %v8205, 0
    %v8241 = vsel %vm6668, %v8206, 0
    %v8244 = vsel %vm6668, %v8207, 0
    %v8247 = vsel %vm6668, %v8208, 0
    %v8250 = vsel %vm6668, %v8209, 0
    %v8253 = vsel %vm6668, %v8210, 0
    %v8256 = vsel %vm6668, %v8211, 0
    %v8259 = vsel %vm6668, %v8212, 0
    %v8262 = vsel %vm6668, %v8213, 0
    %8264 = vmatprep.subr.mxu0 0.0
    %8265 = vmatpush1.msra.mxu0 %v8215
    %8266 = vmatprep.subr.mxu0 0.0
    %8267 = vmatpush1.msra.mxu0 0.0
    %8268 = vmatprep.subr.mxu0 0.0
    %8269 = vmatpush1.msra.mxu0 0.0
    %8270 = vmatprep.subr.mxu0 0.0
    %8271 = vmatpush1.msra.mxu0 0.0
    %8272 = vmatprep.subr.mxu0 0.0
    %8273 = vmatpush1.msra.mxu0 0.0
    %8274 = vmatprep.subr.mxu0 0.0
    %8275 = vmatpush1.msra.mxu0 0.0
    %8276 = vmatprep.subr.mxu0 0.0
    %8277 = vmatpush1.msra.mxu0 0.0
    %8278 = vmatprep.subr.mxu0 0.0
    %8279 = vmatpush1.msra.mxu0 0.0
    %8280 = vmatprep.subr.mxu0 0.0
    %8281 = vmatpush1.msra.mxu0 0.0
    %8282 = vmatprep.subr.mxu0 0.0
    %8283 = vmatpush1.msra.mxu0 0.0
    %8284 = vmatprep.subr.mxu0 0.0
    %8285 = vmatpush1.msra.mxu0 0.0
    %8286 = vmatprep.subr.mxu0 0.0
    %8287 = vmatpush1.msra.mxu0 0.0
    %8288 = vmatprep.subr.mxu0 0.0
    %8289 = vmatpush1.msra.mxu0 0.0
    %8290 = vmatprep.subr.mxu0 0.0
    %8291 = vmatpush1.msra.mxu0 0.0
    %8292 = vmatprep.subr.mxu0 0.0
    %8293 = vmatpush1.msra.mxu0 0.0
    %8294 = vmatprep.subr.mxu0 0.0
    %8295 = vmatpush1.msra.mxu0 0.0
    %8296 = vmatprep.subr.mxu0 0.0
    %8297 = vmatpush1.msra.mxu0 0.0
    %8298 = vmatprep.subr.mxu0 0.0
    %8299 = vmatpush1.msra.mxu0 0.0
    %8300 = vmatprep.subr.mxu0 0.0
    %8301 = vmatpush1.msra.mxu0 0.0
    %8302 = vmatprep.subr.mxu0 0.0
    %8303 = vmatpush1.msra.mxu0 0.0
    %8304 = vmatprep.subr.mxu0 0.0
    %8305 = vmatpush1.msra.mxu0 0.0
    %8306 = vmatprep.subr.mxu0 0.0
    %8307 = vmatpush1.msra.mxu0 0.0
    %8308 = vmatprep.subr.mxu0 0.0
    %8309 = vmatpush1.msra.mxu0 0.0
    %8310 = vmatprep.subr.mxu0 0.0
    %8311 = vmatpush1.msra.mxu0 0.0
    %8312 = vmatprep.subr.mxu0 0.0
    %8313 = vmatpush1.msra.mxu0 0.0
    %8314 = vmatprep.subr.mxu0 0.0
    %8315 = vmatpush1.msra.mxu0 0.0
    %8316 = vmatprep.subr.mxu0 0.0
    %8317 = vmatpush1.msra.mxu0 0.0
    %8318 = vmatprep.subr.mxu0 0.0
    %8319 = vmatpush1.msra.mxu0 0.0
    %8320 = vmatprep.subr.mxu0 0.0
    %8321 = vmatpush1.msra.mxu0 0.0
    %8322 = vmatprep.subr.mxu0 0.0
    %8323 = vmatpush1.msra.mxu0 0.0
    %8324 = vmatprep.subr.mxu0 0.0
    %8325 = vmatpush1.msra.mxu0 0.0
    %8326 = vmatprep.subr.mxu0 0.0
    %8327 = vmatpush1.msra.mxu0 0.0
    %8328 = vmatprep.mubr.f32.mxu0 0.0
    %8329 = vmatmul.mubr.f32.gmra.mrb[0].mxu0 %v8217
    %v8330 = vpop.f32.mrb[0].mxu0
    %v8331 = vadd.f32 0.0, %v8330
    %v8332 = vpop.f32.mrb[0].mxu0
    %8333 = vmatprep.mubr.f32.mxu0 0.0
    %8334 = vmatmul.mubr.f32.gmra.mrb[0].mxu0 %v8220
    %v8335 = vpop.f32.mrb[0].mxu0
    %v8336 = vadd.f32 0.0, %v8335
    %v8337 = vpop.f32.mrb[0].mxu0
    %8338 = vmatprep.mubr.f32.mxu0 0.0
    %8339 = vmatmul.mubr.f32.gmra.mrb[0].mxu0 %v8223
    %v8340 = vpop.f32.mrb[0].mxu0
    %v8341 = vadd.f32 0.0, %v8340
    %v8342 = vpop.f32.mrb[0].mxu0
    %8343 = vmatprep.mubr.f32.mxu0 0.0
    %8344 = vmatmul.mubr.f32.gmra.mrb[0].mxu0 %v8226
    %v8345 = vpop.f32.mrb[0].mxu0
    %v8346 = vadd.f32 0.0, %v8345
    %v8347 = vpop.f32.mrb[0].mxu0
    %8348 = vmatprep.mubr.f32.mxu0 0.0
    %8349 = vmatmul.mubr.f32.gmra.mrb[0].mxu0 %v8229
    %v8350 = vpop.f32.mrb[0].mxu0
    %v8351 = vadd.f32 0.0, %v8350
    %v8352 = vpop.f32.mrb[0].mxu0
    %8353 = vmatprep.mubr.f32.mxu0 0.0
    %8354 = vmatmul.mubr.f32.gmra.mrb[0].mxu0 %v8232
    %v8355 = vpop.f32.mrb[0].mxu0
    %v8356 = vadd.f32 0.0, %v8355
    %v8357 = vpop.f32.mrb[0].mxu0
    %8358 = vmatprep.mubr.f32.mxu0 0.0
    %8359 = vmatmul.mubr.f32.gmra.mrb[0].mxu0 %v8235
    %v8360 = vpop.f32.mrb[0].mxu0
    %v8361 = vadd.f32 0.0, %v8360
    %v8362 = vpop.f32.mrb[0].mxu0
    %8363 = vmatprep.mubr.f32.mxu0 0.0
    %8364 = vmatmul.mubr.f32.gmra.mrb[0].mxu0 %v8238
    %v8365 = vpop.f32.mrb[0].mxu0
    %v8366 = vadd.f32 0.0, %v8365
    %v8367 = vpop.f32.mrb[0].mxu0
    %8368 = vmatprep.mubr.f32.mxu0 0.0
    %8369 = vmatmul.mubr.f32.gmra.mrb[0].mxu0 %v8241
    %v8370 = vpop.f32.mrb[0].mxu0
    %v8371 = vadd.f32 0.0, %v8370
    %v8372 = vpop.f32.mrb[0].mxu0
    %8373 = vmatprep.mubr.f32.mxu0 0.0
    %8374 = vmatmul.mubr.f32.gmra.mrb[0].mxu0 %v8244
    %v8375 = vpop.f32.mrb[0].mxu0
    %v8376 = vadd.f32 0.0, %v8375
    %v8377 = vpop.f32.mrb[0].mxu0
    %8378 = vmatprep.mubr.f32.mxu0 0.0
    %8379 = vmatmul.mubr.f32.gmra.mrb[0].mxu0 %v8247
    %v8380 = vpop.f32.mrb[0].mxu0
    %v8381 = vadd.f32 0.0, %v8380
    %v8382 = vpop.f32.mrb[0].mxu0
    %8383 = vmatprep.mubr.f32.mxu0 0.0
    %8384 = vmatmul.mubr.f32.gmra.mrb[0].mxu0 %v8250
    %v8385 = vpop.f32.mrb[0].mxu0
    %v8386 = vadd.f32 0.0, %v8385
    %v8387 = vpop.f32.mrb[0].mxu0
    %8388 = vmatprep.mubr.f32.mxu0 0.0
    %8389 = vmatmul.mubr.f32.gmra.mrb[0].mxu0 %v8253
    %v8390 = vpop.f32.mrb[0].mxu0
    %v8391 = vadd.f32 0.0, %v8390
    %v8392 = vpop.f32.mrb[0].mxu0
    %8393 = vmatprep.mubr.f32.mxu0 0.0
    %8394 = vmatmul.mubr.f32.gmra.mrb[0].mxu0 %v8256
    %v8395 = vpop.f32.mrb[0].mxu0
    %v8396 = vadd.f32 0.0, %v8395
    %v8397 = vpop.f32.mrb[0].mxu0
    %8398 = vmatprep.mubr.f32.mxu0 0.0
    %8399 = vmatmul.mubr.f32.gmra.mrb[0].mxu0 %v8259
    %v8400 = vpop.f32.mrb[0].mxu0
    %v8401 = vadd.f32 0.0, %v8400
    %v8402 = vpop.f32.mrb[0].mxu0
    %8403 = vmatprep.mubr.f32.mxu0 0.0
    %8404 = vmatmul.mubr.f32.gmra.mrb[0].mxu0 %v8262
    %v8405 = vpop.f32.mrb[0].mxu0
    %v8406 = vadd.f32 0.0, %v8405
    %v8407 = vpop.f32.mrb[0].mxu0
    %8408 = vdwg.mxu0
    %v8409 = vadd.f32 %v8182, %v8331
    %v8410 = vadd.f32 %v8183, %v8336
    %v8411 = vadd.f32 %v8184, %v8341
    %v8412 = vadd.f32 %v8185, %v8346
    %v8413 = vadd.f32 %v8186, %v8351
    %v8414 = vadd.f32 %v8187, %v8356
    %v8415 = vadd.f32 %v8188, %v8361
    %v8416 = vadd.f32 %v8189, %v8366
    %v8417 = vadd.f32 %v8190, %v8371
    %v8418 = vadd.f32 %v8191, %v8376
    %v8419 = vadd.f32 %v8192, %v8381
    %v8420 = vadd.f32 %v8193, %v8386
    %v8421 = vadd.f32 %v8194, %v8391
    %v8422 = vadd.f32 %v8195, %v8396
    %v8423 = vadd.f32 %v8196, %v8401
    %v8424 = vadd.f32 %v8197, %v8406
    %v8425 = vld [vmem:[%s7306 + $0x2] sm:$0xff]
    %v8426 = vld [vmem:[%s7306 + $0x12] sm:$0xff]
    %v8427 = vld [vmem:[%s7306 + $0x22] sm:$0xff]
    %v8428 = vld [vmem:[%s7306 + $0x32] sm:$0xff]
    %v8429 = vld [vmem:[%s7306 + $0x42] sm:$0xff]
    %v8430 = vld [vmem:[%s7306 + $0x52] sm:$0xff]
    %v8431 = vld [vmem:[%s7306 + $0x62] sm:$0xff]
    %v8432 = vld [vmem:[%s7306 + $0x72] sm:$0xff]
    %v8433 = vld [vmem:[%s7306 + $0xa2] sm:$0xff]
    %v8434 = vld [vmem:[%s7306 + $0xb2] sm:$0xff]
    %v8435 = vld [vmem:[%s7306 + $0xc2] sm:$0xff]
    %v8436 = vld [vmem:[%s7306 + $0xd2] sm:$0xff]
    %v8437 = vld [vmem:[%s7306 + $0xe2] sm:$0xff]
    %v8438 = vld [vmem:[%s7306 + $0xf2] sm:$0xff]
    %v8439 = vld [vmem:[%s7306 + $0x102] sm:$0xff]
    %v8440 = vld [vmem:[%s7306 + $0x112] sm:$0xff]
    %s8441 = scalar_lea.vmem %s3, 40
    %v8442 = vld [vmem:[%s8441] sm:$0xff]
    %v8444 = vsel %vm6668, %v8425, 0
    %v8447 = vsel %vm6668, %v8426, 0
    %v8450 = vsel %vm6668, %v8427, 0
    %v8453 = vsel %vm6668, %v8428, 0
    %v8456 = vsel %vm6668, %v8429, 0
    %v8459 = vsel %vm6668, %v8430, 0
    %v8462 = vsel %vm6668, %v8431, 0
    %v8465 = vsel %vm6668, %v8432, 0
    %v8468 = vsel %vm6668, %v8433, 0
    %v8471 = vsel %vm6668, %v8434, 0
    %v8474 = vsel %vm6668, %v8435, 0
    %v8477 = vsel %vm6668, %v8436, 0
    %v8480 = vsel %vm6668, %v8437, 0
    %v8483 = vsel %vm6668, %v8438, 0
    %v8486 = vsel %vm6668, %v8439, 0
    %v8489 = vsel %vm6668, %v8440, 0
    %8491 = vmatprep.subr.mxu0 0.0
    %8492 = vmatpush1.msra.mxu0 %v8442
    %8493 = vmatprep.subr.mxu0 0.0
    %8494 = vmatpush1.msra.mxu0 0.0
    %8495 = vmatprep.subr.mxu0 0.0
    %8496 = vmatpush1.msra.mxu0 0.0
    %8497 = vmatprep.subr.mxu0 0.0
    %8498 = vmatpush1.msra.mxu0 0.0
    %8499 = vmatprep.subr.mxu0 0.0
    %8500 = vmatpush1.msra.mxu0 0.0
    %8501 = vmatprep.subr.mxu0 0.0
    %8502 = vmatpush1.msra.mxu0 0.0
    %8503 = vmatprep.subr.mxu0 0.0
    %8504 = vmatpush1.msra.mxu0 0.0
    %8505 = vmatprep.subr.mxu0 0.0
    %8506 = vmatpush1.msra.mxu0 0.0
    %8507 = vmatprep.subr.mxu0 0.0
    %8508 = vmatpush1.msra.mxu0 0.0
    %8509 = vmatprep.subr.mxu0 0.0
    %8510 = vmatpush1.msra.mxu0 0.0
    %8511 = vmatprep.subr.mxu0 0.0
    %8512 = vmatpush1.msra.mxu0 0.0
    %8513 = vmatprep.subr.mxu0 0.0
    %8514 = vmatpush1.msra.mxu0 0.0
    %8515 = vmatprep.subr.mxu0 0.0
    %8516 = vmatpush1.msra.mxu0 0.0
    %8517 = vmatprep.subr.mxu0 0.0
    %8518 = vmatpush1.msra.mxu0 0.0
    %8519 = vmatprep.subr.mxu0 0.0
    %8520 = vmatpush1.msra.mxu0 0.0
    %8521 = vmatprep.subr.mxu0 0.0
    %8522 = vmatpush1.msra.mxu0 0.0
    %8523 = vmatprep.subr.mxu0 0.0
    %8524 = vmatpush1.msra.mxu0 0.0
    %8525 = vmatprep.subr.mxu0 0.0
    %8526 = vmatpush1.msra.mxu0 0.0
    %8527 = vmatprep.subr.mxu0 0.0
    %8528 = vmatpush1.msra.mxu0 0.0
    %8529 = vmatprep.subr.mxu0 0.0
    %8530 = vmatpush1.msra.mxu0 0.0
    %8531 = vmatprep.subr.mxu0 0.0
    %8532 = vmatpush1.msra.mxu0 0.0
    %8533 = vmatprep.subr.mxu0 0.0
    %8534 = vmatpush1.msra.mxu0 0.0
    %8535 = vmatprep.subr.mxu0 0.0
    %8536 = vmatpush1.msra.mxu0 0.0
    %8537 = vmatprep.subr.mxu0 0.0
    %8538 = vmatpush1.msra.mxu0 0.0
    %8539 = vmatprep.subr.mxu0 0.0
    %8540 = vmatpush1.msra.mxu0 0.0
    %8541 = vmatprep.subr.mxu0 0.0
    %8542 = vmatpush1.msra.mxu0 0.0
    %8543 = vmatprep.subr.mxu0 0.0
    %8544 = vmatpush1.msra.mxu0 0.0
    %8545 = vmatprep.subr.mxu0 0.0
    %8546 = vmatpush1.msra.mxu0 0.0
    %8547 = vmatprep.subr.mxu0 0.0
    %8548 = vmatpush1.msra.mxu0 0.0
    %8549 = vmatprep.subr.mxu0 0.0
    %8550 = vmatpush1.msra.mxu0 0.0
    %8551 = vmatprep.subr.mxu0 0.0
    %8552 = vmatpush1.msra.mxu0 0.0
    %8553 = vmatprep.subr.mxu0 0.0
    %8554 = vmatpush1.msra.mxu0 0.0
    %8555 = vmatprep.mubr.f32.mxu0 0.0
    %8556 = vmatmul.mubr.f32.gmra.mrb[0].mxu0 %v8444
    %v8557 = vpop.f32.mrb[0].mxu0
    %v8558 = vadd.f32 0.0, %v8557
    %v8559 = vpop.f32.mrb[0].mxu0
    %8560 = vmatprep.mubr.f32.mxu0 0.0
    %8561 = vmatmul.mubr.f32.gmra.mrb[0].mxu0 %v8447
    %v8562 = vpop.f32.mrb[0].mxu0
    %v8563 = vadd.f32 0.0, %v8562
    %v8564 = vpop.f32.mrb[0].mxu0
    %8565 = vmatprep.mubr.f32.mxu0 0.0
    %8566 = vmatmul.mubr.f32.gmra.mrb[0].mxu0 %v8450
    %v8567 = vpop.f32.mrb[0].mxu0
    %v8568 = vadd.f32 0.0, %v8567
    %v8569 = vpop.f32.mrb[0].mxu0
    %8570 = vmatprep.mubr.f32.mxu0 0.0
    %8571 = vmatmul.mubr.f32.gmra.mrb[0].mxu0 %v8453
    %v8572 = vpop.f32.mrb[0].mxu0
    %v8573 = vadd.f32 0.0, %v8572
    %v8574 = vpop.f32.mrb[0].mxu0
    %8575 = vmatprep.mubr.f32.mxu0 0.0
    %8576 = vmatmul.mubr.f32.gmra.mrb[0].mxu0 %v8456
    %v8577 = vpop.f32.mrb[0].mxu0
    %v8578 = vadd.f32 0.0, %v8577
    %v8579 = vpop.f32.mrb[0].mxu0
    %8580 = vmatprep.mubr.f32.mxu0 0.0
    %8581 = vmatmul.mubr.f32.gmra.mrb[0].mxu0 %v8459
    %v8582 = vpop.f32.mrb[0].mxu0
    %v8583 = vadd.f32 0.0, %v8582
    %v8584 = vpop.f32.mrb[0].mxu0
    %8585 = vmatprep.mubr.f32.mxu0 0.0
    %8586 = vmatmul.mubr.f32.gmra.mrb[0].mxu0 %v8462
    %v8587 = vpop.f32.mrb[0].mxu0
    %v8588 = vadd.f32 0.0, %v8587
    %v8589 = vpop.f32.mrb[0].mxu0
    %8590 = vmatprep.mubr.f32.mxu0 0.0
    %8591 = vmatmul.mubr.f32.gmra.mrb[0].mxu0 %v8465
    %v8592 = vpop.f32.mrb[0].mxu0
    %v8593 = vadd.f32 0.0, %v8592
    %v8594 = vpop.f32.mrb[0].mxu0
    %8595 = vmatprep.mubr.f32.mxu0 0.0
    %8596 = vmatmul.mubr.f32.gmra.mrb[0].mxu0 %v8468
    %v8597 = vpop.f32.mrb[0].mxu0
    %v8598 = vadd.f32 0.0, %v8597
    %v8599 = vpop.f32.mrb[0].mxu0
    %8600 = vmatprep.mubr.f32.mxu0 0.0
    %8601 = vmatmul.mubr.f32.gmra.mrb[0].mxu0 %v8471
    %v8602 = vpop.f32.mrb[0].mxu0
    %v8603 = vadd.f32 0.0, %v8602
    %v8604 = vpop.f32.mrb[0].mxu0
    %8605 = vmatprep.mubr.f32.mxu0 0.0
    %8606 = vmatmul.mubr.f32.gmra.mrb[0].mxu0 %v8474
    %v8607 = vpop.f32.mrb[0].mxu0
    %v8608 = vadd.f32 0.0, %v8607
    %v8609 = vpop.f32.mrb[0].mxu0
    %8610 = vmatprep.mubr.f32.mxu0 0.0
    %8611 = vmatmul.mubr.f32.gmra.mrb[0].mxu0 %v8477
    %v8612 = vpop.f32.mrb[0].mxu0
    %v8613 = vadd.f32 0.0, %v8612
    %v8614 = vpop.f32.mrb[0].mxu0
    %8615 = vmatprep.mubr.f32.mxu0 0.0
    %8616 = vmatmul.mubr.f32.gmra.mrb[0].mxu0 %v8480
    %v8617 = vpop.f32.mrb[0].mxu0
    %v8618 = vadd.f32 0.0, %v8617
    %v8619 = vpop.f32.mrb[0].mxu0
    %8620 = vmatprep.mubr.f32.mxu0 0.0
    %8621 = vmatmul.mubr.f32.gmra.mrb[0].mxu0 %v8483
    %v8622 = vpop.f32.mrb[0].mxu0
    %v8623 = vadd.f32 0.0, %v8622
    %v8624 = vpop.f32.mrb[0].mxu0
    %8625 = vmatprep.mubr.f32.mxu0 0.0
    %8626 = vmatmul.mubr.f32.gmra.mrb[0].mxu0 %v8486
    %v8627 = vpop.f32.mrb[0].mxu0
    %v8628 = vadd.f32 0.0, %v8627
    %v8629 = vpop.f32.mrb[0].mxu0
    %8630 = vmatprep.mubr.f32.mxu0 0.0
    %8631 = vmatmul.mubr.f32.gmra.mrb[0].mxu0 %v8489
    %v8632 = vpop.f32.mrb[0].mxu0
    %v8633 = vadd.f32 0.0, %v8632
    %v8634 = vpop.f32.mrb[0].mxu0
    %8635 = vdwg.mxu0
    %v8636 = vadd.f32 %v8409, %v8558
    %v8637 = vadd.f32 %v8410, %v8563
    %v8638 = vadd.f32 %v8411, %v8568
    %v8639 = vadd.f32 %v8412, %v8573
    %v8640 = vadd.f32 %v8413, %v8578
    %v8641 = vadd.f32 %v8414, %v8583
    %v8642 = vadd.f32 %v8415, %v8588
    %v8643 = vadd.f32 %v8416, %v8593
    %v8644 = vadd.f32 %v8417, %v8598
    %v8645 = vadd.f32 %v8418, %v8603
    %v8646 = vadd.f32 %v8419, %v8608
    %v8647 = vadd.f32 %v8420, %v8613
    %v8648 = vadd.f32 %v8421, %v8618
    %v8649 = vadd.f32 %v8422, %v8623
    %v8650 = vadd.f32 %v8423, %v8628
    %v8651 = vadd.f32 %v8424, %v8633
    %s8652 = scalar_lea.vmem [#allocation5], 32
    %v8653 = vld [vmem:[%s8652] sm:$0xff]
    %v8654 = vld [vmem:[%s8652 + $0x10] sm:$0xff]
    %v8655 = vld [vmem:[%s8652 + $0x20] sm:$0xff]
    %v8656 = vld [vmem:[%s8652 + $0x30] sm:$0xff]
    %v8657 = vld [vmem:[%s8652 + $0x40] sm:$0xff]
    %v8658 = vld [vmem:[%s8652 + $0x50] sm:$0xff]
    %v8659 = vld [vmem:[%s8652 + $0x60] sm:$0xff]
    %v8660 = vld [vmem:[%s8652 + $0x70] sm:$0xff]
    %v8661 = vld [vmem:[%s8652 + $0xa0] sm:$0xff]
    %v8662 = vld [vmem:[%s8652 + $0xb0] sm:$0xff]
    %v8663 = vld [vmem:[%s8652 + $0xc0] sm:$0xff]
    %v8664 = vld [vmem:[%s8652 + $0xd0] sm:$0xff]
    %v8665 = vld [vmem:[%s8652 + $0xe0] sm:$0xff]
    %v8666 = vld [vmem:[%s8652 + $0xf0] sm:$0xff]
    %v8667 = vld [vmem:[%s8652 + $0x100] sm:$0xff]
    %v8668 = vld [vmem:[%s8652 + $0x110] sm:$0xff]
    %s8669 = scalar_lea.vmem %s3, 48
    %v8670 = vld [vmem:[%s8669] sm:$0xff]
    %v8672 = vsel %vm6668, %v8653, 0
    %v8675 = vsel %vm6668, %v8654, 0
    %v8678 = vsel %vm6668, %v8655, 0
    %v8681 = vsel %vm6668, %v8656, 0
    %v8684 = vsel %vm6668, %v8657, 0
    %v8687 = vsel %vm6668, %v8658, 0
    %v8690 = vsel %vm6668, %v8659, 0
    %v8693 = vsel %vm6668, %v8660, 0
    %v8696 = vsel %vm6668, %v8661, 0
    %v8699 = vsel %vm6668, %v8662, 0
    %v8702 = vsel %vm6668, %v8663, 0
    %v8705 = vsel %vm6668, %v8664, 0
    %v8708 = vsel %vm6668, %v8665, 0
    %v8711 = vsel %vm6668, %v8666, 0
    %v8714 = vsel %vm6668, %v8667, 0
    %v8717 = vsel %vm6668, %v8668, 0
    %8719 = vmatprep.subr.mxu0 0.0
    %8720 = vmatpush1.msra.mxu0 %v8670
    %8721 = vmatprep.subr.mxu0 0.0
    %8722 = vmatpush1.msra.mxu0 0.0
    %8723 = vmatprep.subr.mxu0 0.0
    %8724 = vmatpush1.msra.mxu0 0.0
    %8725 = vmatprep.subr.mxu0 0.0
    %8726 = vmatpush1.msra.mxu0 0.0
    %8727 = vmatprep.subr.mxu0 0.0
    %8728 = vmatpush1.msra.mxu0 0.0
    %8729 = vmatprep.subr.mxu0 0.0
    %8730 = vmatpush1.msra.mxu0 0.0
    %8731 = vmatprep.subr.mxu0 0.0
    %8732 = vmatpush1.msra.mxu0 0.0
    %8733 = vmatprep.subr.mxu0 0.0
    %8734 = vmatpush1.msra.mxu0 0.0
    %8735 = vmatprep.subr.mxu0 0.0
    %8736 = vmatpush1.msra.mxu0 0.0
    %8737 = vmatprep.subr.mxu0 0.0
    %8738 = vmatpush1.msra.mxu0 0.0
    %8739 = vmatprep.subr.mxu0 0.0
    %8740 = vmatpush1.msra.mxu0 0.0
    %8741 = vmatprep.subr.mxu0 0.0
    %8742 = vmatpush1.msra.mxu0 0.0
    %8743 = vmatprep.subr.mxu0 0.0
    %8744 = vmatpush1.msra.mxu0 0.0
    %8745 = vmatprep.subr.mxu0 0.0
    %8746 = vmatpush1.msra.mxu0 0.0
    %8747 = vmatprep.subr.mxu0 0.0
    %8748 = vmatpush1.msra.mxu0 0.0
    %8749 = vmatprep.subr.mxu0 0.0
    %8750 = vmatpush1.msra.mxu0 0.0
    %8751 = vmatprep.subr.mxu0 0.0
    %8752 = vmatpush1.msra.mxu0 0.0
    %8753 = vmatprep.subr.mxu0 0.0
    %8754 = vmatpush1.msra.mxu0 0.0
    %8755 = vmatprep.subr.mxu0 0.0
    %8756 = vmatpush1.msra.mxu0 0.0
    %8757 = vmatprep.subr.mxu0 0.0
    %8758 = vmatpush1.msra.mxu0 0.0
    %8759 = vmatprep.subr.mxu0 0.0
    %8760 = vmatpush1.msra.mxu0 0.0
    %8761 = vmatprep.subr.mxu0 0.0
    %8762 = vmatpush1.msra.mxu0 0.0
    %8763 = vmatprep.subr.mxu0 0.0
    %8764 = vmatpush1.msra.mxu0 0.0
    %8765 = vmatprep.subr.mxu0 0.0
    %8766 = vmatpush1.msra.mxu0 0.0
    %8767 = vmatprep.subr.mxu0 0.0
    %8768 = vmatpush1.msra.mxu0 0.0
    %8769 = vmatprep.subr.mxu0 0.0
    %8770 = vmatpush1.msra.mxu0 0.0
    %8771 = vmatprep.subr.mxu0 0.0
    %8772 = vmatpush1.msra.mxu0 0.0
    %8773 = vmatprep.subr.mxu0 0.0
    %8774 = vmatpush1.msra.mxu0 0.0
    %8775 = vmatprep.subr.mxu0 0.0
    %8776 = vmatpush1.msra.mxu0 0.0
    %8777 = vmatprep.subr.mxu0 0.0
    %8778 = vmatpush1.msra.mxu0 0.0
    %8779 = vmatprep.subr.mxu0 0.0
    %8780 = vmatpush1.msra.mxu0 0.0
    %8781 = vmatprep.subr.mxu0 0.0
    %8782 = vmatpush1.msra.mxu0 0.0
    %8783 = vmatprep.mubr.f32.mxu0 0.0
    %8784 = vmatmul.mubr.f32.gmra.mrb[0].mxu0 %v8672
    %v8785 = vpop.f32.mrb[0].mxu0
    %v8786 = vadd.f32 0.0, %v8785
    %v8787 = vpop.f32.mrb[0].mxu0
    %8788 = vmatprep.mubr.f32.mxu0 0.0
    %8789 = vmatmul.mubr.f32.gmra.mrb[0].mxu0 %v8675
    %v8790 = vpop.f32.mrb[0].mxu0
    %v8791 = vadd.f32 0.0, %v8790
    %v8792 = vpop.f32.mrb[0].mxu0
    %8793 = vmatprep.mubr.f32.mxu0 0.0
    %8794 = vmatmul.mubr.f32.gmra.mrb[0].mxu0 %v8678
    %v8795 = vpop.f32.mrb[0].mxu0
    %v8796 = vadd.f32 0.0, %v8795
    %v8797 = vpop.f32.mrb[0].mxu0
    %8798 = vmatprep.mubr.f32.mxu0 0.0
    %8799 = vmatmul.mubr.f32.gmra.mrb[0].mxu0 %v8681
    %v8800 = vpop.f32.mrb[0].mxu0
    %v8801 = vadd.f32 0.0, %v8800
    %v8802 = vpop.f32.mrb[0].mxu0
    %8803 = vmatprep.mubr.f32.mxu0 0.0
    %8804 = vmatmul.mubr.f32.gmra.mrb[0].mxu0 %v8684
    %v8805 = vpop.f32.mrb[0].mxu0
    %v8806 = vadd.f32 0.0, %v8805
    %v8807 = vpop.f32.mrb[0].mxu0
    %8808 = vmatprep.mubr.f32.mxu0 0.0
    %8809 = vmatmul.mubr.f32.gmra.mrb[0].mxu0 %v8687
    %v8810 = vpop.f32.mrb[0].mxu0
    %v8811 = vadd.f32 0.0, %v8810
    %v8812 = vpop.f32.mrb[0].mxu0
    %8813 = vmatprep.mubr.f32.mxu0 0.0
    %8814 = vmatmul.mubr.f32.gmra.mrb[0].mxu0 %v8690
    %v8815 = vpop.f32.mrb[0].mxu0
    %v8816 = vadd.f32 0.0, %v8815
    %v8817 = vpop.f32.mrb[0].mxu0
    %8818 = vmatprep.mubr.f32.mxu0 0.0
    %8819 = vmatmul.mubr.f32.gmra.mrb[0].mxu0 %v8693
    %v8820 = vpop.f32.mrb[0].mxu0
    %v8821 = vadd.f32 0.0, %v8820
    %v8822 = vpop.f32.mrb[0].mxu0
    %8823 = vmatprep.mubr.f32.mxu0 0.0
    %8824 = vmatmul.mubr.f32.gmra.mrb[0].mxu0 %v8696
    %v8825 = vpop.f32.mrb[0].mxu0
    %v8826 = vadd.f32 0.0, %v8825
    %v8827 = vpop.f32.mrb[0].mxu0
    %8828 = vmatprep.mubr.f32.mxu0 0.0
    %8829 = vmatmul.mubr.f32.gmra.mrb[0].mxu0 %v8699
    %v8830 = vpop.f32.mrb[0].mxu0
    %v8831 = vadd.f32 0.0, %v8830
    %v8832 = vpop.f32.mrb[0].mxu0
    %8833 = vmatprep.mubr.f32.mxu0 0.0
    %8834 = vmatmul.mubr.f32.gmra.mrb[0].mxu0 %v8702
    %v8835 = vpop.f32.mrb[0].mxu0
    %v8836 = vadd.f32 0.0, %v8835
    %v8837 = vpop.f32.mrb[0].mxu0
    %8838 = vmatprep.mubr.f32.mxu0 0.0
    %8839 = vmatmul.mubr.f32.gmra.mrb[0].mxu0 %v8705
    %v8840 = vpop.f32.mrb[0].mxu0
    %v8841 = vadd.f32 0.0, %v8840
    %v8842 = vpop.f32.mrb[0].mxu0
    %8843 = vmatprep.mubr.f32.mxu0 0.0
    %8844 = vmatmul.mubr.f32.gmra.mrb[0].mxu0 %v8708
    %v8845 = vpop.f32.mrb[0].mxu0
    %v8846 = vadd.f32 0.0, %v8845
    %v8847 = vpop.f32.mrb[0].mxu0
    %8848 = vmatprep.mubr.f32.mxu0 0.0
    %8849 = vmatmul.mubr.f32.gmra.mrb[0].mxu0 %v8711
    %v8850 = vpop.f32.mrb[0].mxu0
    %v8851 = vadd.f32 0.0, %v8850
    %v8852 = vpop.f32.mrb[0].mxu0
    %8853 = vmatprep.mubr.f32.mxu0 0.0
    %8854 = vmatmul.mubr.f32.gmra.mrb[0].mxu0 %v8714
    %v8855 = vpop.f32.mrb[0].mxu0
    %v8856 = vadd.f32 0.0, %v8855
    %v8857 = vpop.f32.mrb[0].mxu0
    %8858 = vmatprep.mubr.f32.mxu0 0.0
    %8859 = vmatmul.mubr.f32.gmra.mrb[0].mxu0 %v8717
    %v8860 = vpop.f32.mrb[0].mxu0
    %v8861 = vadd.f32 0.0, %v8860
    %v8862 = vpop.f32.mrb[0].mxu0
    %8863 = vdwg.mxu0
    %v8864 = vadd.f32 %v8636, %v8786
    %v8865 = vadd.f32 %v8637, %v8791
    %v8866 = vadd.f32 %v8638, %v8796
    %v8867 = vadd.f32 %v8639, %v8801
    %v8868 = vadd.f32 %v8640, %v8806
    %v8869 = vadd.f32 %v8641, %v8811
    %v8870 = vadd.f32 %v8642, %v8816
    %v8871 = vadd.f32 %v8643, %v8821
    %v8872 = vadd.f32 %v8644, %v8826
    %v8873 = vadd.f32 %v8645, %v8831
    %v8874 = vadd.f32 %v8646, %v8836
    %v8875 = vadd.f32 %v8647, %v8841
    %v8876 = vadd.f32 %v8648, %v8846
    %v8877 = vadd.f32 %v8649, %v8851
    %v8878 = vadd.f32 %v8650, %v8856
    %v8879 = vadd.f32 %v8651, %v8861
    %v8880 = vld [vmem:[%s8652 + $0x1] sm:$0xff]
    %v8881 = vld [vmem:[%s8652 + $0x11] sm:$0xff]
    %v8882 = vld [vmem:[%s8652 + $0x21] sm:$0xff]
    %v8883 = vld [vmem:[%s8652 + $0x31] sm:$0xff]
    %v8884 = vld [vmem:[%s8652 + $0x41] sm:$0xff]
    %v8885 = vld [vmem:[%s8652 + $0x51] sm:$0xff]
    %v8886 = vld [vmem:[%s8652 + $0x61] sm:$0xff]
    %v8887 = vld [vmem:[%s8652 + $0x71] sm:$0xff]
    %v8888 = vld [vmem:[%s8652 + $0xa1] sm:$0xff]
    %v8889 = vld [vmem:[%s8652 + $0xb1] sm:$0xff]
    %v8890 = vld [vmem:[%s8652 + $0xc1] sm:$0xff]
    %v8891 = vld [vmem:[%s8652 + $0xd1] sm:$0xff]
    %v8892 = vld [vmem:[%s8652 + $0xe1] sm:$0xff]
    %v8893 = vld [vmem:[%s8652 + $0xf1] sm:$0xff]
    %v8894 = vld [vmem:[%s8652 + $0x101] sm:$0xff]
    %v8895 = vld [vmem:[%s8652 + $0x111] sm:$0xff]
    %s8896 = scalar_lea.vmem %s3, 56
    %v8897 = vld [vmem:[%s8896] sm:$0xff]
    %v8899 = vsel %vm6668, %v8880, 0
    %v8902 = vsel %vm6668, %v8881, 0
    %v8905 = vsel %vm6668, %v8882, 0
    %v8908 = vsel %vm6668, %v8883, 0
    %v8911 = vsel %vm6668, %v8884, 0
    %v8914 = vsel %vm6668, %v8885, 0
    %v8917 = vsel %vm6668, %v8886, 0
    %v8920 = vsel %vm6668, %v8887, 0
    %v8923 = vsel %vm6668, %v8888, 0
    %v8926 = vsel %vm6668, %v8889, 0
    %v8929 = vsel %vm6668, %v8890, 0
    %v8932 = vsel %vm6668, %v8891, 0
    %v8935 = vsel %vm6668, %v8892, 0
    %v8938 = vsel %vm6668, %v8893, 0
    %v8941 = vsel %vm6668, %v8894, 0
    %v8944 = vsel %vm6668, %v8895, 0
    %8946 = vmatprep.subr.mxu0 0.0
    %8947 = vmatpush1.msra.mxu0 %v8897
    %8948 = vmatprep.subr.mxu0 0.0
    %8949 = vmatpush1.msra.mxu0 0.0
    %8950 = vmatprep.subr.mxu0 0.0
    %8951 = vmatpush1.msra.mxu0 0.0
    %8952 = vmatprep.subr.mxu0 0.0
    %8953 = vmatpush1.msra.mxu0 0.0
    %8954 = vmatprep.subr.mxu0 0.0
    %8955 = vmatpush1.msra.mxu0 0.0
    %8956 = vmatprep.subr.mxu0 0.0
    %8957 = vmatpush1.msra.mxu0 0.0
    %8958 = vmatprep.subr.mxu0 0.0
    %8959 = vmatpush1.msra.mxu0 0.0
    %8960 = vmatprep.subr.mxu0 0.0
    %8961 = vmatpush1.msra.mxu0 0.0
    %8962 = vmatprep.subr.mxu0 0.0
    %8963 = vmatpush1.msra.mxu0 0.0
    %8964 = vmatprep.subr.mxu0 0.0
    %8965 = vmatpush1.msra.mxu0 0.0
    %8966 = vmatprep.subr.mxu0 0.0
    %8967 = vmatpush1.msra.mxu0 0.0
    %8968 = vmatprep.subr.mxu0 0.0
    %8969 = vmatpush1.msra.mxu0 0.0
    %8970 = vmatprep.subr.mxu0 0.0
    %8971 = vmatpush1.msra.mxu0 0.0
    %8972 = vmatprep.subr.mxu0 0.0
    %8973 = vmatpush1.msra.mxu0 0.0
    %8974 = vmatprep.subr.mxu0 0.0
    %8975 = vmatpush1.msra.mxu0 0.0
    %8976 = vmatprep.subr.mxu0 0.0
    %8977 = vmatpush1.msra.mxu0 0.0
    %8978 = vmatprep.subr.mxu0 0.0
    %8979 = vmatpush1.msra.mxu0 0.0
    %8980 = vmatprep.subr.mxu0 0.0
    %8981 = vmatpush1.msra.mxu0 0.0
    %8982 = vmatprep.subr.mxu0 0.0
    %8983 = vmatpush1.msra.mxu0 0.0
    %8984 = vmatprep.subr.mxu0 0.0
    %8985 = vmatpush1.msra.mxu0 0.0
    %8986 = vmatprep.subr.mxu0 0.0
    %8987 = vmatpush1.msra.mxu0 0.0
    %8988 = vmatprep.subr.mxu0 0.0
    %8989 = vmatpush1.msra.mxu0 0.0
    %8990 = vmatprep.subr.mxu0 0.0
    %8991 = vmatpush1.msra.mxu0 0.0
    %8992 = vmatprep.subr.mxu0 0.0
    %8993 = vmatpush1.msra.mxu0 0.0
    %8994 = vmatprep.subr.mxu0 0.0
    %8995 = vmatpush1.msra.mxu0 0.0
    %8996 = vmatprep.subr.mxu0 0.0
    %8997 = vmatpush1.msra.mxu0 0.0
    %8998 = vmatprep.subr.mxu0 0.0
    %8999 = vmatpush1.msra.mxu0 0.0
    %9000 = vmatprep.subr.mxu0 0.0
    %9001 = vmatpush1.msra.mxu0 0.0
    %9002 = vmatprep.subr.mxu0 0.0
    %9003 = vmatpush1.msra.mxu0 0.0
    %9004 = vmatprep.subr.mxu0 0.0
    %9005 = vmatpush1.msra.mxu0 0.0
    %9006 = vmatprep.subr.mxu0 0.0
    %9007 = vmatpush1.msra.mxu0 0.0
    %9008 = vmatprep.subr.mxu0 0.0
    %9009 = vmatpush1.msra.mxu0 0.0
    %9010 = vmatprep.mubr.f32.mxu0 0.0
    %9011 = vmatmul.mubr.f32.gmra.mrb[0].mxu0 %v8899
    %v9012 = vpop.f32.mrb[0].mxu0
    %v9013 = vadd.f32 0.0, %v9012
    %v9014 = vpop.f32.mrb[0].mxu0
    %9015 = vmatprep.mubr.f32.mxu0 0.0
    %9016 = vmatmul.mubr.f32.gmra.mrb[0].mxu0 %v8902
    %v9017 = vpop.f32.mrb[0].mxu0
    %v9018 = vadd.f32 0.0, %v9017
    %v9019 = vpop.f32.mrb[0].mxu0
    %9020 = vmatprep.mubr.f32.mxu0 0.0
    %9021 = vmatmul.mubr.f32.gmra.mrb[0].mxu0 %v8905
    %v9022 = vpop.f32.mrb[0].mxu0
    %v9023 = vadd.f32 0.0, %v9022
    %v9024 = vpop.f32.mrb[0].mxu0
    %9025 = vmatprep.mubr.f32.mxu0 0.0
    %9026 = vmatmul.mubr.f32.gmra.mrb[0].mxu0 %v8908
    %v9027 = vpop.f32.mrb[0].mxu0
    %v9028 = vadd.f32 0.0, %v9027
    %v9029 = vpop.f32.mrb[0].mxu0
    %9030 = vmatprep.mubr.f32.mxu0 0.0
    %9031 = vmatmul.mubr.f32.gmra.mrb[0].mxu0 %v8911
    %v9032 = vpop.f32.mrb[0].mxu0
    %v9033 = vadd.f32 0.0, %v9032
    %v9034 = vpop.f32.mrb[0].mxu0
    %9035 = vmatprep.mubr.f32.mxu0 0.0
    %9036 = vmatmul.mubr.f32.gmra.mrb[0].mxu0 %v8914
    %v9037 = vpop.f32.mrb[0].mxu0
    %v9038 = vadd.f32 0.0, %v9037
    %v9039 = vpop.f32.mrb[0].mxu0
    %9040 = vmatprep.mubr.f32.mxu0 0.0
    %9041 = vmatmul.mubr.f32.gmra.mrb[0].mxu0 %v8917
    %v9042 = vpop.f32.mrb[0].mxu0
    %v9043 = vadd.f32 0.0, %v9042
    %v9044 = vpop.f32.mrb[0].mxu0
    %9045 = vmatprep.mubr.f32.mxu0 0.0
    %9046 = vmatmul.mubr.f32.gmra.mrb[0].mxu0 %v8920
    %v9047 = vpop.f32.mrb[0].mxu0
    %v9048 = vadd.f32 0.0, %v9047
    %v9049 = vpop.f32.mrb[0].mxu0
    %9050 = vmatprep.mubr.f32.mxu0 0.0
    %9051 = vmatmul.mubr.f32.gmra.mrb[0].mxu0 %v8923
    %v9052 = vpop.f32.mrb[0].mxu0
    %v9053 = vadd.f32 0.0, %v9052
    %v9054 = vpop.f32.mrb[0].mxu0
    %9055 = vmatprep.mubr.f32.mxu0 0.0
    %9056 = vmatmul.mubr.f32.gmra.mrb[0].mxu0 %v8926
    %v9057 = vpop.f32.mrb[0].mxu0
    %v9058 = vadd.f32 0.0, %v9057
    %v9059 = vpop.f32.mrb[0].mxu0
    %9060 = vmatprep.mubr.f32.mxu0 0.0
    %9061 = vmatmul.mubr.f32.gmra.mrb[0].mxu0 %v8929
    %v9062 = vpop.f32.mrb[0].mxu0
    %v9063 = vadd.f32 0.0, %v9062
    %v9064 = vpop.f32.mrb[0].mxu0
    %9065 = vmatprep.mubr.f32.mxu0 0.0
    %9066 = vmatmul.mubr.f32.gmra.mrb[0].mxu0 %v8932
    %v9067 = vpop.f32.mrb[0].mxu0
    %v9068 = vadd.f32 0.0, %v9067
    %v9069 = vpop.f32.mrb[0].mxu0
    %9070 = vmatprep.mubr.f32.mxu0 0.0
    %9071 = vmatmul.mubr.f32.gmra.mrb[0].mxu0 %v8935
    %v9072 = vpop.f32.mrb[0].mxu0
    %v9073 = vadd.f32 0.0, %v9072
    %v9074 = vpop.f32.mrb[0].mxu0
    %9075 = vmatprep.mubr.f32.mxu0 0.0
    %9076 = vmatmul.mubr.f32.gmra.mrb[0].mxu0 %v8938
    %v9077 = vpop.f32.mrb[0].mxu0
    %v9078 = vadd.f32 0.0, %v9077
    %v9079 = vpop.f32.mrb[0].mxu0
    %9080 = vmatprep.mubr.f32.mxu0 0.0
    %9081 = vmatmul.mubr.f32.gmra.mrb[0].mxu0 %v8941
    %v9082 = vpop.f32.mrb[0].mxu0
    %v9083 = vadd.f32 0.0, %v9082
    %v9084 = vpop.f32.mrb[0].mxu0
    %9085 = vmatprep.mubr.f32.mxu0 0.0
    %9086 = vmatmul.mubr.f32.gmra.mrb[0].mxu0 %v8944
    %v9087 = vpop.f32.mrb[0].mxu0
    %v9088 = vadd.f32 0.0, %v9087
    %v9089 = vpop.f32.mrb[0].mxu0
    %9090 = vdwg.mxu0
    %v9091 = vadd.f32 %v8864, %v9013
    %v9092 = vadd.f32 %v8865, %v9018
    %v9093 = vadd.f32 %v8866, %v9023
    %v9094 = vadd.f32 %v8867, %v9028
    %v9095 = vadd.f32 %v8868, %v9033
    %v9096 = vadd.f32 %v8869, %v9038
    %v9097 = vadd.f32 %v8870, %v9043
    %v9098 = vadd.f32 %v8871, %v9048
    %v9099 = vadd.f32 %v8872, %v9053
    %v9100 = vadd.f32 %v8873, %v9058
    %v9101 = vadd.f32 %v8874, %v9063
    %v9102 = vadd.f32 %v8875, %v9068
    %v9103 = vadd.f32 %v8876, %v9073
    %v9104 = vadd.f32 %v8877, %v9078
    %v9105 = vadd.f32 %v8878, %v9083
    %v9106 = vadd.f32 %v8879, %v9088
    %v9107 = vld [vmem:[%s8652 + $0x2] sm:$0xff]
    %v9108 = vld [vmem:[%s8652 + $0x12] sm:$0xff]
    %v9109 = vld [vmem:[%s8652 + $0x22] sm:$0xff]
    %v9110 = vld [vmem:[%s8652 + $0x32] sm:$0xff]
    %v9111 = vld [vmem:[%s8652 + $0x42] sm:$0xff]
    %v9112 = vld [vmem:[%s8652 + $0x52] sm:$0xff]
    %v9113 = vld [vmem:[%s8652 + $0x62] sm:$0xff]
    %v9114 = vld [vmem:[%s8652 + $0x72] sm:$0xff]
    %v9115 = vld [vmem:[%s8652 + $0xa2] sm:$0xff]
    %v9116 = vld [vmem:[%s8652 + $0xb2] sm:$0xff]
    %v9117 = vld [vmem:[%s8652 + $0xc2] sm:$0xff]
    %v9118 = vld [vmem:[%s8652 + $0xd2] sm:$0xff]
    %v9119 = vld [vmem:[%s8652 + $0xe2] sm:$0xff]
    %v9120 = vld [vmem:[%s8652 + $0xf2] sm:$0xff]
    %v9121 = vld [vmem:[%s8652 + $0x102] sm:$0xff]
    %v9122 = vld [vmem:[%s8652 + $0x112] sm:$0xff]
    %s9123 = scalar_lea.vmem %s3, 64
    %v9124 = vld [vmem:[%s9123] sm:$0xff]
    %v9126 = vsel %vm6668, %v9107, 0
    %v9129 = vsel %vm6668, %v9108, 0
    %v9132 = vsel %vm6668, %v9109, 0
    %v9135 = vsel %vm6668, %v9110, 0
    %v9138 = vsel %vm6668, %v9111, 0
    %v9141 = vsel %vm6668, %v9112, 0
    %v9144 = vsel %vm6668, %v9113, 0
    %v9147 = vsel %vm6668, %v9114, 0
    %v9150 = vsel %vm6668, %v9115, 0
    %v9153 = vsel %vm6668, %v9116, 0
    %v9156 = vsel %vm6668, %v9117, 0
    %v9159 = vsel %vm6668, %v9118, 0
    %v9162 = vsel %vm6668, %v9119, 0
    %v9165 = vsel %vm6668, %v9120, 0
    %v9168 = vsel %vm6668, %v9121, 0
    %v9171 = vsel %vm6668, %v9122, 0
    %9173 = vmatprep.subr.mxu0 0.0
    %9174 = vmatpush1.msra.mxu0 %v9124
    %9175 = vmatprep.subr.mxu0 0.0
    %9176 = vmatpush1.msra.mxu0 0.0
    %9177 = vmatprep.subr.mxu0 0.0
    %9178 = vmatpush1.msra.mxu0 0.0
    %9179 = vmatprep.subr.mxu0 0.0
    %9180 = vmatpush1.msra.mxu0 0.0
    %9181 = vmatprep.subr.mxu0 0.0
    %9182 = vmatpush1.msra.mxu0 0.0
    %9183 = vmatprep.subr.mxu0 0.0
    %9184 = vmatpush1.msra.mxu0 0.0
    %9185 = vmatprep.subr.mxu0 0.0
    %9186 = vmatpush1.msra.mxu0 0.0
    %9187 = vmatprep.subr.mxu0 0.0
    %9188 = vmatpush1.msra.mxu0 0.0
    %9189 = vmatprep.subr.mxu0 0.0
    %9190 = vmatpush1.msra.mxu0 0.0
    %9191 = vmatprep.subr.mxu0 0.0
    %9192 = vmatpush1.msra.mxu0 0.0
    %9193 = vmatprep.subr.mxu0 0.0
    %9194 = vmatpush1.msra.mxu0 0.0
    %9195 = vmatprep.subr.mxu0 0.0
    %9196 = vmatpush1.msra.mxu0 0.0
    %9197 = vmatprep.subr.mxu0 0.0
    %9198 = vmatpush1.msra.mxu0 0.0
    %9199 = vmatprep.subr.mxu0 0.0
    %9200 = vmatpush1.msra.mxu0 0.0
    %9201 = vmatprep.subr.mxu0 0.0
    %9202 = vmatpush1.msra.mxu0 0.0
    %9203 = vmatprep.subr.mxu0 0.0
    %9204 = vmatpush1.msra.mxu0 0.0
    %9205 = vmatprep.subr.mxu0 0.0
    %9206 = vmatpush1.msra.mxu0 0.0
    %9207 = vmatprep.subr.mxu0 0.0
    %9208 = vmatpush1.msra.mxu0 0.0
    %9209 = vmatprep.subr.mxu0 0.0
    %9210 = vmatpush1.msra.mxu0 0.0
    %9211 = vmatprep.subr.mxu0 0.0
    %9212 = vmatpush1.msra.mxu0 0.0
    %9213 = vmatprep.subr.mxu0 0.0
    %9214 = vmatpush1.msra.mxu0 0.0
    %9215 = vmatprep.subr.mxu0 0.0
    %9216 = vmatpush1.msra.mxu0 0.0
    %9217 = vmatprep.subr.mxu0 0.0
    %9218 = vmatpush1.msra.mxu0 0.0
    %9219 = vmatprep.subr.mxu0 0.0
    %9220 = vmatpush1.msra.mxu0 0.0
    %9221 = vmatprep.subr.mxu0 0.0
    %9222 = vmatpush1.msra.mxu0 0.0
    %9223 = vmatprep.subr.mxu0 0.0
    %9224 = vmatpush1.msra.mxu0 0.0
    %9225 = vmatprep.subr.mxu0 0.0
    %9226 = vmatpush1.msra.mxu0 0.0
    %9227 = vmatprep.subr.mxu0 0.0
    %9228 = vmatpush1.msra.mxu0 0.0
    %9229 = vmatprep.subr.mxu0 0.0
    %9230 = vmatpush1.msra.mxu0 0.0
    %9231 = vmatprep.subr.mxu0 0.0
    %9232 = vmatpush1.msra.mxu0 0.0
    %9233 = vmatprep.subr.mxu0 0.0
    %9234 = vmatpush1.msra.mxu0 0.0
    %9235 = vmatprep.subr.mxu0 0.0
    %9236 = vmatpush1.msra.mxu0 0.0
    %9237 = vmatprep.mubr.f32.mxu0 0.0
    %9238 = vmatmul.mubr.f32.gmra.mrb[0].mxu0 %v9126
    %v9239 = vpop.f32.mrb[0].mxu0
    %v9240 = vadd.f32 0.0, %v9239
    %v9241 = vpop.f32.mrb[0].mxu0
    %9242 = vmatprep.mubr.f32.mxu0 0.0
    %9243 = vmatmul.mubr.f32.gmra.mrb[0].mxu0 %v9129
    %v9244 = vpop.f32.mrb[0].mxu0
    %v9245 = vadd.f32 0.0, %v9244
    %v9246 = vpop.f32.mrb[0].mxu0
    %9247 = vmatprep.mubr.f32.mxu0 0.0
    %9248 = vmatmul.mubr.f32.gmra.mrb[0].mxu0 %v9132
    %v9249 = vpop.f32.mrb[0].mxu0
    %v9250 = vadd.f32 0.0, %v9249
    %v9251 = vpop.f32.mrb[0].mxu0
    %9252 = vmatprep.mubr.f32.mxu0 0.0
    %9253 = vmatmul.mubr.f32.gmra.mrb[0].mxu0 %v9135
    %v9254 = vpop.f32.mrb[0].mxu0
    %v9255 = vadd.f32 0.0, %v9254
    %v9256 = vpop.f32.mrb[0].mxu0
    %9257 = vmatprep.mubr.f32.mxu0 0.0
    %9258 = vmatmul.mubr.f32.gmra.mrb[0].mxu0 %v9138
    %v9259 = vpop.f32.mrb[0].mxu0
    %v9260 = vadd.f32 0.0, %v9259
    %v9261 = vpop.f32.mrb[0].mxu0
    %9262 = vmatprep.mubr.f32.mxu0 0.0
    %9263 = vmatmul.mubr.f32.gmra.mrb[0].mxu0 %v9141
    %v9264 = vpop.f32.mrb[0].mxu0
    %v9265 = vadd.f32 0.0, %v9264
    %v9266 = vpop.f32.mrb[0].mxu0
    %9267 = vmatprep.mubr.f32.mxu0 0.0
    %9268 = vmatmul.mubr.f32.gmra.mrb[0].mxu0 %v9144
    %v9269 = vpop.f32.mrb[0].mxu0
    %v9270 = vadd.f32 0.0, %v9269
    %v9271 = vpop.f32.mrb[0].mxu0
    %9272 = vmatprep.mubr.f32.mxu0 0.0
    %9273 = vmatmul.mubr.f32.gmra.mrb[0].mxu0 %v9147
    %v9274 = vpop.f32.mrb[0].mxu0
    %v9275 = vadd.f32 0.0, %v9274
    %v9276 = vpop.f32.mrb[0].mxu0
    %9277 = vmatprep.mubr.f32.mxu0 0.0
    %9278 = vmatmul.mubr.f32.gmra.mrb[0].mxu0 %v9150
    %v9279 = vpop.f32.mrb[0].mxu0
    %v9280 = vadd.f32 0.0, %v9279
    %v9281 = vpop.f32.mrb[0].mxu0
    %9282 = vmatprep.mubr.f32.mxu0 0.0
    %9283 = vmatmul.mubr.f32.gmra.mrb[0].mxu0 %v9153
    %v9284 = vpop.f32.mrb[0].mxu0
    %v9285 = vadd.f32 0.0, %v9284
    %v9286 = vpop.f32.mrb[0].mxu0
    %9287 = vmatprep.mubr.f32.mxu0 0.0
    %9288 = vmatmul.mubr.f32.gmra.mrb[0].mxu0 %v9156
    %v9289 = vpop.f32.mrb[0].mxu0
    %v9290 = vadd.f32 0.0, %v9289
    %v9291 = vpop.f32.mrb[0].mxu0
    %9292 = vmatprep.mubr.f32.mxu0 0.0
    %9293 = vmatmul.mubr.f32.gmra.mrb[0].mxu0 %v9159
    %v9294 = vpop.f32.mrb[0].mxu0
    %v9295 = vadd.f32 0.0, %v9294
    %v9296 = vpop.f32.mrb[0].mxu0
    %9297 = vmatprep.mubr.f32.mxu0 0.0
    %9298 = vmatmul.mubr.f32.gmra.mrb[0].mxu0 %v9162
    %v9299 = vpop.f32.mrb[0].mxu0
    %v9300 = vadd.f32 0.0, %v9299
    %v9301 = vpop.f32.mrb[0].mxu0
    %9302 = vmatprep.mubr.f32.mxu0 0.0
    %9303 = vmatmul.mubr.f32.gmra.mrb[0].mxu0 %v9165
    %v9304 = vpop.f32.mrb[0].mxu0
    %v9305 = vadd.f32 0.0, %v9304
    %v9306 = vpop.f32.mrb[0].mxu0
    %9307 = vmatprep.mubr.f32.mxu0 0.0
    %9308 = vmatmul.mubr.f32.gmra.mrb[0].mxu0 %v9168
    %v9309 = vpop.f32.mrb[0].mxu0
    %v9310 = vadd.f32 0.0, %v9309
    %v9311 = vpop.f32.mrb[0].mxu0
    %9312 = vmatprep.mubr.f32.mxu0 0.0
    %9313 = vmatmul.mubr.f32.gmra.mrb[0].mxu0 %v9171
    %v9314 = vpop.f32.mrb[0].mxu0
    %v9315 = vadd.f32 0.0, %v9314
    %v9316 = vpop.f32.mrb[0].mxu0
    %9317 = vdwg.mxu0
    %v9318 = vadd.f32 %v9091, %v9240
    %v9319 = vadd.f32 %v9092, %v9245
    %v9320 = vadd.f32 %v9093, %v9250
    %v9321 = vadd.f32 %v9094, %v9255
    %v9322 = vadd.f32 %v9095, %v9260
    %v9323 = vadd.f32 %v9096, %v9265
    %v9324 = vadd.f32 %v9097, %v9270
    %v9325 = vadd.f32 %v9098, %v9275
    %v9326 = vadd.f32 %v9099, %v9280
    %v9327 = vadd.f32 %v9100, %v9285
    %v9328 = vadd.f32 %v9101, %v9290
    %v9329 = vadd.f32 %v9102, %v9295
    %v9330 = vadd.f32 %v9103, %v9300
    %v9331 = vadd.f32 %v9104, %v9305
    %v9332 = vadd.f32 %v9105, %v9310
    %v9333 = vadd.f32 %v9106, %v9315
    %v9334 = vld [vmem:[%s4] sm:$0x1]
    %v9336 = vlaneseq
    %v9337 = vshrl.u32 %v9336, 7
    %v9338 = vsub.s32 0, %v9337
    %v9339 = vrot.slane %v9334, %v9338
    %v9341 = vadd.f32 %v9318, %v9339
    %v9342 = vadd.f32 %v9319, %v9339
    %v9343 = vadd.f32 %v9320, %v9339
    %v9344 = vadd.f32 %v9321, %v9339
    %v9345 = vadd.f32 %v9322, %v9339
    %v9346 = vadd.f32 %v9323, %v9339
    %v9347 = vadd.f32 %v9324, %v9339
    %v9348 = vadd.f32 %v9325, %v9339
    %v9349 = vadd.f32 %v9326, %v9339
    %v9350 = vadd.f32 %v9327, %v9339
    %v9351 = vadd.f32 %v9328, %v9339
    %v9352 = vadd.f32 %v9329, %v9339
    %v9353 = vadd.f32 %v9330, %v9339
    %v9354 = vadd.f32 %v9331, %v9339
    %v9355 = vadd.f32 %v9332, %v9339
    %v9356 = vadd.f32 %v9333, %v9339
    %v9357 = vmax.f32 %v9341, 0.0
    %v9358 = vmax.f32 %v9342, 0.0
    %v9359 = vmax.f32 %v9343, 0.0
    %v9360 = vmax.f32 %v9344, 0.0
    %v9361 = vmax.f32 %v9345, 0.0
    %v9362 = vmax.f32 %v9346, 0.0
    %v9363 = vmax.f32 %v9347, 0.0
    %v9364 = vmax.f32 %v9348, 0.0
    %v9365 = vmax.f32 %v9349, 0.0
    %v9366 = vmax.f32 %v9350, 0.0
    %v9367 = vmax.f32 %v9351, 0.0
    %v9368 = vmax.f32 %v9352, 0.0
    %v9369 = vmax.f32 %v9353, 0.0
    %v9370 = vmax.f32 %v9354, 0.0
    %v9371 = vmax.f32 %v9355, 0.0
    %v9372 = vmax.f32 %v9356, 0.0
    %v9373 = vmax.f32 %v9357, %v9358
    %v9374 = vmax.f32 %v9365, %v9366
    %vm9375 = vcmask 130048
    %9376 = vst.msk [vmem:[#allocation6] sm:$0xff] %vm9375, %v9373
    %9377 = vst.msk [vmem:[#allocation6 + $0x20] sm:$0xff] %vm9375, %v9374
    %v9378 = vmax.f32 %v9359, %v9360
    %v9379 = vmax.f32 %v9367, %v9368
    %s9380 = scalar_lea.vmem [#allocation6], 8
    %9381 = vst.msk [vmem:[%s9380] sm:$0xff] %vm9375, %v9378
    %9382 = vst.msk [vmem:[%s9380 + $0x20] sm:$0xff] %vm9375, %v9379
    %v9383 = vmax.f32 %v9361, %v9362
    %v9384 = vmax.f32 %v9369, %v9370
    %s9385 = scalar_lea.vmem [#allocation6], 16
    %9386 = vst.msk [vmem:[%s9385] sm:$0xff] %vm9375, %v9383
    %9387 = vst.msk [vmem:[%s9385 + $0x20] sm:$0xff] %vm9375, %v9384
    %v9388 = vmax.f32 %v9363, %v9364
    %v9389 = vmax.f32 %v9371, %v9372
    %s9390 = scalar_lea.vmem [#allocation6], 24
    %9391 = vst.msk [vmem:[%s9390] sm:$0xff] %vm9375, %v9388
    %9392 = vst.msk [vmem:[%s9390 + $0x20] sm:$0xff] %vm9375, %v9389
    %v9393 = vld [vmem:[#allocation6] sm:$0x1]
    %v9394 = vld [vmem:[#allocation6 + $0x8] sm:$0x1]
    %v9395 = vld [vmem:[#allocation6 + $0x10] sm:$0x1]
    %v9396 = vld [vmem:[#allocation6 + $0x18] sm:$0x1]
    %v9397 = vld [vmem:[#allocation6 + $0x20] sm:$0x1]
    %v9398 = vld [vmem:[#allocation6 + $0x28] sm:$0x1]
    %v9399 = vld [vmem:[#allocation6 + $0x30] sm:$0x1]
    %v9400 = vld [vmem:[#allocation6 + $0x38] sm:$0x1]
    %v9401 = vld [vmem:[#allocation6 + $0x1] sm:$0x1]
    %v9402 = vld [vmem:[#allocation6 + $0x9] sm:$0x1]
    %v9403 = vld [vmem:[#allocation6 + $0x11] sm:$0x1]
    %v9404 = vld [vmem:[#allocation6 + $0x19] sm:$0x1]
    %v9405 = vld [vmem:[#allocation6 + $0x21] sm:$0x1]
    %v9406 = vld [vmem:[#allocation6 + $0x29] sm:$0x1]
    %v9407 = vld [vmem:[#allocation6 + $0x31] sm:$0x1]
    %v9408 = vld [vmem:[#allocation6 + $0x39] sm:$0x1]
    %v9409 = vmax.f32 %v9393, %v9401
    %v9410 = vmax.f32 %v9394, %v9402
    %v9411 = vmax.f32 %v9395, %v9403
    %v9412 = vmax.f32 %v9396, %v9404
    %v9413 = vmax.f32 %v9397, %v9405
    %v9414 = vmax.f32 %v9398, %v9406
    %v9415 = vmax.f32 %v9399, %v9407
    %v9416 = vmax.f32 %v9400, %v9408
    %vm9417 = vcmask 122880
    %9418 = vst.msk [vmem:[#allocation7] sm:$0x1] %vm9417, %v9409
    %9419 = vst.msk [vmem:[#allocation7 + $0x4] sm:$0x1] %vm9417, %v9410
    %9420 = vst.msk [vmem:[#allocation7 + $0x8] sm:$0x1] %vm9417, %v9411
    %9421 = vst.msk [vmem:[#allocation7 + $0xc] sm:$0x1] %vm9417, %v9412
    %9422 = vst.msk [vmem:[#allocation7 + $0x10] sm:$0x1] %vm9417, %v9413
    %9423 = vst.msk [vmem:[#allocation7 + $0x14] sm:$0x1] %vm9417, %v9414
    %9424 = vst.msk [vmem:[#allocation7 + $0x18] sm:$0x1] %vm9417, %v9415
    %9425 = vst.msk [vmem:[#allocation7 + $0x1c] sm:$0x1] %vm9417, %v9416
    %v9426 = vld [vmem:[#allocation6 + $0x2] sm:$0x1]
    %v9427 = vld [vmem:[#allocation6 + $0xa] sm:$0x1]
    %v9428 = vld [vmem:[#allocation6 + $0x12] sm:$0x1]
    %v9429 = vld [vmem:[#allocation6 + $0x1a] sm:$0x1]
    %v9430 = vld [vmem:[#allocation6 + $0x22] sm:$0x1]
    %v9431 = vld [vmem:[#allocation6 + $0x2a] sm:$0x1]
    %v9432 = vld [vmem:[#allocation6 + $0x32] sm:$0x1]
    %v9433 = vld [vmem:[#allocation6 + $0x3a] sm:$0x1]
    %v9434 = vld [vmem:[#allocation6 + $0x3] sm:$0x1]
    %v9435 = vld [vmem:[#allocation6 + $0xb] sm:$0x1]
    %v9436 = vld [vmem:[#allocation6 + $0x13] sm:$0x1]
    %v9437 = vld [vmem:[#allocation6 + $0x1b] sm:$0x1]
    %v9438 = vld [vmem:[#allocation6 + $0x23] sm:$0x1]
    %v9439 = vld [vmem:[#allocation6 + $0x2b] sm:$0x1]
    %v9440 = vld [vmem:[#allocation6 + $0x33] sm:$0x1]
    %v9441 = vld [vmem:[#allocation6 + $0x3b] sm:$0x1]
    %v9442 = vmax.f32 %v9426, %v9434
    %v9443 = vmax.f32 %v9427, %v9435
    %v9444 = vmax.f32 %v9428, %v9436
    %v9445 = vmax.f32 %v9429, %v9437
    %v9446 = vmax.f32 %v9430, %v9438
    %v9447 = vmax.f32 %v9431, %v9439
    %v9448 = vmax.f32 %v9432, %v9440
    %v9449 = vmax.f32 %v9433, %v9441
    %9450 = vst.msk [vmem:[#allocation7 + $0x1] sm:$0x1] %vm9417, %v9442
    %9451 = vst.msk [vmem:[#allocation7 + $0x5] sm:$0x1] %vm9417, %v9443
    %9452 = vst.msk [vmem:[#allocation7 + $0x9] sm:$0x1] %vm9417, %v9444
    %9453 = vst.msk [vmem:[#allocation7 + $0xd] sm:$0x1] %vm9417, %v9445
    %9454 = vst.msk [vmem:[#allocation7 + $0x11] sm:$0x1] %vm9417, %v9446
    %9455 = vst.msk [vmem:[#allocation7 + $0x15] sm:$0x1] %vm9417, %v9447
    %9456 = vst.msk [vmem:[#allocation7 + $0x19] sm:$0x1] %vm9417, %v9448
    %9457 = vst.msk [vmem:[#allocation7 + $0x1d] sm:$0x1] %vm9417, %v9449
    %v9458 = vld [vmem:[#allocation6 + $0x4] sm:$0x1]
    %v9459 = vld [vmem:[#allocation6 + $0xc] sm:$0x1]
    %v9460 = vld [vmem:[#allocation6 + $0x14] sm:$0x1]
    %v9461 = vld [vmem:[#allocation6 + $0x1c] sm:$0x1]
    %v9462 = vld [vmem:[#allocation6 + $0x24] sm:$0x1]
    %v9463 = vld [vmem:[#allocation6 + $0x2c] sm:$0x1]
    %v9464 = vld [vmem:[#allocation6 + $0x34] sm:$0x1]
    %v9465 = vld [vmem:[#allocation6 + $0x3c] sm:$0x1]
    %v9466 = vld [vmem:[#allocation6 + $0x5] sm:$0x1]
    %v9467 = vld [vmem:[#allocation6 + $0xd] sm:$0x1]
    %v9468 = vld [vmem:[#allocation6 + $0x15] sm:$0x1]
    %v9469 = vld [vmem:[#allocation6 + $0x1d] sm:$0x1]
    %v9470 = vld [vmem:[#allocation6 + $0x25] sm:$0x1]
    %v9471 = vld [vmem:[#allocation6 + $0x2d] sm:$0x1]
    %v9472 = vld [vmem:[#allocation6 + $0x35] sm:$0x1]
    %v9473 = vld [vmem:[#allocation6 + $0x3d] sm:$0x1]
    %v9474 = vmax.f32 %v9458, %v9466
    %v9475 = vmax.f32 %v9459, %v9467
    %v9476 = vmax.f32 %v9460, %v9468
    %v9477 = vmax.f32 %v9461, %v9469
    %v9478 = vmax.f32 %v9462, %v9470
    %v9479 = vmax.f32 %v9463, %v9471
    %v9480 = vmax.f32 %v9464, %v9472
    %v9481 = vmax.f32 %v9465, %v9473
    %9482 = vst.msk [vmem:[#allocation7 + $0x2] sm:$0x1] %vm9417, %v9474
    %9483 = vst.msk [vmem:[#allocation7 + $0x6] sm:$0x1] %vm9417, %v9475
    %9484 = vst.msk [vmem:[#allocation7 + $0xa] sm:$0x1] %vm9417, %v9476
    %9485 = vst.msk [vmem:[#allocation7 + $0xe] sm:$0x1] %vm9417, %v9477
    %9486 = vst.msk [vmem:[#allocation7 + $0x12] sm:$0x1] %vm9417, %v9478
    %9487 = vst.msk [vmem:[#allocation7 + $0x16] sm:$0x1] %vm9417, %v9479
    %9488 = vst.msk [vmem:[#allocation7 + $0x1a] sm:$0x1] %vm9417, %v9480
    %9489 = vst.msk [vmem:[#allocation7 + $0x1e] sm:$0x1] %vm9417, %v9481
    %v9490 = vld [vmem:[#allocation6 + $0x6] sm:$0x1]
    %v9491 = vld [vmem:[#allocation6 + $0xe] sm:$0x1]
    %v9492 = vld [vmem:[#allocation6 + $0x16] sm:$0x1]
    %v9493 = vld [vmem:[#allocation6 + $0x1e] sm:$0x1]
    %v9494 = vld [vmem:[#allocation6 + $0x26] sm:$0x1]
    %v9495 = vld [vmem:[#allocation6 + $0x2e] sm:$0x1]
    %v9496 = vld [vmem:[#allocation6 + $0x36] sm:$0x1]
    %v9497 = vld [vmem:[#allocation6 + $0x3e] sm:$0x1]
    %v9498 = vld [vmem:[#allocation6 + $0x7] sm:$0x1]
    %v9499 = vld [vmem:[#allocation6 + $0xf] sm:$0x1]
    %v9500 = vld [vmem:[#allocation6 + $0x17] sm:$0x1]
    %v9501 = vld [vmem:[#allocation6 + $0x1f] sm:$0x1]
    %v9502 = vld [vmem:[#allocation6 + $0x27] sm:$0x1]
    %v9503 = vld [vmem:[#allocation6 + $0x2f] sm:$0x1]
    %v9504 = vld [vmem:[#allocation6 + $0x37] sm:$0x1]
    %v9505 = vld [vmem:[#allocation6 + $0x3f] sm:$0x1]
    %v9506 = vmax.f32 %v9490, %v9498
    %v9507 = vmax.f32 %v9491, %v9499
    %v9508 = vmax.f32 %v9492, %v9500
    %v9509 = vmax.f32 %v9493, %v9501
    %v9510 = vmax.f32 %v9494, %v9502
    %v9511 = vmax.f32 %v9495, %v9503
    %v9512 = vmax.f32 %v9496, %v9504
    %v9513 = vmax.f32 %v9497, %v9505
    %9514 = vst.msk [vmem:[#allocation7 + $0x3] sm:$0x1] %vm9417, %v9506
    %9515 = vst.msk [vmem:[#allocation7 + $0x7] sm:$0x1] %vm9417, %v9507
    %9516 = vst.msk [vmem:[#allocation7 + $0xb] sm:$0x1] %vm9417, %v9508
    %9517 = vst.msk [vmem:[#allocation7 + $0xf] sm:$0x1] %vm9417, %v9509
    %9518 = vst.msk [vmem:[#allocation7 + $0x13] sm:$0x1] %vm9417, %v9510
    %9519 = vst.msk [vmem:[#allocation7 + $0x17] sm:$0x1] %vm9417, %v9511
    %9520 = vst.msk [vmem:[#allocation7 + $0x1b] sm:$0x1] %vm9417, %v9512
    %9521 = vst.msk [vmem:[#allocation7 + $0x1f] sm:$0x1] %vm9417, %v9513
    %v9522 = vld [vmem:[#allocation7] sm:$0xf]
    %v9523 = vld [vmem:[#allocation7 + $0x4] sm:$0xf]
    %v9524 = vld [vmem:[#allocation7 + $0x8] sm:$0xf]
    %v9525 = vld [vmem:[#allocation7 + $0xc] sm:$0xf]
    %v9526 = vld [vmem:[#allocation7 + $0x10] sm:$0xf]
    %v9527 = vld [vmem:[#allocation7 + $0x14] sm:$0xf]
    %v9528 = vld [vmem:[#allocation7 + $0x18] sm:$0xf]
    %v9529 = vld [vmem:[#allocation7 + $0x1c] sm:$0xf]
    %v9530 = vld [vmem:[%s5] sm:$0xff]
    %v9531 = vld [vmem:[%s5 + $0x8] sm:$0xff]
    %s9532 = scalar_lea.vmem %s5, 16
    %v9533 = vld [vmem:[%s9532] sm:$0xff]
    %v9534 = vld [vmem:[%s9532 + $0x8] sm:$0xff]
    %v9537 = vrot.slane %v9522, 1
    %vm9538 = vcmask 1041409
    %v9539 = vsel %vm9538, %v9526, %v9537
    %v9540 = vsel %vm9375, %v9539, 0
    %9542 = vmatprep.subr.mxu0 0.0
    %9543 = vmatpush1.msra.mxu0 %v9533
    %9544 = vmatprep.subr.mxu0 0.0
    %9545 = vmatpush1.msra.mxu0 %v9534
    %9546 = vmatprep.subr.mxu0 0.0
    %9547 = vmatpush1.msra.mxu0 0.0
    %9548 = vmatprep.subr.mxu0 0.0
    %9549 = vmatpush1.msra.mxu0 0.0
    %9550 = vmatprep.subr.mxu0 0.0
    %9551 = vmatpush1.msra.mxu0 0.0
    %9552 = vmatprep.subr.mxu0 0.0
    %9553 = vmatpush1.msra.mxu0 0.0
    %9554 = vmatprep.subr.mxu0 0.0
    %9555 = vmatpush1.msra.mxu0 0.0
    %9556 = vmatprep.subr.mxu0 0.0
    %9557 = vmatpush1.msra.mxu0 0.0
    %9558 = vmatprep.subr.mxu0 0.0
    %9559 = vmatpush1.msra.mxu0 0.0
    %9560 = vmatprep.subr.mxu0 0.0
    %9561 = vmatpush1.msra.mxu0 0.0
    %9562 = vmatprep.subr.mxu0 0.0
    %9563 = vmatpush1.msra.mxu0 0.0
    %9564 = vmatprep.subr.mxu0 0.0
    %9565 = vmatpush1.msra.mxu0 0.0
    %9566 = vmatprep.subr.mxu0 0.0
    %9567 = vmatpush1.msra.mxu0 0.0
    %9568 = vmatprep.subr.mxu0 0.0
    %9569 = vmatpush1.msra.mxu0 0.0
    %9570 = vmatprep.subr.mxu0 0.0
    %9571 = vmatpush1.msra.mxu0 0.0
    %9572 = vmatprep.subr.mxu0 0.0
    %9573 = vmatpush1.msra.mxu0 0.0
    %9574 = vmatprep.subr.mxu0 0.0
    %9575 = vmatpush1.msra.mxu0 0.0
    %9576 = vmatprep.subr.mxu0 0.0
    %9577 = vmatpush1.msra.mxu0 0.0
    %9578 = vmatprep.subr.mxu0 0.0
    %9579 = vmatpush1.msra.mxu0 0.0
    %9580 = vmatprep.subr.mxu0 0.0
    %9581 = vmatpush1.msra.mxu0 0.0
    %9582 = vmatprep.subr.mxu0 0.0
    %9583 = vmatpush1.msra.mxu0 0.0
    %9584 = vmatprep.subr.mxu0 0.0
    %9585 = vmatpush1.msra.mxu0 0.0
    %9586 = vmatprep.subr.mxu0 0.0
    %9587 = vmatpush1.msra.mxu0 0.0
    %9588 = vmatprep.subr.mxu0 0.0
    %9589 = vmatpush1.msra.mxu0 0.0
    %9590 = vmatprep.subr.mxu0 0.0
    %9591 = vmatpush1.msra.mxu0 0.0
    %9592 = vmatprep.subr.mxu0 0.0
    %9593 = vmatpush1.msra.mxu0 0.0
    %9594 = vmatprep.subr.mxu0 0.0
    %9595 = vmatpush1.msra.mxu0 0.0
    %9596 = vmatprep.subr.mxu0 0.0
    %9597 = vmatpush1.msra.mxu0 0.0
    %9598 = vmatprep.subr.mxu0 0.0
    %9599 = vmatpush1.msra.mxu0 0.0
    %9600 = vmatprep.subr.mxu0 0.0
    %9601 = vmatpush1.msra.mxu0 0.0
    %9602 = vmatprep.subr.mxu0 0.0
    %9603 = vmatpush1.msra.mxu0 0.0
    %9604 = vmatprep.subr.mxu0 0.0
    %9605 = vmatpush1.msra.mxu0 0.0
    %9606 = vmatprep.mubr.f32.mxu0 0.0
    %9607 = vmatmul.mubr.f32.gmra.mrb[0].mxu0 %v9540
    %v9608 = vpop.f32.mrb[0].mxu0
    %v9609 = vadd.f32 0.0, %v9608
    %v9610 = vpop.f32.mrb[0].mxu0
    %9611 = vdwg.mxu0
    %v9612 = vrot.slane %v9526, 7
    %v9613 = vsel %vm9538, %v9612, %v9522
    %v9614 = vsel %vm9375, %v9613, 0
    %9616 = vmatprep.subr.mxu0 0.0
    %9617 = vmatpush1.msra.mxu0 %v9530
    %9618 = vmatprep.subr.mxu0 0.0
    %9619 = vmatpush1.msra.mxu0 %v9531
    %9620 = vmatprep.subr.mxu0 0.0
    %9621 = vmatpush1.msra.mxu0 0.0
    %9622 = vmatprep.subr.mxu0 0.0
    %9623 = vmatpush1.msra.mxu0 0.0
    %9624 = vmatprep.subr.mxu0 0.0
    %9625 = vmatpush1.msra.mxu0 0.0
    %9626 = vmatprep.subr.mxu0 0.0
    %9627 = vmatpush1.msra.mxu0 0.0
    %9628 = vmatprep.subr.mxu0 0.0
    %9629 = vmatpush1.msra.mxu0 0.0
    %9630 = vmatprep.subr.mxu0 0.0
    %9631 = vmatpush1.msra.mxu0 0.0
    %9632 = vmatprep.subr.mxu0 0.0
    %9633 = vmatpush1.msra.mxu0 0.0
    %9634 = vmatprep.subr.mxu0 0.0
    %9635 = vmatpush1.msra.mxu0 0.0
    %9636 = vmatprep.subr.mxu0 0.0
    %9637 = vmatpush1.msra.mxu0 0.0
    %9638 = vmatprep.subr.mxu0 0.0
    %9639 = vmatpush1.msra.mxu0 0.0
    %9640 = vmatprep.subr.mxu0 0.0
    %9641 = vmatpush1.msra.mxu0 0.0
    %9642 = vmatprep.subr.mxu0 0.0
    %9643 = vmatpush1.msra.mxu0 0.0
    %9644 = vmatprep.subr.mxu0 0.0
    %9645 = vmatpush1.msra.mxu0 0.0
    %9646 = vmatprep.subr.mxu0 0.0
    %9647 = vmatpush1.msra.mxu0 0.0
    %9648 = vmatprep.subr.mxu0 0.0
    %9649 = vmatpush1.msra.mxu0 0.0
    %9650 = vmatprep.subr.mxu0 0.0
    %9651 = vmatpush1.msra.mxu0 0.0
    %9652 = vmatprep.subr.mxu0 0.0
    %9653 = vmatpush1.msra.mxu0 0.0
    %9654 = vmatprep.subr.mxu0 0.0
    %9655 = vmatpush1.msra.mxu0 0.0
    %9656 = vmatprep.subr.mxu0 0.0
    %9657 = vmatpush1.msra.mxu0 0.0
    %9658 = vmatprep.subr.mxu0 0.0
    %9659 = vmatpush1.msra.mxu0 0.0
    %9660 = vmatprep.subr.mxu0 0.0
    %9661 = vmatpush1.msra.mxu0 0.0
    %9662 = vmatprep.subr.mxu0 0.0
    %9663 = vmatpush1.msra.mxu0 0.0
    %9664 = vmatprep.subr.mxu0 0.0
    %9665 = vmatpush1.msra.mxu0 0.0
    %9666 = vmatprep.subr.mxu0 0.0
    %9667 = vmatpush1.msra.mxu0 0.0
    %9668 = vmatprep.subr.mxu0 0.0
    %9669 = vmatpush1.msra.mxu0 0.0
    %9670 = vmatprep.subr.mxu0 0.0
    %9671 = vmatpush1.msra.mxu0 0.0
    %9672 = vmatprep.subr.mxu0 0.0
    %9673 = vmatpush1.msra.mxu0 0.0
    %9674 = vmatprep.subr.mxu0 0.0
    %9675 = vmatpush1.msra.mxu0 0.0
    %9676 = vmatprep.subr.mxu0 0.0
    %9677 = vmatpush1.msra.mxu0 0.0
    %9678 = vmatprep.subr.mxu0 0.0
    %9679 = vmatpush1.msra.mxu0 0.0
    %9680 = vmatprep.mubr.f32.mxu0 0.0
    %9681 = vmatmul.mubr.f32.gmra.mrb[0].mxu0 %v9614
    %v9682 = vpop.f32.mrb[0].mxu0
    %v9683 = vadd.f32 %v9609, %v9682
    %v9684 = vpop.f32.mrb[0].mxu0
    %9685 = vdwg.mxu0
    %s9686 = scalar_lea.vmem %s5, 32
    %v9687 = vld [vmem:[%s9686] sm:$0xff]
    %v9688 = vld [vmem:[%s9686 + $0x8] sm:$0xff]
    %v9689 = vrot.slane %v9522, 2
    %v9690 = vrot.slane %v9526, 1
    %v9691 = vsel %vm9538, %v9690, %v9689
    %v9692 = vsel %vm9375, %v9691, 0
    %9694 = vmatprep.subr.mxu0 0.0
    %9695 = vmatpush1.msra.mxu0 %v9687
    %9696 = vmatprep.subr.mxu0 0.0
    %9697 = vmatpush1.msra.mxu0 %v9688
    %9698 = vmatprep.subr.mxu0 0.0
    %9699 = vmatpush1.msra.mxu0 0.0
    %9700 = vmatprep.subr.mxu0 0.0
    %9701 = vmatpush1.msra.mxu0 0.0
    %9702 = vmatprep.subr.mxu0 0.0
    %9703 = vmatpush1.msra.mxu0 0.0
    %9704 = vmatprep.subr.mxu0 0.0
    %9705 = vmatpush1.msra.mxu0 0.0
    %9706 = vmatprep.subr.mxu0 0.0
    %9707 = vmatpush1.msra.mxu0 0.0
    %9708 = vmatprep.subr.mxu0 0.0
    %9709 = vmatpush1.msra.mxu0 0.0
    %9710 = vmatprep.subr.mxu0 0.0
    %9711 = vmatpush1.msra.mxu0 0.0
    %9712 = vmatprep.subr.mxu0 0.0
    %9713 = vmatpush1.msra.mxu0 0.0
    %9714 = vmatprep.subr.mxu0 0.0
    %9715 = vmatpush1.msra.mxu0 0.0
    %9716 = vmatprep.subr.mxu0 0.0
    %9717 = vmatpush1.msra.mxu0 0.0
    %9718 = vmatprep.subr.mxu0 0.0
    %9719 = vmatpush1.msra.mxu0 0.0
    %9720 = vmatprep.subr.mxu0 0.0
    %9721 = vmatpush1.msra.mxu0 0.0
    %9722 = vmatprep.subr.mxu0 0.0
    %9723 = vmatpush1.msra.mxu0 0.0
    %9724 = vmatprep.subr.mxu0 0.0
    %9725 = vmatpush1.msra.mxu0 0.0
    %9726 = vmatprep.subr.mxu0 0.0
    %9727 = vmatpush1.msra.mxu0 0.0
    %9728 = vmatprep.subr.mxu0 0.0
    %9729 = vmatpush1.msra.mxu0 0.0
    %9730 = vmatprep.subr.mxu0 0.0
    %9731 = vmatpush1.msra.mxu0 0.0
    %9732 = vmatprep.subr.mxu0 0.0
    %9733 = vmatpush1.msra.mxu0 0.0
    %9734 = vmatprep.subr.mxu0 0.0
    %9735 = vmatpush1.msra.mxu0 0.0
    %9736 = vmatprep.subr.mxu0 0.0
    %9737 = vmatpush1.msra.mxu0 0.0
    %9738 = vmatprep.subr.mxu0 0.0
    %9739 = vmatpush1.msra.mxu0 0.0
    %9740 = vmatprep.subr.mxu0 0.0
    %9741 = vmatpush1.msra.mxu0 0.0
    %9742 = vmatprep.subr.mxu0 0.0
    %9743 = vmatpush1.msra.mxu0 0.0
    %9744 = vmatprep.subr.mxu0 0.0
    %9745 = vmatpush1.msra.mxu0 0.0
    %9746 = vmatprep.subr.mxu0 0.0
    %9747 = vmatpush1.msra.mxu0 0.0
    %9748 = vmatprep.subr.mxu0 0.0
    %9749 = vmatpush1.msra.mxu0 0.0
    %9750 = vmatprep.subr.mxu0 0.0
    %9751 = vmatpush1.msra.mxu0 0.0
    %9752 = vmatprep.subr.mxu0 0.0
    %9753 = vmatpush1.msra.mxu0 0.0
    %9754 = vmatprep.subr.mxu0 0.0
    %9755 = vmatpush1.msra.mxu0 0.0
    %9756 = vmatprep.subr.mxu0 0.0
    %9757 = vmatpush1.msra.mxu0 0.0
    %9758 = vmatprep.mubr.f32.mxu0 0.0
    %9759 = vmatmul.mubr.f32.gmra.mrb[0].mxu0 %v9692
    %v9760 = vpop.f32.mrb[0].mxu0
    %v9761 = vadd.f32 0.0, %v9760
    %v9762 = vpop.f32.mrb[0].mxu0
    %9763 = vdwg.mxu0
    %v9764 = vadd.f32 %v9683, %v9761
    %s9765 = scalar_lea.vmem %s5, 48
    %v9766 = vld [vmem:[%s9765] sm:$0xff]
    %v9767 = vld [vmem:[%s9765 + $0x8] sm:$0xff]
    %v9768 = vrot.slane %v9522, 3
    %v9769 = vrot.slane %v9526, 2
    %v9770 = vsel %vm9538, %v9769, %v9768
    %v9771 = vsel %vm9375, %v9770, 0
    %9773 = vmatprep.subr.mxu0 0.0
    %9774 = vmatpush1.msra.mxu0 %v9766
    %9775 = vmatprep.subr.mxu0 0.0
    %9776 = vmatpush1.msra.mxu0 %v9767
    %9777 = vmatprep.subr.mxu0 0.0
    %9778 = vmatpush1.msra.mxu0 0.0
    %9779 = vmatprep.subr.mxu0 0.0
    %9780 = vmatpush1.msra.mxu0 0.0
    %9781 = vmatprep.subr.mxu0 0.0
    %9782 = vmatpush1.msra.mxu0 0.0
    %9783 = vmatprep.subr.mxu0 0.0
    %9784 = vmatpush1.msra.mxu0 0.0
    %9785 = vmatprep.subr.mxu0 0.0
    %9786 = vmatpush1.msra.mxu0 0.0
    %9787 = vmatprep.subr.mxu0 0.0
    %9788 = vmatpush1.msra.mxu0 0.0
    %9789 = vmatprep.subr.mxu0 0.0
    %9790 = vmatpush1.msra.mxu0 0.0
    %9791 = vmatprep.subr.mxu0 0.0
    %9792 = vmatpush1.msra.mxu0 0.0
    %9793 = vmatprep.subr.mxu0 0.0
    %9794 = vmatpush1.msra.mxu0 0.0
    %9795 = vmatprep.subr.mxu0 0.0
    %9796 = vmatpush1.msra.mxu0 0.0
    %9797 = vmatprep.subr.mxu0 0.0
    %9798 = vmatpush1.msra.mxu0 0.0
    %9799 = vmatprep.subr.mxu0 0.0
    %9800 = vmatpush1.msra.mxu0 0.0
    %9801 = vmatprep.subr.mxu0 0.0
    %9802 = vmatpush1.msra.mxu0 0.0
    %9803 = vmatprep.subr.mxu0 0.0
    %9804 = vmatpush1.msra.mxu0 0.0
    %9805 = vmatprep.subr.mxu0 0.0
    %9806 = vmatpush1.msra.mxu0 0.0
    %9807 = vmatprep.subr.mxu0 0.0
    %9808 = vmatpush1.msra.mxu0 0.0
    %9809 = vmatprep.subr.mxu0 0.0
    %9810 = vmatpush1.msra.mxu0 0.0
    %9811 = vmatprep.subr.mxu0 0.0
    %9812 = vmatpush1.msra.mxu0 0.0
    %9813 = vmatprep.subr.mxu0 0.0
    %9814 = vmatpush1.msra.mxu0 0.0
    %9815 = vmatprep.subr.mxu0 0.0
    %9816 = vmatpush1.msra.mxu0 0.0
    %9817 = vmatprep.subr.mxu0 0.0
    %9818 = vmatpush1.msra.mxu0 0.0
    %9819 = vmatprep.subr.mxu0 0.0
    %9820 = vmatpush1.msra.mxu0 0.0
    %9821 = vmatprep.subr.mxu0 0.0
    %9822 = vmatpush1.msra.mxu0 0.0
    %9823 = vmatprep.subr.mxu0 0.0
    %9824 = vmatpush1.msra.mxu0 0.0
    %9825 = vmatprep.subr.mxu0 0.0
    %9826 = vmatpush1.msra.mxu0 0.0
    %9827 = vmatprep.subr.mxu0 0.0
    %9828 = vmatpush1.msra.mxu0 0.0
    %9829 = vmatprep.subr.mxu0 0.0
    %9830 = vmatpush1.msra.mxu0 0.0
    %9831 = vmatprep.subr.mxu0 0.0
    %9832 = vmatpush1.msra.mxu0 0.0
    %9833 = vmatprep.subr.mxu0 0.0
    %9834 = vmatpush1.msra.mxu0 0.0
    %9835 = vmatprep.subr.mxu0 0.0
    %9836 = vmatpush1.msra.mxu0 0.0
    %9837 = vmatprep.mubr.f32.mxu0 0.0
    %9838 = vmatmul.mubr.f32.gmra.mrb[0].mxu0 %v9771
    %v9839 = vpop.f32.mrb[0].mxu0
    %v9840 = vadd.f32 0.0, %v9839
    %v9841 = vpop.f32.mrb[0].mxu0
    %9842 = vdwg.mxu0
    %v9843 = vadd.f32 %v9764, %v9840
    %s9844 = scalar_lea.vmem %s5, 64
    %v9845 = vld [vmem:[%s9844] sm:$0xff]
    %v9846 = vld [vmem:[%s9844 + $0x8] sm:$0xff]
    %v9849 = vrot.slane %v9527, 7
    %v9850 = vsel %vm9538, %v9849, %v9523
    %v9851 = vsel %vm9375, %v9850, 0
    %9853 = vmatprep.subr.mxu0 0.0
    %9854 = vmatpush1.msra.mxu0 %v9845
    %9855 = vmatprep.subr.mxu0 0.0
    %9856 = vmatpush1.msra.mxu0 %v9846
    %9857 = vmatprep.subr.mxu0 0.0
    %9858 = vmatpush1.msra.mxu0 0.0
    %9859 = vmatprep.subr.mxu0 0.0
    %9860 = vmatpush1.msra.mxu0 0.0
    %9861 = vmatprep.subr.mxu0 0.0
    %9862 = vmatpush1.msra.mxu0 0.0
    %9863 = vmatprep.subr.mxu0 0.0
    %9864 = vmatpush1.msra.mxu0 0.0
    %9865 = vmatprep.subr.mxu0 0.0
    %9866 = vmatpush1.msra.mxu0 0.0
    %9867 = vmatprep.subr.mxu0 0.0
    %9868 = vmatpush1.msra.mxu0 0.0
    %9869 = vmatprep.subr.mxu0 0.0
    %9870 = vmatpush1.msra.mxu0 0.0
    %9871 = vmatprep.subr.mxu0 0.0
    %9872 = vmatpush1.msra.mxu0 0.0
    %9873 = vmatprep.subr.mxu0 0.0
    %9874 = vmatpush1.msra.mxu0 0.0
    %9875 = vmatprep.subr.mxu0 0.0
    %9876 = vmatpush1.msra.mxu0 0.0
    %9877 = vmatprep.subr.mxu0 0.0
    %9878 = vmatpush1.msra.mxu0 0.0
    %9879 = vmatprep.subr.mxu0 0.0
    %9880 = vmatpush1.msra.mxu0 0.0
    %9881 = vmatprep.subr.mxu0 0.0
    %9882 = vmatpush1.msra.mxu0 0.0
    %9883 = vmatprep.subr.mxu0 0.0
    %9884 = vmatpush1.msra.mxu0 0.0
    %9885 = vmatprep.subr.mxu0 0.0
    %9886 = vmatpush1.msra.mxu0 0.0
    %9887 = vmatprep.subr.mxu0 0.0
    %9888 = vmatpush1.msra.mxu0 0.0
    %9889 = vmatprep.subr.mxu0 0.0
    %9890 = vmatpush1.msra.mxu0 0.0
    %9891 = vmatprep.subr.mxu0 0.0
    %9892 = vmatpush1.msra.mxu0 0.0
    %9893 = vmatprep.subr.mxu0 0.0
    %9894 = vmatpush1.msra.mxu0 0.0
    %9895 = vmatprep.subr.mxu0 0.0
    %9896 = vmatpush1.msra.mxu0 0.0
    %9897 = vmatprep.subr.mxu0 0.0
    %9898 = vmatpush1.msra.mxu0 0.0
    %9899 = vmatprep.subr.mxu0 0.0
    %9900 = vmatpush1.msra.mxu0 0.0
    %9901 = vmatprep.subr.mxu0 0.0
    %9902 = vmatpush1.msra.mxu0 0.0
    %9903 = vmatprep.subr.mxu0 0.0
    %9904 = vmatpush1.msra.mxu0 0.0
    %9905 = vmatprep.subr.mxu0 0.0
    %9906 = vmatpush1.msra.mxu0 0.0
    %9907 = vmatprep.subr.mxu0 0.0
    %9908 = vmatpush1.msra.mxu0 0.0
    %9909 = vmatprep.subr.mxu0 0.0
    %9910 = vmatpush1.msra.mxu0 0.0
    %9911 = vmatprep.subr.mxu0 0.0
    %9912 = vmatpush1.msra.mxu0 0.0
    %9913 = vmatprep.subr.mxu0 0.0
    %9914 = vmatpush1.msra.mxu0 0.0
    %9915 = vmatprep.subr.mxu0 0.0
    %9916 = vmatpush1.msra.mxu0 0.0
    %9917 = vmatprep.mubr.f32.mxu0 0.0
    %9918 = vmatmul.mubr.f32.gmra.mrb[0].mxu0 %v9851
    %v9919 = vpop.f32.mrb[0].mxu0
    %v9920 = vadd.f32 0.0, %v9919
    %v9921 = vpop.f32.mrb[0].mxu0
    %9922 = vdwg.mxu0
    %v9923 = vadd.f32 %v9843, %v9920
    %s9924 = scalar_lea.vmem %s5, 80
    %v9925 = vld [vmem:[%s9924] sm:$0xff]
    %v9926 = vld [vmem:[%s9924 + $0x8] sm:$0xff]
    %v9927 = vrot.slane %v9523, 1
    %v9928 = vsel %vm9538, %v9527, %v9927
    %v9929 = vsel %vm9375, %v9928, 0
    %9931 = vmatprep.subr.mxu0 0.0
    %9932 = vmatpush1.msra.mxu0 %v9925
    %9933 = vmatprep.subr.mxu0 0.0
    %9934 = vmatpush1.msra.mxu0 %v9926
    %9935 = vmatprep.subr.mxu0 0.0
    %9936 = vmatpush1.msra.mxu0 0.0
    %9937 = vmatprep.subr.mxu0 0.0
    %9938 = vmatpush1.msra.mxu0 0.0
    %9939 = vmatprep.subr.mxu0 0.0
    %9940 = vmatpush1.msra.mxu0 0.0
    %9941 = vmatprep.subr.mxu0 0.0
    %9942 = vmatpush1.msra.mxu0 0.0
    %9943 = vmatprep.subr.mxu0 0.0
    %9944 = vmatpush1.msra.mxu0 0.0
    %9945 = vmatprep.subr.mxu0 0.0
    %9946 = vmatpush1.msra.mxu0 0.0
    %9947 = vmatprep.subr.mxu0 0.0
    %9948 = vmatpush1.msra.mxu0 0.0
    %9949 = vmatprep.subr.mxu0 0.0
    %9950 = vmatpush1.msra.mxu0 0.0
    %9951 = vmatprep.subr.mxu0 0.0
    %9952 = vmatpush1.msra.mxu0 0.0
    %9953 = vmatprep.subr.mxu0 0.0
    %9954 = vmatpush1.msra.mxu0 0.0
    %9955 = vmatprep.subr.mxu0 0.0
    %9956 = vmatpush1.msra.mxu0 0.0
    %9957 = vmatprep.subr.mxu0 0.0
    %9958 = vmatpush1.msra.mxu0 0.0
    %9959 = vmatprep.subr.mxu0 0.0
    %9960 = vmatpush1.msra.mxu0 0.0
    %9961 = vmatprep.subr.mxu0 0.0
    %9962 = vmatpush1.msra.mxu0 0.0
    %9963 = vmatprep.subr.mxu0 0.0
    %9964 = vmatpush1.msra.mxu0 0.0
    %9965 = vmatprep.subr.mxu0 0.0
    %9966 = vmatpush1.msra.mxu0 0.0
    %9967 = vmatprep.subr.mxu0 0.0
    %9968 = vmatpush1.msra.mxu0 0.0
    %9969 = vmatprep.subr.mxu0 0.0
    %9970 = vmatpush1.msra.mxu0 0.0
    %9971 = vmatprep.subr.mxu0 0.0
    %9972 = vmatpush1.msra.mxu0 0.0
    %9973 = vmatprep.subr.mxu0 0.0
    %9974 = vmatpush1.msra.mxu0 0.0
    %9975 = vmatprep.subr.mxu0 0.0
    %9976 = vmatpush1.msra.mxu0 0.0
    %9977 = vmatprep.subr.mxu0 0.0
    %9978 = vmatpush1.msra.mxu0 0.0
    %9979 = vmatprep.subr.mxu0 0.0
    %9980 = vmatpush1.msra.mxu0 0.0
    %9981 = vmatprep.subr.mxu0 0.0
    %9982 = vmatpush1.msra.mxu0 0.0
    %9983 = vmatprep.subr.mxu0 0.0
    %9984 = vmatpush1.msra.mxu0 0.0
    %9985 = vmatprep.subr.mxu0 0.0
    %9986 = vmatpush1.msra.mxu0 0.0
    %9987 = vmatprep.subr.mxu0 0.0
    %9988 = vmatpush1.msra.mxu0 0.0
    %9989 = vmatprep.subr.mxu0 0.0
    %9990 = vmatpush1.msra.mxu0 0.0
    %9991 = vmatprep.subr.mxu0 0.0
    %9992 = vmatpush1.msra.mxu0 0.0
    %9993 = vmatprep.subr.mxu0 0.0
    %9994 = vmatpush1.msra.mxu0 0.0
    %9995 = vmatprep.mubr.f32.mxu0 0.0
    %9996 = vmatmul.mubr.f32.gmra.mrb[0].mxu0 %v9929
    %v9997 = vpop.f32.mrb[0].mxu0
    %v9998 = vadd.f32 0.0, %v9997
    %v9999 = vpop.f32.mrb[0].mxu0
    %10000 = vdwg.mxu0
    %v10001 = vadd.f32 %v9923, %v9998
    %s10002 = scalar_lea.vmem %s5, 96
    %v10003 = vld [vmem:[%s10002] sm:$0xff]
    %v10004 = vld [vmem:[%s10002 + $0x8] sm:$0xff]
    %v10005 = vrot.slane %v9523, 2
    %v10006 = vrot.slane %v9527, 1
    %v10007 = vsel %vm9538, %v10006, %v10005
    %v10008 = vsel %vm9375, %v10007, 0
    %10010 = vmatprep.subr.mxu0 0.0
    %10011 = vmatpush1.msra.mxu0 %v10003
    %10012 = vmatprep.subr.mxu0 0.0
    %10013 = vmatpush1.msra.mxu0 %v10004
    %10014 = vmatprep.subr.mxu0 0.0
    %10015 = vmatpush1.msra.mxu0 0.0
    %10016 = vmatprep.subr.mxu0 0.0
    %10017 = vmatpush1.msra.mxu0 0.0
    %10018 = vmatprep.subr.mxu0 0.0
    %10019 = vmatpush1.msra.mxu0 0.0
    %10020 = vmatprep.subr.mxu0 0.0
    %10021 = vmatpush1.msra.mxu0 0.0
    %10022 = vmatprep.subr.mxu0 0.0
    %10023 = vmatpush1.msra.mxu0 0.0
    %10024 = vmatprep.subr.mxu0 0.0
    %10025 = vmatpush1.msra.mxu0 0.0
    %10026 = vmatprep.subr.mxu0 0.0
    %10027 = vmatpush1.msra.mxu0 0.0
    %10028 = vmatprep.subr.mxu0 0.0
    %10029 = vmatpush1.msra.mxu0 0.0
    %10030 = vmatprep.subr.mxu0 0.0
    %10031 = vmatpush1.msra.mxu0 0.0
    %10032 = vmatprep.subr.mxu0 0.0
    %10033 = vmatpush1.msra.mxu0 0.0
    %10034 = vmatprep.subr.mxu0 0.0
    %10035 = vmatpush1.msra.mxu0 0.0
    %10036 = vmatprep.subr.mxu0 0.0
    %10037 = vmatpush1.msra.mxu0 0.0
    %10038 = vmatprep.subr.mxu0 0.0
    %10039 = vmatpush1.msra.mxu0 0.0
    %10040 = vmatprep.subr.mxu0 0.0
    %10041 = vmatpush1.msra.mxu0 0.0
    %10042 = vmatprep.subr.mxu0 0.0
    %10043 = vmatpush1.msra.mxu0 0.0
    %10044 = vmatprep.subr.mxu0 0.0
    %10045 = vmatpush1.msra.mxu0 0.0
    %10046 = vmatprep.subr.mxu0 0.0
    %10047 = vmatpush1.msra.mxu0 0.0
    %10048 = vmatprep.subr.mxu0 0.0
    %10049 = vmatpush1.msra.mxu0 0.0
    %10050 = vmatprep.subr.mxu0 0.0
    %10051 = vmatpush1.msra.mxu0 0.0
    %10052 = vmatprep.subr.mxu0 0.0
    %10053 = vmatpush1.msra.mxu0 0.0
    %10054 = vmatprep.subr.mxu0 0.0
    %10055 = vmatpush1.msra.mxu0 0.0
    %10056 = vmatprep.subr.mxu0 0.0
    %10057 = vmatpush1.msra.mxu0 0.0
    %10058 = vmatprep.subr.mxu0 0.0
    %10059 = vmatpush1.msra.mxu0 0.0
    %10060 = vmatprep.subr.mxu0 0.0
    %10061 = vmatpush1.msra.mxu0 0.0
    %10062 = vmatprep.subr.mxu0 0.0
    %10063 = vmatpush1.msra.mxu0 0.0
    %10064 = vmatprep.subr.mxu0 0.0
    %10065 = vmatpush1.msra.mxu0 0.0
    %10066 = vmatprep.subr.mxu0 0.0
    %10067 = vmatpush1.msra.mxu0 0.0
    %10068 = vmatprep.subr.mxu0 0.0
    %10069 = vmatpush1.msra.mxu0 0.0
    %10070 = vmatprep.subr.mxu0 0.0
    %10071 = vmatpush1.msra.mxu0 0.0
    %10072 = vmatprep.subr.mxu0 0.0
    %10073 = vmatpush1.msra.mxu0 0.0
    %10074 = vmatprep.mubr.f32.mxu0 0.0
    %10075 = vmatmul.mubr.f32.gmra.mrb[0].mxu0 %v10008
    %v10076 = vpop.f32.mrb[0].mxu0
    %v10077 = vadd.f32 0.0, %v10076
    %v10078 = vpop.f32.mrb[0].mxu0
    %10079 = vdwg.mxu0
    %v10080 = vadd.f32 %v10001, %v10077
    %s10081 = scalar_lea.vmem %s5, 112
    %v10082 = vld [vmem:[%s10081] sm:$0xff]
    %v10083 = vld [vmem:[%s10081 + $0x8] sm:$0xff]
    %v10084 = vrot.slane %v9523, 3
    %v10085 = vrot.slane %v9527, 2
    %v10086 = vsel %vm9538, %v10085, %v10084
    %v10087 = vsel %vm9375, %v10086, 0
    %10089 = vmatprep.subr.mxu0 0.0
    %10090 = vmatpush1.msra.mxu0 %v10082
    %10091 = vmatprep.subr.mxu0 0.0
    %10092 = vmatpush1.msra.mxu0 %v10083
    %10093 = vmatprep.subr.mxu0 0.0
    %10094 = vmatpush1.msra.mxu0 0.0
    %10095 = vmatprep.subr.mxu0 0.0
    %10096 = vmatpush1.msra.mxu0 0.0
    %10097 = vmatprep.subr.mxu0 0.0
    %10098 = vmatpush1.msra.mxu0 0.0
    %10099 = vmatprep.subr.mxu0 0.0
    %10100 = vmatpush1.msra.mxu0 0.0
    %10101 = vmatprep.subr.mxu0 0.0
    %10102 = vmatpush1.msra.mxu0 0.0
    %10103 = vmatprep.subr.mxu0 0.0
    %10104 = vmatpush1.msra.mxu0 0.0
    %10105 = vmatprep.subr.mxu0 0.0
    %10106 = vmatpush1.msra.mxu0 0.0
    %10107 = vmatprep.subr.mxu0 0.0
    %10108 = vmatpush1.msra.mxu0 0.0
    %10109 = vmatprep.subr.mxu0 0.0
    %10110 = vmatpush1.msra.mxu0 0.0
    %10111 = vmatprep.subr.mxu0 0.0
    %10112 = vmatpush1.msra.mxu0 0.0
    %10113 = vmatprep.subr.mxu0 0.0
    %10114 = vmatpush1.msra.mxu0 0.0
    %10115 = vmatprep.subr.mxu0 0.0
    %10116 = vmatpush1.msra.mxu0 0.0
    %10117 = vmatprep.subr.mxu0 0.0
    %10118 = vmatpush1.msra.mxu0 0.0
    %10119 = vmatprep.subr.mxu0 0.0
    %10120 = vmatpush1.msra.mxu0 0.0
    %10121 = vmatprep.subr.mxu0 0.0
    %10122 = vmatpush1.msra.mxu0 0.0
    %10123 = vmatprep.subr.mxu0 0.0
    %10124 = vmatpush1.msra.mxu0 0.0
    %10125 = vmatprep.subr.mxu0 0.0
    %10126 = vmatpush1.msra.mxu0 0.0
    %10127 = vmatprep.subr.mxu0 0.0
    %10128 = vmatpush1.msra.mxu0 0.0
    %10129 = vmatprep.subr.mxu0 0.0
    %10130 = vmatpush1.msra.mxu0 0.0
    %10131 = vmatprep.subr.mxu0 0.0
    %10132 = vmatpush1.msra.mxu0 0.0
    %10133 = vmatprep.subr.mxu0 0.0
    %10134 = vmatpush1.msra.mxu0 0.0
    %10135 = vmatprep.subr.mxu0 0.0
    %10136 = vmatpush1.msra.mxu0 0.0
    %10137 = vmatprep.subr.mxu0 0.0
    %10138 = vmatpush1.msra.mxu0 0.0
    %10139 = vmatprep.subr.mxu0 0.0
    %10140 = vmatpush1.msra.mxu0 0.0
    %10141 = vmatprep.subr.mxu0 0.0
    %10142 = vmatpush1.msra.mxu0 0.0
    %10143 = vmatprep.subr.mxu0 0.0
    %10144 = vmatpush1.msra.mxu0 0.0
    %10145 = vmatprep.subr.mxu0 0.0
    %10146 = vmatpush1.msra.mxu0 0.0
    %10147 = vmatprep.subr.mxu0 0.0
    %10148 = vmatpush1.msra.mxu0 0.0
    %10149 = vmatprep.subr.mxu0 0.0
    %10150 = vmatpush1.msra.mxu0 0.0
    %10151 = vmatprep.subr.mxu0 0.0
    %10152 = vmatpush1.msra.mxu0 0.0
    %10153 = vmatprep.mubr.f32.mxu0 0.0
    %10154 = vmatmul.mubr.f32.gmra.mrb[0].mxu0 %v10087
    %v10155 = vpop.f32.mrb[0].mxu0
    %v10156 = vadd.f32 0.0, %v10155
    %v10157 = vpop.f32.mrb[0].mxu0
    %10158 = vdwg.mxu0
    %v10159 = vadd.f32 %v10080, %v10156
    %s10160 = scalar_lea.vmem %s5, 128
    %v10161 = vld [vmem:[%s10160] sm:$0xff]
    %v10162 = vld [vmem:[%s10160 + $0x8] sm:$0xff]
    %v10165 = vrot.slane %v9528, 7
    %v10166 = vsel %vm9538, %v10165, %v9524
    %v10167 = vsel %vm9375, %v10166, 0
    %10169 = vmatprep.subr.mxu0 0.0
    %10170 = vmatpush1.msra.mxu0 %v10161
    %10171 = vmatprep.subr.mxu0 0.0
    %10172 = vmatpush1.msra.mxu0 %v10162
    %10173 = vmatprep.subr.mxu0 0.0
    %10174 = vmatpush1.msra.mxu0 0.0
    %10175 = vmatprep.subr.mxu0 0.0
    %10176 = vmatpush1.msra.mxu0 0.0
    %10177 = vmatprep.subr.mxu0 0.0
    %10178 = vmatpush1.msra.mxu0 0.0
    %10179 = vmatprep.subr.mxu0 0.0
    %10180 = vmatpush1.msra.mxu0 0.0
    %10181 = vmatprep.subr.mxu0 0.0
    %10182 = vmatpush1.msra.mxu0 0.0
    %10183 = vmatprep.subr.mxu0 0.0
    %10184 = vmatpush1.msra.mxu0 0.0
    %10185 = vmatprep.subr.mxu0 0.0
    %10186 = vmatpush1.msra.mxu0 0.0
    %10187 = vmatprep.subr.mxu0 0.0
    %10188 = vmatpush1.msra.mxu0 0.0
    %10189 = vmatprep.subr.mxu0 0.0
    %10190 = vmatpush1.msra.mxu0 0.0
    %10191 = vmatprep.subr.mxu0 0.0
    %10192 = vmatpush1.msra.mxu0 0.0
    %10193 = vmatprep.subr.mxu0 0.0
    %10194 = vmatpush1.msra.mxu0 0.0
    %10195 = vmatprep.subr.mxu0 0.0
    %10196 = vmatpush1.msra.mxu0 0.0
    %10197 = vmatprep.subr.mxu0 0.0
    %10198 = vmatpush1.msra.mxu0 0.0
    %10199 = vmatprep.subr.mxu0 0.0
    %10200 = vmatpush1.msra.mxu0 0.0
    %10201 = vmatprep.subr.mxu0 0.0
    %10202 = vmatpush1.msra.mxu0 0.0
    %10203 = vmatprep.subr.mxu0 0.0
    %10204 = vmatpush1.msra.mxu0 0.0
    %10205 = vmatprep.subr.mxu0 0.0
    %10206 = vmatpush1.msra.mxu0 0.0
    %10207 = vmatprep.subr.mxu0 0.0
    %10208 = vmatpush1.msra.mxu0 0.0
    %10209 = vmatprep.subr.mxu0 0.0
    %10210 = vmatpush1.msra.mxu0 0.0
    %10211 = vmatprep.subr.mxu0 0.0
    %10212 = vmatpush1.msra.mxu0 0.0
    %10213 = vmatprep.subr.mxu0 0.0
    %10214 = vmatpush1.msra.mxu0 0.0
    %10215 = vmatprep.subr.mxu0 0.0
    %10216 = vmatpush1.msra.mxu0 0.0
    %10217 = vmatprep.subr.mxu0 0.0
    %10218 = vmatpush1.msra.mxu0 0.0
    %10219 = vmatprep.subr.mxu0 0.0
    %10220 = vmatpush1.msra.mxu0 0.0
    %10221 = vmatprep.subr.mxu0 0.0
    %10222 = vmatpush1.msra.mxu0 0.0
    %10223 = vmatprep.subr.mxu0 0.0
    %10224 = vmatpush1.msra.mxu0 0.0
    %10225 = vmatprep.subr.mxu0 0.0
    %10226 = vmatpush1.msra.mxu0 0.0
    %10227 = vmatprep.subr.mxu0 0.0
    %10228 = vmatpush1.msra.mxu0 0.0
    %10229 = vmatprep.subr.mxu0 0.0
    %10230 = vmatpush1.msra.mxu0 0.0
    %10231 = vmatprep.subr.mxu0 0.0
    %10232 = vmatpush1.msra.mxu0 0.0
    %10233 = vmatprep.mubr.f32.mxu0 0.0
    %10234 = vmatmul.mubr.f32.gmra.mrb[0].mxu0 %v10167
    %v10235 = vpop.f32.mrb[0].mxu0
    %v10236 = vadd.f32 0.0, %v10235
    %v10237 = vpop.f32.mrb[0].mxu0
    %10238 = vdwg.mxu0
    %v10239 = vadd.f32 %v10159, %v10236
    %s10240 = scalar_lea.vmem %s5, 144
    %v10241 = vld [vmem:[%s10240] sm:$0xff]
    %v10242 = vld [vmem:[%s10240 + $0x8] sm:$0xff]
    %v10243 = vrot.slane %v9524, 1
    %v10244 = vsel %vm9538, %v9528, %v10243
    %v10245 = vsel %vm9375, %v10244, 0
    %10247 = vmatprep.subr.mxu0 0.0
    %10248 = vmatpush1.msra.mxu0 %v10241
    %10249 = vmatprep.subr.mxu0 0.0
    %10250 = vmatpush1.msra.mxu0 %v10242
    %10251 = vmatprep.subr.mxu0 0.0
    %10252 = vmatpush1.msra.mxu0 0.0
    %10253 = vmatprep.subr.mxu0 0.0
    %10254 = vmatpush1.msra.mxu0 0.0
    %10255 = vmatprep.subr.mxu0 0.0
    %10256 = vmatpush1.msra.mxu0 0.0
    %10257 = vmatprep.subr.mxu0 0.0
    %10258 = vmatpush1.msra.mxu0 0.0
    %10259 = vmatprep.subr.mxu0 0.0
    %10260 = vmatpush1.msra.mxu0 0.0
    %10261 = vmatprep.subr.mxu0 0.0
    %10262 = vmatpush1.msra.mxu0 0.0
    %10263 = vmatprep.subr.mxu0 0.0
    %10264 = vmatpush1.msra.mxu0 0.0
    %10265 = vmatprep.subr.mxu0 0.0
    %10266 = vmatpush1.msra.mxu0 0.0
    %10267 = vmatprep.subr.mxu0 0.0
    %10268 = vmatpush1.msra.mxu0 0.0
    %10269 = vmatprep.subr.mxu0 0.0
    %10270 = vmatpush1.msra.mxu0 0.0
    %10271 = vmatprep.subr.mxu0 0.0
    %10272 = vmatpush1.msra.mxu0 0.0
    %10273 = vmatprep.subr.mxu0 0.0
    %10274 = vmatpush1.msra.mxu0 0.0
    %10275 = vmatprep.subr.mxu0 0.0
    %10276 = vmatpush1.msra.mxu0 0.0
    %10277 = vmatprep.subr.mxu0 0.0
    %10278 = vmatpush1.msra.mxu0 0.0
    %10279 = vmatprep.subr.mxu0 0.0
    %10280 = vmatpush1.msra.mxu0 0.0
    %10281 = vmatprep.subr.mxu0 0.0
    %10282 = vmatpush1.msra.mxu0 0.0
    %10283 = vmatprep.subr.mxu0 0.0
    %10284 = vmatpush1.msra.mxu0 0.0
    %10285 = vmatprep.subr.mxu0 0.0
    %10286 = vmatpush1.msra.mxu0 0.0
    %10287 = vmatprep.subr.mxu0 0.0
    %10288 = vmatpush1.msra.mxu0 0.0
    %10289 = vmatprep.subr.mxu0 0.0
    %10290 = vmatpush1.msra.mxu0 0.0
    %10291 = vmatprep.subr.mxu0 0.0
    %10292 = vmatpush1.msra.mxu0 0.0
    %10293 = vmatprep.subr.mxu0 0.0
    %10294 = vmatpush1.msra.mxu0 0.0
    %10295 = vmatprep.subr.mxu0 0.0
    %10296 = vmatpush1.msra.mxu0 0.0
    %10297 = vmatprep.subr.mxu0 0.0
    %10298 = vmatpush1.msra.mxu0 0.0
    %10299 = vmatprep.subr.mxu0 0.0
    %10300 = vmatpush1.msra.mxu0 0.0
    %10301 = vmatprep.subr.mxu0 0.0
    %10302 = vmatpush1.msra.mxu0 0.0
    %10303 = vmatprep.subr.mxu0 0.0
    %10304 = vmatpush1.msra.mxu0 0.0
    %10305 = vmatprep.subr.mxu0 0.0
    %10306 = vmatpush1.msra.mxu0 0.0
    %10307 = vmatprep.subr.mxu0 0.0
    %10308 = vmatpush1.msra.mxu0 0.0
    %10309 = vmatprep.subr.mxu0 0.0
    %10310 = vmatpush1.msra.mxu0 0.0
    %10311 = vmatprep.mubr.f32.mxu0 0.0
    %10312 = vmatmul.mubr.f32.gmra.mrb[0].mxu0 %v10245
    %v10313 = vpop.f32.mrb[0].mxu0
    %v10314 = vadd.f32 0.0, %v10313
    %v10315 = vpop.f32.mrb[0].mxu0
    %10316 = vdwg.mxu0
    %v10317 = vadd.f32 %v10239, %v10314
    %s10318 = scalar_lea.vmem %s5, 160
    %v10319 = vld [vmem:[%s10318] sm:$0xff]
    %v10320 = vld [vmem:[%s10318 + $0x8] sm:$0xff]
    %v10321 = vrot.slane %v9524, 2
    %v10322 = vrot.slane %v9528, 1
    %v10323 = vsel %vm9538, %v10322, %v10321
    %v10324 = vsel %vm9375, %v10323, 0
    %10326 = vmatprep.subr.mxu0 0.0
    %10327 = vmatpush1.msra.mxu0 %v10319
    %10328 = vmatprep.subr.mxu0 0.0
    %10329 = vmatpush1.msra.mxu0 %v10320
    %10330 = vmatprep.subr.mxu0 0.0
    %10331 = vmatpush1.msra.mxu0 0.0
    %10332 = vmatprep.subr.mxu0 0.0
    %10333 = vmatpush1.msra.mxu0 0.0
    %10334 = vmatprep.subr.mxu0 0.0
    %10335 = vmatpush1.msra.mxu0 0.0
    %10336 = vmatprep.subr.mxu0 0.0
    %10337 = vmatpush1.msra.mxu0 0.0
    %10338 = vmatprep.subr.mxu0 0.0
    %10339 = vmatpush1.msra.mxu0 0.0
    %10340 = vmatprep.subr.mxu0 0.0
    %10341 = vmatpush1.msra.mxu0 0.0
    %10342 = vmatprep.subr.mxu0 0.0
    %10343 = vmatpush1.msra.mxu0 0.0
    %10344 = vmatprep.subr.mxu0 0.0
    %10345 = vmatpush1.msra.mxu0 0.0
    %10346 = vmatprep.subr.mxu0 0.0
    %10347 = vmatpush1.msra.mxu0 0.0
    %10348 = vmatprep.subr.mxu0 0.0
    %10349 = vmatpush1.msra.mxu0 0.0
    %10350 = vmatprep.subr.mxu0 0.0
    %10351 = vmatpush1.msra.mxu0 0.0
    %10352 = vmatprep.subr.mxu0 0.0
    %10353 = vmatpush1.msra.mxu0 0.0
    %10354 = vmatprep.subr.mxu0 0.0
    %10355 = vmatpush1.msra.mxu0 0.0
    %10356 = vmatprep.subr.mxu0 0.0
    %10357 = vmatpush1.msra.mxu0 0.0
    %10358 = vmatprep.subr.mxu0 0.0
    %10359 = vmatpush1.msra.mxu0 0.0
    %10360 = vmatprep.subr.mxu0 0.0
    %10361 = vmatpush1.msra.mxu0 0.0
    %10362 = vmatprep.subr.mxu0 0.0
    %10363 = vmatpush1.msra.mxu0 0.0
    %10364 = vmatprep.subr.mxu0 0.0
    %10365 = vmatpush1.msra.mxu0 0.0
    %10366 = vmatprep.subr.mxu0 0.0
    %10367 = vmatpush1.msra.mxu0 0.0
    %10368 = vmatprep.subr.mxu0 0.0
    %10369 = vmatpush1.msra.mxu0 0.0
    %10370 = vmatprep.subr.mxu0 0.0
    %10371 = vmatpush1.msra.mxu0 0.0
    %10372 = vmatprep.subr.mxu0 0.0
    %10373 = vmatpush1.msra.mxu0 0.0
    %10374 = vmatprep.subr.mxu0 0.0
    %10375 = vmatpush1.msra.mxu0 0.0
    %10376 = vmatprep.subr.mxu0 0.0
    %10377 = vmatpush1.msra.mxu0 0.0
    %10378 = vmatprep.subr.mxu0 0.0
    %10379 = vmatpush1.msra.mxu0 0.0
    %10380 = vmatprep.subr.mxu0 0.0
    %10381 = vmatpush1.msra.mxu0 0.0
    %10382 = vmatprep.subr.mxu0 0.0
    %10383 = vmatpush1.msra.mxu0 0.0
    %10384 = vmatprep.subr.mxu0 0.0
    %10385 = vmatpush1.msra.mxu0 0.0
    %10386 = vmatprep.subr.mxu0 0.0
    %10387 = vmatpush1.msra.mxu0 0.0
    %10388 = vmatprep.subr.mxu0 0.0
    %10389 = vmatpush1.msra.mxu0 0.0
    %10390 = vmatprep.mubr.f32.mxu0 0.0
    %10391 = vmatmul.mubr.f32.gmra.mrb[0].mxu0 %v10324
    %v10392 = vpop.f32.mrb[0].mxu0
    %v10393 = vadd.f32 0.0, %v10392
    %v10394 = vpop.f32.mrb[0].mxu0
    %10395 = vdwg.mxu0
    %v10396 = vadd.f32 %v10317, %v10393
    %s10397 = scalar_lea.vmem %s5, 176
    %v10398 = vld [vmem:[%s10397] sm:$0xff]
    %v10399 = vld [vmem:[%s10397 + $0x8] sm:$0xff]
    %v10400 = vrot.slane %v9524, 3
    %v10401 = vrot.slane %v9528, 2
    %v10402 = vsel %vm9538, %v10401, %v10400
    %v10403 = vsel %vm9375, %v10402, 0
    %10405 = vmatprep.subr.mxu0 0.0
    %10406 = vmatpush1.msra.mxu0 %v10398
    %10407 = vmatprep.subr.mxu0 0.0
    %10408 = vmatpush1.msra.mxu0 %v10399
    %10409 = vmatprep.subr.mxu0 0.0
    %10410 = vmatpush1.msra.mxu0 0.0
    %10411 = vmatprep.subr.mxu0 0.0
    %10412 = vmatpush1.msra.mxu0 0.0
    %10413 = vmatprep.subr.mxu0 0.0
    %10414 = vmatpush1.msra.mxu0 0.0
    %10415 = vmatprep.subr.mxu0 0.0
    %10416 = vmatpush1.msra.mxu0 0.0
    %10417 = vmatprep.subr.mxu0 0.0
    %10418 = vmatpush1.msra.mxu0 0.0
    %10419 = vmatprep.subr.mxu0 0.0
    %10420 = vmatpush1.msra.mxu0 0.0
    %10421 = vmatprep.subr.mxu0 0.0
    %10422 = vmatpush1.msra.mxu0 0.0
    %10423 = vmatprep.subr.mxu0 0.0
    %10424 = vmatpush1.msra.mxu0 0.0
    %10425 = vmatprep.subr.mxu0 0.0
    %10426 = vmatpush1.msra.mxu0 0.0
    %10427 = vmatprep.subr.mxu0 0.0
    %10428 = vmatpush1.msra.mxu0 0.0
    %10429 = vmatprep.subr.mxu0 0.0
    %10430 = vmatpush1.msra.mxu0 0.0
    %10431 = vmatprep.subr.mxu0 0.0
    %10432 = vmatpush1.msra.mxu0 0.0
    %10433 = vmatprep.subr.mxu0 0.0
    %10434 = vmatpush1.msra.mxu0 0.0
    %10435 = vmatprep.subr.mxu0 0.0
    %10436 = vmatpush1.msra.mxu0 0.0
    %10437 = vmatprep.subr.mxu0 0.0
    %10438 = vmatpush1.msra.mxu0 0.0
    %10439 = vmatprep.subr.mxu0 0.0
    %10440 = vmatpush1.msra.mxu0 0.0
    %10441 = vmatprep.subr.mxu0 0.0
    %10442 = vmatpush1.msra.mxu0 0.0
    %10443 = vmatprep.subr.mxu0 0.0
    %10444 = vmatpush1.msra.mxu0 0.0
    %10445 = vmatprep.subr.mxu0 0.0
    %10446 = vmatpush1.msra.mxu0 0.0
    %10447 = vmatprep.subr.mxu0 0.0
    %10448 = vmatpush1.msra.mxu0 0.0
    %10449 = vmatprep.subr.mxu0 0.0
    %10450 = vmatpush1.msra.mxu0 0.0
    %10451 = vmatprep.subr.mxu0 0.0
    %10452 = vmatpush1.msra.mxu0 0.0
    %10453 = vmatprep.subr.mxu0 0.0
    %10454 = vmatpush1.msra.mxu0 0.0
    %10455 = vmatprep.subr.mxu0 0.0
    %10456 = vmatpush1.msra.mxu0 0.0
    %10457 = vmatprep.subr.mxu0 0.0
    %10458 = vmatpush1.msra.mxu0 0.0
    %10459 = vmatprep.subr.mxu0 0.0
    %10460 = vmatpush1.msra.mxu0 0.0
    %10461 = vmatprep.subr.mxu0 0.0
    %10462 = vmatpush1.msra.mxu0 0.0
    %10463 = vmatprep.subr.mxu0 0.0
    %10464 = vmatpush1.msra.mxu0 0.0
    %10465 = vmatprep.subr.mxu0 0.0
    %10466 = vmatpush1.msra.mxu0 0.0
    %10467 = vmatprep.subr.mxu0 0.0
    %10468 = vmatpush1.msra.mxu0 0.0
    %10469 = vmatprep.mubr.f32.mxu0 0.0
    %10470 = vmatmul.mubr.f32.gmra.mrb[0].mxu0 %v10403
    %v10471 = vpop.f32.mrb[0].mxu0
    %v10472 = vadd.f32 0.0, %v10471
    %v10473 = vpop.f32.mrb[0].mxu0
    %10474 = vdwg.mxu0
    %v10475 = vadd.f32 %v10396, %v10472
    %s10476 = scalar_lea.vmem %s5, 192
    %v10477 = vld [vmem:[%s10476] sm:$0xff]
    %v10478 = vld [vmem:[%s10476 + $0x8] sm:$0xff]
    %v10481 = vrot.slane %v9529, 7
    %v10482 = vsel %vm9538, %v10481, %v9525
    %v10483 = vsel %vm9375, %v10482, 0
    %10485 = vmatprep.subr.mxu0 0.0
    %10486 = vmatpush1.msra.mxu0 %v10477
    %10487 = vmatprep.subr.mxu0 0.0
    %10488 = vmatpush1.msra.mxu0 %v10478
    %10489 = vmatprep.subr.mxu0 0.0
    %10490 = vmatpush1.msra.mxu0 0.0
    %10491 = vmatprep.subr.mxu0 0.0
    %10492 = vmatpush1.msra.mxu0 0.0
    %10493 = vmatprep.subr.mxu0 0.0
    %10494 = vmatpush1.msra.mxu0 0.0
    %10495 = vmatprep.subr.mxu0 0.0
    %10496 = vmatpush1.msra.mxu0 0.0
    %10497 = vmatprep.subr.mxu0 0.0
    %10498 = vmatpush1.msra.mxu0 0.0
    %10499 = vmatprep.subr.mxu0 0.0
    %10500 = vmatpush1.msra.mxu0 0.0
    %10501 = vmatprep.subr.mxu0 0.0
    %10502 = vmatpush1.msra.mxu0 0.0
    %10503 = vmatprep.subr.mxu0 0.0
    %10504 = vmatpush1.msra.mxu0 0.0
    %10505 = vmatprep.subr.mxu0 0.0
    %10506 = vmatpush1.msra.mxu0 0.0
    %10507 = vmatprep.subr.mxu0 0.0
    %10508 = vmatpush1.msra.mxu0 0.0
    %10509 = vmatprep.subr.mxu0 0.0
    %10510 = vmatpush1.msra.mxu0 0.0
    %10511 = vmatprep.subr.mxu0 0.0
    %10512 = vmatpush1.msra.mxu0 0.0
    %10513 = vmatprep.subr.mxu0 0.0
    %10514 = vmatpush1.msra.mxu0 0.0
    %10515 = vmatprep.subr.mxu0 0.0
    %10516 = vmatpush1.msra.mxu0 0.0
    %10517 = vmatprep.subr.mxu0 0.0
    %10518 = vmatpush1.msra.mxu0 0.0
    %10519 = vmatprep.subr.mxu0 0.0
    %10520 = vmatpush1.msra.mxu0 0.0
    %10521 = vmatprep.subr.mxu0 0.0
    %10522 = vmatpush1.msra.mxu0 0.0
    %10523 = vmatprep.subr.mxu0 0.0
    %10524 = vmatpush1.msra.mxu0 0.0
    %10525 = vmatprep.subr.mxu0 0.0
    %10526 = vmatpush1.msra.mxu0 0.0
    %10527 = vmatprep.subr.mxu0 0.0
    %10528 = vmatpush1.msra.mxu0 0.0
    %10529 = vmatprep.subr.mxu0 0.0
    %10530 = vmatpush1.msra.mxu0 0.0
    %10531 = vmatprep.subr.mxu0 0.0
    %10532 = vmatpush1.msra.mxu0 0.0
    %10533 = vmatprep.subr.mxu0 0.0
    %10534 = vmatpush1.msra.mxu0 0.0
    %10535 = vmatprep.subr.mxu0 0.0
    %10536 = vmatpush1.msra.mxu0 0.0
    %10537 = vmatprep.subr.mxu0 0.0
    %10538 = vmatpush1.msra.mxu0 0.0
    %10539 = vmatprep.subr.mxu0 0.0
    %10540 = vmatpush1.msra.mxu0 0.0
    %10541 = vmatprep.subr.mxu0 0.0
    %10542 = vmatpush1.msra.mxu0 0.0
    %10543 = vmatprep.subr.mxu0 0.0
    %10544 = vmatpush1.msra.mxu0 0.0
    %10545 = vmatprep.subr.mxu0 0.0
    %10546 = vmatpush1.msra.mxu0 0.0
    %10547 = vmatprep.subr.mxu0 0.0
    %10548 = vmatpush1.msra.mxu0 0.0
    %10549 = vmatprep.mubr.f32.mxu0 0.0
    %10550 = vmatmul.mubr.f32.gmra.mrb[0].mxu0 %v10483
    %v10551 = vpop.f32.mrb[0].mxu0
    %v10552 = vadd.f32 0.0, %v10551
    %v10553 = vpop.f32.mrb[0].mxu0
    %10554 = vdwg.mxu0
    %v10555 = vadd.f32 %v10475, %v10552
    %s10556 = scalar_lea.vmem %s5, 208
    %v10557 = vld [vmem:[%s10556] sm:$0xff]
    %v10558 = vld [vmem:[%s10556 + $0x8] sm:$0xff]
    %v10559 = vrot.slane %v9525, 1
    %v10560 = vsel %vm9538, %v9529, %v10559
    %v10561 = vsel %vm9375, %v10560, 0
    %10563 = vmatprep.subr.mxu0 0.0
    %10564 = vmatpush1.msra.mxu0 %v10557
    %10565 = vmatprep.subr.mxu0 0.0
    %10566 = vmatpush1.msra.mxu0 %v10558
    %10567 = vmatprep.subr.mxu0 0.0
    %10568 = vmatpush1.msra.mxu0 0.0
    %10569 = vmatprep.subr.mxu0 0.0
    %10570 = vmatpush1.msra.mxu0 0.0
    %10571 = vmatprep.subr.mxu0 0.0
    %10572 = vmatpush1.msra.mxu0 0.0
    %10573 = vmatprep.subr.mxu0 0.0
    %10574 = vmatpush1.msra.mxu0 0.0
    %10575 = vmatprep.subr.mxu0 0.0
    %10576 = vmatpush1.msra.mxu0 0.0
    %10577 = vmatprep.subr.mxu0 0.0
    %10578 = vmatpush1.msra.mxu0 0.0
    %10579 = vmatprep.subr.mxu0 0.0
    %10580 = vmatpush1.msra.mxu0 0.0
    %10581 = vmatprep.subr.mxu0 0.0
    %10582 = vmatpush1.msra.mxu0 0.0
    %10583 = vmatprep.subr.mxu0 0.0
    %10584 = vmatpush1.msra.mxu0 0.0
    %10585 = vmatprep.subr.mxu0 0.0
    %10586 = vmatpush1.msra.mxu0 0.0
    %10587 = vmatprep.subr.mxu0 0.0
    %10588 = vmatpush1.msra.mxu0 0.0
    %10589 = vmatprep.subr.mxu0 0.0
    %10590 = vmatpush1.msra.mxu0 0.0
    %10591 = vmatprep.subr.mxu0 0.0
    %10592 = vmatpush1.msra.mxu0 0.0
    %10593 = vmatprep.subr.mxu0 0.0
    %10594 = vmatpush1.msra.mxu0 0.0
    %10595 = vmatprep.subr.mxu0 0.0
    %10596 = vmatpush1.msra.mxu0 0.0
    %10597 = vmatprep.subr.mxu0 0.0
    %10598 = vmatpush1.msra.mxu0 0.0
    %10599 = vmatprep.subr.mxu0 0.0
    %10600 = vmatpush1.msra.mxu0 0.0
    %10601 = vmatprep.subr.mxu0 0.0
    %10602 = vmatpush1.msra.mxu0 0.0
    %10603 = vmatprep.subr.mxu0 0.0
    %10604 = vmatpush1.msra.mxu0 0.0
    %10605 = vmatprep.subr.mxu0 0.0
    %10606 = vmatpush1.msra.mxu0 0.0
    %10607 = vmatprep.subr.mxu0 0.0
    %10608 = vmatpush1.msra.mxu0 0.0
    %10609 = vmatprep.subr.mxu0 0.0
    %10610 = vmatpush1.msra.mxu0 0.0
    %10611 = vmatprep.subr.mxu0 0.0
    %10612 = vmatpush1.msra.mxu0 0.0
    %10613 = vmatprep.subr.mxu0 0.0
    %10614 = vmatpush1.msra.mxu0 0.0
    %10615 = vmatprep.subr.mxu0 0.0
    %10616 = vmatpush1.msra.mxu0 0.0
    %10617 = vmatprep.subr.mxu0 0.0
    %10618 = vmatpush1.msra.mxu0 0.0
    %10619 = vmatprep.subr.mxu0 0.0
    %10620 = vmatpush1.msra.mxu0 0.0
    %10621 = vmatprep.subr.mxu0 0.0
    %10622 = vmatpush1.msra.mxu0 0.0
    %10623 = vmatprep.subr.mxu0 0.0
    %10624 = vmatpush1.msra.mxu0 0.0
    %10625 = vmatprep.subr.mxu0 0.0
    %10626 = vmatpush1.msra.mxu0 0.0
    %10627 = vmatprep.mubr.f32.mxu0 0.0
    %10628 = vmatmul.mubr.f32.gmra.mrb[0].mxu0 %v10561
    %v10629 = vpop.f32.mrb[0].mxu0
    %v10630 = vadd.f32 0.0, %v10629
    %v10631 = vpop.f32.mrb[0].mxu0
    %10632 = vdwg.mxu0
    %v10633 = vadd.f32 %v10555, %v10630
    %s10634 = scalar_lea.vmem %s5, 224
    %v10635 = vld [vmem:[%s10634] sm:$0xff]
    %v10636 = vld [vmem:[%s10634 + $0x8] sm:$0xff]
    %v10637 = vrot.slane %v9525, 2
    %v10638 = vrot.slane %v9529, 1
    %v10639 = vsel %vm9538, %v10638, %v10637
    %v10640 = vsel %vm9375, %v10639, 0
    %10642 = vmatprep.subr.mxu0 0.0
    %10643 = vmatpush1.msra.mxu0 %v10635
    %10644 = vmatprep.subr.mxu0 0.0
    %10645 = vmatpush1.msra.mxu0 %v10636
    %10646 = vmatprep.subr.mxu0 0.0
    %10647 = vmatpush1.msra.mxu0 0.0
    %10648 = vmatprep.subr.mxu0 0.0
    %10649 = vmatpush1.msra.mxu0 0.0
    %10650 = vmatprep.subr.mxu0 0.0
    %10651 = vmatpush1.msra.mxu0 0.0
    %10652 = vmatprep.subr.mxu0 0.0
    %10653 = vmatpush1.msra.mxu0 0.0
    %10654 = vmatprep.subr.mxu0 0.0
    %10655 = vmatpush1.msra.mxu0 0.0
    %10656 = vmatprep.subr.mxu0 0.0
    %10657 = vmatpush1.msra.mxu0 0.0
    %10658 = vmatprep.subr.mxu0 0.0
    %10659 = vmatpush1.msra.mxu0 0.0
    %10660 = vmatprep.subr.mxu0 0.0
    %10661 = vmatpush1.msra.mxu0 0.0
    %10662 = vmatprep.subr.mxu0 0.0
    %10663 = vmatpush1.msra.mxu0 0.0
    %10664 = vmatprep.subr.mxu0 0.0
    %10665 = vmatpush1.msra.mxu0 0.0
    %10666 = vmatprep.subr.mxu0 0.0
    %10667 = vmatpush1.msra.mxu0 0.0
    %10668 = vmatprep.subr.mxu0 0.0
    %10669 = vmatpush1.msra.mxu0 0.0
    %10670 = vmatprep.subr.mxu0 0.0
    %10671 = vmatpush1.msra.mxu0 0.0
    %10672 = vmatprep.subr.mxu0 0.0
    %10673 = vmatpush1.msra.mxu0 0.0
    %10674 = vmatprep.subr.mxu0 0.0
    %10675 = vmatpush1.msra.mxu0 0.0
    %10676 = vmatprep.subr.mxu0 0.0
    %10677 = vmatpush1.msra.mxu0 0.0
    %10678 = vmatprep.subr.mxu0 0.0
    %10679 = vmatpush1.msra.mxu0 0.0
    %10680 = vmatprep.subr.mxu0 0.0
    %10681 = vmatpush1.msra.mxu0 0.0
    %10682 = vmatprep.subr.mxu0 0.0
    %10683 = vmatpush1.msra.mxu0 0.0
    %10684 = vmatprep.subr.mxu0 0.0
    %10685 = vmatpush1.msra.mxu0 0.0
    %10686 = vmatprep.subr.mxu0 0.0
    %10687 = vmatpush1.msra.mxu0 0.0
    %10688 = vmatprep.subr.mxu0 0.0
    %10689 = vmatpush1.msra.mxu0 0.0
    %10690 = vmatprep.subr.mxu0 0.0
    %10691 = vmatpush1.msra.mxu0 0.0
    %10692 = vmatprep.subr.mxu0 0.0
    %10693 = vmatpush1.msra.mxu0 0.0
    %10694 = vmatprep.subr.mxu0 0.0
    %10695 = vmatpush1.msra.mxu0 0.0
    %10696 = vmatprep.subr.mxu0 0.0
    %10697 = vmatpush1.msra.mxu0 0.0
    %10698 = vmatprep.subr.mxu0 0.0
    %10699 = vmatpush1.msra.mxu0 0.0
    %10700 = vmatprep.subr.mxu0 0.0
    %10701 = vmatpush1.msra.mxu0 0.0
    %10702 = vmatprep.subr.mxu0 0.0
    %10703 = vmatpush1.msra.mxu0 0.0
    %10704 = vmatprep.subr.mxu0 0.0
    %10705 = vmatpush1.msra.mxu0 0.0
    %10706 = vmatprep.mubr.f32.mxu0 0.0
    %10707 = vmatmul.mubr.f32.gmra.mrb[0].mxu0 %v10640
    %v10708 = vpop.f32.mrb[0].mxu0
    %v10709 = vadd.f32 0.0, %v10708
    %v10710 = vpop.f32.mrb[0].mxu0
    %10711 = vdwg.mxu0
    %v10712 = vadd.f32 %v10633, %v10709
    %s10713 = scalar_lea.vmem %s5, 240
    %v10714 = vld [vmem:[%s10713] sm:$0xff]
    %v10715 = vld [vmem:[%s10713 + $0x8] sm:$0xff]
    %v10716 = vrot.slane %v9525, 3
    %v10717 = vrot.slane %v9529, 2
    %v10718 = vsel %vm9538, %v10717, %v10716
    %v10719 = vsel %vm9375, %v10718, 0
    %10721 = vmatprep.subr.mxu0 0.0
    %10722 = vmatpush1.msra.mxu0 %v10714
    %10723 = vmatprep.subr.mxu0 0.0
    %10724 = vmatpush1.msra.mxu0 %v10715
    %10725 = vmatprep.subr.mxu0 0.0
    %10726 = vmatpush1.msra.mxu0 0.0
    %10727 = vmatprep.subr.mxu0 0.0
    %10728 = vmatpush1.msra.mxu0 0.0
    %10729 = vmatprep.subr.mxu0 0.0
    %10730 = vmatpush1.msra.mxu0 0.0
    %10731 = vmatprep.subr.mxu0 0.0
    %10732 = vmatpush1.msra.mxu0 0.0
    %10733 = vmatprep.subr.mxu0 0.0
    %10734 = vmatpush1.msra.mxu0 0.0
    %10735 = vmatprep.subr.mxu0 0.0
    %10736 = vmatpush1.msra.mxu0 0.0
    %10737 = vmatprep.subr.mxu0 0.0
    %10738 = vmatpush1.msra.mxu0 0.0
    %10739 = vmatprep.subr.mxu0 0.0
    %10740 = vmatpush1.msra.mxu0 0.0
    %10741 = vmatprep.subr.mxu0 0.0
    %10742 = vmatpush1.msra.mxu0 0.0
    %10743 = vmatprep.subr.mxu0 0.0
    %10744 = vmatpush1.msra.mxu0 0.0
    %10745 = vmatprep.subr.mxu0 0.0
    %10746 = vmatpush1.msra.mxu0 0.0
    %10747 = vmatprep.subr.mxu0 0.0
    %10748 = vmatpush1.msra.mxu0 0.0
    %10749 = vmatprep.subr.mxu0 0.0
    %10750 = vmatpush1.msra.mxu0 0.0
    %10751 = vmatprep.subr.mxu0 0.0
    %10752 = vmatpush1.msra.mxu0 0.0
    %10753 = vmatprep.subr.mxu0 0.0
    %10754 = vmatpush1.msra.mxu0 0.0
    %10755 = vmatprep.subr.mxu0 0.0
    %10756 = vmatpush1.msra.mxu0 0.0
    %10757 = vmatprep.subr.mxu0 0.0
    %10758 = vmatpush1.msra.mxu0 0.0
    %10759 = vmatprep.subr.mxu0 0.0
    %10760 = vmatpush1.msra.mxu0 0.0
    %10761 = vmatprep.subr.mxu0 0.0
    %10762 = vmatpush1.msra.mxu0 0.0
    %10763 = vmatprep.subr.mxu0 0.0
    %10764 = vmatpush1.msra.mxu0 0.0
    %10765 = vmatprep.subr.mxu0 0.0
    %10766 = vmatpush1.msra.mxu0 0.0
    %10767 = vmatprep.subr.mxu0 0.0
    %10768 = vmatpush1.msra.mxu0 0.0
    %10769 = vmatprep.subr.mxu0 0.0
    %10770 = vmatpush1.msra.mxu0 0.0
    %10771 = vmatprep.subr.mxu0 0.0
    %10772 = vmatpush1.msra.mxu0 0.0
    %10773 = vmatprep.subr.mxu0 0.0
    %10774 = vmatpush1.msra.mxu0 0.0
    %10775 = vmatprep.subr.mxu0 0.0
    %10776 = vmatpush1.msra.mxu0 0.0
    %10777 = vmatprep.subr.mxu0 0.0
    %10778 = vmatpush1.msra.mxu0 0.0
    %10779 = vmatprep.subr.mxu0 0.0
    %10780 = vmatpush1.msra.mxu0 0.0
    %10781 = vmatprep.subr.mxu0 0.0
    %10782 = vmatpush1.msra.mxu0 0.0
    %10783 = vmatprep.subr.mxu0 0.0
    %10784 = vmatpush1.msra.mxu0 0.0
    %10785 = vmatprep.mubr.f32.mxu0 0.0
    %10786 = vmatmul.mubr.f32.gmra.mrb[0].mxu0 %v10719
    %v10787 = vpop.f32.mrb[0].mxu0
    %v10788 = vadd.f32 0.0, %v10787
    %v10789 = vpop.f32.mrb[0].mxu0
    %10790 = vdwg.mxu0
    %v10791 = vadd.f32 %v10712, %v10788
    %v10792 = vld [vmem:[%s6] sm:$0x1]
    %v10794 = vlaneseq
    %v10795 = vshrl.u32 %v10794, 7
    %v10796 = vsub.s32 0, %v10795
    %v10797 = vrot.slane %v10792, %v10796
    %v10799 = vadd.f32 %v10791, %v10797
    %vm10800 = vcmask 74752
    %10801 = vst.msk [vmem:[#allocation8] sm:$0x3] %vm10800, %v10799
    // Predicated region
    $region30: #{_lambda_.1} parent=1 // pred_check
      _
    $region31: #{_lambda_.1} parent=1 // pred_check_branch
      %10803 = sbr.rel (0) target = $region33
    $region32: #{_lambda_.1} parent=1 // pred_region
      %s10805 = ssub.s32 32, 32
      %10806 = vsyncadd [#allocation9], %s10805
      %s10808 = sshll.u32 [#allocation8], 4
      %s10809 = int_to_ptr.vmem [resolvable:$true] %s10808
      %10811 = dma.vmem_to_hbm [thread:$0]  %s10809, 32, %s7, [#allocation9]
    $region33: #{_lambda_.1} parent=1 // pred_fallthru
      _
    // Predicated region
    $region34: #{_lambda_.1} parent=1 // pred_check
      _
    $region35: #{_lambda_.1} parent=1 // pred_check_branch
      %10813 = sbr.rel (0) target = $region37
    $region36: #{_lambda_.1} parent=1 // pred_region
      %10814 = dma.done [#allocation9], 32
    $region37: #{_lambda_.1} parent=1 // pred_fallthru
      _
    %10815 = vsyncpa [#allocation9], 1

</llo_original>
